<compile_context>
chip_gen: v6e
topology: v6e:2x2x1
jax: 0.10.0
libtpu: 0.0.40
codegen_flags: <defaults>
</compile_context>

<pallas_src>
import functools
import math

import jax
import jax.numpy as jnp
from jax.experimental import pallas as pl
from jax.experimental.pallas import tpu as pltpu  # noqa: F401  (TPU backend assumed)

HIDDEN = 5 * 16            # 80, module default hidden_dims
NUM_HEADS = 8
HEAD_DIM = HIDDEN // NUM_HEADS
NUM_LAYERS = 2
NUM_CLASSES = 3
FFN_DIM = 2048             # PyTorch TransformerEncoderLayer default dim_feedforward
LN_EPS = 1e-5
MAX_LEN = 64               # positional-encoder table (only :n is used per type)
NEG_INF = -1e9
LANE = 128


# ------------------------- packed parameter layouts --------------------------

def _align(n):
    return ((n + LANE - 1) // LANE) * LANE


def _build_layout(entries):
    layout, off = {}, 0
    for name, width in entries:
        layout[name] = (off, width)
        off += _align(width)
    return layout, off


# All f32 matrices with HIDDEN rows, lane-concatenated (each slab 128-lane aligned).
_W80_ENTRIES = (
    [("sa_wqkv", 3 * HIDDEN), ("sa_wo", HIDDEN)]
    + [(f"l{l}_{n}", w) for l in range(NUM_LAYERS)
       for n, w in (("wqkv", 3 * HIDDEN), ("wo", HIDDEN))]
    + [("head_w", NUM_CLASSES + 1)]
)
_W80_LAYOUT, _W80_TOTAL = _build_layout(_W80_ENTRIES)

# All bias / LayerNorm / head row-vectors, lane-concatenated into one (1, N) slab.
_VEC_ENTRIES = (
    [("emb_b", HIDDEN), ("sa_bqkv", 3 * HIDDEN), ("sa_bo", HIDDEN)]
    + [(f"l{l}_{n}", w) for l in range(NUM_LAYERS)
       for n, w in (("bqkv", 3 * HIDDEN), ("bo", HIDDEN), ("ln1_g", HIDDEN),
                    ("ln1_b", HIDDEN), ("b1", FFN_DIM), ("b2", HIDDEN),
                    ("ln2_g", HIDDEN), ("ln2_b", HIDDEN))]
    + [("head_b", NUM_CLASSES + 1)]
)
_VEC_LAYOUT, _VEC_TOTAL = _build_layout(_VEC_ENTRIES)


def _full_spec(shape):
    # Whole-array block resident in VMEM (block == full dims satisfies the (8,128) rule).
    return pl.BlockSpec(tuple(shape), lambda: (0,) * len(shape))


# ----------------------------- in-kernel helpers ----------------------------

def _iota(shape, axis):
    return jax.lax.broadcasted_iota(jnp.int32, shape, axis)


def _bucketize(idx, boundaries):
    """id = number of static boundaries <= idx (all compares/adds on the VPU)."""
    out = jnp.zeros_like(idx)
    for b in boundaries:
        out = out + jnp.where(idx >= b, 1, 0)
    return out


# ------------------------------ fused kernel --------------------------------

def _fused_kernel(x_ref, misc_ref, w80_ref, vec_ref, w1_ref, w2_ref, o_ref, *, lens):
    f32, bf16 = jnp.float32, jnp.bfloat16
    L = x_ref.shape[0]
    E, H, Dh = HIDDEN, NUM_HEADS, HEAD_DIM
    HL = H * L
    scale = 1.0 / math.sqrt(Dh)

    def wmat(name, width=None):
        off, w = _W80_LAYOUT[name]
        return w80_ref[:, off:off + (w if width is None else width)]

    def vrow(name, width=None):
        off, w = _VEC_LAYOUT[name]
        return vec_ref[:, off:off + (w if width is None else width)]

    # ---- head / segment index masks, built ONCE from iota (no DMA'd masks) ----
    head_bnds = [h * Dh for h in range(1, H)]      # feature-column head boundaries
    blk_bnds = [h * L for h in range(1, H)]        # stacked-row head boundaries
    seg_bnds, acc = [], 0
    for n in lens[:-1]:
        acc += n
        seg_bnds.append(acc)

    hid_e_row = _bucketize(_iota((1, E), 1), head_bnds)          # (1, E)  head of feature col
    idx_r = _iota((HL, 1), 0)
    hid_r = _bucketize(idx_r, blk_bnds)                          # (HL, 1) head of stacked row
    j_r = idx_r - L * hid_r                                      # (HL, 1) within-head key pos
    idx_c = _iota((1, HL), 1)
    hid_c = _bucketize(idx_c, blk_bnds)                          # (1, HL)
    j_c = idx_c - L * hid_c                                      # (1, HL)

    grep_t = jnp.where(j_r == _iota((1, L), 1), 1.0, 0.0).astype(f32)   # (HL, L) replication op
    sel = jnp.where(hid_r == hid_e_row, 1.0, 0.0).astype(f32)           # (HL, E) per-head select
    blk = jnp.where(hid_r == hid_c, 1.0, 0.0).astype(f32)               # (HL, HL) head blocks

    seg_q = _bucketize(_iota((L, 1), 0), seg_bnds)                      # (L, 1) node type of query
    seg_c = _bucketize(j_c, seg_bnds)                                   # (1, HL) node type of key
    type_mask = jnp.where(seg_q == seg_c, 0.0, NEG_INF).astype(f32)     # (L, HL)

    def layernorm(y, g, b):
        mu = jnp.mean(y, axis=-1, keepdims=True)
        var = jnp.mean((y - mu) ** 2, axis=-1, keepdims=True)
        return (y - mu) * jax.lax.rsqrt(var + LN_EPS) * g + b

    def mha(xin, pfx, extra_mask):
        # Fused QKV projection: one (L, 3E) matmul.
        qkv = (jnp.dot(xin, wmat(pfx + "_wqkv"), preferred_element_type=f32)
               + vrow(pfx + "_bqkv"))
        q = qkv[:, :E] * scale                                           # (L, E)
        # Head-stack K|V along sublanes with a single matmul, then per-head select.
        kv = jnp.dot(grep_t, qkv[:, E:], preferred_element_type=f32)     # (HL, 2E)
        k_bd = kv[:, :E] * sel                                           # (HL, E)
        v_bd = kv[:, E:] * sel                                           # (HL, E)
        # All-head scores in one matmul: s[i, h*L+j] = q_h[i] . k_h[j] / sqrt(Dh)
        s = jax.lax.dot_general(q, k_bd, (((1,), (1,)), ((), ())),
                                preferred_element_type=f32)              # (L, HL)
        if extra_mask is not None:
            s = s + extra_mask
        s = s - jnp.max(s, axis=-1, keepdims=True)
        e = jnp.exp(s)
        denom = jnp.dot(e, blk, preferred_element_type=f32)              # per-head row sums
        p = e / jnp.maximum(denom, 1e-30)
        o = jnp.dot(p, v_bd, preferred_element_type=f32)                 # (L, E), heads merged
        return (jnp.dot(o, wmat(pfx + "_wo"), preferred_element_type=f32)
                + vrow(pfx + "_bo"))

    # ---- embedding + positional encoding (dropout = identity in eval) ----
    emb_w = misc_ref[MAX_LEN:MAX_LEN + 5, :]                             # (5, E)
    x = jnp.dot(x_ref[...], emb_w, preferred_element_type=f32) + vrow("emb_b")
    pe = jnp.concatenate([misc_ref[0:n, :] for n in lens], axis=0)       # per-type pe[:n]
    x = x + pe

    # ---- shared self-attention, block-diagonal over node types ----
    x = mha(x, "sa", type_mask)

    # TODO(synk): GATv2Conv / to_hetero hetero message passing is not defined in the
    # reference source (_to_transformer_input is also a stub); treated as identity.

    # ---- 2x post-LN TransformerEncoder layers (ReLU FFN, dropout = identity) ----
    for l in range(NUM_LAYERS):
        pfx = f"l{l}"
        a = mha(x, pfx, None)                # empty mask in the reference
        x = layernorm(x + a, vrow(pfx + "_ln1_g"), vrow(pfx + "_ln1_b"))
        h = (jnp.dot(x.astype(bf16), w1_ref[l], preferred_element_type=f32)
             + vrow(pfx + "_b1"))
        h = jnp.maximum(h, 0.0).astype(bf16)                 # keep only the bf16 copy live
        ffn = (jnp.dot(h, w2_ref[l], preferred_element_type=f32)
               + vrow(pfx + "_b2"))
        x = layernorm(x + ffn, vrow(pfx + "_ln2_g"), vrow(pfx + "_ln2_b"))

    # ---- fused classifier + time heads, lane-dense (L, 128) output ----
    # head_w / head_b slabs are zero-padded to 128 lanes, so cols 4..127 are exact zeros.
    o_ref[...] = (jnp.dot(x, wmat("head_w", LANE), preferred_element_type=f32)
                  + vrow("head_b", LANE))


def _fused_forward(params, x, lens):
    L = int(x.shape[0])
    args = [x, params["misc"], params["w80"], params["vec"], params["w1"], params["w2"]]
    kernel = functools.partial(_fused_kernel, lens=tuple(lens))
    return pl.pallas_call(
        kernel,
        out_shape=jax.ShapeDtypeStruct((L, LANE), jnp.float32),
        in_specs=[_full_spec(a.shape) for a in args],
        out_specs=_full_spec((L, LANE)),
    )(*args)


# ------------------------------ model wrapper --------------------------------

def market_transformer_forward(params, x_dict, edge_index_dict=None):
    # TODO(synk): GATv2Conv / to_hetero message passing over edge_index_dict is not
    # defined in the reference source; treated as a pass-through.
    del edge_index_dict
    keys = list(x_dict.keys())
    xs = [x_dict[k].astype(jnp.float32) for k in keys]
    lens = tuple(int(v.shape[0]) for v in xs)
    assert all(1 <= n <= MAX_LEN for n in lens)

    x = jnp.concatenate(xs, axis=0)                  # (L, 5)
    out = _fused_forward(params, x, lens)            # (L, 128) lane-dense slab
    class_out = out[:, :NUM_CLASSES]
    time_out = out[:, NUM_CLASSES:NUM_CLASSES + 1]
    # Reference computes classifier(x)/time_prediction(x) on the full concatenated
    # sequence for every node-type key, so the per-key outputs are identical slabs.
    class_out_dict = {k: class_out for k in keys}
    time_out_dict = {k: time_out for k in keys}
    return class_out_dict, time_out_dict


# ----------------------------- parameter setup -------------------------------

def _init_linear(key, fan_in, fan_out):
    kw, kb = jax.random.split(key)
    bound = 1.0 / math.sqrt(fan_in)
    w = jax.random.uniform(kw, (fan_in, fan_out), jnp.float32, -bound, bound)
    b = jax.random.uniform(kb, (fan_out,), jnp.float32, -bound, bound)
    return w, b


def _positional_encoding(max_len, d_model):
    # Note: the reference PositionalEncoder uses log(100000.0) (not the usual 10000.0).
    position = jnp.arange(max_len, dtype=jnp.float32)[:, None]
    div_term = jnp.exp(jnp.arange(0, d_model, 2, dtype=jnp.float32)
                       * (-math.log(100000.0) / d_model))
    pe = jnp.zeros((max_len, d_model), jnp.float32)
    pe = pe.at[:, 0::2].set(jnp.sin(position * div_term))
    pe = pe.at[:, 1::2].set(jnp.cos(position * div_term))
    return pe


def _pack_lanes(arrays, layout, total, rows):
    """Pack named arrays into a single lane-dense (rows, total) f32 slab."""
    buf = jnp.zeros((rows, total), jnp.float32)
    for name, (off, width) in layout.items():
        a = jnp.asarray(arrays[name], jnp.float32).reshape(rows, width)
        buf = buf.at[:, off:off + width].set(a)
    return buf


def init_params(key):
    keys = jax.random.split(key, 6)
    emb_w, emb_b = _init_linear(keys[0], 5, HIDDEN)
    sa_wqkv, sa_bqkv = _init_linear(keys[1], HIDDEN, 3 * HIDDEN)
    sa_wo, sa_bo = _init_linear(keys[2], HIDDEN, HIDDEN)

    w80 = {"sa_wqkv": sa_wqkv, "sa_wo": sa_wo}
    vec = {"emb_b": emb_b, "sa_bqkv": sa_bqkv, "sa_bo": sa_bo}
    w1_list, w2_list = [], []
    for l, lk in enumerate(jax.random.split(keys[3], NUM_LAYERS)):
        sub = jax.random.split(lk, 4)
        wqkv, bqkv = _init_linear(sub[0], HIDDEN, 3 * HIDDEN)
        wo, bo = _init_linear(sub[1], HIDDEN, HIDDEN)
        w1, b1 = _init_linear(sub[2], HIDDEN, FFN_DIM)
        w2, b2 = _init_linear(sub[3], FFN_DIM, HIDDEN)
        w80[f"l{l}_wqkv"] = wqkv
        w80[f"l{l}_wo"] = wo
        vec.update({
            f"l{l}_bqkv": bqkv, f"l{l}_bo": bo,
            f"l{l}_ln1_g": jnp.ones((HIDDEN,), jnp.float32),
            f"l{l}_ln1_b": jnp.zeros((HIDDEN,), jnp.float32),
            f"l{l}_b1": b1, f"l{l}_b2": b2,
            f"l{l}_ln2_g": jnp.ones((HIDDEN,), jnp.float32),
            f"l{l}_ln2_b": jnp.zeros((HIDDEN,), jnp.float32),
        })
        w1_list.append(w1.astype(jnp.bfloat16))   # FFN weights bf16, f32 accumulation
        w2_list.append(w2.astype(jnp.bfloat16))

    cls_w, cls_b = _init_linear(keys[4], HIDDEN, NUM_CLASSES)
    time_w, time_b = _init_linear(keys[5], HIDDEN, 1)
    w80["head_w"] = jnp.concatenate([cls_w, time_w], axis=1)       # (E, 4)
    vec["head_b"] = jnp.concatenate([cls_b, time_b], axis=0)       # (4,)

    # PE table (rows 0..63) + embedding weight (rows 64..68) in one slab.
    misc = jnp.zeros((MAX_LEN + 5, HIDDEN), jnp.float32)
    misc = misc.at[:MAX_LEN].set(_positional_encoding(MAX_LEN, HIDDEN))
    misc = misc.at[MAX_LEN:].set(emb_w)

    return {
        "misc": misc,
        "w80": _pack_lanes(w80, _W80_LAYOUT, _W80_TOTAL, rows=HIDDEN),   # (80, 1280) f32
        "vec": _pack_lanes(vec, _VEC_LAYOUT, _VEC_TOTAL, rows=1),        # (1, 6784) f32
        "w1": jnp.stack(w1_list, axis=0),                                # (2, 80, 2048) bf16
        "w2": jnp.stack(w2_list, axis=0),                                # (2, 2048, 80) bf16
    }


# --------------------------------- main --------------------------------------

if __name__ == "__main__":
    key = jax.random.PRNGKey(0)
    pkey, xk1, xk2 = jax.random.split(key, 3)
    params = init_params(pkey)

    # Two node types, 8 nodes each, 5 raw market features per node.
    x_dict = {
        "stock": jax.random.normal(xk1, (8, 5), jnp.float32),
        "market": jax.random.normal(xk2, (8, 5), jnp.float32),
    }
    edge_index_dict = {("stock", "trades_in", "market"): jnp.zeros((2, 4), jnp.int32)}

    class_out, time_out = market_transformer_forward(params, x_dict, edge_index_dict)
    jax.block_until_ready(class_out)
    jax.block_until_ready(time_out)

    for k in class_out:
        assert class_out[k].shape == (16, NUM_CLASSES)
        assert time_out[k].shape == (16, 1)
        assert bool(jnp.all(jnp.isfinite(class_out[k])))
        assert bool(jnp.all(jnp.isfinite(time_out[k])))
    print("KERNEL_OK")
</pallas_src>

<mosaic_0001>
module attributes {stable_mosaic.version = 11 : i64} {
  func.func @_fused_kernel(%arg0: memref<16x5xf32, #tpu.memory_space<vmem>>, %arg1: memref<69x80xf32, #tpu.memory_space<vmem>>, %arg2: memref<80x1280xf32, #tpu.memory_space<vmem>>, %arg3: memref<1x6784xf32, #tpu.memory_space<vmem>>, %arg4: memref<2x80x2048xbf16, #tpu.memory_space<vmem>>, %arg5: memref<2x2048x80xbf16, #tpu.memory_space<vmem>>, %arg6: memref<16x128xf32, #tpu.memory_space<vmem>>) attributes {dimension_semantics = [], scalar_prefetch = 0 : i64, scratch_operands = 0 : i64, tpu.core_type = #tpu.core_type<tc>} {
    %0 = tpu.iota {dimensions = array<i32: 1>} : vector<1x80xi32>
    %c0_i32 = arith.constant 0 : i32
    %1 = vector.broadcast %c0_i32 : i32 to vector<1x80xi32>
    %c10_i32 = arith.constant 10 : i32
    %2 = vector.broadcast %c10_i32 : i32 to vector<1x80xi32>
    %3 = arith.cmpi sge, %0, %2 : vector<1x80xi32>
    %c1_i32 = arith.constant 1 : i32
    %c0_i32_0 = arith.constant 0 : i32
    %4 = vector.broadcast %c1_i32 : i32 to vector<1x80xi32>
    %5 = vector.broadcast %c0_i32_0 : i32 to vector<1x80xi32>
    %6 = arith.select %3, %4, %5 : vector<1x80xi1>, vector<1x80xi32>
    %7 = arith.addi %1, %6 : vector<1x80xi32>
    %c20_i32 = arith.constant 20 : i32
    %8 = vector.broadcast %c20_i32 : i32 to vector<1x80xi32>
    %9 = arith.cmpi sge, %0, %8 : vector<1x80xi32>
    %c1_i32_1 = arith.constant 1 : i32
    %c0_i32_2 = arith.constant 0 : i32
    %10 = vector.broadcast %c1_i32_1 : i32 to vector<1x80xi32>
    %11 = vector.broadcast %c0_i32_2 : i32 to vector<1x80xi32>
    %12 = arith.select %9, %10, %11 : vector<1x80xi1>, vector<1x80xi32>
    %13 = arith.addi %7, %12 : vector<1x80xi32>
    %c30_i32 = arith.constant 30 : i32
    %14 = vector.broadcast %c30_i32 : i32 to vector<1x80xi32>
    %15 = arith.cmpi sge, %0, %14 : vector<1x80xi32>
    %c1_i32_3 = arith.constant 1 : i32
    %c0_i32_4 = arith.constant 0 : i32
    %16 = vector.broadcast %c1_i32_3 : i32 to vector<1x80xi32>
    %17 = vector.broadcast %c0_i32_4 : i32 to vector<1x80xi32>
    %18 = arith.select %15, %16, %17 : vector<1x80xi1>, vector<1x80xi32>
    %19 = arith.addi %13, %18 : vector<1x80xi32>
    %c40_i32 = arith.constant 40 : i32
    %20 = vector.broadcast %c40_i32 : i32 to vector<1x80xi32>
    %21 = arith.cmpi sge, %0, %20 : vector<1x80xi32>
    %c1_i32_5 = arith.constant 1 : i32
    %c0_i32_6 = arith.constant 0 : i32
    %22 = vector.broadcast %c1_i32_5 : i32 to vector<1x80xi32>
    %23 = vector.broadcast %c0_i32_6 : i32 to vector<1x80xi32>
    %24 = arith.select %21, %22, %23 : vector<1x80xi1>, vector<1x80xi32>
    %25 = arith.addi %19, %24 : vector<1x80xi32>
    %c50_i32 = arith.constant 50 : i32
    %26 = vector.broadcast %c50_i32 : i32 to vector<1x80xi32>
    %27 = arith.cmpi sge, %0, %26 : vector<1x80xi32>
    %c1_i32_7 = arith.constant 1 : i32
    %c0_i32_8 = arith.constant 0 : i32
    %28 = vector.broadcast %c1_i32_7 : i32 to vector<1x80xi32>
    %29 = vector.broadcast %c0_i32_8 : i32 to vector<1x80xi32>
    %30 = arith.select %27, %28, %29 : vector<1x80xi1>, vector<1x80xi32>
    %31 = arith.addi %25, %30 : vector<1x80xi32>
    %c60_i32 = arith.constant 60 : i32
    %32 = vector.broadcast %c60_i32 : i32 to vector<1x80xi32>
    %33 = arith.cmpi sge, %0, %32 : vector<1x80xi32>
    %c1_i32_9 = arith.constant 1 : i32
    %c0_i32_10 = arith.constant 0 : i32
    %34 = vector.broadcast %c1_i32_9 : i32 to vector<1x80xi32>
    %35 = vector.broadcast %c0_i32_10 : i32 to vector<1x80xi32>
    %36 = arith.select %33, %34, %35 : vector<1x80xi1>, vector<1x80xi32>
    %37 = arith.addi %31, %36 : vector<1x80xi32>
    %c70_i32 = arith.constant 70 : i32
    %38 = vector.broadcast %c70_i32 : i32 to vector<1x80xi32>
    %39 = arith.cmpi sge, %0, %38 : vector<1x80xi32>
    %c1_i32_11 = arith.constant 1 : i32
    %c0_i32_12 = arith.constant 0 : i32
    %40 = vector.broadcast %c1_i32_11 : i32 to vector<1x80xi32>
    %41 = vector.broadcast %c0_i32_12 : i32 to vector<1x80xi32>
    %42 = arith.select %39, %40, %41 : vector<1x80xi1>, vector<1x80xi32>
    %43 = arith.addi %37, %42 : vector<1x80xi32>
    %44 = tpu.iota {dimensions = array<i32: 0>} : vector<128x1xi32>
    %c0_i32_13 = arith.constant 0 : i32
    %45 = vector.broadcast %c0_i32_13 : i32 to vector<128x1xi32>
    %c16_i32 = arith.constant 16 : i32
    %46 = vector.broadcast %c16_i32 : i32 to vector<128x1xi32>
    %47 = arith.cmpi sge, %44, %46 : vector<128x1xi32>
    %c1_i32_14 = arith.constant 1 : i32
    %c0_i32_15 = arith.constant 0 : i32
    %48 = vector.broadcast %c1_i32_14 : i32 to vector<128x1xi32>
    %49 = vector.broadcast %c0_i32_15 : i32 to vector<128x1xi32>
    %50 = arith.select %47, %48, %49 : vector<128x1xi1>, vector<128x1xi32>
    %51 = arith.addi %45, %50 : vector<128x1xi32>
    %c32_i32 = arith.constant 32 : i32
    %52 = vector.broadcast %c32_i32 : i32 to vector<128x1xi32>
    %53 = arith.cmpi sge, %44, %52 : vector<128x1xi32>
    %c1_i32_16 = arith.constant 1 : i32
    %c0_i32_17 = arith.constant 0 : i32
    %54 = vector.broadcast %c1_i32_16 : i32 to vector<128x1xi32>
    %55 = vector.broadcast %c0_i32_17 : i32 to vector<128x1xi32>
    %56 = arith.select %53, %54, %55 : vector<128x1xi1>, vector<128x1xi32>
    %57 = arith.addi %51, %56 : vector<128x1xi32>
    %c48_i32 = arith.constant 48 : i32
    %58 = vector.broadcast %c48_i32 : i32 to vector<128x1xi32>
    %59 = arith.cmpi sge, %44, %58 : vector<128x1xi32>
    %c1_i32_18 = arith.constant 1 : i32
    %c0_i32_19 = arith.constant 0 : i32
    %60 = vector.broadcast %c1_i32_18 : i32 to vector<128x1xi32>
    %61 = vector.broadcast %c0_i32_19 : i32 to vector<128x1xi32>
    %62 = arith.select %59, %60, %61 : vector<128x1xi1>, vector<128x1xi32>
    %63 = arith.addi %57, %62 : vector<128x1xi32>
    %c64_i32 = arith.constant 64 : i32
    %64 = vector.broadcast %c64_i32 : i32 to vector<128x1xi32>
    %65 = arith.cmpi sge, %44, %64 : vector<128x1xi32>
    %c1_i32_20 = arith.constant 1 : i32
    %c0_i32_21 = arith.constant 0 : i32
    %66 = vector.broadcast %c1_i32_20 : i32 to vector<128x1xi32>
    %67 = vector.broadcast %c0_i32_21 : i32 to vector<128x1xi32>
    %68 = arith.select %65, %66, %67 : vector<128x1xi1>, vector<128x1xi32>
    %69 = arith.addi %63, %68 : vector<128x1xi32>
    %c80_i32 = arith.constant 80 : i32
    %70 = vector.broadcast %c80_i32 : i32 to vector<128x1xi32>
    %71 = arith.cmpi sge, %44, %70 : vector<128x1xi32>
    %c1_i32_22 = arith.constant 1 : i32
    %c0_i32_23 = arith.constant 0 : i32
    %72 = vector.broadcast %c1_i32_22 : i32 to vector<128x1xi32>
    %73 = vector.broadcast %c0_i32_23 : i32 to vector<128x1xi32>
    %74 = arith.select %71, %72, %73 : vector<128x1xi1>, vector<128x1xi32>
    %75 = arith.addi %69, %74 : vector<128x1xi32>
    %c96_i32 = arith.constant 96 : i32
    %76 = vector.broadcast %c96_i32 : i32 to vector<128x1xi32>
    %77 = arith.cmpi sge, %44, %76 : vector<128x1xi32>
    %c1_i32_24 = arith.constant 1 : i32
    %c0_i32_25 = arith.constant 0 : i32
    %78 = vector.broadcast %c1_i32_24 : i32 to vector<128x1xi32>
    %79 = vector.broadcast %c0_i32_25 : i32 to vector<128x1xi32>
    %80 = arith.select %77, %78, %79 : vector<128x1xi1>, vector<128x1xi32>
    %81 = arith.addi %75, %80 : vector<128x1xi32>
    %c112_i32 = arith.constant 112 : i32
    %82 = vector.broadcast %c112_i32 : i32 to vector<128x1xi32>
    %83 = arith.cmpi sge, %44, %82 : vector<128x1xi32>
    %c1_i32_26 = arith.constant 1 : i32
    %c0_i32_27 = arith.constant 0 : i32
    %84 = vector.broadcast %c1_i32_26 : i32 to vector<128x1xi32>
    %85 = vector.broadcast %c0_i32_27 : i32 to vector<128x1xi32>
    %86 = arith.select %83, %84, %85 : vector<128x1xi1>, vector<128x1xi32>
    %87 = arith.addi %81, %86 : vector<128x1xi32>
    %c16_i32_28 = arith.constant 16 : i32
    %88 = vector.broadcast %c16_i32_28 : i32 to vector<128x1xi32>
    %89 = arith.muli %88, %87 : vector<128x1xi32>
    %90 = arith.subi %44, %89 : vector<128x1xi32>
    %91 = tpu.iota {dimensions = array<i32: 1>} : vector<1x128xi32>
    %c0_i32_29 = arith.constant 0 : i32
    %92 = vector.broadcast %c0_i32_29 : i32 to vector<1x128xi32>
    %c16_i32_30 = arith.constant 16 : i32
    %93 = vector.broadcast %c16_i32_30 : i32 to vector<1x128xi32>
    %94 = arith.cmpi sge, %91, %93 : vector<1x128xi32>
    %c1_i32_31 = arith.constant 1 : i32
    %c0_i32_32 = arith.constant 0 : i32
    %95 = vector.broadcast %c1_i32_31 : i32 to vector<1x128xi32>
    %96 = vector.broadcast %c0_i32_32 : i32 to vector<1x128xi32>
    %97 = arith.select %94, %95, %96 : vector<1x128xi1>, vector<1x128xi32>
    %98 = arith.addi %92, %97 : vector<1x128xi32>
    %c32_i32_33 = arith.constant 32 : i32
    %99 = vector.broadcast %c32_i32_33 : i32 to vector<1x128xi32>
    %100 = arith.cmpi sge, %91, %99 : vector<1x128xi32>
    %c1_i32_34 = arith.constant 1 : i32
    %c0_i32_35 = arith.constant 0 : i32
    %101 = vector.broadcast %c1_i32_34 : i32 to vector<1x128xi32>
    %102 = vector.broadcast %c0_i32_35 : i32 to vector<1x128xi32>
    %103 = arith.select %100, %101, %102 : vector<1x128xi1>, vector<1x128xi32>
    %104 = arith.addi %98, %103 : vector<1x128xi32>
    %c48_i32_36 = arith.constant 48 : i32
    %105 = vector.broadcast %c48_i32_36 : i32 to vector<1x128xi32>
    %106 = arith.cmpi sge, %91, %105 : vector<1x128xi32>
    %c1_i32_37 = arith.constant 1 : i32
    %c0_i32_38 = arith.constant 0 : i32
    %107 = vector.broadcast %c1_i32_37 : i32 to vector<1x128xi32>
    %108 = vector.broadcast %c0_i32_38 : i32 to vector<1x128xi32>
    %109 = arith.select %106, %107, %108 : vector<1x128xi1>, vector<1x128xi32>
    %110 = arith.addi %104, %109 : vector<1x128xi32>
    %c64_i32_39 = arith.constant 64 : i32
    %111 = vector.broadcast %c64_i32_39 : i32 to vector<1x128xi32>
    %112 = arith.cmpi sge, %91, %111 : vector<1x128xi32>
    %c1_i32_40 = arith.constant 1 : i32
    %c0_i32_41 = arith.constant 0 : i32
    %113 = vector.broadcast %c1_i32_40 : i32 to vector<1x128xi32>
    %114 = vector.broadcast %c0_i32_41 : i32 to vector<1x128xi32>
    %115 = arith.select %112, %113, %114 : vector<1x128xi1>, vector<1x128xi32>
    %116 = arith.addi %110, %115 : vector<1x128xi32>
    %c80_i32_42 = arith.constant 80 : i32
    %117 = vector.broadcast %c80_i32_42 : i32 to vector<1x128xi32>
    %118 = arith.cmpi sge, %91, %117 : vector<1x128xi32>
    %c1_i32_43 = arith.constant 1 : i32
    %c0_i32_44 = arith.constant 0 : i32
    %119 = vector.broadcast %c1_i32_43 : i32 to vector<1x128xi32>
    %120 = vector.broadcast %c0_i32_44 : i32 to vector<1x128xi32>
    %121 = arith.select %118, %119, %120 : vector<1x128xi1>, vector<1x128xi32>
    %122 = arith.addi %116, %121 : vector<1x128xi32>
    %c96_i32_45 = arith.constant 96 : i32
    %123 = vector.broadcast %c96_i32_45 : i32 to vector<1x128xi32>
    %124 = arith.cmpi sge, %91, %123 : vector<1x128xi32>
    %c1_i32_46 = arith.constant 1 : i32
    %c0_i32_47 = arith.constant 0 : i32
    %125 = vector.broadcast %c1_i32_46 : i32 to vector<1x128xi32>
    %126 = vector.broadcast %c0_i32_47 : i32 to vector<1x128xi32>
    %127 = arith.select %124, %125, %126 : vector<1x128xi1>, vector<1x128xi32>
    %128 = arith.addi %122, %127 : vector<1x128xi32>
    %c112_i32_48 = arith.constant 112 : i32
    %129 = vector.broadcast %c112_i32_48 : i32 to vector<1x128xi32>
    %130 = arith.cmpi sge, %91, %129 : vector<1x128xi32>
    %c1_i32_49 = arith.constant 1 : i32
    %c0_i32_50 = arith.constant 0 : i32
    %131 = vector.broadcast %c1_i32_49 : i32 to vector<1x128xi32>
    %132 = vector.broadcast %c0_i32_50 : i32 to vector<1x128xi32>
    %133 = arith.select %130, %131, %132 : vector<1x128xi1>, vector<1x128xi32>
    %134 = arith.addi %128, %133 : vector<1x128xi32>
    %c16_i32_51 = arith.constant 16 : i32
    %135 = vector.broadcast %c16_i32_51 : i32 to vector<1x128xi32>
    %136 = arith.muli %135, %134 : vector<1x128xi32>
    %137 = arith.subi %91, %136 : vector<1x128xi32>
    %138 = tpu.iota {dimensions = array<i32: 1>} : vector<1x16xi32>
    %139 = vector.broadcast %90 : vector<128x1xi32> to vector<128x16xi32>
    %140 = vector.broadcast %138 : vector<1x16xi32> to vector<128x16xi32>
    %141 = arith.cmpi eq, %139, %140 : vector<128x16xi32>
    %cst = arith.constant 1.000000e+00 : f32
    %cst_52 = arith.constant 0.000000e+00 : f32
    %142 = vector.broadcast %cst : f32 to vector<128x16xf32>
    %143 = vector.broadcast %cst_52 : f32 to vector<128x16xf32>
    %144 = arith.select %141, %142, %143 : vector<128x16xi1>, vector<128x16xf32>
    %145 = vector.broadcast %87 : vector<128x1xi32> to vector<128x80xi32>
    %146 = vector.broadcast %43 : vector<1x80xi32> to vector<128x80xi32>
    %147 = arith.cmpi eq, %145, %146 : vector<128x80xi32>
    %cst_53 = arith.constant 1.000000e+00 : f32
    %cst_54 = arith.constant 0.000000e+00 : f32
    %148 = vector.broadcast %cst_53 : f32 to vector<128x80xf32>
    %149 = vector.broadcast %cst_54 : f32 to vector<128x80xf32>
    %150 = arith.select %147, %148, %149 : vector<128x80xi1>, vector<128x80xf32>
    %151 = vector.broadcast %87 : vector<128x1xi32> to vector<128x128xi32>
    %152 = vector.broadcast %134 : vector<1x128xi32> to vector<128x128xi32>
    %153 = arith.cmpi eq, %151, %152 : vector<128x128xi32>
    %cst_55 = arith.constant 1.000000e+00 : f32
    %cst_56 = arith.constant 0.000000e+00 : f32
    %154 = vector.broadcast %cst_55 : f32 to vector<128x128xf32>
    %155 = vector.broadcast %cst_56 : f32 to vector<128x128xf32>
    %156 = arith.select %153, %154, %155 : vector<128x128xi1>, vector<128x128xf32>
    %157 = tpu.iota {dimensions = array<i32: 0>} : vector<16x1xi32>
    %c0_i32_57 = arith.constant 0 : i32
    %158 = vector.broadcast %c0_i32_57 : i32 to vector<16x1xi32>
    %c8_i32 = arith.constant 8 : i32
    %159 = vector.broadcast %c8_i32 : i32 to vector<16x1xi32>
    %160 = arith.cmpi sge, %157, %159 : vector<16x1xi32>
    %c1_i32_58 = arith.constant 1 : i32
    %c0_i32_59 = arith.constant 0 : i32
    %161 = vector.broadcast %c1_i32_58 : i32 to vector<16x1xi32>
    %162 = vector.broadcast %c0_i32_59 : i32 to vector<16x1xi32>
    %163 = arith.select %160, %161, %162 : vector<16x1xi1>, vector<16x1xi32>
    %164 = arith.addi %158, %163 : vector<16x1xi32>
    %c0_i32_60 = arith.constant 0 : i32
    %165 = vector.broadcast %c0_i32_60 : i32 to vector<1x128xi32>
    %c8_i32_61 = arith.constant 8 : i32
    %166 = vector.broadcast %c8_i32_61 : i32 to vector<1x128xi32>
    %167 = arith.cmpi sge, %137, %166 : vector<1x128xi32>
    %c1_i32_62 = arith.constant 1 : i32
    %c0_i32_63 = arith.constant 0 : i32
    %168 = vector.broadcast %c1_i32_62 : i32 to vector<1x128xi32>
    %169 = vector.broadcast %c0_i32_63 : i32 to vector<1x128xi32>
    %170 = arith.select %167, %168, %169 : vector<1x128xi1>, vector<1x128xi32>
    %171 = arith.addi %165, %170 : vector<1x128xi32>
    %172 = vector.broadcast %164 : vector<16x1xi32> to vector<16x128xi32>
    %173 = vector.broadcast %171 : vector<1x128xi32> to vector<16x128xi32>
    %174 = arith.cmpi eq, %172, %173 : vector<16x128xi32>
    %cst_64 = arith.constant 0.000000e+00 : f32
    %cst_65 = arith.constant -1.000000e+09 : f32
    %175 = vector.broadcast %cst_64 : f32 to vector<16x128xf32>
    %176 = vector.broadcast %cst_65 : f32 to vector<16x128xf32>
    %177 = arith.select %174, %175, %176 : vector<16x128xi1>, vector<16x128xf32>
    %c64 = arith.constant 64 : index
    %c0 = arith.constant 0 : index
    %178 = vector.load %arg1[%c64, %c0] : memref<69x80xf32, #tpu.memory_space<vmem>>, vector<5x80xf32>
    %c0_66 = arith.constant 0 : index
    %c0_67 = arith.constant 0 : index
    %179 = vector.load %arg0[%c0_66, %c0_67] : memref<16x5xf32, #tpu.memory_space<vmem>>, vector<16x5xf32>
    %cst_68 = arith.constant dense<0.000000e+00> : vector<16x80xf32>
    %180 = tpu.matmul %179, %178, %cst_68 {dimension_numbers = #tpu.dot_dimension_numbers<[1], [0], [0], [1], [0, 0, 1, 1], [], []>} : vector<16x5xf32>, vector<5x80xf32>, vector<16x80xf32> -> vector<16x80xf32>
    %c0_69 = arith.constant 0 : index
    %c0_70 = arith.constant 0 : index
    %181 = vector.load %arg3[%c0_69, %c0_70] : memref<1x6784xf32, #tpu.memory_space<vmem>>, vector<1x80xf32>
    %182 = vector.broadcast %181 : vector<1x80xf32> to vector<16x80xf32>
    %183 = arith.addf %180, %182 : vector<16x80xf32>
    %c0_71 = arith.constant 0 : index
    %c0_72 = arith.constant 0 : index
    %184 = vector.load %arg1[%c0_71, %c0_72] : memref<69x80xf32, #tpu.memory_space<vmem>>, vector<8x80xf32>
    %c0_73 = arith.constant 0 : index
    %c0_74 = arith.constant 0 : index
    %185 = vector.load %arg1[%c0_73, %c0_74] : memref<69x80xf32, #tpu.memory_space<vmem>>, vector<8x80xf32>
    %186 = tpu.concatenate %184, %185 in 0 : vector<8x80xf32>, vector<8x80xf32> -> vector<16x80xf32>
    %187 = arith.addf %183, %186 : vector<16x80xf32>
    %c0_75 = arith.constant 0 : index
    %c0_76 = arith.constant 0 : index
    %188 = vector.load %arg2[%c0_75, %c0_76] : memref<80x1280xf32, #tpu.memory_space<vmem>>, vector<80x240xf32>
    %cst_77 = arith.constant dense<0.000000e+00> : vector<16x240xf32>
    %189 = tpu.matmul %187, %188, %cst_77 {dimension_numbers = #tpu.dot_dimension_numbers<[1], [0], [0], [1], [0, 0, 1, 1], [], []>} : vector<16x80xf32>, vector<80x240xf32>, vector<16x240xf32> -> vector<16x240xf32>
    %c0_78 = arith.constant 0 : index
    %c128 = arith.constant 128 : index
    %190 = vector.load %arg3[%c0_78, %c128] : memref<1x6784xf32, #tpu.memory_space<vmem>>, vector<1x240xf32>
    %191 = vector.broadcast %190 : vector<1x240xf32> to vector<16x240xf32>
    %192 = arith.addf %189, %191 : vector<16x240xf32>
    %193 = vector.extract_strided_slice %192 {offsets = [0, 0], sizes = [16, 80], strides = [1, 1]} : vector<16x240xf32> to vector<16x80xf32>
    %cst_79 = arith.constant 0.316227764 : f32
    %194 = vector.broadcast %cst_79 : f32 to vector<16x80xf32>
    %195 = arith.mulf %193, %194 : vector<16x80xf32>
    %196 = vector.extract_strided_slice %192 {offsets = [0, 80], sizes = [16, 160], strides = [1, 1]} : vector<16x240xf32> to vector<16x160xf32>
    %cst_80 = arith.constant dense<0.000000e+00> : vector<128x160xf32>
    %197 = tpu.matmul %144, %196, %cst_80 {dimension_numbers = #tpu.dot_dimension_numbers<[1], [0], [0], [1], [0, 0, 1, 1], [], []>} : vector<128x16xf32>, vector<16x160xf32>, vector<128x160xf32> -> vector<128x160xf32>
    %198 = vector.extract_strided_slice %197 {offsets = [0, 0], sizes = [128, 80], strides = [1, 1]} : vector<128x160xf32> to vector<128x80xf32>
    %199 = arith.mulf %198, %150 : vector<128x80xf32>
    %200 = vector.extract_strided_slice %197 {offsets = [0, 80], sizes = [128, 80], strides = [1, 1]} : vector<128x160xf32> to vector<128x80xf32>
    %201 = arith.mulf %200, %150 : vector<128x80xf32>
    %cst_81 = arith.constant dense<0.000000e+00> : vector<16x128xf32>
    %202 = tpu.matmul %195, %199, %cst_81 {dimension_numbers = #tpu.dot_dimension_numbers<[1], [1], [0], [0], [0, 0, 1, 0], [], []>} : vector<16x80xf32>, vector<128x80xf32>, vector<16x128xf32> -> vector<16x128xf32>
    %203 = arith.addf %202, %177 : vector<16x128xf32>
    %cst_82 = arith.constant dense<0xFF800000> : vector<16xf32>
    %204 = vector.multi_reduction <maximumf>, %203, %cst_82 [1] : vector<16x128xf32> to vector<16xf32>
    %205 = vector.shape_cast %204 : vector<16xf32> to vector<16x1xf32>
    %206 = vector.broadcast %205 : vector<16x1xf32> to vector<16x128xf32>
    %207 = arith.subf %203, %206 : vector<16x128xf32>
    %208 = math.exp %207 : vector<16x128xf32>
    %cst_83 = arith.constant dense<0.000000e+00> : vector<16x128xf32>
    %209 = tpu.matmul %208, %156, %cst_83 {dimension_numbers = #tpu.dot_dimension_numbers<[1], [0], [0], [1], [0, 0, 1, 1], [], []>} : vector<16x128xf32>, vector<128x128xf32>, vector<16x128xf32> -> vector<16x128xf32>
    %cst_84 = arith.constant 1.000000e-30 : f32
    %210 = vector.broadcast %cst_84 : f32 to vector<16x128xf32>
    %211 = arith.maximumf %209, %210 : vector<16x128xf32>
    %212 = arith.divf %208, %211 : vector<16x128xf32>
    %cst_85 = arith.constant dense<0.000000e+00> : vector<16x80xf32>
    %213 = tpu.matmul %212, %201, %cst_85 {dimension_numbers = #tpu.dot_dimension_numbers<[1], [0], [0], [1], [0, 0, 1, 1], [], []>} : vector<16x128xf32>, vector<128x80xf32>, vector<16x80xf32> -> vector<16x80xf32>
    %c0_86 = arith.constant 0 : index
    %c256 = arith.constant 256 : index
    %214 = vector.load %arg2[%c0_86, %c256] : memref<80x1280xf32, #tpu.memory_space<vmem>>, vector<80x80xf32>
    %cst_87 = arith.constant dense<0.000000e+00> : vector<16x80xf32>
    %215 = tpu.matmul %213, %214, %cst_87 {dimension_numbers = #tpu.dot_dimension_numbers<[1], [0], [0], [1], [0, 0, 1, 1], [], []>} : vector<16x80xf32>, vector<80x80xf32>, vector<16x80xf32> -> vector<16x80xf32>
    %c0_88 = arith.constant 0 : index
    %c384 = arith.constant 384 : index
    %216 = vector.load %arg3[%c0_88, %c384] : memref<1x6784xf32, #tpu.memory_space<vmem>>, vector<1x80xf32>
    %217 = vector.broadcast %216 : vector<1x80xf32> to vector<16x80xf32>
    %218 = arith.addf %215, %217 : vector<16x80xf32>
    %c0_89 = arith.constant 0 : index
    %c384_90 = arith.constant 384 : index
    %219 = vector.load %arg2[%c0_89, %c384_90] : memref<80x1280xf32, #tpu.memory_space<vmem>>, vector<80x240xf32>
    %cst_91 = arith.constant dense<0.000000e+00> : vector<16x240xf32>
    %220 = tpu.matmul %218, %219, %cst_91 {dimension_numbers = #tpu.dot_dimension_numbers<[1], [0], [0], [1], [0, 0, 1, 1], [], []>} : vector<16x80xf32>, vector<80x240xf32>, vector<16x240xf32> -> vector<16x240xf32>
    %c0_92 = arith.constant 0 : index
    %c512 = arith.constant 512 : index
    %221 = vector.load %arg3[%c0_92, %c512] : memref<1x6784xf32, #tpu.memory_space<vmem>>, vector<1x240xf32>
    %222 = vector.broadcast %221 : vector<1x240xf32> to vector<16x240xf32>
    %223 = arith.addf %220, %222 : vector<16x240xf32>
    %224 = vector.extract_strided_slice %223 {offsets = [0, 0], sizes = [16, 80], strides = [1, 1]} : vector<16x240xf32> to vector<16x80xf32>
    %cst_93 = arith.constant 0.316227764 : f32
    %225 = vector.broadcast %cst_93 : f32 to vector<16x80xf32>
    %226 = arith.mulf %224, %225 : vector<16x80xf32>
    %227 = vector.extract_strided_slice %223 {offsets = [0, 80], sizes = [16, 160], strides = [1, 1]} : vector<16x240xf32> to vector<16x160xf32>
    %cst_94 = arith.constant dense<0.000000e+00> : vector<128x160xf32>
    %228 = tpu.matmul %144, %227, %cst_94 {dimension_numbers = #tpu.dot_dimension_numbers<[1], [0], [0], [1], [0, 0, 1, 1], [], []>} : vector<128x16xf32>, vector<16x160xf32>, vector<128x160xf32> -> vector<128x160xf32>
    %229 = vector.extract_strided_slice %228 {offsets = [0, 0], sizes = [128, 80], strides = [1, 1]} : vector<128x160xf32> to vector<128x80xf32>
    %230 = arith.mulf %229, %150 : vector<128x80xf32>
    %231 = vector.extract_strided_slice %228 {offsets = [0, 80], sizes = [128, 80], strides = [1, 1]} : vector<128x160xf32> to vector<128x80xf32>
    %232 = arith.mulf %231, %150 : vector<128x80xf32>
    %cst_95 = arith.constant dense<0.000000e+00> : vector<16x128xf32>
    %233 = tpu.matmul %226, %230, %cst_95 {dimension_numbers = #tpu.dot_dimension_numbers<[1], [1], [0], [0], [0, 0, 1, 0], [], []>} : vector<16x80xf32>, vector<128x80xf32>, vector<16x128xf32> -> vector<16x128xf32>
    %cst_96 = arith.constant dense<0xFF800000> : vector<16xf32>
    %234 = vector.multi_reduction <maximumf>, %233, %cst_96 [1] : vector<16x128xf32> to vector<16xf32>
    %235 = vector.shape_cast %234 : vector<16xf32> to vector<16x1xf32>
    %236 = vector.broadcast %235 : vector<16x1xf32> to vector<16x128xf32>
    %237 = arith.subf %233, %236 : vector<16x128xf32>
    %238 = math.exp %237 : vector<16x128xf32>
    %cst_97 = arith.constant dense<0.000000e+00> : vector<16x128xf32>
    %239 = tpu.matmul %238, %156, %cst_97 {dimension_numbers = #tpu.dot_dimension_numbers<[1], [0], [0], [1], [0, 0, 1, 1], [], []>} : vector<16x128xf32>, vector<128x128xf32>, vector<16x128xf32> -> vector<16x128xf32>
    %cst_98 = arith.constant 1.000000e-30 : f32
    %240 = vector.broadcast %cst_98 : f32 to vector<16x128xf32>
    %241 = arith.maximumf %239, %240 : vector<16x128xf32>
    %242 = arith.divf %238, %241 : vector<16x128xf32>
    %cst_99 = arith.constant dense<0.000000e+00> : vector<16x80xf32>
    %243 = tpu.matmul %242, %232, %cst_99 {dimension_numbers = #tpu.dot_dimension_numbers<[1], [0], [0], [1], [0, 0, 1, 1], [], []>} : vector<16x128xf32>, vector<128x80xf32>, vector<16x80xf32> -> vector<16x80xf32>
    %c0_100 = arith.constant 0 : index
    %c640 = arith.constant 640 : index
    %244 = vector.load %arg2[%c0_100, %c640] : memref<80x1280xf32, #tpu.memory_space<vmem>>, vector<80x80xf32>
    %cst_101 = arith.constant dense<0.000000e+00> : vector<16x80xf32>
    %245 = tpu.matmul %243, %244, %cst_101 {dimension_numbers = #tpu.dot_dimension_numbers<[1], [0], [0], [1], [0, 0, 1, 1], [], []>} : vector<16x80xf32>, vector<80x80xf32>, vector<16x80xf32> -> vector<16x80xf32>
    %c0_102 = arith.constant 0 : index
    %c768 = arith.constant 768 : index
    %246 = vector.load %arg3[%c0_102, %c768] : memref<1x6784xf32, #tpu.memory_space<vmem>>, vector<1x80xf32>
    %247 = vector.broadcast %246 : vector<1x80xf32> to vector<16x80xf32>
    %248 = arith.addf %245, %247 : vector<16x80xf32>
    %249 = arith.addf %218, %248 : vector<16x80xf32>
    %c0_103 = arith.constant 0 : index
    %c896 = arith.constant 896 : index
    %250 = vector.load %arg3[%c0_103, %c896] : memref<1x6784xf32, #tpu.memory_space<vmem>>, vector<1x80xf32>
    %c0_104 = arith.constant 0 : index
    %c1024 = arith.constant 1024 : index
    %251 = vector.load %arg3[%c0_104, %c1024] : memref<1x6784xf32, #tpu.memory_space<vmem>>, vector<1x80xf32>
    %cst_105 = arith.constant dense<0.000000e+00> : vector<16xf32>
    %252 = vector.multi_reduction <add>, %249, %cst_105 [1] : vector<16x80xf32> to vector<16xf32>
    %253 = vector.shape_cast %252 : vector<16xf32> to vector<16x1xf32>
    %cst_106 = arith.constant 8.000000e+01 : f32
    %254 = vector.broadcast %cst_106 : f32 to vector<16x1xf32>
    %255 = arith.divf %253, %254 : vector<16x1xf32>
    %256 = vector.broadcast %255 : vector<16x1xf32> to vector<16x80xf32>
    %257 = arith.subf %249, %256 : vector<16x80xf32>
    %258 = arith.mulf %257, %257 : vector<16x80xf32>
    %cst_107 = arith.constant dense<0.000000e+00> : vector<16xf32>
    %259 = vector.multi_reduction <add>, %258, %cst_107 [1] : vector<16x80xf32> to vector<16xf32>
    %260 = vector.shape_cast %259 : vector<16xf32> to vector<16x1xf32>
    %cst_108 = arith.constant 8.000000e+01 : f32
    %261 = vector.broadcast %cst_108 : f32 to vector<16x1xf32>
    %262 = arith.divf %260, %261 : vector<16x1xf32>
    %263 = vector.broadcast %255 : vector<16x1xf32> to vector<16x80xf32>
    %264 = arith.subf %249, %263 : vector<16x80xf32>
    %cst_109 = arith.constant 9.99999974E-6 : f32
    %265 = vector.broadcast %cst_109 : f32 to vector<16x1xf32>
    %266 = arith.addf %262, %265 : vector<16x1xf32>
    %267 = math.rsqrt %266 : vector<16x1xf32>
    %268 = vector.broadcast %267 : vector<16x1xf32> to vector<16x80xf32>
    %269 = arith.mulf %264, %268 : vector<16x80xf32>
    %270 = vector.broadcast %250 : vector<1x80xf32> to vector<16x80xf32>
    %271 = arith.mulf %269, %270 : vector<16x80xf32>
    %272 = vector.broadcast %251 : vector<1x80xf32> to vector<16x80xf32>
    %273 = arith.addf %271, %272 : vector<16x80xf32>
    %274 = arith.truncf %273 : vector<16x80xf32> to vector<16x80xbf16>
    %c0_110 = arith.constant 0 : index
    %c0_111 = arith.constant 0 : index
    %c0_112 = arith.constant 0 : index
    %275 = vector.load %arg4[%c0_110, %c0_111, %c0_112] : memref<2x80x2048xbf16, #tpu.memory_space<vmem>>, vector<1x80x2048xbf16>
    %276 = vector.shape_cast %275 : vector<1x80x2048xbf16> to vector<80x2048xbf16>
    %cst_113 = arith.constant dense<0.000000e+00> : vector<16x2048xf32>
    %277 = tpu.matmul %274, %276, %cst_113 {dimension_numbers = #tpu.dot_dimension_numbers<[1], [0], [0], [1], [0, 0, 1, 1], [], []>} : vector<16x80xbf16>, vector<80x2048xbf16>, vector<16x2048xf32> -> vector<16x2048xf32>
    %c0_114 = arith.constant 0 : index
    %c1152 = arith.constant 1152 : index
    %278 = vector.load %arg3[%c0_114, %c1152] : memref<1x6784xf32, #tpu.memory_space<vmem>>, vector<1x2048xf32>
    %279 = vector.broadcast %278 : vector<1x2048xf32> to vector<16x2048xf32>
    %280 = arith.addf %277, %279 : vector<16x2048xf32>
    %cst_115 = arith.constant 0.000000e+00 : f32
    %281 = vector.broadcast %cst_115 : f32 to vector<16x2048xf32>
    %282 = arith.maximumf %280, %281 : vector<16x2048xf32>
    %283 = arith.truncf %282 : vector<16x2048xf32> to vector<16x2048xbf16>
    %c0_116 = arith.constant 0 : index
    %c0_117 = arith.constant 0 : index
    %c0_118 = arith.constant 0 : index
    %284 = vector.load %arg5[%c0_116, %c0_117, %c0_118] : memref<2x2048x80xbf16, #tpu.memory_space<vmem>>, vector<1x2048x80xbf16>
    %285 = vector.shape_cast %284 : vector<1x2048x80xbf16> to vector<2048x80xbf16>
    %cst_119 = arith.constant dense<0.000000e+00> : vector<16x80xf32>
    %286 = tpu.matmul %283, %285, %cst_119 {dimension_numbers = #tpu.dot_dimension_numbers<[1], [0], [0], [1], [0, 0, 1, 1], [], []>} : vector<16x2048xbf16>, vector<2048x80xbf16>, vector<16x80xf32> -> vector<16x80xf32>
    %c0_120 = arith.constant 0 : index
    %c3200 = arith.constant 3200 : index
    %287 = vector.load %arg3[%c0_120, %c3200] : memref<1x6784xf32, #tpu.memory_space<vmem>>, vector<1x80xf32>
    %288 = vector.broadcast %287 : vector<1x80xf32> to vector<16x80xf32>
    %289 = arith.addf %286, %288 : vector<16x80xf32>
    %290 = arith.addf %273, %289 : vector<16x80xf32>
    %c0_121 = arith.constant 0 : index
    %c3328 = arith.constant 3328 : index
    %291 = vector.load %arg3[%c0_121, %c3328] : memref<1x6784xf32, #tpu.memory_space<vmem>>, vector<1x80xf32>
    %c0_122 = arith.constant 0 : index
    %c3456 = arith.constant 3456 : index
    %292 = vector.load %arg3[%c0_122, %c3456] : memref<1x6784xf32, #tpu.memory_space<vmem>>, vector<1x80xf32>
    %cst_123 = arith.constant dense<0.000000e+00> : vector<16xf32>
    %293 = vector.multi_reduction <add>, %290, %cst_123 [1] : vector<16x80xf32> to vector<16xf32>
    %294 = vector.shape_cast %293 : vector<16xf32> to vector<16x1xf32>
    %cst_124 = arith.constant 8.000000e+01 : f32
    %295 = vector.broadcast %cst_124 : f32 to vector<16x1xf32>
    %296 = arith.divf %294, %295 : vector<16x1xf32>
    %297 = vector.broadcast %296 : vector<16x1xf32> to vector<16x80xf32>
    %298 = arith.subf %290, %297 : vector<16x80xf32>
    %299 = arith.mulf %298, %298 : vector<16x80xf32>
    %cst_125 = arith.constant dense<0.000000e+00> : vector<16xf32>
    %300 = vector.multi_reduction <add>, %299, %cst_125 [1] : vector<16x80xf32> to vector<16xf32>
    %301 = vector.shape_cast %300 : vector<16xf32> to vector<16x1xf32>
    %cst_126 = arith.constant 8.000000e+01 : f32
    %302 = vector.broadcast %cst_126 : f32 to vector<16x1xf32>
    %303 = arith.divf %301, %302 : vector<16x1xf32>
    %304 = vector.broadcast %296 : vector<16x1xf32> to vector<16x80xf32>
    %305 = arith.subf %290, %304 : vector<16x80xf32>
    %cst_127 = arith.constant 9.99999974E-6 : f32
    %306 = vector.broadcast %cst_127 : f32 to vector<16x1xf32>
    %307 = arith.addf %303, %306 : vector<16x1xf32>
    %308 = math.rsqrt %307 : vector<16x1xf32>
    %309 = vector.broadcast %308 : vector<16x1xf32> to vector<16x80xf32>
    %310 = arith.mulf %305, %309 : vector<16x80xf32>
    %311 = vector.broadcast %291 : vector<1x80xf32> to vector<16x80xf32>
    %312 = arith.mulf %310, %311 : vector<16x80xf32>
    %313 = vector.broadcast %292 : vector<1x80xf32> to vector<16x80xf32>
    %314 = arith.addf %312, %313 : vector<16x80xf32>
    %c0_128 = arith.constant 0 : index
    %c768_129 = arith.constant 768 : index
    %315 = vector.load %arg2[%c0_128, %c768_129] : memref<80x1280xf32, #tpu.memory_space<vmem>>, vector<80x240xf32>
    %cst_130 = arith.constant dense<0.000000e+00> : vector<16x240xf32>
    %316 = tpu.matmul %314, %315, %cst_130 {dimension_numbers = #tpu.dot_dimension_numbers<[1], [0], [0], [1], [0, 0, 1, 1], [], []>} : vector<16x80xf32>, vector<80x240xf32>, vector<16x240xf32> -> vector<16x240xf32>
    %c0_131 = arith.constant 0 : index
    %c3584 = arith.constant 3584 : index
    %317 = vector.load %arg3[%c0_131, %c3584] : memref<1x6784xf32, #tpu.memory_space<vmem>>, vector<1x240xf32>
    %318 = vector.broadcast %317 : vector<1x240xf32> to vector<16x240xf32>
    %319 = arith.addf %316, %318 : vector<16x240xf32>
    %320 = vector.extract_strided_slice %319 {offsets = [0, 0], sizes = [16, 80], strides = [1, 1]} : vector<16x240xf32> to vector<16x80xf32>
    %cst_132 = arith.constant 0.316227764 : f32
    %321 = vector.broadcast %cst_132 : f32 to vector<16x80xf32>
    %322 = arith.mulf %320, %321 : vector<16x80xf32>
    %323 = vector.extract_strided_slice %319 {offsets = [0, 80], sizes = [16, 160], strides = [1, 1]} : vector<16x240xf32> to vector<16x160xf32>
    %cst_133 = arith.constant dense<0.000000e+00> : vector<128x160xf32>
    %324 = tpu.matmul %144, %323, %cst_133 {dimension_numbers = #tpu.dot_dimension_numbers<[1], [0], [0], [1], [0, 0, 1, 1], [], []>} : vector<128x16xf32>, vector<16x160xf32>, vector<128x160xf32> -> vector<128x160xf32>
    %325 = vector.extract_strided_slice %324 {offsets = [0, 0], sizes = [128, 80], strides = [1, 1]} : vector<128x160xf32> to vector<128x80xf32>
    %326 = arith.mulf %325, %150 : vector<128x80xf32>
    %327 = vector.extract_strided_slice %324 {offsets = [0, 80], sizes = [128, 80], strides = [1, 1]} : vector<128x160xf32> to vector<128x80xf32>
    %328 = arith.mulf %327, %150 : vector<128x80xf32>
    %cst_134 = arith.constant dense<0.000000e+00> : vector<16x128xf32>
    %329 = tpu.matmul %322, %326, %cst_134 {dimension_numbers = #tpu.dot_dimension_numbers<[1], [1], [0], [0], [0, 0, 1, 0], [], []>} : vector<16x80xf32>, vector<128x80xf32>, vector<16x128xf32> -> vector<16x128xf32>
    %cst_135 = arith.constant dense<0xFF800000> : vector<16xf32>
    %330 = vector.multi_reduction <maximumf>, %329, %cst_135 [1] : vector<16x128xf32> to vector<16xf32>
    %331 = vector.shape_cast %330 : vector<16xf32> to vector<16x1xf32>
    %332 = vector.broadcast %331 : vector<16x1xf32> to vector<16x128xf32>
    %333 = arith.subf %329, %332 : vector<16x128xf32>
    %334 = math.exp %333 : vector<16x128xf32>
    %cst_136 = arith.constant dense<0.000000e+00> : vector<16x128xf32>
    %335 = tpu.matmul %334, %156, %cst_136 {dimension_numbers = #tpu.dot_dimension_numbers<[1], [0], [0], [1], [0, 0, 1, 1], [], []>} : vector<16x128xf32>, vector<128x128xf32>, vector<16x128xf32> -> vector<16x128xf32>
    %cst_137 = arith.constant 1.000000e-30 : f32
    %336 = vector.broadcast %cst_137 : f32 to vector<16x128xf32>
    %337 = arith.maximumf %335, %336 : vector<16x128xf32>
    %338 = arith.divf %334, %337 : vector<16x128xf32>
    %cst_138 = arith.constant dense<0.000000e+00> : vector<16x80xf32>
    %339 = tpu.matmul %338, %328, %cst_138 {dimension_numbers = #tpu.dot_dimension_numbers<[1], [0], [0], [1], [0, 0, 1, 1], [], []>} : vector<16x128xf32>, vector<128x80xf32>, vector<16x80xf32> -> vector<16x80xf32>
    %c0_139 = arith.constant 0 : index
    %c1024_140 = arith.constant 1024 : index
    %340 = vector.load %arg2[%c0_139, %c1024_140] : memref<80x1280xf32, #tpu.memory_space<vmem>>, vector<80x80xf32>
    %cst_141 = arith.constant dense<0.000000e+00> : vector<16x80xf32>
    %341 = tpu.matmul %339, %340, %cst_141 {dimension_numbers = #tpu.dot_dimension_numbers<[1], [0], [0], [1], [0, 0, 1, 1], [], []>} : vector<16x80xf32>, vector<80x80xf32>, vector<16x80xf32> -> vector<16x80xf32>
    %c0_142 = arith.constant 0 : index
    %c3840 = arith.constant 3840 : index
    %342 = vector.load %arg3[%c0_142, %c3840] : memref<1x6784xf32, #tpu.memory_space<vmem>>, vector<1x80xf32>
    %343 = vector.broadcast %342 : vector<1x80xf32> to vector<16x80xf32>
    %344 = arith.addf %341, %343 : vector<16x80xf32>
    %345 = arith.addf %314, %344 : vector<16x80xf32>
    %c0_143 = arith.constant 0 : index
    %c3968 = arith.constant 3968 : index
    %346 = vector.load %arg3[%c0_143, %c3968] : memref<1x6784xf32, #tpu.memory_space<vmem>>, vector<1x80xf32>
    %c0_144 = arith.constant 0 : index
    %c4096 = arith.constant 4096 : index
    %347 = vector.load %arg3[%c0_144, %c4096] : memref<1x6784xf32, #tpu.memory_space<vmem>>, vector<1x80xf32>
    %cst_145 = arith.constant dense<0.000000e+00> : vector<16xf32>
    %348 = vector.multi_reduction <add>, %345, %cst_145 [1] : vector<16x80xf32> to vector<16xf32>
    %349 = vector.shape_cast %348 : vector<16xf32> to vector<16x1xf32>
    %cst_146 = arith.constant 8.000000e+01 : f32
    %350 = vector.broadcast %cst_146 : f32 to vector<16x1xf32>
    %351 = arith.divf %349, %350 : vector<16x1xf32>
    %352 = vector.broadcast %351 : vector<16x1xf32> to vector<16x80xf32>
    %353 = arith.subf %345, %352 : vector<16x80xf32>
    %354 = arith.mulf %353, %353 : vector<16x80xf32>
    %cst_147 = arith.constant dense<0.000000e+00> : vector<16xf32>
    %355 = vector.multi_reduction <add>, %354, %cst_147 [1] : vector<16x80xf32> to vector<16xf32>
    %356 = vector.shape_cast %355 : vector<16xf32> to vector<16x1xf32>
    %cst_148 = arith.constant 8.000000e+01 : f32
    %357 = vector.broadcast %cst_148 : f32 to vector<16x1xf32>
    %358 = arith.divf %356, %357 : vector<16x1xf32>
    %359 = vector.broadcast %351 : vector<16x1xf32> to vector<16x80xf32>
    %360 = arith.subf %345, %359 : vector<16x80xf32>
    %cst_149 = arith.constant 9.99999974E-6 : f32
    %361 = vector.broadcast %cst_149 : f32 to vector<16x1xf32>
    %362 = arith.addf %358, %361 : vector<16x1xf32>
    %363 = math.rsqrt %362 : vector<16x1xf32>
    %364 = vector.broadcast %363 : vector<16x1xf32> to vector<16x80xf32>
    %365 = arith.mulf %360, %364 : vector<16x80xf32>
    %366 = vector.broadcast %346 : vector<1x80xf32> to vector<16x80xf32>
    %367 = arith.mulf %365, %366 : vector<16x80xf32>
    %368 = vector.broadcast %347 : vector<1x80xf32> to vector<16x80xf32>
    %369 = arith.addf %367, %368 : vector<16x80xf32>
    %370 = arith.truncf %369 : vector<16x80xf32> to vector<16x80xbf16>
    %c1 = arith.constant 1 : index
    %c0_150 = arith.constant 0 : index
    %c0_151 = arith.constant 0 : index
    %371 = vector.load %arg4[%c1, %c0_150, %c0_151] : memref<2x80x2048xbf16, #tpu.memory_space<vmem>>, vector<1x80x2048xbf16>
    %372 = vector.shape_cast %371 : vector<1x80x2048xbf16> to vector<80x2048xbf16>
    %cst_152 = arith.constant dense<0.000000e+00> : vector<16x2048xf32>
    %373 = tpu.matmul %370, %372, %cst_152 {dimension_numbers = #tpu.dot_dimension_numbers<[1], [0], [0], [1], [0, 0, 1, 1], [], []>} : vector<16x80xbf16>, vector<80x2048xbf16>, vector<16x2048xf32> -> vector<16x2048xf32>
    %c0_153 = arith.constant 0 : index
    %c4224 = arith.constant 4224 : index
    %374 = vector.load %arg3[%c0_153, %c4224] : memref<1x6784xf32, #tpu.memory_space<vmem>>, vector<1x2048xf32>
    %375 = vector.broadcast %374 : vector<1x2048xf32> to vector<16x2048xf32>
    %376 = arith.addf %373, %375 : vector<16x2048xf32>
    %cst_154 = arith.constant 0.000000e+00 : f32
    %377 = vector.broadcast %cst_154 : f32 to vector<16x2048xf32>
    %378 = arith.maximumf %376, %377 : vector<16x2048xf32>
    %379 = arith.truncf %378 : vector<16x2048xf32> to vector<16x2048xbf16>
    %c1_155 = arith.constant 1 : index
    %c0_156 = arith.constant 0 : index
    %c0_157 = arith.constant 0 : index
    %380 = vector.load %arg5[%c1_155, %c0_156, %c0_157] : memref<2x2048x80xbf16, #tpu.memory_space<vmem>>, vector<1x2048x80xbf16>
    %381 = vector.shape_cast %380 : vector<1x2048x80xbf16> to vector<2048x80xbf16>
    %cst_158 = arith.constant dense<0.000000e+00> : vector<16x80xf32>
    %382 = tpu.matmul %379, %381, %cst_158 {dimension_numbers = #tpu.dot_dimension_numbers<[1], [0], [0], [1], [0, 0, 1, 1], [], []>} : vector<16x2048xbf16>, vector<2048x80xbf16>, vector<16x80xf32> -> vector<16x80xf32>
    %c0_159 = arith.constant 0 : index
    %c6272 = arith.constant 6272 : index
    %383 = vector.load %arg3[%c0_159, %c6272] : memref<1x6784xf32, #tpu.memory_space<vmem>>, vector<1x80xf32>
    %384 = vector.broadcast %383 : vector<1x80xf32> to vector<16x80xf32>
    %385 = arith.addf %382, %384 : vector<16x80xf32>
    %386 = arith.addf %369, %385 : vector<16x80xf32>
    %c0_160 = arith.constant 0 : index
    %c6400 = arith.constant 6400 : index
    %387 = vector.load %arg3[%c0_160, %c6400] : memref<1x6784xf32, #tpu.memory_space<vmem>>, vector<1x80xf32>
    %c0_161 = arith.constant 0 : index
    %c6528 = arith.constant 6528 : index
    %388 = vector.load %arg3[%c0_161, %c6528] : memref<1x6784xf32, #tpu.memory_space<vmem>>, vector<1x80xf32>
    %cst_162 = arith.constant dense<0.000000e+00> : vector<16xf32>
    %389 = vector.multi_reduction <add>, %386, %cst_162 [1] : vector<16x80xf32> to vector<16xf32>
    %390 = vector.shape_cast %389 : vector<16xf32> to vector<16x1xf32>
    %cst_163 = arith.constant 8.000000e+01 : f32
    %391 = vector.broadcast %cst_163 : f32 to vector<16x1xf32>
    %392 = arith.divf %390, %391 : vector<16x1xf32>
    %393 = vector.broadcast %392 : vector<16x1xf32> to vector<16x80xf32>
    %394 = arith.subf %386, %393 : vector<16x80xf32>
    %395 = arith.mulf %394, %394 : vector<16x80xf32>
    %cst_164 = arith.constant dense<0.000000e+00> : vector<16xf32>
    %396 = vector.multi_reduction <add>, %395, %cst_164 [1] : vector<16x80xf32> to vector<16xf32>
    %397 = vector.shape_cast %396 : vector<16xf32> to vector<16x1xf32>
    %cst_165 = arith.constant 8.000000e+01 : f32
    %398 = vector.broadcast %cst_165 : f32 to vector<16x1xf32>
    %399 = arith.divf %397, %398 : vector<16x1xf32>
    %400 = vector.broadcast %392 : vector<16x1xf32> to vector<16x80xf32>
    %401 = arith.subf %386, %400 : vector<16x80xf32>
    %cst_166 = arith.constant 9.99999974E-6 : f32
    %402 = vector.broadcast %cst_166 : f32 to vector<16x1xf32>
    %403 = arith.addf %399, %402 : vector<16x1xf32>
    %404 = math.rsqrt %403 : vector<16x1xf32>
    %405 = vector.broadcast %404 : vector<16x1xf32> to vector<16x80xf32>
    %406 = arith.mulf %401, %405 : vector<16x80xf32>
    %407 = vector.broadcast %387 : vector<1x80xf32> to vector<16x80xf32>
    %408 = arith.mulf %406, %407 : vector<16x80xf32>
    %409 = vector.broadcast %388 : vector<1x80xf32> to vector<16x80xf32>
    %410 = arith.addf %408, %409 : vector<16x80xf32>
    %c0_167 = arith.constant 0 : index
    %c1152_168 = arith.constant 1152 : index
    %411 = vector.load %arg2[%c0_167, %c1152_168] : memref<80x1280xf32, #tpu.memory_space<vmem>>, vector<80x128xf32>
    %cst_169 = arith.constant dense<0.000000e+00> : vector<16x128xf32>
    %412 = tpu.matmul %410, %411, %cst_169 {dimension_numbers = #tpu.dot_dimension_numbers<[1], [0], [0], [1], [0, 0, 1, 1], [], []>} : vector<16x80xf32>, vector<80x128xf32>, vector<16x128xf32> -> vector<16x128xf32>
    %c0_170 = arith.constant 0 : index
    %c6656 = arith.constant 6656 : index
    %413 = vector.load %arg3[%c0_170, %c6656] : memref<1x6784xf32, #tpu.memory_space<vmem>>, vector<1x128xf32>
    %414 = vector.broadcast %413 : vector<1x128xf32> to vector<16x128xf32>
    %415 = arith.addf %412, %414 : vector<16x128xf32>
    %c0_171 = arith.constant 0 : index
    %c0_172 = arith.constant 0 : index
    %416 = vector.load %arg6[%c0_171, %c0_172] : memref<16x128xf32, #tpu.memory_space<vmem>>, vector<16x128xf32>
    tpu.vector_store %arg6[%c0_171, %c0_172], %415 {strides = array<i32>} : memref<16x128xf32, #tpu.memory_space<vmem>>, vector<16x128xf32>,
    return
  }
}

</mosaic_0001>

<llo_original>
// kernel: tpu_custom_call.1
$region0: #{tpu_custom_call.1}
  #allocation0 [shape = 'u32[]', space=smem, size = 0x4, offset = 0x4, fixed_abs, tag = 'smem constant byte address 0x4 - core index']
  #allocation1 [shape = 'u32[144,128]{1,0:T(1,128)}', space=vmem, size = 0x12000, scoped, tag = 'internal scratch']
  %s0 = inlined_call_operand.vmem [shape: f32[16,5], index: 0, kind: input, shape index: {}]
  %s1 = inlined_call_operand.vmem [shape: f32[69,80], index: 1, kind: input, shape index: {}]
  %s2 = inlined_call_operand.vmem [shape: f32[80,1280], index: 2, kind: input, shape index: {}]
  %s3 = inlined_call_operand.vmem [shape: f32[1,6784], index: 3, kind: input, shape index: {}]
  %s4 = inlined_call_operand.vmem [shape: bf16[2,80,2048], index: 4, kind: input, shape index: {}]
  %s5 = inlined_call_operand.vmem [shape: bf16[2,2048,80], index: 5, kind: input, shape index: {}]
  %s6 = inlined_call_operand.hbm [shape: f32[16,128], index: 6, kind: output, shape index: {}]
  %s7 = sld [smem:[#allocation0]]
  $region34: #{tpu_custom_call.1} parent=0
    _
  %s9 = ssub.s32 1, %s7
  %s10 = scalar_select 0, %s9, %s7
  $region1: #{tpu_custom_call.1} parent=0
    #allocation2 [shape = 'u8[8192]{0}', space=vmem, size = 0x2000, scoped, tag = 'output window, operand 0, single buffered']
    #allocation3 [shape = 's32[1]{0}', space=sflag, size = 0x4, scoped, tag = 'scoped memory for tpu_custom_call.1']
    %11 = vsyncpa [#allocation3], 0
    // Predicated region
    $region2: #{tpu_custom_call.1} parent=1 // pred_check
      _
    $region3: #{tpu_custom_call.1} parent=1 // pred_check_branch
      %13 = sbr.rel (0) target = $region5
    $region4: #{tpu_custom_call.1} parent=1 // pred_region
      _
    $region5: #{tpu_custom_call.1} parent=1 // pred_fallthru
      _
    // Predicated region
    $region6: #{tpu_custom_call.1} parent=1 // pred_check
      _
    $region7: #{tpu_custom_call.1} parent=1 // pred_check_branch
      %15 = sbr.rel (0) target = $region9
    $region8: #{tpu_custom_call.1} parent=1 // pred_region
      _
    $region9: #{tpu_custom_call.1} parent=1 // pred_fallthru
      _
    // Predicated region
    $region10: #{tpu_custom_call.1} parent=1 // pred_check
      _
    $region11: #{tpu_custom_call.1} parent=1 // pred_check_branch
      %17 = sbr.rel (0) target = $region13
    $region12: #{tpu_custom_call.1} parent=1 // pred_region
      _
    $region13: #{tpu_custom_call.1} parent=1 // pred_fallthru
      _
    // Predicated region
    $region14: #{tpu_custom_call.1} parent=1 // pred_check
      _
    $region15: #{tpu_custom_call.1} parent=1 // pred_check_branch
      %19 = sbr.rel (0) target = $region17
    $region16: #{tpu_custom_call.1} parent=1 // pred_region
      _
    $region17: #{tpu_custom_call.1} parent=1 // pred_fallthru
      _
    // Predicated region
    $region18: #{tpu_custom_call.1} parent=1 // pred_check
      _
    $region19: #{tpu_custom_call.1} parent=1 // pred_check_branch
      %21 = sbr.rel (0) target = $region21
    $region20: #{tpu_custom_call.1} parent=1 // pred_region
      _
    $region21: #{tpu_custom_call.1} parent=1 // pred_fallthru
      _
    // Predicated region
    $region22: #{tpu_custom_call.1} parent=1 // pred_check
      _
    $region23: #{tpu_custom_call.1} parent=1 // pred_check_branch
      %23 = sbr.rel (0) target = $region25
    $region24: #{tpu_custom_call.1} parent=1 // pred_region
      _
    $region25: #{tpu_custom_call.1} parent=1 // pred_fallthru
      _
    %v25 = vlaneseq
    %v26 = vand.u32 %v25, 127
    %vm27 = vcmp.ge.s32.totalorder %v26, 10
    %v28 = vsel %vm27, 1, 0
    %vm29 = vcmp.ge.s32.totalorder %v26, 20
    %v30 = vsel %vm29, 1, 0
    %v31 = vadd.s32 %v28, %v30
    %vm32 = vcmp.ge.s32.totalorder %v26, 30
    %v33 = vsel %vm32, 1, 0
    %v34 = vadd.s32 %v31, %v33
    %vm35 = vcmp.ge.s32.totalorder %v26, 40
    %v36 = vsel %vm35, 1, 0
    %v37 = vadd.s32 %v34, %v36
    %vm38 = vcmp.ge.s32.totalorder %v26, 50
    %v39 = vsel %vm38, 1, 0
    %v40 = vadd.s32 %v37, %v39
    %vm41 = vcmp.ge.s32.totalorder %v26, 60
    %v42 = vsel %vm41, 1, 0
    %v43 = vadd.s32 %v40, %v42
    %vm44 = vcmp.ge.s32.totalorder %v26, 70
    %v45 = vsel %vm44, 1, 0
    %v46 = vadd.s32 %v43, %v45
    %v47 = vlaneseq
    %v48 = vshrl.u32 %v47, 7
    %v49 = vadd.s32 %v48, 8
    %v50 = vadd.s32 %v48, 16
    %v51 = vadd.s32 %v48, 24
    %v52 = vadd.s32 %v48, 32
    %v53 = vadd.s32 %v48, 40
    %v54 = vadd.s32 %v48, 48
    %v55 = vadd.s32 %v48, 56
    %v56 = vadd.s32 %v48, 64
    %v57 = vadd.s32 %v48, 72
    %v58 = vadd.s32 %v48, 80
    %v59 = vadd.s32 %v48, 88
    %v60 = vadd.s32 %v48, 96
    %v61 = vadd.s32 %v48, 104
    %v62 = vadd.s32 %v48, 112
    %v63 = vadd.s32 %v48, 120
    %vm64 = vcmp.ge.s32.totalorder %v48, 16
    %vm65 = vcmp.ge.s32.totalorder %v49, 16
    %vm66 = vcmp.ge.s32.totalorder %v50, 16
    %vm67 = vcmp.ge.s32.totalorder %v51, 16
    %vm68 = vcmp.ge.s32.totalorder %v52, 16
    %vm69 = vcmp.ge.s32.totalorder %v53, 16
    %vm70 = vcmp.ge.s32.totalorder %v54, 16
    %vm71 = vcmp.ge.s32.totalorder %v55, 16
    %vm72 = vcmp.ge.s32.totalorder %v56, 16
    %vm73 = vcmp.ge.s32.totalorder %v57, 16
    %vm74 = vcmp.ge.s32.totalorder %v58, 16
    %vm75 = vcmp.ge.s32.totalorder %v59, 16
    %vm76 = vcmp.ge.s32.totalorder %v60, 16
    %vm77 = vcmp.ge.s32.totalorder %v61, 16
    %vm78 = vcmp.ge.s32.totalorder %v62, 16
    %vm79 = vcmp.ge.s32.totalorder %v63, 16
    %v80 = vsel %vm64, 1, 0
    %v81 = vsel %vm65, 1, 0
    %v82 = vsel %vm66, 1, 0
    %v83 = vsel %vm67, 1, 0
    %v84 = vsel %vm68, 1, 0
    %v85 = vsel %vm69, 1, 0
    %v86 = vsel %vm70, 1, 0
    %v87 = vsel %vm71, 1, 0
    %v88 = vsel %vm72, 1, 0
    %v89 = vsel %vm73, 1, 0
    %v90 = vsel %vm74, 1, 0
    %v91 = vsel %vm75, 1, 0
    %v92 = vsel %vm76, 1, 0
    %v93 = vsel %vm77, 1, 0
    %v94 = vsel %vm78, 1, 0
    %v95 = vsel %vm79, 1, 0
    %vm96 = vcmp.ge.s32.totalorder %v48, 32
    %vm97 = vcmp.ge.s32.totalorder %v49, 32
    %vm98 = vcmp.ge.s32.totalorder %v50, 32
    %vm99 = vcmp.ge.s32.totalorder %v51, 32
    %vm100 = vcmp.ge.s32.totalorder %v52, 32
    %vm101 = vcmp.ge.s32.totalorder %v53, 32
    %vm102 = vcmp.ge.s32.totalorder %v54, 32
    %vm103 = vcmp.ge.s32.totalorder %v55, 32
    %vm104 = vcmp.ge.s32.totalorder %v56, 32
    %vm105 = vcmp.ge.s32.totalorder %v57, 32
    %vm106 = vcmp.ge.s32.totalorder %v58, 32
    %vm107 = vcmp.ge.s32.totalorder %v59, 32
    %vm108 = vcmp.ge.s32.totalorder %v60, 32
    %vm109 = vcmp.ge.s32.totalorder %v61, 32
    %vm110 = vcmp.ge.s32.totalorder %v62, 32
    %vm111 = vcmp.ge.s32.totalorder %v63, 32
    %v112 = vsel %vm96, 1, 0
    %v113 = vsel %vm97, 1, 0
    %v114 = vsel %vm98, 1, 0
    %v115 = vsel %vm99, 1, 0
    %v116 = vsel %vm100, 1, 0
    %v117 = vsel %vm101, 1, 0
    %v118 = vsel %vm102, 1, 0
    %v119 = vsel %vm103, 1, 0
    %v120 = vsel %vm104, 1, 0
    %v121 = vsel %vm105, 1, 0
    %v122 = vsel %vm106, 1, 0
    %v123 = vsel %vm107, 1, 0
    %v124 = vsel %vm108, 1, 0
    %v125 = vsel %vm109, 1, 0
    %v126 = vsel %vm110, 1, 0
    %v127 = vsel %vm111, 1, 0
    %v128 = vadd.s32 %v80, %v112
    %v129 = vadd.s32 %v81, %v113
    %v130 = vadd.s32 %v82, %v114
    %v131 = vadd.s32 %v83, %v115
    %v132 = vadd.s32 %v84, %v116
    %v133 = vadd.s32 %v85, %v117
    %v134 = vadd.s32 %v86, %v118
    %v135 = vadd.s32 %v87, %v119
    %v136 = vadd.s32 %v88, %v120
    %v137 = vadd.s32 %v89, %v121
    %v138 = vadd.s32 %v90, %v122
    %v139 = vadd.s32 %v91, %v123
    %v140 = vadd.s32 %v92, %v124
    %v141 = vadd.s32 %v93, %v125
    %v142 = vadd.s32 %v94, %v126
    %v143 = vadd.s32 %v95, %v127
    %vm144 = vcmp.ge.s32.totalorder %v48, 48
    %vm145 = vcmp.ge.s32.totalorder %v49, 48
    %vm146 = vcmp.ge.s32.totalorder %v50, 48
    %vm147 = vcmp.ge.s32.totalorder %v51, 48
    %vm148 = vcmp.ge.s32.totalorder %v52, 48
    %vm149 = vcmp.ge.s32.totalorder %v53, 48
    %vm150 = vcmp.ge.s32.totalorder %v54, 48
    %vm151 = vcmp.ge.s32.totalorder %v55, 48
    %vm152 = vcmp.ge.s32.totalorder %v56, 48
    %vm153 = vcmp.ge.s32.totalorder %v57, 48
    %vm154 = vcmp.ge.s32.totalorder %v58, 48
    %vm155 = vcmp.ge.s32.totalorder %v59, 48
    %vm156 = vcmp.ge.s32.totalorder %v60, 48
    %vm157 = vcmp.ge.s32.totalorder %v61, 48
    %vm158 = vcmp.ge.s32.totalorder %v62, 48
    %vm159 = vcmp.ge.s32.totalorder %v63, 48
    %v160 = vsel %vm144, 1, 0
    %v161 = vsel %vm145, 1, 0
    %v162 = vsel %vm146, 1, 0
    %v163 = vsel %vm147, 1, 0
    %v164 = vsel %vm148, 1, 0
    %v165 = vsel %vm149, 1, 0
    %v166 = vsel %vm150, 1, 0
    %v167 = vsel %vm151, 1, 0
    %v168 = vsel %vm152, 1, 0
    %v169 = vsel %vm153, 1, 0
    %v170 = vsel %vm154, 1, 0
    %v171 = vsel %vm155, 1, 0
    %v172 = vsel %vm156, 1, 0
    %v173 = vsel %vm157, 1, 0
    %v174 = vsel %vm158, 1, 0
    %v175 = vsel %vm159, 1, 0
    %v176 = vadd.s32 %v128, %v160
    %v177 = vadd.s32 %v129, %v161
    %v178 = vadd.s32 %v130, %v162
    %v179 = vadd.s32 %v131, %v163
    %v180 = vadd.s32 %v132, %v164
    %v181 = vadd.s32 %v133, %v165
    %v182 = vadd.s32 %v134, %v166
    %v183 = vadd.s32 %v135, %v167
    %v184 = vadd.s32 %v136, %v168
    %v185 = vadd.s32 %v137, %v169
    %v186 = vadd.s32 %v138, %v170
    %v187 = vadd.s32 %v139, %v171
    %v188 = vadd.s32 %v140, %v172
    %v189 = vadd.s32 %v141, %v173
    %v190 = vadd.s32 %v142, %v174
    %v191 = vadd.s32 %v143, %v175
    %vm192 = vcmp.ge.s32.totalorder %v48, 64
    %vm193 = vcmp.ge.s32.totalorder %v49, 64
    %vm194 = vcmp.ge.s32.totalorder %v50, 64
    %vm195 = vcmp.ge.s32.totalorder %v51, 64
    %vm196 = vcmp.ge.s32.totalorder %v52, 64
    %vm197 = vcmp.ge.s32.totalorder %v53, 64
    %vm198 = vcmp.ge.s32.totalorder %v54, 64
    %vm199 = vcmp.ge.s32.totalorder %v55, 64
    %vm200 = vcmp.ge.s32.totalorder %v56, 64
    %vm201 = vcmp.ge.s32.totalorder %v57, 64
    %vm202 = vcmp.ge.s32.totalorder %v58, 64
    %vm203 = vcmp.ge.s32.totalorder %v59, 64
    %vm204 = vcmp.ge.s32.totalorder %v60, 64
    %vm205 = vcmp.ge.s32.totalorder %v61, 64
    %vm206 = vcmp.ge.s32.totalorder %v62, 64
    %vm207 = vcmp.ge.s32.totalorder %v63, 64
    %v208 = vsel %vm192, 1, 0
    %v209 = vsel %vm193, 1, 0
    %v210 = vsel %vm194, 1, 0
    %v211 = vsel %vm195, 1, 0
    %v212 = vsel %vm196, 1, 0
    %v213 = vsel %vm197, 1, 0
    %v214 = vsel %vm198, 1, 0
    %v215 = vsel %vm199, 1, 0
    %v216 = vsel %vm200, 1, 0
    %v217 = vsel %vm201, 1, 0
    %v218 = vsel %vm202, 1, 0
    %v219 = vsel %vm203, 1, 0
    %v220 = vsel %vm204, 1, 0
    %v221 = vsel %vm205, 1, 0
    %v222 = vsel %vm206, 1, 0
    %v223 = vsel %vm207, 1, 0
    %v224 = vadd.s32 %v176, %v208
    %v225 = vadd.s32 %v177, %v209
    %v226 = vadd.s32 %v178, %v210
    %v227 = vadd.s32 %v179, %v211
    %v228 = vadd.s32 %v180, %v212
    %v229 = vadd.s32 %v181, %v213
    %v230 = vadd.s32 %v182, %v214
    %v231 = vadd.s32 %v183, %v215
    %v232 = vadd.s32 %v184, %v216
    %v233 = vadd.s32 %v185, %v217
    %v234 = vadd.s32 %v186, %v218
    %v235 = vadd.s32 %v187, %v219
    %v236 = vadd.s32 %v188, %v220
    %v237 = vadd.s32 %v189, %v221
    %v238 = vadd.s32 %v190, %v222
    %v239 = vadd.s32 %v191, %v223
    %vm240 = vcmp.ge.s32.totalorder %v48, 80
    %vm241 = vcmp.ge.s32.totalorder %v49, 80
    %vm242 = vcmp.ge.s32.totalorder %v50, 80
    %vm243 = vcmp.ge.s32.totalorder %v51, 80
    %vm244 = vcmp.ge.s32.totalorder %v52, 80
    %vm245 = vcmp.ge.s32.totalorder %v53, 80
    %vm246 = vcmp.ge.s32.totalorder %v54, 80
    %vm247 = vcmp.ge.s32.totalorder %v55, 80
    %vm248 = vcmp.ge.s32.totalorder %v56, 80
    %vm249 = vcmp.ge.s32.totalorder %v57, 80
    %vm250 = vcmp.ge.s32.totalorder %v58, 80
    %vm251 = vcmp.ge.s32.totalorder %v59, 80
    %vm252 = vcmp.ge.s32.totalorder %v60, 80
    %vm253 = vcmp.ge.s32.totalorder %v61, 80
    %vm254 = vcmp.ge.s32.totalorder %v62, 80
    %vm255 = vcmp.ge.s32.totalorder %v63, 80
    %v256 = vsel %vm240, 1, 0
    %v257 = vsel %vm241, 1, 0
    %v258 = vsel %vm242, 1, 0
    %v259 = vsel %vm243, 1, 0
    %v260 = vsel %vm244, 1, 0
    %v261 = vsel %vm245, 1, 0
    %v262 = vsel %vm246, 1, 0
    %v263 = vsel %vm247, 1, 0
    %v264 = vsel %vm248, 1, 0
    %v265 = vsel %vm249, 1, 0
    %v266 = vsel %vm250, 1, 0
    %v267 = vsel %vm251, 1, 0
    %v268 = vsel %vm252, 1, 0
    %v269 = vsel %vm253, 1, 0
    %v270 = vsel %vm254, 1, 0
    %v271 = vsel %vm255, 1, 0
    %v272 = vadd.s32 %v224, %v256
    %v273 = vadd.s32 %v225, %v257
    %v274 = vadd.s32 %v226, %v258
    %v275 = vadd.s32 %v227, %v259
    %v276 = vadd.s32 %v228, %v260
    %v277 = vadd.s32 %v229, %v261
    %v278 = vadd.s32 %v230, %v262
    %v279 = vadd.s32 %v231, %v263
    %v280 = vadd.s32 %v232, %v264
    %v281 = vadd.s32 %v233, %v265
    %v282 = vadd.s32 %v234, %v266
    %v283 = vadd.s32 %v235, %v267
    %v284 = vadd.s32 %v236, %v268
    %v285 = vadd.s32 %v237, %v269
    %v286 = vadd.s32 %v238, %v270
    %v287 = vadd.s32 %v239, %v271
    %vm288 = vcmp.ge.s32.totalorder %v48, 96
    %vm289 = vcmp.ge.s32.totalorder %v49, 96
    %vm290 = vcmp.ge.s32.totalorder %v50, 96
    %vm291 = vcmp.ge.s32.totalorder %v51, 96
    %vm292 = vcmp.ge.s32.totalorder %v52, 96
    %vm293 = vcmp.ge.s32.totalorder %v53, 96
    %vm294 = vcmp.ge.s32.totalorder %v54, 96
    %vm295 = vcmp.ge.s32.totalorder %v55, 96
    %vm296 = vcmp.ge.s32.totalorder %v56, 96
    %vm297 = vcmp.ge.s32.totalorder %v57, 96
    %vm298 = vcmp.ge.s32.totalorder %v58, 96
    %vm299 = vcmp.ge.s32.totalorder %v59, 96
    %vm300 = vcmp.ge.s32.totalorder %v60, 96
    %vm301 = vcmp.ge.s32.totalorder %v61, 96
    %vm302 = vcmp.ge.s32.totalorder %v62, 96
    %vm303 = vcmp.ge.s32.totalorder %v63, 96
    %v304 = vsel %vm288, 1, 0
    %v305 = vsel %vm289, 1, 0
    %v306 = vsel %vm290, 1, 0
    %v307 = vsel %vm291, 1, 0
    %v308 = vsel %vm292, 1, 0
    %v309 = vsel %vm293, 1, 0
    %v310 = vsel %vm294, 1, 0
    %v311 = vsel %vm295, 1, 0
    %v312 = vsel %vm296, 1, 0
    %v313 = vsel %vm297, 1, 0
    %v314 = vsel %vm298, 1, 0
    %v315 = vsel %vm299, 1, 0
    %v316 = vsel %vm300, 1, 0
    %v317 = vsel %vm301, 1, 0
    %v318 = vsel %vm302, 1, 0
    %v319 = vsel %vm303, 1, 0
    %v320 = vadd.s32 %v272, %v304
    %v321 = vadd.s32 %v273, %v305
    %v322 = vadd.s32 %v274, %v306
    %v323 = vadd.s32 %v275, %v307
    %v324 = vadd.s32 %v276, %v308
    %v325 = vadd.s32 %v277, %v309
    %v326 = vadd.s32 %v278, %v310
    %v327 = vadd.s32 %v279, %v311
    %v328 = vadd.s32 %v280, %v312
    %v329 = vadd.s32 %v281, %v313
    %v330 = vadd.s32 %v282, %v314
    %v331 = vadd.s32 %v283, %v315
    %v332 = vadd.s32 %v284, %v316
    %v333 = vadd.s32 %v285, %v317
    %v334 = vadd.s32 %v286, %v318
    %v335 = vadd.s32 %v287, %v319
    %vm336 = vcmp.ge.s32.totalorder %v48, 112
    %vm337 = vcmp.ge.s32.totalorder %v49, 112
    %vm338 = vcmp.ge.s32.totalorder %v50, 112
    %vm339 = vcmp.ge.s32.totalorder %v51, 112
    %vm340 = vcmp.ge.s32.totalorder %v52, 112
    %vm341 = vcmp.ge.s32.totalorder %v53, 112
    %vm342 = vcmp.ge.s32.totalorder %v54, 112
    %vm343 = vcmp.ge.s32.totalorder %v55, 112
    %vm344 = vcmp.ge.s32.totalorder %v56, 112
    %vm345 = vcmp.ge.s32.totalorder %v57, 112
    %vm346 = vcmp.ge.s32.totalorder %v58, 112
    %vm347 = vcmp.ge.s32.totalorder %v59, 112
    %vm348 = vcmp.ge.s32.totalorder %v60, 112
    %vm349 = vcmp.ge.s32.totalorder %v61, 112
    %vm350 = vcmp.ge.s32.totalorder %v62, 112
    %vm351 = vcmp.ge.s32.totalorder %v63, 112
    %v352 = vsel %vm336, 1, 0
    %v353 = vsel %vm337, 1, 0
    %v354 = vsel %vm338, 1, 0
    %v355 = vsel %vm339, 1, 0
    %v356 = vsel %vm340, 1, 0
    %v357 = vsel %vm341, 1, 0
    %v358 = vsel %vm342, 1, 0
    %v359 = vsel %vm343, 1, 0
    %v360 = vsel %vm344, 1, 0
    %v361 = vsel %vm345, 1, 0
    %v362 = vsel %vm346, 1, 0
    %v363 = vsel %vm347, 1, 0
    %v364 = vsel %vm348, 1, 0
    %v365 = vsel %vm349, 1, 0
    %v366 = vsel %vm350, 1, 0
    %v367 = vsel %vm351, 1, 0
    %v368 = vadd.s32 %v320, %v352
    %v369 = vadd.s32 %v321, %v353
    %v370 = vadd.s32 %v322, %v354
    %v371 = vadd.s32 %v323, %v355
    %v372 = vadd.s32 %v324, %v356
    %v373 = vadd.s32 %v325, %v357
    %v374 = vadd.s32 %v326, %v358
    %v375 = vadd.s32 %v327, %v359
    %v376 = vadd.s32 %v328, %v360
    %v377 = vadd.s32 %v329, %v361
    %v378 = vadd.s32 %v330, %v362
    %v379 = vadd.s32 %v331, %v363
    %v380 = vadd.s32 %v332, %v364
    %v381 = vadd.s32 %v333, %v365
    %v382 = vadd.s32 %v334, %v366
    %v383 = vadd.s32 %v335, %v367
    %v384 = vmul.u32 %v368, 16
    %v385 = vmul.u32 %v369, 16
    %v386 = vmul.u32 %v370, 16
    %v387 = vmul.u32 %v371, 16
    %v388 = vmul.u32 %v372, 16
    %v389 = vmul.u32 %v373, 16
    %v390 = vmul.u32 %v374, 16
    %v391 = vmul.u32 %v375, 16
    %v392 = vmul.u32 %v376, 16
    %v393 = vmul.u32 %v377, 16
    %v394 = vmul.u32 %v378, 16
    %v395 = vmul.u32 %v379, 16
    %v396 = vmul.u32 %v380, 16
    %v397 = vmul.u32 %v381, 16
    %v398 = vmul.u32 %v382, 16
    %v399 = vmul.u32 %v383, 16
    %v400 = vsub.s32 %v48, %v384
    %v401 = vsub.s32 %v49, %v385
    %v402 = vsub.s32 %v50, %v386
    %v403 = vsub.s32 %v51, %v387
    %v404 = vsub.s32 %v52, %v388
    %v405 = vsub.s32 %v53, %v389
    %v406 = vsub.s32 %v54, %v390
    %v407 = vsub.s32 %v55, %v391
    %v408 = vsub.s32 %v56, %v392
    %v409 = vsub.s32 %v57, %v393
    %v410 = vsub.s32 %v58, %v394
    %v411 = vsub.s32 %v59, %v395
    %v412 = vsub.s32 %v60, %v396
    %v413 = vsub.s32 %v61, %v397
    %v414 = vsub.s32 %v62, %v398
    %v415 = vsub.s32 %v63, %v399
    %vm416 = vcmp.ge.s32.totalorder %v26, 16
    %v417 = vsel %vm416, 1, 0
    %vm418 = vcmp.ge.s32.totalorder %v26, 32
    %v419 = vsel %vm418, 1, 0
    %v420 = vadd.s32 %v417, %v419
    %vm421 = vcmp.ge.s32.totalorder %v26, 48
    %v422 = vsel %vm421, 1, 0
    %v423 = vadd.s32 %v420, %v422
    %vm424 = vcmp.ge.s32.totalorder %v26, 64
    %v425 = vsel %vm424, 1, 0
    %v426 = vadd.s32 %v423, %v425
    %vm427 = vcmp.ge.s32.totalorder %v26, 80
    %v428 = vsel %vm427, 1, 0
    %v429 = vadd.s32 %v426, %v428
    %vm430 = vcmp.ge.s32.totalorder %v26, 96
    %v431 = vsel %vm430, 1, 0
    %v432 = vadd.s32 %v429, %v431
    %vm433 = vcmp.ge.s32.totalorder %v26, 112
    %v434 = vsel %vm433, 1, 0
    %v435 = vadd.s32 %v432, %v434
    %v436 = vmul.u32 %v435, 16
    %v437 = vsub.s32 %v26, %v436
    %vm438 = vcmp.eq.s32.totalorder %v400, %v26
    %vm439 = vcmp.eq.s32.totalorder %v401, %v26
    %vm440 = vcmp.eq.s32.totalorder %v402, %v26
    %vm441 = vcmp.eq.s32.totalorder %v403, %v26
    %vm442 = vcmp.eq.s32.totalorder %v404, %v26
    %vm443 = vcmp.eq.s32.totalorder %v405, %v26
    %vm444 = vcmp.eq.s32.totalorder %v406, %v26
    %vm445 = vcmp.eq.s32.totalorder %v407, %v26
    %vm446 = vcmp.eq.s32.totalorder %v408, %v26
    %vm447 = vcmp.eq.s32.totalorder %v409, %v26
    %vm448 = vcmp.eq.s32.totalorder %v410, %v26
    %vm449 = vcmp.eq.s32.totalorder %v411, %v26
    %vm450 = vcmp.eq.s32.totalorder %v412, %v26
    %vm451 = vcmp.eq.s32.totalorder %v413, %v26
    %vm452 = vcmp.eq.s32.totalorder %v414, %v26
    %vm453 = vcmp.eq.s32.totalorder %v415, %v26
    %v454 = vsel %vm438, 1.0, 0.0
    %v455 = vsel %vm439, 1.0, 0.0
    %v456 = vsel %vm440, 1.0, 0.0
    %v457 = vsel %vm441, 1.0, 0.0
    %v458 = vsel %vm442, 1.0, 0.0
    %v459 = vsel %vm443, 1.0, 0.0
    %v460 = vsel %vm444, 1.0, 0.0
    %v461 = vsel %vm445, 1.0, 0.0
    %v462 = vsel %vm446, 1.0, 0.0
    %v463 = vsel %vm447, 1.0, 0.0
    %v464 = vsel %vm448, 1.0, 0.0
    %v465 = vsel %vm449, 1.0, 0.0
    %v466 = vsel %vm450, 1.0, 0.0
    %v467 = vsel %vm451, 1.0, 0.0
    %v468 = vsel %vm452, 1.0, 0.0
    %v469 = vsel %vm453, 1.0, 0.0
    %vm470 = vcmp.eq.s32.totalorder %v368, %v46
    %vm471 = vcmp.eq.s32.totalorder %v369, %v46
    %vm472 = vcmp.eq.s32.totalorder %v370, %v46
    %vm473 = vcmp.eq.s32.totalorder %v371, %v46
    %vm474 = vcmp.eq.s32.totalorder %v372, %v46
    %vm475 = vcmp.eq.s32.totalorder %v373, %v46
    %vm476 = vcmp.eq.s32.totalorder %v374, %v46
    %vm477 = vcmp.eq.s32.totalorder %v375, %v46
    %vm478 = vcmp.eq.s32.totalorder %v376, %v46
    %vm479 = vcmp.eq.s32.totalorder %v377, %v46
    %vm480 = vcmp.eq.s32.totalorder %v378, %v46
    %vm481 = vcmp.eq.s32.totalorder %v379, %v46
    %vm482 = vcmp.eq.s32.totalorder %v380, %v46
    %vm483 = vcmp.eq.s32.totalorder %v381, %v46
    %vm484 = vcmp.eq.s32.totalorder %v382, %v46
    %vm485 = vcmp.eq.s32.totalorder %v383, %v46
    %v486 = vsel %vm470, 1.0, 0.0
    %v487 = vsel %vm471, 1.0, 0.0
    %v488 = vsel %vm472, 1.0, 0.0
    %v489 = vsel %vm473, 1.0, 0.0
    %v490 = vsel %vm474, 1.0, 0.0
    %v491 = vsel %vm475, 1.0, 0.0
    %v492 = vsel %vm476, 1.0, 0.0
    %v493 = vsel %vm477, 1.0, 0.0
    %v494 = vsel %vm478, 1.0, 0.0
    %v495 = vsel %vm479, 1.0, 0.0
    %v496 = vsel %vm480, 1.0, 0.0
    %v497 = vsel %vm481, 1.0, 0.0
    %v498 = vsel %vm482, 1.0, 0.0
    %v499 = vsel %vm483, 1.0, 0.0
    %v500 = vsel %vm484, 1.0, 0.0
    %v501 = vsel %vm485, 1.0, 0.0
    %vm502 = vcmp.eq.s32.totalorder %v368, %v435
    %vm503 = vcmp.eq.s32.totalorder %v369, %v435
    %vm504 = vcmp.eq.s32.totalorder %v370, %v435
    %vm505 = vcmp.eq.s32.totalorder %v371, %v435
    %vm506 = vcmp.eq.s32.totalorder %v372, %v435
    %vm507 = vcmp.eq.s32.totalorder %v373, %v435
    %vm508 = vcmp.eq.s32.totalorder %v374, %v435
    %vm509 = vcmp.eq.s32.totalorder %v375, %v435
    %vm510 = vcmp.eq.s32.totalorder %v376, %v435
    %vm511 = vcmp.eq.s32.totalorder %v377, %v435
    %vm512 = vcmp.eq.s32.totalorder %v378, %v435
    %vm513 = vcmp.eq.s32.totalorder %v379, %v435
    %vm514 = vcmp.eq.s32.totalorder %v380, %v435
    %vm515 = vcmp.eq.s32.totalorder %v381, %v435
    %vm516 = vcmp.eq.s32.totalorder %v382, %v435
    %vm517 = vcmp.eq.s32.totalorder %v383, %v435
    %v518 = vsel %vm502, 1.0, 0.0
    %v519 = vsel %vm503, 1.0, 0.0
    %v520 = vsel %vm504, 1.0, 0.0
    %v521 = vsel %vm505, 1.0, 0.0
    %v522 = vsel %vm506, 1.0, 0.0
    %v523 = vsel %vm507, 1.0, 0.0
    %v524 = vsel %vm508, 1.0, 0.0
    %v525 = vsel %vm509, 1.0, 0.0
    %v526 = vsel %vm510, 1.0, 0.0
    %v527 = vsel %vm511, 1.0, 0.0
    %v528 = vsel %vm512, 1.0, 0.0
    %v529 = vsel %vm513, 1.0, 0.0
    %v530 = vsel %vm514, 1.0, 0.0
    %v531 = vsel %vm515, 1.0, 0.0
    %v532 = vsel %vm516, 1.0, 0.0
    %v533 = vsel %vm517, 1.0, 0.0
    %vm534 = vcmp.ge.s32.totalorder %v48, 8
    %vm535 = vcmp.ge.s32.totalorder %v49, 8
    %v536 = vsel %vm534, 1, 0
    %v537 = vsel %vm535, 1, 0
    %vm538 = vcmp.ge.s32.totalorder %v437, 8
    %v539 = vsel %vm538, 1, 0
    %vm540 = vcmp.eq.s32.totalorder %v536, %v539
    %vm541 = vcmp.eq.s32.totalorder %v537, %v539
    %v542 = vsel %vm540, 0.0, -1e+09
    %v543 = vsel %vm541, 0.0, -1e+09
    %v544 = vld [vmem:[%s1 + $0x40] sm:$0x1f]
    %v545 = vld [vmem:[%s0] sm:$0xff]
    %v546 = vld [vmem:[%s0 + $0x8] sm:$0xff]
    %v547 = vld [vmem:[%s3] sm:$0x1]
    %v549 = vlaneseq
    %v550 = vshrl.u32 %v549, 7
    %v551 = vsub.s32 0, %v550
    %v552 = vrot.slane %v547, %v551
    %vm554 = vcmask 39936
    %v556 = vsel %vm554, %v545, 0
    %v559 = vsel %vm554, %v546, 0
    %vm561 = vcmask 1044480
    %v563 = vsel %vm561, %v544, 0
    %565 = vmatprep.subr.mxu0 0.0
    %566 = vmatpush1.msra.mxu0 0.0
    %567 = vmatprep.subr.mxu0 0.0
    %568 = vmatpush1.msra.mxu0 0.0
    %569 = vmatprep.subr.mxu0 0.0
    %570 = vmatpush1.msra.mxu0 0.0
    %571 = vmatprep.subr.mxu0 0.0
    %572 = vmatpush1.msra.mxu0 0.0
    %573 = vmatprep.subr.mxu0 0.0
    %574 = vmatpush1.msra.mxu0 0.0
    %575 = vmatprep.subr.mxu0 0.0
    %576 = vmatpush1.msra.mxu0 0.0
    %577 = vmatprep.subr.mxu0 0.0
    %578 = vmatpush1.msra.mxu0 0.0
    %579 = vmatprep.subr.mxu0 0.0
    %580 = vmatpush1.msra.mxu0 0.0
    %581 = vmatprep.subr.mxu0 0.0
    %582 = vmatpush1.msra.mxu0 0.0
    %583 = vmatprep.subr.mxu0 0.0
    %584 = vmatpush1.msra.mxu0 0.0
    %585 = vmatprep.subr.mxu0 0.0
    %586 = vmatpush1.msra.mxu0 0.0
    %587 = vmatprep.subr.mxu0 0.0
    %588 = vmatpush1.msra.mxu0 0.0
    %589 = vmatprep.subr.mxu0 0.0
    %590 = vmatpush1.msra.mxu0 0.0
    %591 = vmatprep.subr.mxu0 0.0
    %592 = vmatpush1.msra.mxu0 0.0
    %593 = vmatprep.subr.mxu0 0.0
    %594 = vmatpush1.msra.mxu0 0.0
    %595 = vmatprep.subr.mxu0 0.0
    %596 = vmatpush1.msra.mxu0 %v563
    %597 = vmatprep.subr.mxu0 0.0
    %598 = vmatpush2.msra.mxu0 0.0
    %599 = vmatprep.subr.mxu0 0.0
    %600 = vmatpush2.msra.mxu0 0.0
    %601 = vmatprep.subr.mxu0 0.0
    %602 = vmatpush2.msra.mxu0 0.0
    %603 = vmatprep.subr.mxu0 0.0
    %604 = vmatpush2.msra.mxu0 0.0
    %605 = vmatprep.subr.mxu0 0.0
    %606 = vmatpush2.msra.mxu0 0.0
    %607 = vmatprep.subr.mxu0 0.0
    %608 = vmatpush2.msra.mxu0 0.0
    %609 = vmatprep.subr.mxu0 0.0
    %610 = vmatpush2.msra.mxu0 0.0
    %611 = vmatprep.subr.mxu0 0.0
    %612 = vmatpush2.msra.mxu0 0.0
    %613 = vmatprep.subr.mxu0 0.0
    %614 = vmatpush2.msra.mxu0 0.0
    %615 = vmatprep.subr.mxu0 0.0
    %616 = vmatpush2.msra.mxu0 0.0
    %617 = vmatprep.subr.mxu0 0.0
    %618 = vmatpush2.msra.mxu0 0.0
    %619 = vmatprep.subr.mxu0 0.0
    %620 = vmatpush2.msra.mxu0 0.0
    %621 = vmatprep.subr.mxu0 0.0
    %622 = vmatpush2.msra.mxu0 0.0
    %623 = vmatprep.subr.mxu0 0.0
    %624 = vmatpush2.msra.mxu0 0.0
    %625 = vmatprep.subr.mxu0 0.0
    %626 = vmatpush2.msra.mxu0 0.0
    %627 = vmatprep.subr.mxu0 0.0
    %628 = vmatpush2.msra.mxu0 0.0
    %629 = vmatprep.mubr.f32.mxu0 0.0
    %630 = vmatmul.mubr.f32.gmra.mxu0 %v556
    %v631 = vpop.f32.mrf.mxu0
    %v632 = vadd.f32 %v552, %v631
    %v633 = vpop.f32.mrf.mxu0
    %634 = vmatprep.mubr.f32.mxu0 0.0
    %635 = vmatmul.mubr.f32.gmra.mxu0 %v559
    %v636 = vpop.f32.mrf.mxu0
    %v637 = vadd.f32 %v552, %v636
    %v638 = vpop.f32.mrf.mxu0
    %639 = vdwg.mxu0
    %v640 = vld [vmem:[%s1] sm:$0xff]
    %v641 = vadd.f32 %v632, %v640
    %v642 = vadd.f32 %v637, %v640
    %v643 = vld [vmem:[%s2] sm:$0xff]
    %v644 = vld [vmem:[%s2 + $0x8] sm:$0xff]
    %v645 = vld [vmem:[%s2 + $0x50] sm:$0xff]
    %v646 = vld [vmem:[%s2 + $0x58] sm:$0xff]
    %v647 = vld [vmem:[%s2 + $0xa0] sm:$0xff]
    %v648 = vld [vmem:[%s2 + $0xa8] sm:$0xff]
    %v649 = vld [vmem:[%s2 + $0xf0] sm:$0xff]
    %v650 = vld [vmem:[%s2 + $0xf8] sm:$0xff]
    %v651 = vld [vmem:[%s2 + $0x140] sm:$0xff]
    %v652 = vld [vmem:[%s2 + $0x148] sm:$0xff]
    %v653 = vld [vmem:[%s2 + $0x190] sm:$0xff]
    %v654 = vld [vmem:[%s2 + $0x198] sm:$0xff]
    %v655 = vld [vmem:[%s2 + $0x1e0] sm:$0xff]
    %v656 = vld [vmem:[%s2 + $0x1e8] sm:$0xff]
    %v657 = vld [vmem:[%s2 + $0x230] sm:$0xff]
    %v658 = vld [vmem:[%s2 + $0x238] sm:$0xff]
    %v659 = vld [vmem:[%s2 + $0x280] sm:$0xff]
    %v660 = vld [vmem:[%s2 + $0x288] sm:$0xff]
    %v661 = vld [vmem:[%s2 + $0x2d0] sm:$0xff]
    %v662 = vld [vmem:[%s2 + $0x2d8] sm:$0xff]
    %v663 = vld [vmem:[%s3 + $0x1] sm:$0x3]
    %v665 = vlaneseq
    %v666 = vshrl.u32 %v665, 7
    %v667 = vsub.s32 0, %v666
    %v668 = vrot.slane %v663, %v667
    %v669 = vlaneseq
    %v670 = vshrl.u32 %v669, 7
    %v671 = vsub.s32 1, %v670
    %v672 = vrot.slane %v663, %v671
    %vm675 = vcmask 654336
    %v677 = vsel %vm675, %v641, 0
    %v680 = vsel %vm675, %v642, 0
    %682 = vmatprep.subr.mxu0 0.0
    %683 = vmatpush1.msra.mxu0 0.0
    %684 = vmatprep.subr.mxu0 0.0
    %685 = vmatpush1.msra.mxu0 0.0
    %686 = vmatprep.subr.mxu0 0.0
    %687 = vmatpush1.msra.mxu0 0.0
    %688 = vmatprep.subr.mxu0 0.0
    %689 = vmatpush1.msra.mxu0 0.0
    %690 = vmatprep.subr.mxu0 0.0
    %691 = vmatpush1.msra.mxu0 0.0
    %692 = vmatprep.subr.mxu0 0.0
    %693 = vmatpush1.msra.mxu0 0.0
    %694 = vmatprep.subr.mxu0 %v662
    %695 = vmatpush1.msra.mxu0 %v661
    %696 = vmatprep.subr.mxu0 %v660
    %697 = vmatpush1.msra.mxu0 %v659
    %698 = vmatprep.subr.mxu0 %v658
    %699 = vmatpush1.msra.mxu0 %v657
    %700 = vmatprep.subr.mxu0 %v656
    %701 = vmatpush1.msra.mxu0 %v655
    %702 = vmatprep.subr.mxu0 %v654
    %703 = vmatpush1.msra.mxu0 %v653
    %704 = vmatprep.subr.mxu0 %v652
    %705 = vmatpush1.msra.mxu0 %v651
    %706 = vmatprep.subr.mxu0 %v650
    %707 = vmatpush1.msra.mxu0 %v649
    %708 = vmatprep.subr.mxu0 %v648
    %709 = vmatpush1.msra.mxu0 %v647
    %710 = vmatprep.subr.mxu0 %v646
    %711 = vmatpush1.msra.mxu0 %v645
    %712 = vmatprep.subr.mxu0 %v644
    %713 = vmatpush1.msra.mxu0 %v643
    %714 = vmatprep.subr.mxu0 0.0
    %715 = vmatpush2.msra.mxu0 0.0
    %716 = vmatprep.subr.mxu0 0.0
    %717 = vmatpush2.msra.mxu0 0.0
    %718 = vmatprep.subr.mxu0 0.0
    %719 = vmatpush2.msra.mxu0 0.0
    %720 = vmatprep.subr.mxu0 0.0
    %721 = vmatpush2.msra.mxu0 0.0
    %722 = vmatprep.subr.mxu0 0.0
    %723 = vmatpush2.msra.mxu0 0.0
    %724 = vmatprep.subr.mxu0 0.0
    %725 = vmatpush2.msra.mxu0 0.0
    %726 = vmatprep.subr.mxu0 0.0
    %727 = vmatpush2.msra.mxu0 0.0
    %728 = vmatprep.subr.mxu0 0.0
    %729 = vmatpush2.msra.mxu0 0.0
    %730 = vmatprep.subr.mxu0 0.0
    %731 = vmatpush2.msra.mxu0 0.0
    %732 = vmatprep.subr.mxu0 0.0
    %733 = vmatpush2.msra.mxu0 0.0
    %734 = vmatprep.subr.mxu0 0.0
    %735 = vmatpush2.msra.mxu0 0.0
    %736 = vmatprep.subr.mxu0 0.0
    %737 = vmatpush2.msra.mxu0 0.0
    %738 = vmatprep.subr.mxu0 0.0
    %739 = vmatpush2.msra.mxu0 0.0
    %740 = vmatprep.subr.mxu0 0.0
    %741 = vmatpush2.msra.mxu0 0.0
    %742 = vmatprep.subr.mxu0 0.0
    %743 = vmatpush2.msra.mxu0 0.0
    %744 = vmatprep.subr.mxu0 0.0
    %745 = vmatpush2.msra.mxu0 0.0
    %746 = vmatprep.mubr.f32.mxu0 0.0
    %747 = vmatmul.mubr.f32.gmra.mxu0 %v677
    %v748 = vpop.f32.mrf.mxu0
    %v749 = vadd.f32 %v668, %v748
    %v750 = vpop.f32.mrf.mxu0
    %v751 = vadd.f32 %v672, %v750
    %752 = vmatprep.mubr.f32.mxu0 0.0
    %753 = vmatmul.mubr.f32.gmra.mxu0 %v680
    %v754 = vpop.f32.mrf.mxu0
    %v755 = vadd.f32 %v668, %v754
    %v756 = vpop.f32.mrf.mxu0
    %v757 = vadd.f32 %v672, %v756
    %758 = vdwg.mxu0
    %v759 = vmul.f32 %v749, 0.31622776
    %v760 = vmul.f32 %v755, 0.31622776
    %765 = vrot.lane.b32.xlu0 %v749, 48
    %v766 = vpop.permute.xlu0 %765
    %767 = vrot.lane.b32.xlu0 %v751, 48
    %v768 = vpop.permute.xlu0 %767
    %769 = vrot.lane.b32.xlu0 %v755, 48
    %v770 = vpop.permute.xlu0 %769
    %771 = vrot.lane.b32.xlu0 %v757, 48
    %v772 = vpop.permute.xlu0 %771
    %vm773 = vcmask 392192
    %v774 = vsel %vm773, %v766, %v768
    %v775 = vsel %vm773, %v770, %v772
    %vm780 = vcmask 130048
    %v782 = vsel %vm780, %v454, 0
    %v785 = vsel %vm780, %v455, 0
    %v788 = vsel %vm780, %v456, 0
    %v791 = vsel %vm780, %v457, 0
    %v794 = vsel %vm780, %v458, 0
    %v797 = vsel %vm780, %v459, 0
    %v800 = vsel %vm780, %v460, 0
    %v803 = vsel %vm780, %v461, 0
    %v806 = vsel %vm780, %v462, 0
    %v809 = vsel %vm780, %v463, 0
    %v812 = vsel %vm780, %v464, 0
    %v815 = vsel %vm780, %v465, 0
    %v818 = vsel %vm780, %v466, 0
    %v821 = vsel %vm780, %v467, 0
    %v824 = vsel %vm780, %v468, 0
    %v827 = vsel %vm780, %v469, 0
    %829 = vmatprep.subr.mxu0 0.0
    %830 = vmatpush1.msra.mxu0 0.0
    %831 = vmatprep.subr.mxu0 0.0
    %832 = vmatpush1.msra.mxu0 0.0
    %833 = vmatprep.subr.mxu0 0.0
    %834 = vmatpush1.msra.mxu0 0.0
    %835 = vmatprep.subr.mxu0 0.0
    %836 = vmatpush1.msra.mxu0 0.0
    %837 = vmatprep.subr.mxu0 0.0
    %838 = vmatpush1.msra.mxu0 0.0
    %839 = vmatprep.subr.mxu0 0.0
    %840 = vmatpush1.msra.mxu0 0.0
    %841 = vmatprep.subr.mxu0 0.0
    %842 = vmatpush1.msra.mxu0 0.0
    %843 = vmatprep.subr.mxu0 0.0
    %844 = vmatpush1.msra.mxu0 0.0
    %845 = vmatprep.subr.mxu0 0.0
    %846 = vmatpush1.msra.mxu0 0.0
    %847 = vmatprep.subr.mxu0 0.0
    %848 = vmatpush1.msra.mxu0 0.0
    %849 = vmatprep.subr.mxu0 0.0
    %850 = vmatpush1.msra.mxu0 0.0
    %851 = vmatprep.subr.mxu0 0.0
    %852 = vmatpush1.msra.mxu0 0.0
    %853 = vmatprep.subr.mxu0 0.0
    %854 = vmatpush1.msra.mxu0 0.0
    %855 = vmatprep.subr.mxu0 0.0
    %856 = vmatpush1.msra.mxu0 0.0
    %857 = vmatprep.subr.mxu0 %v772
    %858 = vmatpush1.msra.mxu0 %v775
    %859 = vmatprep.subr.mxu0 %v768
    %860 = vmatpush1.msra.mxu0 %v774
    %861 = vmatprep.subr.mxu0 0.0
    %862 = vmatpush2.msra.mxu0 0.0
    %863 = vmatprep.subr.mxu0 0.0
    %864 = vmatpush2.msra.mxu0 0.0
    %865 = vmatprep.subr.mxu0 0.0
    %866 = vmatpush2.msra.mxu0 0.0
    %867 = vmatprep.subr.mxu0 0.0
    %868 = vmatpush2.msra.mxu0 0.0
    %869 = vmatprep.subr.mxu0 0.0
    %870 = vmatpush2.msra.mxu0 0.0
    %871 = vmatprep.subr.mxu0 0.0
    %872 = vmatpush2.msra.mxu0 0.0
    %873 = vmatprep.subr.mxu0 0.0
    %874 = vmatpush2.msra.mxu0 0.0
    %875 = vmatprep.subr.mxu0 0.0
    %876 = vmatpush2.msra.mxu0 0.0
    %877 = vmatprep.subr.mxu0 0.0
    %878 = vmatpush2.msra.mxu0 0.0
    %879 = vmatprep.subr.mxu0 0.0
    %880 = vmatpush2.msra.mxu0 0.0
    %881 = vmatprep.subr.mxu0 0.0
    %882 = vmatpush2.msra.mxu0 0.0
    %883 = vmatprep.subr.mxu0 0.0
    %884 = vmatpush2.msra.mxu0 0.0
    %885 = vmatprep.subr.mxu0 0.0
    %886 = vmatpush2.msra.mxu0 0.0
    %887 = vmatprep.subr.mxu0 0.0
    %888 = vmatpush2.msra.mxu0 0.0
    %889 = vmatprep.subr.mxu0 0.0
    %890 = vmatpush2.msra.mxu0 0.0
    %891 = vmatprep.subr.mxu0 0.0
    %892 = vmatpush2.msra.mxu0 0.0
    %893 = vmatprep.mubr.f32.mxu0 0.0
    %894 = vmatmul.mubr.f32.gmra.mxu0 %v782
    %v895 = vpop.f32.mrf.mxu0
    %v896 = vadd.f32 0.0, %v895
    %v897 = vpop.f32.mrf.mxu0
    %v898 = vadd.f32 0.0, %v897
    %899 = vmatprep.mubr.f32.mxu0 0.0
    %900 = vmatmul.mubr.f32.gmra.mxu0 %v785
    %v901 = vpop.f32.mrf.mxu0
    %v902 = vadd.f32 0.0, %v901
    %v903 = vpop.f32.mrf.mxu0
    %v904 = vadd.f32 0.0, %v903
    %905 = vmatprep.mubr.f32.mxu0 0.0
    %906 = vmatmul.mubr.f32.gmra.mxu0 %v788
    %v907 = vpop.f32.mrf.mxu0
    %v908 = vadd.f32 0.0, %v907
    %v909 = vpop.f32.mrf.mxu0
    %v910 = vadd.f32 0.0, %v909
    %911 = vmatprep.mubr.f32.mxu0 0.0
    %912 = vmatmul.mubr.f32.gmra.mxu0 %v791
    %v913 = vpop.f32.mrf.mxu0
    %v914 = vadd.f32 0.0, %v913
    %v915 = vpop.f32.mrf.mxu0
    %v916 = vadd.f32 0.0, %v915
    %917 = vmatprep.mubr.f32.mxu0 0.0
    %918 = vmatmul.mubr.f32.gmra.mxu0 %v794
    %v919 = vpop.f32.mrf.mxu0
    %v920 = vadd.f32 0.0, %v919
    %v921 = vpop.f32.mrf.mxu0
    %v922 = vadd.f32 0.0, %v921
    %923 = vmatprep.mubr.f32.mxu0 0.0
    %924 = vmatmul.mubr.f32.gmra.mxu0 %v797
    %v925 = vpop.f32.mrf.mxu0
    %v926 = vadd.f32 0.0, %v925
    %v927 = vpop.f32.mrf.mxu0
    %v928 = vadd.f32 0.0, %v927
    %929 = vmatprep.mubr.f32.mxu0 0.0
    %930 = vmatmul.mubr.f32.gmra.mxu0 %v800
    %v931 = vpop.f32.mrf.mxu0
    %v932 = vadd.f32 0.0, %v931
    %v933 = vpop.f32.mrf.mxu0
    %v934 = vadd.f32 0.0, %v933
    %935 = vmatprep.mubr.f32.mxu0 0.0
    %936 = vmatmul.mubr.f32.gmra.mxu0 %v803
    %v937 = vpop.f32.mrf.mxu0
    %v938 = vadd.f32 0.0, %v937
    %v939 = vpop.f32.mrf.mxu0
    %v940 = vadd.f32 0.0, %v939
    %941 = vmatprep.mubr.f32.mxu0 0.0
    %942 = vmatmul.mubr.f32.gmra.mxu0 %v806
    %v943 = vpop.f32.mrf.mxu0
    %v944 = vadd.f32 0.0, %v943
    %v945 = vpop.f32.mrf.mxu0
    %v946 = vadd.f32 0.0, %v945
    %947 = vmatprep.mubr.f32.mxu0 0.0
    %948 = vmatmul.mubr.f32.gmra.mxu0 %v809
    %v949 = vpop.f32.mrf.mxu0
    %v950 = vadd.f32 0.0, %v949
    %v951 = vpop.f32.mrf.mxu0
    %v952 = vadd.f32 0.0, %v951
    %953 = vmatprep.mubr.f32.mxu0 0.0
    %954 = vmatmul.mubr.f32.gmra.mxu0 %v812
    %v955 = vpop.f32.mrf.mxu0
    %v956 = vadd.f32 0.0, %v955
    %v957 = vpop.f32.mrf.mxu0
    %v958 = vadd.f32 0.0, %v957
    %959 = vmatprep.mubr.f32.mxu0 0.0
    %960 = vmatmul.mubr.f32.gmra.mxu0 %v815
    %v961 = vpop.f32.mrf.mxu0
    %v962 = vadd.f32 0.0, %v961
    %v963 = vpop.f32.mrf.mxu0
    %v964 = vadd.f32 0.0, %v963
    %965 = vmatprep.mubr.f32.mxu0 0.0
    %966 = vmatmul.mubr.f32.gmra.mxu0 %v818
    %v967 = vpop.f32.mrf.mxu0
    %v968 = vadd.f32 0.0, %v967
    %v969 = vpop.f32.mrf.mxu0
    %v970 = vadd.f32 0.0, %v969
    %971 = vmatprep.mubr.f32.mxu0 0.0
    %972 = vmatmul.mubr.f32.gmra.mxu0 %v821
    %v973 = vpop.f32.mrf.mxu0
    %v974 = vadd.f32 0.0, %v973
    %v975 = vpop.f32.mrf.mxu0
    %v976 = vadd.f32 0.0, %v975
    %977 = vmatprep.mubr.f32.mxu0 0.0
    %978 = vmatmul.mubr.f32.gmra.mxu0 %v824
    %v979 = vpop.f32.mrf.mxu0
    %v980 = vadd.f32 0.0, %v979
    %v981 = vpop.f32.mrf.mxu0
    %v982 = vadd.f32 0.0, %v981
    %983 = vmatprep.mubr.f32.mxu0 0.0
    %984 = vmatmul.mubr.f32.gmra.mxu0 %v827
    %v985 = vpop.f32.mrf.mxu0
    %v986 = vadd.f32 0.0, %v985
    %v987 = vpop.f32.mrf.mxu0
    %v988 = vadd.f32 0.0, %v987
    %989 = vdwg.mxu0
    %v990 = vmul.f32 %v896, %v486
    %v991 = vmul.f32 %v902, %v487
    %v992 = vmul.f32 %v908, %v488
    %v993 = vmul.f32 %v914, %v489
    %v994 = vmul.f32 %v920, %v490
    %v995 = vmul.f32 %v926, %v491
    %v996 = vmul.f32 %v932, %v492
    %v997 = vmul.f32 %v938, %v493
    %v998 = vmul.f32 %v944, %v494
    %v999 = vmul.f32 %v950, %v495
    %v1000 = vmul.f32 %v956, %v496
    %v1001 = vmul.f32 %v962, %v497
    %v1002 = vmul.f32 %v968, %v498
    %v1003 = vmul.f32 %v974, %v499
    %v1004 = vmul.f32 %v980, %v500
    %v1005 = vmul.f32 %v986, %v501
    %1022 = vrot.lane.b32.xlu0 %v486, 80
    %v1023 = vpop.permute.xlu0 %1022
    %1024 = vrot.lane.b32.xlu0 %v487, 80
    %v1025 = vpop.permute.xlu0 %1024
    %1026 = vrot.lane.b32.xlu0 %v488, 80
    %v1027 = vpop.permute.xlu0 %1026
    %1028 = vrot.lane.b32.xlu0 %v489, 80
    %v1029 = vpop.permute.xlu0 %1028
    %1030 = vrot.lane.b32.xlu0 %v490, 80
    %v1031 = vpop.permute.xlu0 %1030
    %1032 = vrot.lane.b32.xlu0 %v491, 80
    %v1033 = vpop.permute.xlu0 %1032
    %1034 = vrot.lane.b32.xlu0 %v492, 80
    %v1035 = vpop.permute.xlu0 %1034
    %1036 = vrot.lane.b32.xlu0 %v493, 80
    %v1037 = vpop.permute.xlu0 %1036
    %1038 = vrot.lane.b32.xlu0 %v494, 80
    %v1039 = vpop.permute.xlu0 %1038
    %1040 = vrot.lane.b32.xlu0 %v495, 80
    %v1041 = vpop.permute.xlu0 %1040
    %1042 = vrot.lane.b32.xlu0 %v496, 80
    %v1043 = vpop.permute.xlu0 %1042
    %1044 = vrot.lane.b32.xlu0 %v497, 80
    %v1045 = vpop.permute.xlu0 %1044
    %1046 = vrot.lane.b32.xlu0 %v498, 80
    %v1047 = vpop.permute.xlu0 %1046
    %1048 = vrot.lane.b32.xlu0 %v499, 80
    %v1049 = vpop.permute.xlu0 %1048
    %1050 = vrot.lane.b32.xlu0 %v500, 80
    %v1051 = vpop.permute.xlu0 %1050
    %1052 = vrot.lane.b32.xlu0 %v501, 80
    %v1053 = vpop.permute.xlu0 %1052
    %v1070 = vmul.f32 %v896, %v1023
    %v1071 = vmul.f32 %v898, %v1023
    %v1072 = vmul.f32 %v902, %v1025
    %v1073 = vmul.f32 %v904, %v1025
    %v1074 = vmul.f32 %v908, %v1027
    %v1075 = vmul.f32 %v910, %v1027
    %v1076 = vmul.f32 %v914, %v1029
    %v1077 = vmul.f32 %v916, %v1029
    %v1078 = vmul.f32 %v920, %v1031
    %v1079 = vmul.f32 %v922, %v1031
    %v1080 = vmul.f32 %v926, %v1033
    %v1081 = vmul.f32 %v928, %v1033
    %v1082 = vmul.f32 %v932, %v1035
    %v1083 = vmul.f32 %v934, %v1035
    %v1084 = vmul.f32 %v938, %v1037
    %v1085 = vmul.f32 %v940, %v1037
    %v1086 = vmul.f32 %v944, %v1039
    %v1087 = vmul.f32 %v946, %v1039
    %v1088 = vmul.f32 %v950, %v1041
    %v1089 = vmul.f32 %v952, %v1041
    %v1090 = vmul.f32 %v956, %v1043
    %v1091 = vmul.f32 %v958, %v1043
    %v1092 = vmul.f32 %v962, %v1045
    %v1093 = vmul.f32 %v964, %v1045
    %v1094 = vmul.f32 %v968, %v1047
    %v1095 = vmul.f32 %v970, %v1047
    %v1096 = vmul.f32 %v974, %v1049
    %v1097 = vmul.f32 %v976, %v1049
    %v1098 = vmul.f32 %v980, %v1051
    %v1099 = vmul.f32 %v982, %v1051
    %v1100 = vmul.f32 %v986, %v1053
    %v1101 = vmul.f32 %v988, %v1053
    %v1103 = vsel %vm675, %v759, 0
    %v1106 = vsel %vm675, %v760, 0
    %v1109 = vsel %vm675, %v990, 0
    %v1112 = vsel %vm675, %v991, 0
    %v1115 = vsel %vm675, %v992, 0
    %v1118 = vsel %vm675, %v993, 0
    %v1121 = vsel %vm675, %v994, 0
    %v1124 = vsel %vm675, %v995, 0
    %v1127 = vsel %vm675, %v996, 0
    %v1130 = vsel %vm675, %v997, 0
    %v1133 = vsel %vm675, %v998, 0
    %v1136 = vsel %vm675, %v999, 0
    %v1139 = vsel %vm675, %v1000, 0
    %v1142 = vsel %vm675, %v1001, 0
    %v1145 = vsel %vm675, %v1002, 0
    %v1148 = vsel %vm675, %v1003, 0
    %v1151 = vsel %vm675, %v1004, 0
    %v1154 = vsel %vm675, %v1005, 0
    %1156 = vmatprep.subr.mxu0 0.0
    %1157 = vmatpush1.xpose.msra.mxu0 %v1154
    %1158 = vmatprep.subr.mxu0 0.0
    %1159 = vmatpush1.xpose.msra.mxu0 %v1151
    %1160 = vmatprep.subr.mxu0 0.0
    %1161 = vmatpush1.xpose.msra.mxu0 %v1148
    %1162 = vmatprep.subr.mxu0 0.0
    %1163 = vmatpush1.xpose.msra.mxu0 %v1145
    %1164 = vmatprep.subr.mxu0 0.0
    %1165 = vmatpush1.xpose.msra.mxu0 %v1142
    %1166 = vmatprep.subr.mxu0 0.0
    %1167 = vmatpush1.xpose.msra.mxu0 %v1139
    %1168 = vmatprep.subr.mxu0 0.0
    %1169 = vmatpush1.xpose.msra.mxu0 %v1136
    %1170 = vmatprep.subr.mxu0 0.0
    %1171 = vmatpush1.xpose.msra.mxu0 %v1133
    %1172 = vmatprep.subr.mxu0 0.0
    %1173 = vmatpush1.xpose.msra.mxu0 %v1130
    %1174 = vmatprep.subr.mxu0 0.0
    %1175 = vmatpush1.xpose.msra.mxu0 %v1127
    %1176 = vmatprep.subr.mxu0 0.0
    %1177 = vmatpush1.xpose.msra.mxu0 %v1124
    %1178 = vmatprep.subr.mxu0 0.0
    %1179 = vmatpush1.xpose.msra.mxu0 %v1121
    %1180 = vmatprep.subr.mxu0 0.0
    %1181 = vmatpush1.xpose.msra.mxu0 %v1118
    %1182 = vmatprep.subr.mxu0 0.0
    %1183 = vmatpush1.xpose.msra.mxu0 %v1115
    %1184 = vmatprep.subr.mxu0 0.0
    %1185 = vmatpush1.xpose.msra.mxu0 %v1112
    %1186 = vmatprep.subr.mxu0 0.0
    %1187 = vmatpush1.xpose.msra.mxu0 %v1109
    %1188 = vmatprep.subr.mxu0 0.0
    %1189 = vmatpush2.xpose.msra.mxu0 0.0
    %1190 = vmatprep.subr.mxu0 0.0
    %1191 = vmatpush2.xpose.msra.mxu0 0.0
    %1192 = vmatprep.subr.mxu0 0.0
    %1193 = vmatpush2.xpose.msra.mxu0 0.0
    %1194 = vmatprep.subr.mxu0 0.0
    %1195 = vmatpush2.xpose.msra.mxu0 0.0
    %1196 = vmatprep.subr.mxu0 0.0
    %1197 = vmatpush2.xpose.msra.mxu0 0.0
    %1198 = vmatprep.subr.mxu0 0.0
    %1199 = vmatpush2.xpose.msra.mxu0 0.0
    %1200 = vmatprep.subr.mxu0 0.0
    %1201 = vmatpush2.xpose.msra.mxu0 0.0
    %1202 = vmatprep.subr.mxu0 0.0
    %1203 = vmatpush2.xpose.msra.mxu0 0.0
    %1204 = vmatprep.subr.mxu0 0.0
    %1205 = vmatpush2.xpose.msra.mxu0 0.0
    %1206 = vmatprep.subr.mxu0 0.0
    %1207 = vmatpush2.xpose.msra.mxu0 0.0
    %1208 = vmatprep.subr.mxu0 0.0
    %1209 = vmatpush2.xpose.msra.mxu0 0.0
    %1210 = vmatprep.subr.mxu0 0.0
    %1211 = vmatpush2.xpose.msra.mxu0 0.0
    %1212 = vmatprep.subr.mxu0 0.0
    %1213 = vmatpush2.xpose.msra.mxu0 0.0
    %1214 = vmatprep.subr.mxu0 0.0
    %1215 = vmatpush2.xpose.msra.mxu0 0.0
    %1216 = vmatprep.subr.mxu0 0.0
    %1217 = vmatpush2.xpose.msra.mxu0 0.0
    %1218 = vmatprep.subr.mxu0 0.0
    %1219 = vmatpush2.xpose.msra.mxu0 0.0
    %1220 = vmatprep.mubr.f32.mxu0 0.0
    %1221 = vmatmul.mubr.f32.gmra.mxu0 %v1103
    %v1222 = vpop.f32.mrf.mxu0
    %v1223 = vadd.f32 %v542, %v1222
    %v1224 = vpop.f32.mrf.mxu0
    %1225 = vmatprep.mubr.f32.mxu0 0.0
    %1226 = vmatmul.mubr.f32.gmra.mxu0 %v1106
    %v1227 = vpop.f32.mrf.mxu0
    %v1228 = vadd.f32 %v543, %v1227
    %v1229 = vpop.f32.mrf.mxu0
    %1230 = vdwg.mxu0
    %1231 = vmax.xlane.f32.xlu0 %v1223
    %v1232 = vpop.xlane.xlu0 %1231
    %1233 = vmax.xlane.f32.xlu0 %v1228
    %v1234 = vpop.xlane.xlu0 %1233
    %v1235 = vsub.f32 %v1223, %v1232
    %v1236 = vsub.f32 %v1228, %v1234
    %v1237 = vmul.f32 %v1235, 1.442695
    %v1238 = vpow.pop %v1237
    %v1239 = vmul.f32 %v1236, 1.442695
    %v1240 = vpow.pop %v1239
    %1241 = vmatprep.subr.mxu0 0.0
    %1242 = vmatpush1.msra.mxu0 %v533
    %1243 = vmatprep.subr.mxu0 0.0
    %1244 = vmatpush1.msra.mxu0 %v532
    %1245 = vmatprep.subr.mxu0 0.0
    %1246 = vmatpush1.msra.mxu0 %v531
    %1247 = vmatprep.subr.mxu0 0.0
    %1248 = vmatpush1.msra.mxu0 %v530
    %1249 = vmatprep.subr.mxu0 0.0
    %1250 = vmatpush1.msra.mxu0 %v529
    %1251 = vmatprep.subr.mxu0 0.0
    %1252 = vmatpush1.msra.mxu0 %v528
    %1253 = vmatprep.subr.mxu0 0.0
    %1254 = vmatpush1.msra.mxu0 %v527
    %1255 = vmatprep.subr.mxu0 0.0
    %1256 = vmatpush1.msra.mxu0 %v526
    %1257 = vmatprep.subr.mxu0 0.0
    %1258 = vmatpush1.msra.mxu0 %v525
    %1259 = vmatprep.subr.mxu0 0.0
    %1260 = vmatpush1.msra.mxu0 %v524
    %1261 = vmatprep.subr.mxu0 0.0
    %1262 = vmatpush1.msra.mxu0 %v523
    %1263 = vmatprep.subr.mxu0 0.0
    %1264 = vmatpush1.msra.mxu0 %v522
    %1265 = vmatprep.subr.mxu0 0.0
    %1266 = vmatpush1.msra.mxu0 %v521
    %1267 = vmatprep.subr.mxu0 0.0
    %1268 = vmatpush1.msra.mxu0 %v520
    %1269 = vmatprep.subr.mxu0 0.0
    %1270 = vmatpush1.msra.mxu0 %v519
    %1271 = vmatprep.subr.mxu0 0.0
    %1272 = vmatpush1.msra.mxu0 %v518
    %1273 = vmatprep.subr.mxu0 0.0
    %1274 = vmatpush2.msra.mxu0 0.0
    %1275 = vmatprep.subr.mxu0 0.0
    %1276 = vmatpush2.msra.mxu0 0.0
    %1277 = vmatprep.subr.mxu0 0.0
    %1278 = vmatpush2.msra.mxu0 0.0
    %1279 = vmatprep.subr.mxu0 0.0
    %1280 = vmatpush2.msra.mxu0 0.0
    %1281 = vmatprep.subr.mxu0 0.0
    %1282 = vmatpush2.msra.mxu0 0.0
    %1283 = vmatprep.subr.mxu0 0.0
    %1284 = vmatpush2.msra.mxu0 0.0
    %1285 = vmatprep.subr.mxu0 0.0
    %1286 = vmatpush2.msra.mxu0 0.0
    %1287 = vmatprep.subr.mxu0 0.0
    %1288 = vmatpush2.msra.mxu0 0.0
    %1289 = vmatprep.subr.mxu0 0.0
    %1290 = vmatpush2.msra.mxu0 0.0
    %1291 = vmatprep.subr.mxu0 0.0
    %1292 = vmatpush2.msra.mxu0 0.0
    %1293 = vmatprep.subr.mxu0 0.0
    %1294 = vmatpush2.msra.mxu0 0.0
    %1295 = vmatprep.subr.mxu0 0.0
    %1296 = vmatpush2.msra.mxu0 0.0
    %1297 = vmatprep.subr.mxu0 0.0
    %1298 = vmatpush2.msra.mxu0 0.0
    %1299 = vmatprep.subr.mxu0 0.0
    %1300 = vmatpush2.msra.mxu0 0.0
    %1301 = vmatprep.subr.mxu0 0.0
    %1302 = vmatpush2.msra.mxu0 0.0
    %1303 = vmatprep.subr.mxu0 0.0
    %1304 = vmatpush2.msra.mxu0 0.0
    %1305 = vmatprep.mubr.f32.mxu0 0.0
    %1306 = vmatmul.mubr.f32.gmra.mxu0 %v1238
    %v1307 = vpop.f32.mrf.mxu0
    %v1308 = vadd.f32 0.0, %v1307
    %v1309 = vpop.f32.mrf.mxu0
    %1310 = vmatprep.mubr.f32.mxu0 0.0
    %1311 = vmatmul.mubr.f32.gmra.mxu0 %v1240
    %v1312 = vpop.f32.mrf.mxu0
    %v1313 = vadd.f32 0.0, %v1312
    %v1314 = vpop.f32.mrf.mxu0
    %1315 = vdwg.mxu0
    %v1316 = vmax.f32 %v1308, 1e-30
    %v1317 = vmax.f32 %v1313, 1e-30
    %v1318 = vrcp.pop %v1316
    %v1319 = vmul.f32 %v1238, %v1318
    %v1320 = vrcp.pop %v1317
    %v1321 = vmul.f32 %v1240, %v1320
    %1354 = vrot.lane.b32.xlu0 %v1070, 48
    %v1355 = vpop.permute.xlu0 %1354
    %1356 = vrot.lane.b32.xlu0 %v1071, 48
    %v1357 = vpop.permute.xlu0 %1356
    %1358 = vrot.lane.b32.xlu0 %v1072, 48
    %v1359 = vpop.permute.xlu0 %1358
    %1360 = vrot.lane.b32.xlu0 %v1073, 48
    %v1361 = vpop.permute.xlu0 %1360
    %1362 = vrot.lane.b32.xlu0 %v1074, 48
    %v1363 = vpop.permute.xlu0 %1362
    %1364 = vrot.lane.b32.xlu0 %v1075, 48
    %v1365 = vpop.permute.xlu0 %1364
    %1366 = vrot.lane.b32.xlu0 %v1076, 48
    %v1367 = vpop.permute.xlu0 %1366
    %1368 = vrot.lane.b32.xlu0 %v1077, 48
    %v1369 = vpop.permute.xlu0 %1368
    %1370 = vrot.lane.b32.xlu0 %v1078, 48
    %v1371 = vpop.permute.xlu0 %1370
    %1372 = vrot.lane.b32.xlu0 %v1079, 48
    %v1373 = vpop.permute.xlu0 %1372
    %1374 = vrot.lane.b32.xlu0 %v1080, 48
    %v1375 = vpop.permute.xlu0 %1374
    %1376 = vrot.lane.b32.xlu0 %v1081, 48
    %v1377 = vpop.permute.xlu0 %1376
    %1378 = vrot.lane.b32.xlu0 %v1082, 48
    %v1379 = vpop.permute.xlu0 %1378
    %1380 = vrot.lane.b32.xlu0 %v1083, 48
    %v1381 = vpop.permute.xlu0 %1380
    %1382 = vrot.lane.b32.xlu0 %v1084, 48
    %v1383 = vpop.permute.xlu0 %1382
    %1384 = vrot.lane.b32.xlu0 %v1085, 48
    %v1385 = vpop.permute.xlu0 %1384
    %1386 = vrot.lane.b32.xlu0 %v1086, 48
    %v1387 = vpop.permute.xlu0 %1386
    %1388 = vrot.lane.b32.xlu0 %v1087, 48
    %v1389 = vpop.permute.xlu0 %1388
    %1390 = vrot.lane.b32.xlu0 %v1088, 48
    %v1391 = vpop.permute.xlu0 %1390
    %1392 = vrot.lane.b32.xlu0 %v1089, 48
    %v1393 = vpop.permute.xlu0 %1392
    %1394 = vrot.lane.b32.xlu0 %v1090, 48
    %v1395 = vpop.permute.xlu0 %1394
    %1396 = vrot.lane.b32.xlu0 %v1091, 48
    %v1397 = vpop.permute.xlu0 %1396
    %1398 = vrot.lane.b32.xlu0 %v1092, 48
    %v1399 = vpop.permute.xlu0 %1398
    %1400 = vrot.lane.b32.xlu0 %v1093, 48
    %v1401 = vpop.permute.xlu0 %1400
    %1402 = vrot.lane.b32.xlu0 %v1094, 48
    %v1403 = vpop.permute.xlu0 %1402
    %1404 = vrot.lane.b32.xlu0 %v1095, 48
    %v1405 = vpop.permute.xlu0 %1404
    %1406 = vrot.lane.b32.xlu0 %v1096, 48
    %v1407 = vpop.permute.xlu0 %1406
    %1408 = vrot.lane.b32.xlu0 %v1097, 48
    %v1409 = vpop.permute.xlu0 %1408
    %1410 = vrot.lane.b32.xlu0 %v1098, 48
    %v1411 = vpop.permute.xlu0 %1410
    %1412 = vrot.lane.b32.xlu0 %v1099, 48
    %v1413 = vpop.permute.xlu0 %1412
    %1414 = vrot.lane.b32.xlu0 %v1100, 48
    %v1415 = vpop.permute.xlu0 %1414
    %1416 = vrot.lane.b32.xlu0 %v1101, 48
    %v1417 = vpop.permute.xlu0 %1416
    %v1418 = vsel %vm773, %v1355, %v1357
    %v1419 = vsel %vm773, %v1359, %v1361
    %v1420 = vsel %vm773, %v1363, %v1365
    %v1421 = vsel %vm773, %v1367, %v1369
    %v1422 = vsel %vm773, %v1371, %v1373
    %v1423 = vsel %vm773, %v1375, %v1377
    %v1424 = vsel %vm773, %v1379, %v1381
    %v1425 = vsel %vm773, %v1383, %v1385
    %v1426 = vsel %vm773, %v1387, %v1389
    %v1427 = vsel %vm773, %v1391, %v1393
    %v1428 = vsel %vm773, %v1395, %v1397
    %v1429 = vsel %vm773, %v1399, %v1401
    %v1430 = vsel %vm773, %v1403, %v1405
    %v1431 = vsel %vm773, %v1407, %v1409
    %v1432 = vsel %vm773, %v1411, %v1413
    %v1433 = vsel %vm773, %v1415, %v1417
    %1450 = vmatprep.subr.mxu0 0.0
    %1451 = vmatpush1.msra.mxu0 %v1433
    %1452 = vmatprep.subr.mxu0 0.0
    %1453 = vmatpush1.msra.mxu0 %v1432
    %1454 = vmatprep.subr.mxu0 0.0
    %1455 = vmatpush1.msra.mxu0 %v1431
    %1456 = vmatprep.subr.mxu0 0.0
    %1457 = vmatpush1.msra.mxu0 %v1430
    %1458 = vmatprep.subr.mxu0 0.0
    %1459 = vmatpush1.msra.mxu0 %v1429
    %1460 = vmatprep.subr.mxu0 0.0
    %1461 = vmatpush1.msra.mxu0 %v1428
    %1462 = vmatprep.subr.mxu0 0.0
    %1463 = vmatpush1.msra.mxu0 %v1427
    %1464 = vmatprep.subr.mxu0 0.0
    %1465 = vmatpush1.msra.mxu0 %v1426
    %1466 = vmatprep.subr.mxu0 0.0
    %1467 = vmatpush1.msra.mxu0 %v1425
    %1468 = vmatprep.subr.mxu0 0.0
    %1469 = vmatpush1.msra.mxu0 %v1424
    %1470 = vmatprep.subr.mxu0 0.0
    %1471 = vmatpush1.msra.mxu0 %v1423
    %1472 = vmatprep.subr.mxu0 0.0
    %1473 = vmatpush1.msra.mxu0 %v1422
    %1474 = vmatprep.subr.mxu0 0.0
    %1475 = vmatpush1.msra.mxu0 %v1421
    %1476 = vmatprep.subr.mxu0 0.0
    %1477 = vmatpush1.msra.mxu0 %v1420
    %1478 = vmatprep.subr.mxu0 0.0
    %1479 = vmatpush1.msra.mxu0 %v1419
    %1480 = vmatprep.subr.mxu0 0.0
    %1481 = vmatpush1.msra.mxu0 %v1418
    %1482 = vmatprep.subr.mxu0 0.0
    %1483 = vmatpush2.msra.mxu0 0.0
    %1484 = vmatprep.subr.mxu0 0.0
    %1485 = vmatpush2.msra.mxu0 0.0
    %1486 = vmatprep.subr.mxu0 0.0
    %1487 = vmatpush2.msra.mxu0 0.0
    %1488 = vmatprep.subr.mxu0 0.0
    %1489 = vmatpush2.msra.mxu0 0.0
    %1490 = vmatprep.subr.mxu0 0.0
    %1491 = vmatpush2.msra.mxu0 0.0
    %1492 = vmatprep.subr.mxu0 0.0
    %1493 = vmatpush2.msra.mxu0 0.0
    %1494 = vmatprep.subr.mxu0 0.0
    %1495 = vmatpush2.msra.mxu0 0.0
    %1496 = vmatprep.subr.mxu0 0.0
    %1497 = vmatpush2.msra.mxu0 0.0
    %1498 = vmatprep.subr.mxu0 0.0
    %1499 = vmatpush2.msra.mxu0 0.0
    %1500 = vmatprep.subr.mxu0 0.0
    %1501 = vmatpush2.msra.mxu0 0.0
    %1502 = vmatprep.subr.mxu0 0.0
    %1503 = vmatpush2.msra.mxu0 0.0
    %1504 = vmatprep.subr.mxu0 0.0
    %1505 = vmatpush2.msra.mxu0 0.0
    %1506 = vmatprep.subr.mxu0 0.0
    %1507 = vmatpush2.msra.mxu0 0.0
    %1508 = vmatprep.subr.mxu0 0.0
    %1509 = vmatpush2.msra.mxu0 0.0
    %1510 = vmatprep.subr.mxu0 0.0
    %1511 = vmatpush2.msra.mxu0 0.0
    %1512 = vmatprep.subr.mxu0 0.0
    %1513 = vmatpush2.msra.mxu0 0.0
    %1514 = vmatprep.mubr.f32.mxu0 0.0
    %1515 = vmatmul.mubr.f32.gmra.mxu0 %v1319
    %v1516 = vpop.f32.mrf.mxu0
    %v1517 = vadd.f32 0.0, %v1516
    %v1518 = vpop.f32.mrf.mxu0
    %1519 = vmatprep.mubr.f32.mxu0 0.0
    %1520 = vmatmul.mubr.f32.gmra.mxu0 %v1321
    %v1521 = vpop.f32.mrf.mxu0
    %v1522 = vadd.f32 0.0, %v1521
    %v1523 = vpop.f32.mrf.mxu0
    %1524 = vdwg.mxu0
    %v1525 = vld [vmem:[%s2 + $0x10] sm:$0xff]
    %v1526 = vld [vmem:[%s2 + $0x60] sm:$0xff]
    %v1527 = vld [vmem:[%s2 + $0xb0] sm:$0xff]
    %v1528 = vld [vmem:[%s2 + $0x100] sm:$0xff]
    %v1529 = vld [vmem:[%s2 + $0x150] sm:$0xff]
    %v1530 = vld [vmem:[%s2 + $0x1a0] sm:$0xff]
    %v1531 = vld [vmem:[%s2 + $0x1f0] sm:$0xff]
    %v1532 = vld [vmem:[%s2 + $0x240] sm:$0xff]
    %v1533 = vld [vmem:[%s2 + $0x290] sm:$0xff]
    %v1534 = vld [vmem:[%s2 + $0x2e0] sm:$0xff]
    %v1535 = vld [vmem:[%s3 + $0x3] sm:$0x1]
    %v1537 = vlaneseq
    %v1538 = vshrl.u32 %v1537, 7
    %v1539 = vsub.s32 0, %v1538
    %v1540 = vrot.slane %v1535, %v1539
    %v1543 = vsel %vm675, %v1517, 0
    %v1546 = vsel %vm675, %v1522, 0
    %1548 = vmatprep.subr.mxu0 0.0
    %1549 = vmatpush1.msra.mxu0 0.0
    %1550 = vmatprep.subr.mxu0 0.0
    %1551 = vmatpush1.msra.mxu0 0.0
    %1552 = vmatprep.subr.mxu0 0.0
    %1553 = vmatpush1.msra.mxu0 0.0
    %1554 = vmatprep.subr.mxu0 0.0
    %1555 = vmatpush1.msra.mxu0 0.0
    %1556 = vmatprep.subr.mxu0 0.0
    %1557 = vmatpush1.msra.mxu0 0.0
    %1558 = vmatprep.subr.mxu0 0.0
    %1559 = vmatpush1.msra.mxu0 0.0
    %1560 = vmatprep.subr.mxu0 0.0
    %1561 = vmatpush1.msra.mxu0 %v1534
    %1562 = vmatprep.subr.mxu0 0.0
    %1563 = vmatpush1.msra.mxu0 %v1533
    %1564 = vmatprep.subr.mxu0 0.0
    %1565 = vmatpush1.msra.mxu0 %v1532
    %1566 = vmatprep.subr.mxu0 0.0
    %1567 = vmatpush1.msra.mxu0 %v1531
    %1568 = vmatprep.subr.mxu0 0.0
    %1569 = vmatpush1.msra.mxu0 %v1530
    %1570 = vmatprep.subr.mxu0 0.0
    %1571 = vmatpush1.msra.mxu0 %v1529
    %1572 = vmatprep.subr.mxu0 0.0
    %1573 = vmatpush1.msra.mxu0 %v1528
    %1574 = vmatprep.subr.mxu0 0.0
    %1575 = vmatpush1.msra.mxu0 %v1527
    %1576 = vmatprep.subr.mxu0 0.0
    %1577 = vmatpush1.msra.mxu0 %v1526
    %1578 = vmatprep.subr.mxu0 0.0
    %1579 = vmatpush1.msra.mxu0 %v1525
    %1580 = vmatprep.subr.mxu0 0.0
    %1581 = vmatpush2.msra.mxu0 0.0
    %1582 = vmatprep.subr.mxu0 0.0
    %1583 = vmatpush2.msra.mxu0 0.0
    %1584 = vmatprep.subr.mxu0 0.0
    %1585 = vmatpush2.msra.mxu0 0.0
    %1586 = vmatprep.subr.mxu0 0.0
    %1587 = vmatpush2.msra.mxu0 0.0
    %1588 = vmatprep.subr.mxu0 0.0
    %1589 = vmatpush2.msra.mxu0 0.0
    %1590 = vmatprep.subr.mxu0 0.0
    %1591 = vmatpush2.msra.mxu0 0.0
    %1592 = vmatprep.subr.mxu0 0.0
    %1593 = vmatpush2.msra.mxu0 0.0
    %1594 = vmatprep.subr.mxu0 0.0
    %1595 = vmatpush2.msra.mxu0 0.0
    %1596 = vmatprep.subr.mxu0 0.0
    %1597 = vmatpush2.msra.mxu0 0.0
    %1598 = vmatprep.subr.mxu0 0.0
    %1599 = vmatpush2.msra.mxu0 0.0
    %1600 = vmatprep.subr.mxu0 0.0
    %1601 = vmatpush2.msra.mxu0 0.0
    %1602 = vmatprep.subr.mxu0 0.0
    %1603 = vmatpush2.msra.mxu0 0.0
    %1604 = vmatprep.subr.mxu0 0.0
    %1605 = vmatpush2.msra.mxu0 0.0
    %1606 = vmatprep.subr.mxu0 0.0
    %1607 = vmatpush2.msra.mxu0 0.0
    %1608 = vmatprep.subr.mxu0 0.0
    %1609 = vmatpush2.msra.mxu0 0.0
    %1610 = vmatprep.subr.mxu0 0.0
    %1611 = vmatpush2.msra.mxu0 0.0
    %1612 = vmatprep.mubr.f32.mxu0 0.0
    %1613 = vmatmul.mubr.f32.gmra.mxu0 %v1543
    %v1614 = vpop.f32.mrf.mxu0
    %v1615 = vadd.f32 %v1540, %v1614
    %v1616 = vpop.f32.mrf.mxu0
    %1617 = vmatprep.mubr.f32.mxu0 0.0
    %1618 = vmatmul.mubr.f32.gmra.mxu0 %v1546
    %v1619 = vpop.f32.mrf.mxu0
    %v1620 = vadd.f32 %v1540, %v1619
    %v1621 = vpop.f32.mrf.mxu0
    %1622 = vdwg.mxu0
    %v1623 = vld [vmem:[%s2 + $0x18] sm:$0xff]
    %v1624 = vld [vmem:[%s2 + $0x20] sm:$0xff]
    %v1625 = vld [vmem:[%s2 + $0x68] sm:$0xff]
    %v1626 = vld [vmem:[%s2 + $0x70] sm:$0xff]
    %v1627 = vld [vmem:[%s2 + $0xb8] sm:$0xff]
    %v1628 = vld [vmem:[%s2 + $0xc0] sm:$0xff]
    %v1629 = vld [vmem:[%s2 + $0x108] sm:$0xff]
    %v1630 = vld [vmem:[%s2 + $0x110] sm:$0xff]
    %v1631 = vld [vmem:[%s2 + $0x158] sm:$0xff]
    %v1632 = vld [vmem:[%s2 + $0x160] sm:$0xff]
    %v1633 = vld [vmem:[%s2 + $0x1a8] sm:$0xff]
    %v1634 = vld [vmem:[%s2 + $0x1b0] sm:$0xff]
    %v1635 = vld [vmem:[%s2 + $0x1f8] sm:$0xff]
    %v1636 = vld [vmem:[%s2 + $0x200] sm:$0xff]
    %v1637 = vld [vmem:[%s2 + $0x248] sm:$0xff]
    %v1638 = vld [vmem:[%s2 + $0x250] sm:$0xff]
    %v1639 = vld [vmem:[%s2 + $0x298] sm:$0xff]
    %v1640 = vld [vmem:[%s2 + $0x2a0] sm:$0xff]
    %v1641 = vld [vmem:[%s2 + $0x2e8] sm:$0xff]
    %v1642 = vld [vmem:[%s2 + $0x2f0] sm:$0xff]
    %v1643 = vld [vmem:[%s3 + $0x4] sm:$0x3]
    %v1645 = vlaneseq
    %v1646 = vshrl.u32 %v1645, 7
    %v1647 = vsub.s32 0, %v1646
    %v1648 = vrot.slane %v1643, %v1647
    %v1649 = vlaneseq
    %v1650 = vshrl.u32 %v1649, 7
    %v1651 = vsub.s32 1, %v1650
    %v1652 = vrot.slane %v1643, %v1651
    %v1656 = vsel %vm675, %v1615, 0
    %v1659 = vsel %vm675, %v1620, 0
    %1661 = vmatprep.subr.mxu0 0.0
    %1662 = vmatpush1.msra.mxu0 0.0
    %1663 = vmatprep.subr.mxu0 0.0
    %1664 = vmatpush1.msra.mxu0 0.0
    %1665 = vmatprep.subr.mxu0 0.0
    %1666 = vmatpush1.msra.mxu0 0.0
    %1667 = vmatprep.subr.mxu0 0.0
    %1668 = vmatpush1.msra.mxu0 0.0
    %1669 = vmatprep.subr.mxu0 0.0
    %1670 = vmatpush1.msra.mxu0 0.0
    %1671 = vmatprep.subr.mxu0 0.0
    %1672 = vmatpush1.msra.mxu0 0.0
    %1673 = vmatprep.subr.mxu0 %v1642
    %1674 = vmatpush1.msra.mxu0 %v1641
    %1675 = vmatprep.subr.mxu0 %v1640
    %1676 = vmatpush1.msra.mxu0 %v1639
    %1677 = vmatprep.subr.mxu0 %v1638
    %1678 = vmatpush1.msra.mxu0 %v1637
    %1679 = vmatprep.subr.mxu0 %v1636
    %1680 = vmatpush1.msra.mxu0 %v1635
    %1681 = vmatprep.subr.mxu0 %v1634
    %1682 = vmatpush1.msra.mxu0 %v1633
    %1683 = vmatprep.subr.mxu0 %v1632
    %1684 = vmatpush1.msra.mxu0 %v1631
    %1685 = vmatprep.subr.mxu0 %v1630
    %1686 = vmatpush1.msra.mxu0 %v1629
    %1687 = vmatprep.subr.mxu0 %v1628
    %1688 = vmatpush1.msra.mxu0 %v1627
    %1689 = vmatprep.subr.mxu0 %v1626
    %1690 = vmatpush1.msra.mxu0 %v1625
    %1691 = vmatprep.subr.mxu0 %v1624
    %1692 = vmatpush1.msra.mxu0 %v1623
    %1693 = vmatprep.subr.mxu0 0.0
    %1694 = vmatpush2.msra.mxu0 0.0
    %1695 = vmatprep.subr.mxu0 0.0
    %1696 = vmatpush2.msra.mxu0 0.0
    %1697 = vmatprep.subr.mxu0 0.0
    %1698 = vmatpush2.msra.mxu0 0.0
    %1699 = vmatprep.subr.mxu0 0.0
    %1700 = vmatpush2.msra.mxu0 0.0
    %1701 = vmatprep.subr.mxu0 0.0
    %1702 = vmatpush2.msra.mxu0 0.0
    %1703 = vmatprep.subr.mxu0 0.0
    %1704 = vmatpush2.msra.mxu0 0.0
    %1705 = vmatprep.subr.mxu0 0.0
    %1706 = vmatpush2.msra.mxu0 0.0
    %1707 = vmatprep.subr.mxu0 0.0
    %1708 = vmatpush2.msra.mxu0 0.0
    %1709 = vmatprep.subr.mxu0 0.0
    %1710 = vmatpush2.msra.mxu0 0.0
    %1711 = vmatprep.subr.mxu0 0.0
    %1712 = vmatpush2.msra.mxu0 0.0
    %1713 = vmatprep.subr.mxu0 0.0
    %1714 = vmatpush2.msra.mxu0 0.0
    %1715 = vmatprep.subr.mxu0 0.0
    %1716 = vmatpush2.msra.mxu0 0.0
    %1717 = vmatprep.subr.mxu0 0.0
    %1718 = vmatpush2.msra.mxu0 0.0
    %1719 = vmatprep.subr.mxu0 0.0
    %1720 = vmatpush2.msra.mxu0 0.0
    %1721 = vmatprep.subr.mxu0 0.0
    %1722 = vmatpush2.msra.mxu0 0.0
    %1723 = vmatprep.subr.mxu0 0.0
    %1724 = vmatpush2.msra.mxu0 0.0
    %1725 = vmatprep.mubr.f32.mxu0 0.0
    %1726 = vmatmul.mubr.f32.gmra.mxu0 %v1656
    %v1727 = vpop.f32.mrf.mxu0
    %v1728 = vadd.f32 %v1648, %v1727
    %v1729 = vpop.f32.mrf.mxu0
    %v1730 = vadd.f32 %v1652, %v1729
    %1731 = vmatprep.mubr.f32.mxu0 0.0
    %1732 = vmatmul.mubr.f32.gmra.mxu0 %v1659
    %v1733 = vpop.f32.mrf.mxu0
    %v1734 = vadd.f32 %v1648, %v1733
    %v1735 = vpop.f32.mrf.mxu0
    %v1736 = vadd.f32 %v1652, %v1735
    %1737 = vdwg.mxu0
    %v1738 = vmul.f32 %v1728, 0.31622776
    %v1739 = vmul.f32 %v1734, 0.31622776
    %1744 = vrot.lane.b32.xlu0 %v1728, 48
    %v1745 = vpop.permute.xlu0 %1744
    %1746 = vrot.lane.b32.xlu0 %v1730, 48
    %v1747 = vpop.permute.xlu0 %1746
    %1748 = vrot.lane.b32.xlu0 %v1734, 48
    %v1749 = vpop.permute.xlu0 %1748
    %1750 = vrot.lane.b32.xlu0 %v1736, 48
    %v1751 = vpop.permute.xlu0 %1750
    %v1752 = vsel %vm773, %v1745, %v1747
    %v1753 = vsel %vm773, %v1749, %v1751
    %1758 = vmatprep.subr.mxu0 0.0
    %1759 = vmatpush1.msra.mxu0 0.0
    %1760 = vmatprep.subr.mxu0 0.0
    %1761 = vmatpush1.msra.mxu0 0.0
    %1762 = vmatprep.subr.mxu0 0.0
    %1763 = vmatpush1.msra.mxu0 0.0
    %1764 = vmatprep.subr.mxu0 0.0
    %1765 = vmatpush1.msra.mxu0 0.0
    %1766 = vmatprep.subr.mxu0 0.0
    %1767 = vmatpush1.msra.mxu0 0.0
    %1768 = vmatprep.subr.mxu0 0.0
    %1769 = vmatpush1.msra.mxu0 0.0
    %1770 = vmatprep.subr.mxu0 0.0
    %1771 = vmatpush1.msra.mxu0 0.0
    %1772 = vmatprep.subr.mxu0 0.0
    %1773 = vmatpush1.msra.mxu0 0.0
    %1774 = vmatprep.subr.mxu0 0.0
    %1775 = vmatpush1.msra.mxu0 0.0
    %1776 = vmatprep.subr.mxu0 0.0
    %1777 = vmatpush1.msra.mxu0 0.0
    %1778 = vmatprep.subr.mxu0 0.0
    %1779 = vmatpush1.msra.mxu0 0.0
    %1780 = vmatprep.subr.mxu0 0.0
    %1781 = vmatpush1.msra.mxu0 0.0
    %1782 = vmatprep.subr.mxu0 0.0
    %1783 = vmatpush1.msra.mxu0 0.0
    %1784 = vmatprep.subr.mxu0 0.0
    %1785 = vmatpush1.msra.mxu0 0.0
    %1786 = vmatprep.subr.mxu0 %v1751
    %1787 = vmatpush1.msra.mxu0 %v1753
    %1788 = vmatprep.subr.mxu0 %v1747
    %1789 = vmatpush1.msra.mxu0 %v1752
    %1790 = vmatprep.subr.mxu0 0.0
    %1791 = vmatpush2.msra.mxu0 0.0
    %1792 = vmatprep.subr.mxu0 0.0
    %1793 = vmatpush2.msra.mxu0 0.0
    %1794 = vmatprep.subr.mxu0 0.0
    %1795 = vmatpush2.msra.mxu0 0.0
    %1796 = vmatprep.subr.mxu0 0.0
    %1797 = vmatpush2.msra.mxu0 0.0
    %1798 = vmatprep.subr.mxu0 0.0
    %1799 = vmatpush2.msra.mxu0 0.0
    %1800 = vmatprep.subr.mxu0 0.0
    %1801 = vmatpush2.msra.mxu0 0.0
    %1802 = vmatprep.subr.mxu0 0.0
    %1803 = vmatpush2.msra.mxu0 0.0
    %1804 = vmatprep.subr.mxu0 0.0
    %1805 = vmatpush2.msra.mxu0 0.0
    %1806 = vmatprep.subr.mxu0 0.0
    %1807 = vmatpush2.msra.mxu0 0.0
    %1808 = vmatprep.subr.mxu0 0.0
    %1809 = vmatpush2.msra.mxu0 0.0
    %1810 = vmatprep.subr.mxu0 0.0
    %1811 = vmatpush2.msra.mxu0 0.0
    %1812 = vmatprep.subr.mxu0 0.0
    %1813 = vmatpush2.msra.mxu0 0.0
    %1814 = vmatprep.subr.mxu0 0.0
    %1815 = vmatpush2.msra.mxu0 0.0
    %1816 = vmatprep.subr.mxu0 0.0
    %1817 = vmatpush2.msra.mxu0 0.0
    %1818 = vmatprep.subr.mxu0 0.0
    %1819 = vmatpush2.msra.mxu0 0.0
    %1820 = vmatprep.subr.mxu0 0.0
    %1821 = vmatpush2.msra.mxu0 0.0
    %1822 = vmatprep.mubr.f32.mxu0 0.0
    %1823 = vmatmul.mubr.f32.gmra.mxu0 %v782
    %v1824 = vpop.f32.mrf.mxu0
    %v1825 = vadd.f32 0.0, %v1824
    %v1826 = vpop.f32.mrf.mxu0
    %v1827 = vadd.f32 0.0, %v1826
    %1828 = vmatprep.mubr.f32.mxu0 0.0
    %1829 = vmatmul.mubr.f32.gmra.mxu0 %v785
    %v1830 = vpop.f32.mrf.mxu0
    %v1831 = vadd.f32 0.0, %v1830
    %v1832 = vpop.f32.mrf.mxu0
    %v1833 = vadd.f32 0.0, %v1832
    %1834 = vmatprep.mubr.f32.mxu0 0.0
    %1835 = vmatmul.mubr.f32.gmra.mxu0 %v788
    %v1836 = vpop.f32.mrf.mxu0
    %v1837 = vadd.f32 0.0, %v1836
    %v1838 = vpop.f32.mrf.mxu0
    %v1839 = vadd.f32 0.0, %v1838
    %1840 = vmatprep.mubr.f32.mxu0 0.0
    %1841 = vmatmul.mubr.f32.gmra.mxu0 %v791
    %v1842 = vpop.f32.mrf.mxu0
    %v1843 = vadd.f32 0.0, %v1842
    %v1844 = vpop.f32.mrf.mxu0
    %v1845 = vadd.f32 0.0, %v1844
    %1846 = vmatprep.mubr.f32.mxu0 0.0
    %1847 = vmatmul.mubr.f32.gmra.mxu0 %v794
    %v1848 = vpop.f32.mrf.mxu0
    %v1849 = vadd.f32 0.0, %v1848
    %v1850 = vpop.f32.mrf.mxu0
    %v1851 = vadd.f32 0.0, %v1850
    %1852 = vmatprep.mubr.f32.mxu0 0.0
    %1853 = vmatmul.mubr.f32.gmra.mxu0 %v797
    %v1854 = vpop.f32.mrf.mxu0
    %v1855 = vadd.f32 0.0, %v1854
    %v1856 = vpop.f32.mrf.mxu0
    %v1857 = vadd.f32 0.0, %v1856
    %1858 = vmatprep.mubr.f32.mxu0 0.0
    %1859 = vmatmul.mubr.f32.gmra.mxu0 %v800
    %v1860 = vpop.f32.mrf.mxu0
    %v1861 = vadd.f32 0.0, %v1860
    %v1862 = vpop.f32.mrf.mxu0
    %v1863 = vadd.f32 0.0, %v1862
    %1864 = vmatprep.mubr.f32.mxu0 0.0
    %1865 = vmatmul.mubr.f32.gmra.mxu0 %v803
    %v1866 = vpop.f32.mrf.mxu0
    %v1867 = vadd.f32 0.0, %v1866
    %v1868 = vpop.f32.mrf.mxu0
    %v1869 = vadd.f32 0.0, %v1868
    %1870 = vmatprep.mubr.f32.mxu0 0.0
    %1871 = vmatmul.mubr.f32.gmra.mxu0 %v806
    %v1872 = vpop.f32.mrf.mxu0
    %v1873 = vadd.f32 0.0, %v1872
    %v1874 = vpop.f32.mrf.mxu0
    %v1875 = vadd.f32 0.0, %v1874
    %1876 = vmatprep.mubr.f32.mxu0 0.0
    %1877 = vmatmul.mubr.f32.gmra.mxu0 %v809
    %v1878 = vpop.f32.mrf.mxu0
    %v1879 = vadd.f32 0.0, %v1878
    %v1880 = vpop.f32.mrf.mxu0
    %v1881 = vadd.f32 0.0, %v1880
    %1882 = vmatprep.mubr.f32.mxu0 0.0
    %1883 = vmatmul.mubr.f32.gmra.mxu0 %v812
    %v1884 = vpop.f32.mrf.mxu0
    %v1885 = vadd.f32 0.0, %v1884
    %v1886 = vpop.f32.mrf.mxu0
    %v1887 = vadd.f32 0.0, %v1886
    %1888 = vmatprep.mubr.f32.mxu0 0.0
    %1889 = vmatmul.mubr.f32.gmra.mxu0 %v815
    %v1890 = vpop.f32.mrf.mxu0
    %v1891 = vadd.f32 0.0, %v1890
    %v1892 = vpop.f32.mrf.mxu0
    %v1893 = vadd.f32 0.0, %v1892
    %1894 = vmatprep.mubr.f32.mxu0 0.0
    %1895 = vmatmul.mubr.f32.gmra.mxu0 %v818
    %v1896 = vpop.f32.mrf.mxu0
    %v1897 = vadd.f32 0.0, %v1896
    %v1898 = vpop.f32.mrf.mxu0
    %v1899 = vadd.f32 0.0, %v1898
    %1900 = vmatprep.mubr.f32.mxu0 0.0
    %1901 = vmatmul.mubr.f32.gmra.mxu0 %v821
    %v1902 = vpop.f32.mrf.mxu0
    %v1903 = vadd.f32 0.0, %v1902
    %v1904 = vpop.f32.mrf.mxu0
    %v1905 = vadd.f32 0.0, %v1904
    %1906 = vmatprep.mubr.f32.mxu0 0.0
    %1907 = vmatmul.mubr.f32.gmra.mxu0 %v824
    %v1908 = vpop.f32.mrf.mxu0
    %v1909 = vadd.f32 0.0, %v1908
    %v1910 = vpop.f32.mrf.mxu0
    %v1911 = vadd.f32 0.0, %v1910
    %1912 = vmatprep.mubr.f32.mxu0 0.0
    %1913 = vmatmul.mubr.f32.gmra.mxu0 %v827
    %v1914 = vpop.f32.mrf.mxu0
    %v1915 = vadd.f32 0.0, %v1914
    %v1916 = vpop.f32.mrf.mxu0
    %v1917 = vadd.f32 0.0, %v1916
    %1918 = vdwg.mxu0
    %v1919 = vmul.f32 %v1825, %v486
    %v1920 = vmul.f32 %v1831, %v487
    %v1921 = vmul.f32 %v1837, %v488
    %v1922 = vmul.f32 %v1843, %v489
    %v1923 = vmul.f32 %v1849, %v490
    %v1924 = vmul.f32 %v1855, %v491
    %v1925 = vmul.f32 %v1861, %v492
    %v1926 = vmul.f32 %v1867, %v493
    %v1927 = vmul.f32 %v1873, %v494
    %v1928 = vmul.f32 %v1879, %v495
    %v1929 = vmul.f32 %v1885, %v496
    %v1930 = vmul.f32 %v1891, %v497
    %v1931 = vmul.f32 %v1897, %v498
    %v1932 = vmul.f32 %v1903, %v499
    %v1933 = vmul.f32 %v1909, %v500
    %v1934 = vmul.f32 %v1915, %v501
    %v1935 = vmul.f32 %v1825, %v1023
    %v1936 = vmul.f32 %v1827, %v1023
    %v1937 = vmul.f32 %v1831, %v1025
    %v1938 = vmul.f32 %v1833, %v1025
    %v1939 = vmul.f32 %v1837, %v1027
    %v1940 = vmul.f32 %v1839, %v1027
    %v1941 = vmul.f32 %v1843, %v1029
    %v1942 = vmul.f32 %v1845, %v1029
    %v1943 = vmul.f32 %v1849, %v1031
    %v1944 = vmul.f32 %v1851, %v1031
    %v1945 = vmul.f32 %v1855, %v1033
    %v1946 = vmul.f32 %v1857, %v1033
    %v1947 = vmul.f32 %v1861, %v1035
    %v1948 = vmul.f32 %v1863, %v1035
    %v1949 = vmul.f32 %v1867, %v1037
    %v1950 = vmul.f32 %v1869, %v1037
    %v1951 = vmul.f32 %v1873, %v1039
    %v1952 = vmul.f32 %v1875, %v1039
    %v1953 = vmul.f32 %v1879, %v1041
    %v1954 = vmul.f32 %v1881, %v1041
    %v1955 = vmul.f32 %v1885, %v1043
    %v1956 = vmul.f32 %v1887, %v1043
    %v1957 = vmul.f32 %v1891, %v1045
    %v1958 = vmul.f32 %v1893, %v1045
    %v1959 = vmul.f32 %v1897, %v1047
    %v1960 = vmul.f32 %v1899, %v1047
    %v1961 = vmul.f32 %v1903, %v1049
    %v1962 = vmul.f32 %v1905, %v1049
    %v1963 = vmul.f32 %v1909, %v1051
    %v1964 = vmul.f32 %v1911, %v1051
    %v1965 = vmul.f32 %v1915, %v1053
    %v1966 = vmul.f32 %v1917, %v1053
    %v1968 = vsel %vm675, %v1738, 0
    %v1971 = vsel %vm675, %v1739, 0
    %v1974 = vsel %vm675, %v1919, 0
    %v1977 = vsel %vm675, %v1920, 0
    %v1980 = vsel %vm675, %v1921, 0
    %v1983 = vsel %vm675, %v1922, 0
    %v1986 = vsel %vm675, %v1923, 0
    %v1989 = vsel %vm675, %v1924, 0
    %v1992 = vsel %vm675, %v1925, 0
    %v1995 = vsel %vm675, %v1926, 0
    %v1998 = vsel %vm675, %v1927, 0
    %v2001 = vsel %vm675, %v1928, 0
    %v2004 = vsel %vm675, %v1929, 0
    %v2007 = vsel %vm675, %v1930, 0
    %v2010 = vsel %vm675, %v1931, 0
    %v2013 = vsel %vm675, %v1932, 0
    %v2016 = vsel %vm675, %v1933, 0
    %v2019 = vsel %vm675, %v1934, 0
    %2021 = vmatprep.subr.mxu0 0.0
    %2022 = vmatpush1.xpose.msra.mxu0 %v2019
    %2023 = vmatprep.subr.mxu0 0.0
    %2024 = vmatpush1.xpose.msra.mxu0 %v2016
    %2025 = vmatprep.subr.mxu0 0.0
    %2026 = vmatpush1.xpose.msra.mxu0 %v2013
    %2027 = vmatprep.subr.mxu0 0.0
    %2028 = vmatpush1.xpose.msra.mxu0 %v2010
    %2029 = vmatprep.subr.mxu0 0.0
    %2030 = vmatpush1.xpose.msra.mxu0 %v2007
    %2031 = vmatprep.subr.mxu0 0.0
    %2032 = vmatpush1.xpose.msra.mxu0 %v2004
    %2033 = vmatprep.subr.mxu0 0.0
    %2034 = vmatpush1.xpose.msra.mxu0 %v2001
    %2035 = vmatprep.subr.mxu0 0.0
    %2036 = vmatpush1.xpose.msra.mxu0 %v1998
    %2037 = vmatprep.subr.mxu0 0.0
    %2038 = vmatpush1.xpose.msra.mxu0 %v1995
    %2039 = vmatprep.subr.mxu0 0.0
    %2040 = vmatpush1.xpose.msra.mxu0 %v1992
    %2041 = vmatprep.subr.mxu0 0.0
    %2042 = vmatpush1.xpose.msra.mxu0 %v1989
    %2043 = vmatprep.subr.mxu0 0.0
    %2044 = vmatpush1.xpose.msra.mxu0 %v1986
    %2045 = vmatprep.subr.mxu0 0.0
    %2046 = vmatpush1.xpose.msra.mxu0 %v1983
    %2047 = vmatprep.subr.mxu0 0.0
    %2048 = vmatpush1.xpose.msra.mxu0 %v1980
    %2049 = vmatprep.subr.mxu0 0.0
    %2050 = vmatpush1.xpose.msra.mxu0 %v1977
    %2051 = vmatprep.subr.mxu0 0.0
    %2052 = vmatpush1.xpose.msra.mxu0 %v1974
    %2053 = vmatprep.subr.mxu0 0.0
    %2054 = vmatpush2.xpose.msra.mxu0 0.0
    %2055 = vmatprep.subr.mxu0 0.0
    %2056 = vmatpush2.xpose.msra.mxu0 0.0
    %2057 = vmatprep.subr.mxu0 0.0
    %2058 = vmatpush2.xpose.msra.mxu0 0.0
    %2059 = vmatprep.subr.mxu0 0.0
    %2060 = vmatpush2.xpose.msra.mxu0 0.0
    %2061 = vmatprep.subr.mxu0 0.0
    %2062 = vmatpush2.xpose.msra.mxu0 0.0
    %2063 = vmatprep.subr.mxu0 0.0
    %2064 = vmatpush2.xpose.msra.mxu0 0.0
    %2065 = vmatprep.subr.mxu0 0.0
    %2066 = vmatpush2.xpose.msra.mxu0 0.0
    %2067 = vmatprep.subr.mxu0 0.0
    %2068 = vmatpush2.xpose.msra.mxu0 0.0
    %2069 = vmatprep.subr.mxu0 0.0
    %2070 = vmatpush2.xpose.msra.mxu0 0.0
    %2071 = vmatprep.subr.mxu0 0.0
    %2072 = vmatpush2.xpose.msra.mxu0 0.0
    %2073 = vmatprep.subr.mxu0 0.0
    %2074 = vmatpush2.xpose.msra.mxu0 0.0
    %2075 = vmatprep.subr.mxu0 0.0
    %2076 = vmatpush2.xpose.msra.mxu0 0.0
    %2077 = vmatprep.subr.mxu0 0.0
    %2078 = vmatpush2.xpose.msra.mxu0 0.0
    %2079 = vmatprep.subr.mxu0 0.0
    %2080 = vmatpush2.xpose.msra.mxu0 0.0
    %2081 = vmatprep.subr.mxu0 0.0
    %2082 = vmatpush2.xpose.msra.mxu0 0.0
    %2083 = vmatprep.subr.mxu0 0.0
    %2084 = vmatpush2.xpose.msra.mxu0 0.0
    %2085 = vmatprep.mubr.f32.mxu0 0.0
    %2086 = vmatmul.mubr.f32.gmra.mxu0 %v1968
    %v2087 = vpop.f32.mrf.mxu0
    %v2088 = vadd.f32 0.0, %v2087
    %v2089 = vpop.f32.mrf.mxu0
    %2090 = vmatprep.mubr.f32.mxu0 0.0
    %2091 = vmatmul.mubr.f32.gmra.mxu0 %v1971
    %v2092 = vpop.f32.mrf.mxu0
    %v2093 = vadd.f32 0.0, %v2092
    %v2094 = vpop.f32.mrf.mxu0
    %2095 = vdwg.mxu0
    %2096 = vmax.xlane.f32.xlu0 %v2088
    %v2097 = vpop.xlane.xlu0 %2096
    %2098 = vmax.xlane.f32.xlu0 %v2093
    %v2099 = vpop.xlane.xlu0 %2098
    %v2100 = vsub.f32 %v2088, %v2097
    %v2101 = vsub.f32 %v2093, %v2099
    %v2102 = vmul.f32 %v2100, 1.442695
    %v2103 = vpow.pop %v2102
    %v2104 = vmul.f32 %v2101, 1.442695
    %v2105 = vpow.pop %v2104
    %2106 = vmatprep.subr.mxu0 0.0
    %2107 = vmatpush1.msra.mxu0 %v533
    %2108 = vmatprep.subr.mxu0 0.0
    %2109 = vmatpush1.msra.mxu0 %v532
    %2110 = vmatprep.subr.mxu0 0.0
    %2111 = vmatpush1.msra.mxu0 %v531
    %2112 = vmatprep.subr.mxu0 0.0
    %2113 = vmatpush1.msra.mxu0 %v530
    %2114 = vmatprep.subr.mxu0 0.0
    %2115 = vmatpush1.msra.mxu0 %v529
    %2116 = vmatprep.subr.mxu0 0.0
    %2117 = vmatpush1.msra.mxu0 %v528
    %2118 = vmatprep.subr.mxu0 0.0
    %2119 = vmatpush1.msra.mxu0 %v527
    %2120 = vmatprep.subr.mxu0 0.0
    %2121 = vmatpush1.msra.mxu0 %v526
    %2122 = vmatprep.subr.mxu0 0.0
    %2123 = vmatpush1.msra.mxu0 %v525
    %2124 = vmatprep.subr.mxu0 0.0
    %2125 = vmatpush1.msra.mxu0 %v524
    %2126 = vmatprep.subr.mxu0 0.0
    %2127 = vmatpush1.msra.mxu0 %v523
    %2128 = vmatprep.subr.mxu0 0.0
    %2129 = vmatpush1.msra.mxu0 %v522
    %2130 = vmatprep.subr.mxu0 0.0
    %2131 = vmatpush1.msra.mxu0 %v521
    %2132 = vmatprep.subr.mxu0 0.0
    %2133 = vmatpush1.msra.mxu0 %v520
    %2134 = vmatprep.subr.mxu0 0.0
    %2135 = vmatpush1.msra.mxu0 %v519
    %2136 = vmatprep.subr.mxu0 0.0
    %2137 = vmatpush1.msra.mxu0 %v518
    %2138 = vmatprep.subr.mxu0 0.0
    %2139 = vmatpush2.msra.mxu0 0.0
    %2140 = vmatprep.subr.mxu0 0.0
    %2141 = vmatpush2.msra.mxu0 0.0
    %2142 = vmatprep.subr.mxu0 0.0
    %2143 = vmatpush2.msra.mxu0 0.0
    %2144 = vmatprep.subr.mxu0 0.0
    %2145 = vmatpush2.msra.mxu0 0.0
    %2146 = vmatprep.subr.mxu0 0.0
    %2147 = vmatpush2.msra.mxu0 0.0
    %2148 = vmatprep.subr.mxu0 0.0
    %2149 = vmatpush2.msra.mxu0 0.0
    %2150 = vmatprep.subr.mxu0 0.0
    %2151 = vmatpush2.msra.mxu0 0.0
    %2152 = vmatprep.subr.mxu0 0.0
    %2153 = vmatpush2.msra.mxu0 0.0
    %2154 = vmatprep.subr.mxu0 0.0
    %2155 = vmatpush2.msra.mxu0 0.0
    %2156 = vmatprep.subr.mxu0 0.0
    %2157 = vmatpush2.msra.mxu0 0.0
    %2158 = vmatprep.subr.mxu0 0.0
    %2159 = vmatpush2.msra.mxu0 0.0
    %2160 = vmatprep.subr.mxu0 0.0
    %2161 = vmatpush2.msra.mxu0 0.0
    %2162 = vmatprep.subr.mxu0 0.0
    %2163 = vmatpush2.msra.mxu0 0.0
    %2164 = vmatprep.subr.mxu0 0.0
    %2165 = vmatpush2.msra.mxu0 0.0
    %2166 = vmatprep.subr.mxu0 0.0
    %2167 = vmatpush2.msra.mxu0 0.0
    %2168 = vmatprep.subr.mxu0 0.0
    %2169 = vmatpush2.msra.mxu0 0.0
    %2170 = vmatprep.mubr.f32.mxu0 0.0
    %2171 = vmatmul.mubr.f32.gmra.mxu0 %v2103
    %v2172 = vpop.f32.mrf.mxu0
    %v2173 = vadd.f32 0.0, %v2172
    %v2174 = vpop.f32.mrf.mxu0
    %2175 = vmatprep.mubr.f32.mxu0 0.0
    %2176 = vmatmul.mubr.f32.gmra.mxu0 %v2105
    %v2177 = vpop.f32.mrf.mxu0
    %v2178 = vadd.f32 0.0, %v2177
    %v2179 = vpop.f32.mrf.mxu0
    %2180 = vdwg.mxu0
    %v2181 = vmax.f32 %v2173, 1e-30
    %v2182 = vmax.f32 %v2178, 1e-30
    %v2183 = vrcp.pop %v2181
    %v2184 = vmul.f32 %v2103, %v2183
    %v2185 = vrcp.pop %v2182
    %v2186 = vmul.f32 %v2105, %v2185
    %2219 = vrot.lane.b32.xlu0 %v1935, 48
    %v2220 = vpop.permute.xlu0 %2219
    %2221 = vrot.lane.b32.xlu0 %v1936, 48
    %v2222 = vpop.permute.xlu0 %2221
    %2223 = vrot.lane.b32.xlu0 %v1937, 48
    %v2224 = vpop.permute.xlu0 %2223
    %2225 = vrot.lane.b32.xlu0 %v1938, 48
    %v2226 = vpop.permute.xlu0 %2225
    %2227 = vrot.lane.b32.xlu0 %v1939, 48
    %v2228 = vpop.permute.xlu0 %2227
    %2229 = vrot.lane.b32.xlu0 %v1940, 48
    %v2230 = vpop.permute.xlu0 %2229
    %2231 = vrot.lane.b32.xlu0 %v1941, 48
    %v2232 = vpop.permute.xlu0 %2231
    %2233 = vrot.lane.b32.xlu0 %v1942, 48
    %v2234 = vpop.permute.xlu0 %2233
    %2235 = vrot.lane.b32.xlu0 %v1943, 48
    %v2236 = vpop.permute.xlu0 %2235
    %2237 = vrot.lane.b32.xlu0 %v1944, 48
    %v2238 = vpop.permute.xlu0 %2237
    %2239 = vrot.lane.b32.xlu0 %v1945, 48
    %v2240 = vpop.permute.xlu0 %2239
    %2241 = vrot.lane.b32.xlu0 %v1946, 48
    %v2242 = vpop.permute.xlu0 %2241
    %2243 = vrot.lane.b32.xlu0 %v1947, 48
    %v2244 = vpop.permute.xlu0 %2243
    %2245 = vrot.lane.b32.xlu0 %v1948, 48
    %v2246 = vpop.permute.xlu0 %2245
    %2247 = vrot.lane.b32.xlu0 %v1949, 48
    %v2248 = vpop.permute.xlu0 %2247
    %2249 = vrot.lane.b32.xlu0 %v1950, 48
    %v2250 = vpop.permute.xlu0 %2249
    %2251 = vrot.lane.b32.xlu0 %v1951, 48
    %v2252 = vpop.permute.xlu0 %2251
    %2253 = vrot.lane.b32.xlu0 %v1952, 48
    %v2254 = vpop.permute.xlu0 %2253
    %2255 = vrot.lane.b32.xlu0 %v1953, 48
    %v2256 = vpop.permute.xlu0 %2255
    %2257 = vrot.lane.b32.xlu0 %v1954, 48
    %v2258 = vpop.permute.xlu0 %2257
    %2259 = vrot.lane.b32.xlu0 %v1955, 48
    %v2260 = vpop.permute.xlu0 %2259
    %2261 = vrot.lane.b32.xlu0 %v1956, 48
    %v2262 = vpop.permute.xlu0 %2261
    %2263 = vrot.lane.b32.xlu0 %v1957, 48
    %v2264 = vpop.permute.xlu0 %2263
    %2265 = vrot.lane.b32.xlu0 %v1958, 48
    %v2266 = vpop.permute.xlu0 %2265
    %2267 = vrot.lane.b32.xlu0 %v1959, 48
    %v2268 = vpop.permute.xlu0 %2267
    %2269 = vrot.lane.b32.xlu0 %v1960, 48
    %v2270 = vpop.permute.xlu0 %2269
    %2271 = vrot.lane.b32.xlu0 %v1961, 48
    %v2272 = vpop.permute.xlu0 %2271
    %2273 = vrot.lane.b32.xlu0 %v1962, 48
    %v2274 = vpop.permute.xlu0 %2273
    %2275 = vrot.lane.b32.xlu0 %v1963, 48
    %v2276 = vpop.permute.xlu0 %2275
    %2277 = vrot.lane.b32.xlu0 %v1964, 48
    %v2278 = vpop.permute.xlu0 %2277
    %2279 = vrot.lane.b32.xlu0 %v1965, 48
    %v2280 = vpop.permute.xlu0 %2279
    %2281 = vrot.lane.b32.xlu0 %v1966, 48
    %v2282 = vpop.permute.xlu0 %2281
    %v2283 = vsel %vm773, %v2220, %v2222
    %v2284 = vsel %vm773, %v2224, %v2226
    %v2285 = vsel %vm773, %v2228, %v2230
    %v2286 = vsel %vm773, %v2232, %v2234
    %v2287 = vsel %vm773, %v2236, %v2238
    %v2288 = vsel %vm773, %v2240, %v2242
    %v2289 = vsel %vm773, %v2244, %v2246
    %v2290 = vsel %vm773, %v2248, %v2250
    %v2291 = vsel %vm773, %v2252, %v2254
    %v2292 = vsel %vm773, %v2256, %v2258
    %v2293 = vsel %vm773, %v2260, %v2262
    %v2294 = vsel %vm773, %v2264, %v2266
    %v2295 = vsel %vm773, %v2268, %v2270
    %v2296 = vsel %vm773, %v2272, %v2274
    %v2297 = vsel %vm773, %v2276, %v2278
    %v2298 = vsel %vm773, %v2280, %v2282
    %2315 = vmatprep.subr.mxu0 0.0
    %2316 = vmatpush1.msra.mxu0 %v2298
    %2317 = vmatprep.subr.mxu0 0.0
    %2318 = vmatpush1.msra.mxu0 %v2297
    %2319 = vmatprep.subr.mxu0 0.0
    %2320 = vmatpush1.msra.mxu0 %v2296
    %2321 = vmatprep.subr.mxu0 0.0
    %2322 = vmatpush1.msra.mxu0 %v2295
    %2323 = vmatprep.subr.mxu0 0.0
    %2324 = vmatpush1.msra.mxu0 %v2294
    %2325 = vmatprep.subr.mxu0 0.0
    %2326 = vmatpush1.msra.mxu0 %v2293
    %2327 = vmatprep.subr.mxu0 0.0
    %2328 = vmatpush1.msra.mxu0 %v2292
    %2329 = vmatprep.subr.mxu0 0.0
    %2330 = vmatpush1.msra.mxu0 %v2291
    %2331 = vmatprep.subr.mxu0 0.0
    %2332 = vmatpush1.msra.mxu0 %v2290
    %2333 = vmatprep.subr.mxu0 0.0
    %2334 = vmatpush1.msra.mxu0 %v2289
    %2335 = vmatprep.subr.mxu0 0.0
    %2336 = vmatpush1.msra.mxu0 %v2288
    %2337 = vmatprep.subr.mxu0 0.0
    %2338 = vmatpush1.msra.mxu0 %v2287
    %2339 = vmatprep.subr.mxu0 0.0
    %2340 = vmatpush1.msra.mxu0 %v2286
    %2341 = vmatprep.subr.mxu0 0.0
    %2342 = vmatpush1.msra.mxu0 %v2285
    %2343 = vmatprep.subr.mxu0 0.0
    %2344 = vmatpush1.msra.mxu0 %v2284
    %2345 = vmatprep.subr.mxu0 0.0
    %2346 = vmatpush1.msra.mxu0 %v2283
    %2347 = vmatprep.subr.mxu0 0.0
    %2348 = vmatpush2.msra.mxu0 0.0
    %2349 = vmatprep.subr.mxu0 0.0
    %2350 = vmatpush2.msra.mxu0 0.0
    %2351 = vmatprep.subr.mxu0 0.0
    %2352 = vmatpush2.msra.mxu0 0.0
    %2353 = vmatprep.subr.mxu0 0.0
    %2354 = vmatpush2.msra.mxu0 0.0
    %2355 = vmatprep.subr.mxu0 0.0
    %2356 = vmatpush2.msra.mxu0 0.0
    %2357 = vmatprep.subr.mxu0 0.0
    %2358 = vmatpush2.msra.mxu0 0.0
    %2359 = vmatprep.subr.mxu0 0.0
    %2360 = vmatpush2.msra.mxu0 0.0
    %2361 = vmatprep.subr.mxu0 0.0
    %2362 = vmatpush2.msra.mxu0 0.0
    %2363 = vmatprep.subr.mxu0 0.0
    %2364 = vmatpush2.msra.mxu0 0.0
    %2365 = vmatprep.subr.mxu0 0.0
    %2366 = vmatpush2.msra.mxu0 0.0
    %2367 = vmatprep.subr.mxu0 0.0
    %2368 = vmatpush2.msra.mxu0 0.0
    %2369 = vmatprep.subr.mxu0 0.0
    %2370 = vmatpush2.msra.mxu0 0.0
    %2371 = vmatprep.subr.mxu0 0.0
    %2372 = vmatpush2.msra.mxu0 0.0
    %2373 = vmatprep.subr.mxu0 0.0
    %2374 = vmatpush2.msra.mxu0 0.0
    %2375 = vmatprep.subr.mxu0 0.0
    %2376 = vmatpush2.msra.mxu0 0.0
    %2377 = vmatprep.subr.mxu0 0.0
    %2378 = vmatpush2.msra.mxu0 0.0
    %2379 = vmatprep.mubr.f32.mxu0 0.0
    %2380 = vmatmul.mubr.f32.gmra.mxu0 %v2184
    %v2381 = vpop.f32.mrf.mxu0
    %v2382 = vadd.f32 0.0, %v2381
    %v2383 = vpop.f32.mrf.mxu0
    %2384 = vmatprep.mubr.f32.mxu0 0.0
    %2385 = vmatmul.mubr.f32.gmra.mxu0 %v2186
    %v2386 = vpop.f32.mrf.mxu0
    %v2387 = vadd.f32 0.0, %v2386
    %v2388 = vpop.f32.mrf.mxu0
    %2389 = vdwg.mxu0
    %v2390 = vld [vmem:[%s2 + $0x28] sm:$0xff]
    %v2391 = vld [vmem:[%s2 + $0x78] sm:$0xff]
    %v2392 = vld [vmem:[%s2 + $0xc8] sm:$0xff]
    %v2393 = vld [vmem:[%s2 + $0x118] sm:$0xff]
    %v2394 = vld [vmem:[%s2 + $0x168] sm:$0xff]
    %v2395 = vld [vmem:[%s2 + $0x1b8] sm:$0xff]
    %v2396 = vld [vmem:[%s2 + $0x208] sm:$0xff]
    %v2397 = vld [vmem:[%s2 + $0x258] sm:$0xff]
    %v2398 = vld [vmem:[%s2 + $0x2a8] sm:$0xff]
    %v2399 = vld [vmem:[%s2 + $0x2f8] sm:$0xff]
    %v2400 = vld [vmem:[%s3 + $0x6] sm:$0x1]
    %v2402 = vlaneseq
    %v2403 = vshrl.u32 %v2402, 7
    %v2404 = vsub.s32 0, %v2403
    %v2405 = vrot.slane %v2400, %v2404
    %v2408 = vsel %vm675, %v2382, 0
    %v2411 = vsel %vm675, %v2387, 0
    %2413 = vmatprep.subr.mxu0 0.0
    %2414 = vmatpush1.msra.mxu0 0.0
    %2415 = vmatprep.subr.mxu0 0.0
    %2416 = vmatpush1.msra.mxu0 0.0
    %2417 = vmatprep.subr.mxu0 0.0
    %2418 = vmatpush1.msra.mxu0 0.0
    %2419 = vmatprep.subr.mxu0 0.0
    %2420 = vmatpush1.msra.mxu0 0.0
    %2421 = vmatprep.subr.mxu0 0.0
    %2422 = vmatpush1.msra.mxu0 0.0
    %2423 = vmatprep.subr.mxu0 0.0
    %2424 = vmatpush1.msra.mxu0 0.0
    %2425 = vmatprep.subr.mxu0 0.0
    %2426 = vmatpush1.msra.mxu0 %v2399
    %2427 = vmatprep.subr.mxu0 0.0
    %2428 = vmatpush1.msra.mxu0 %v2398
    %2429 = vmatprep.subr.mxu0 0.0
    %2430 = vmatpush1.msra.mxu0 %v2397
    %2431 = vmatprep.subr.mxu0 0.0
    %2432 = vmatpush1.msra.mxu0 %v2396
    %2433 = vmatprep.subr.mxu0 0.0
    %2434 = vmatpush1.msra.mxu0 %v2395
    %2435 = vmatprep.subr.mxu0 0.0
    %2436 = vmatpush1.msra.mxu0 %v2394
    %2437 = vmatprep.subr.mxu0 0.0
    %2438 = vmatpush1.msra.mxu0 %v2393
    %2439 = vmatprep.subr.mxu0 0.0
    %2440 = vmatpush1.msra.mxu0 %v2392
    %2441 = vmatprep.subr.mxu0 0.0
    %2442 = vmatpush1.msra.mxu0 %v2391
    %2443 = vmatprep.subr.mxu0 0.0
    %2444 = vmatpush1.msra.mxu0 %v2390
    %2445 = vmatprep.subr.mxu0 0.0
    %2446 = vmatpush2.msra.mxu0 0.0
    %2447 = vmatprep.subr.mxu0 0.0
    %2448 = vmatpush2.msra.mxu0 0.0
    %2449 = vmatprep.subr.mxu0 0.0
    %2450 = vmatpush2.msra.mxu0 0.0
    %2451 = vmatprep.subr.mxu0 0.0
    %2452 = vmatpush2.msra.mxu0 0.0
    %2453 = vmatprep.subr.mxu0 0.0
    %2454 = vmatpush2.msra.mxu0 0.0
    %2455 = vmatprep.subr.mxu0 0.0
    %2456 = vmatpush2.msra.mxu0 0.0
    %2457 = vmatprep.subr.mxu0 0.0
    %2458 = vmatpush2.msra.mxu0 0.0
    %2459 = vmatprep.subr.mxu0 0.0
    %2460 = vmatpush2.msra.mxu0 0.0
    %2461 = vmatprep.subr.mxu0 0.0
    %2462 = vmatpush2.msra.mxu0 0.0
    %2463 = vmatprep.subr.mxu0 0.0
    %2464 = vmatpush2.msra.mxu0 0.0
    %2465 = vmatprep.subr.mxu0 0.0
    %2466 = vmatpush2.msra.mxu0 0.0
    %2467 = vmatprep.subr.mxu0 0.0
    %2468 = vmatpush2.msra.mxu0 0.0
    %2469 = vmatprep.subr.mxu0 0.0
    %2470 = vmatpush2.msra.mxu0 0.0
    %2471 = vmatprep.subr.mxu0 0.0
    %2472 = vmatpush2.msra.mxu0 0.0
    %2473 = vmatprep.subr.mxu0 0.0
    %2474 = vmatpush2.msra.mxu0 0.0
    %2475 = vmatprep.subr.mxu0 0.0
    %2476 = vmatpush2.msra.mxu0 0.0
    %2477 = vmatprep.mubr.f32.mxu0 0.0
    %2478 = vmatmul.mubr.f32.gmra.mxu0 %v2408
    %v2479 = vpop.f32.mrf.mxu0
    %v2480 = vadd.f32 %v2405, %v2479
    %v2481 = vpop.f32.mrf.mxu0
    %2482 = vmatprep.mubr.f32.mxu0 0.0
    %2483 = vmatmul.mubr.f32.gmra.mxu0 %v2411
    %v2484 = vpop.f32.mrf.mxu0
    %v2485 = vadd.f32 %v2405, %v2484
    %v2486 = vpop.f32.mrf.mxu0
    %2487 = vdwg.mxu0
    %v2488 = vadd.f32 %v1615, %v2480
    %v2489 = vadd.f32 %v1620, %v2485
    %v2490 = vld [vmem:[%s3 + $0x7] sm:$0x1]
    %v2491 = vld [vmem:[%s3 + $0x8] sm:$0x1]
    %v2492 = vsel %vm675, %v2488, 0.0
    %2493 = vadd.xlane.f32.xlu0 %v2492
    %v2494 = vpop.xlane.xlu0 %2493
    %v2495 = vsel %vm675, %v2489, 0.0
    %2496 = vadd.xlane.f32.xlu0 %v2495
    %v2497 = vpop.xlane.xlu0 %2496
    %v2498 = vrcp.pop 80.0
    %v2499 = vmul.f32 %v2494, %v2498
    %v2500 = vmul.f32 %v2497, %v2498
    %v2501 = vsub.f32 %v2488, %v2499
    %v2502 = vsub.f32 %v2489, %v2500
    %v2503 = vmul.f32 %v2501, %v2501
    %v2504 = vmul.f32 %v2502, %v2502
    %v2505 = vsel %vm675, %v2503, 0.0
    %2506 = vadd.xlane.f32.xlu0 %v2505
    %v2507 = vpop.xlane.xlu0 %2506
    %v2508 = vsel %vm675, %v2504, 0.0
    %2509 = vadd.xlane.f32.xlu0 %v2508
    %v2510 = vpop.xlane.xlu0 %2509
    %v2511 = vmul.f32 %v2507, %v2498
    %v2512 = vmul.f32 %v2510, %v2498
    %v2513 = vadd.f32 %v2511, 1e-05
    %v2514 = vadd.f32 %v2512, 1e-05
    %v2515 = vrsqrt.pop %v2513
    %v2516 = vrsqrt.pop %v2514
    %v2517 = vmul.f32 %v2501, %v2515
    %v2518 = vmul.f32 %v2502, %v2516
    %v2520 = vlaneseq
    %v2521 = vshrl.u32 %v2520, 7
    %v2522 = vsub.s32 0, %v2521
    %v2523 = vrot.slane %v2490, %v2522
    %v2525 = vmul.f32 %v2517, %v2523
    %v2526 = vmul.f32 %v2518, %v2523
    %v2528 = vlaneseq
    %v2529 = vshrl.u32 %v2528, 7
    %v2530 = vsub.s32 0, %v2529
    %v2531 = vrot.slane %v2491, %v2530
    %v2533 = vadd.f32 %v2525, %v2531
    %v2534 = vadd.f32 %v2526, %v2531
    %v2535 = vpack.c.bf16 %v2534, %v2533
    %v2536 = vld [vmem:[%s4] sm:$0xff]
    %v2537 = vld [vmem:[%s4 + $0x8] sm:$0xff]
    %v2538 = vld [vmem:[%s4 + $0x10] sm:$0xff]
    %v2539 = vld [vmem:[%s4 + $0x18] sm:$0xff]
    %v2540 = vld [vmem:[%s4 + $0x20] sm:$0xff]
    %v2541 = vld [vmem:[%s4 + $0x28] sm:$0xff]
    %v2542 = vld [vmem:[%s4 + $0x30] sm:$0xff]
    %v2543 = vld [vmem:[%s4 + $0x38] sm:$0xff]
    %v2544 = vld [vmem:[%s4 + $0x40] sm:$0xff]
    %v2545 = vld [vmem:[%s4 + $0x48] sm:$0xff]
    %v2546 = vld [vmem:[%s4 + $0x50] sm:$0xff]
    %v2547 = vld [vmem:[%s4 + $0x58] sm:$0xff]
    %v2548 = vld [vmem:[%s4 + $0x60] sm:$0xff]
    %v2549 = vld [vmem:[%s4 + $0x68] sm:$0xff]
    %v2550 = vld [vmem:[%s4 + $0x70] sm:$0xff]
    %v2551 = vld [vmem:[%s4 + $0x78] sm:$0xff]
    %v2552 = vld [vmem:[%s4 + $0x80] sm:$0xff]
    %v2553 = vld [vmem:[%s4 + $0x88] sm:$0xff]
    %v2554 = vld [vmem:[%s4 + $0x90] sm:$0xff]
    %v2555 = vld [vmem:[%s4 + $0x98] sm:$0xff]
    %v2556 = vld [vmem:[%s4 + $0xa0] sm:$0xff]
    %v2557 = vld [vmem:[%s4 + $0xa8] sm:$0xff]
    %v2558 = vld [vmem:[%s4 + $0xb0] sm:$0xff]
    %v2559 = vld [vmem:[%s4 + $0xb8] sm:$0xff]
    %v2560 = vld [vmem:[%s4 + $0xc0] sm:$0xff]
    %v2561 = vld [vmem:[%s4 + $0xc8] sm:$0xff]
    %v2562 = vld [vmem:[%s4 + $0xd0] sm:$0xff]
    %v2563 = vld [vmem:[%s4 + $0xd8] sm:$0xff]
    %v2564 = vld [vmem:[%s4 + $0xe0] sm:$0xff]
    %v2565 = vld [vmem:[%s4 + $0xe8] sm:$0xff]
    %v2566 = vld [vmem:[%s4 + $0xf0] sm:$0xff]
    %v2567 = vld [vmem:[%s4 + $0xf8] sm:$0xff]
    %v2568 = vld [vmem:[%s4 + $0x100] sm:$0xff]
    %v2569 = vld [vmem:[%s4 + $0x108] sm:$0xff]
    %v2570 = vld [vmem:[%s4 + $0x110] sm:$0xff]
    %v2571 = vld [vmem:[%s4 + $0x118] sm:$0xff]
    %v2572 = vld [vmem:[%s4 + $0x120] sm:$0xff]
    %v2573 = vld [vmem:[%s4 + $0x128] sm:$0xff]
    %v2574 = vld [vmem:[%s4 + $0x130] sm:$0xff]
    %v2575 = vld [vmem:[%s4 + $0x138] sm:$0xff]
    %v2576 = vld [vmem:[%s4 + $0x140] sm:$0xff]
    %v2577 = vld [vmem:[%s4 + $0x148] sm:$0xff]
    %v2578 = vld [vmem:[%s4 + $0x150] sm:$0xff]
    %v2579 = vld [vmem:[%s4 + $0x158] sm:$0xff]
    %v2580 = vld [vmem:[%s4 + $0x160] sm:$0xff]
    %v2581 = vld [vmem:[%s4 + $0x168] sm:$0xff]
    %v2582 = vld [vmem:[%s4 + $0x170] sm:$0xff]
    %v2583 = vld [vmem:[%s4 + $0x178] sm:$0xff]
    %v2584 = vld [vmem:[%s4 + $0x180] sm:$0xff]
    %v2585 = vld [vmem:[%s4 + $0x188] sm:$0xff]
    %v2586 = vld [vmem:[%s4 + $0x190] sm:$0xff]
    %v2587 = vld [vmem:[%s4 + $0x198] sm:$0xff]
    %v2588 = vld [vmem:[%s4 + $0x1a0] sm:$0xff]
    %v2589 = vld [vmem:[%s4 + $0x1a8] sm:$0xff]
    %v2590 = vld [vmem:[%s4 + $0x1b0] sm:$0xff]
    %v2591 = vld [vmem:[%s4 + $0x1b8] sm:$0xff]
    %v2592 = vld [vmem:[%s4 + $0x1c0] sm:$0xff]
    %v2593 = vld [vmem:[%s4 + $0x1c8] sm:$0xff]
    %v2594 = vld [vmem:[%s4 + $0x1d0] sm:$0xff]
    %v2595 = vld [vmem:[%s4 + $0x1d8] sm:$0xff]
    %v2596 = vld [vmem:[%s4 + $0x1e0] sm:$0xff]
    %v2597 = vld [vmem:[%s4 + $0x1e8] sm:$0xff]
    %v2598 = vld [vmem:[%s4 + $0x1f0] sm:$0xff]
    %v2599 = vld [vmem:[%s4 + $0x1f8] sm:$0xff]
    %v2600 = vld [vmem:[%s4 + $0x200] sm:$0xff]
    %v2601 = vld [vmem:[%s4 + $0x208] sm:$0xff]
    %v2602 = vld [vmem:[%s4 + $0x210] sm:$0xff]
    %v2603 = vld [vmem:[%s4 + $0x218] sm:$0xff]
    %v2604 = vld [vmem:[%s4 + $0x220] sm:$0xff]
    %v2605 = vld [vmem:[%s4 + $0x228] sm:$0xff]
    %v2606 = vld [vmem:[%s4 + $0x230] sm:$0xff]
    %v2607 = vld [vmem:[%s4 + $0x238] sm:$0xff]
    %v2608 = vld [vmem:[%s4 + $0x240] sm:$0xff]
    %v2609 = vld [vmem:[%s4 + $0x248] sm:$0xff]
    %v2610 = vld [vmem:[%s4 + $0x250] sm:$0xff]
    %v2611 = vld [vmem:[%s4 + $0x258] sm:$0xff]
    %v2612 = vld [vmem:[%s4 + $0x260] sm:$0xff]
    %v2613 = vld [vmem:[%s4 + $0x268] sm:$0xff]
    %v2614 = vld [vmem:[%s4 + $0x270] sm:$0xff]
    %v2615 = vld [vmem:[%s4 + $0x278] sm:$0xff]
    %v2616 = vld [vmem:[%s3 + $0x9] sm:$0xff]
    %v2617 = vld [vmem:[%s3 + $0x11] sm:$0xff]
    %v2620 = vlaneseq
    %v2621 = vshrl.u32 %v2620, 7
    %v2622 = vsub.s32 0, %v2621
    %v2623 = vrot.slane %v2616, %v2622
    %v2624 = vlaneseq
    %v2625 = vshrl.u32 %v2624, 7
    %v2626 = vsub.s32 1, %v2625
    %v2627 = vrot.slane %v2616, %v2626
    %v2628 = vlaneseq
    %v2629 = vshrl.u32 %v2628, 7
    %v2630 = vsub.s32 2, %v2629
    %v2631 = vrot.slane %v2616, %v2630
    %v2632 = vlaneseq
    %v2633 = vshrl.u32 %v2632, 7
    %v2634 = vsub.s32 3, %v2633
    %v2635 = vrot.slane %v2616, %v2634
    %v2636 = vlaneseq
    %v2637 = vshrl.u32 %v2636, 7
    %v2638 = vsub.s32 4, %v2637
    %v2639 = vrot.slane %v2616, %v2638
    %v2640 = vlaneseq
    %v2641 = vshrl.u32 %v2640, 7
    %v2642 = vsub.s32 5, %v2641
    %v2643 = vrot.slane %v2616, %v2642
    %v2644 = vlaneseq
    %v2645 = vshrl.u32 %v2644, 7
    %v2646 = vsub.s32 6, %v2645
    %v2647 = vrot.slane %v2616, %v2646
    %v2648 = vlaneseq
    %v2649 = vshrl.u32 %v2648, 7
    %v2650 = vsub.s32 7, %v2649
    %v2651 = vrot.slane %v2616, %v2650
    %v2652 = vlaneseq
    %v2653 = vshrl.u32 %v2652, 7
    %v2654 = vsub.s32 0, %v2653
    %v2655 = vrot.slane %v2617, %v2654
    %v2656 = vlaneseq
    %v2657 = vshrl.u32 %v2656, 7
    %v2658 = vsub.s32 1, %v2657
    %v2659 = vrot.slane %v2617, %v2658
    %v2660 = vlaneseq
    %v2661 = vshrl.u32 %v2660, 7
    %v2662 = vsub.s32 2, %v2661
    %v2663 = vrot.slane %v2617, %v2662
    %v2664 = vlaneseq
    %v2665 = vshrl.u32 %v2664, 7
    %v2666 = vsub.s32 3, %v2665
    %v2667 = vrot.slane %v2617, %v2666
    %v2668 = vlaneseq
    %v2669 = vshrl.u32 %v2668, 7
    %v2670 = vsub.s32 4, %v2669
    %v2671 = vrot.slane %v2617, %v2670
    %v2672 = vlaneseq
    %v2673 = vshrl.u32 %v2672, 7
    %v2674 = vsub.s32 5, %v2673
    %v2675 = vrot.slane %v2617, %v2674
    %v2676 = vlaneseq
    %v2677 = vshrl.u32 %v2676, 7
    %v2678 = vsub.s32 6, %v2677
    %v2679 = vrot.slane %v2617, %v2678
    %v2680 = vlaneseq
    %v2681 = vshrl.u32 %v2680, 7
    %v2682 = vsub.s32 7, %v2681
    %v2683 = vrot.slane %v2617, %v2682
    %v2780 = vunpack.c.l.b16 %v2536
    %v2781 = vunpack.c.h.b16 %v2536
    %v2782 = vunpack.c.l.b16 %v2537
    %v2783 = vunpack.c.h.b16 %v2537
    %v2784 = vunpack.c.l.b16 %v2538
    %v2785 = vunpack.c.h.b16 %v2538
    %v2786 = vunpack.c.l.b16 %v2539
    %v2787 = vunpack.c.h.b16 %v2539
    %v2788 = vunpack.c.l.b16 %v2540
    %v2789 = vunpack.c.h.b16 %v2540
    %v2790 = vunpack.c.l.b16 %v2541
    %v2791 = vunpack.c.h.b16 %v2541
    %v2792 = vunpack.c.l.b16 %v2542
    %v2793 = vunpack.c.h.b16 %v2542
    %v2794 = vunpack.c.l.b16 %v2543
    %v2795 = vunpack.c.h.b16 %v2543
    %v2796 = vunpack.c.l.b16 %v2544
    %v2797 = vunpack.c.h.b16 %v2544
    %v2798 = vunpack.c.l.b16 %v2545
    %v2799 = vunpack.c.h.b16 %v2545
    %v2800 = vunpack.c.l.b16 %v2546
    %v2801 = vunpack.c.h.b16 %v2546
    %v2802 = vunpack.c.l.b16 %v2547
    %v2803 = vunpack.c.h.b16 %v2547
    %v2804 = vunpack.c.l.b16 %v2548
    %v2805 = vunpack.c.h.b16 %v2548
    %v2806 = vunpack.c.l.b16 %v2549
    %v2807 = vunpack.c.h.b16 %v2549
    %v2808 = vunpack.c.l.b16 %v2550
    %v2809 = vunpack.c.h.b16 %v2550
    %v2810 = vunpack.c.l.b16 %v2551
    %v2811 = vunpack.c.h.b16 %v2551
    %v2812 = vunpack.c.l.b16 %v2552
    %v2813 = vunpack.c.h.b16 %v2552
    %v2814 = vunpack.c.l.b16 %v2553
    %v2815 = vunpack.c.h.b16 %v2553
    %v2816 = vunpack.c.l.b16 %v2554
    %v2817 = vunpack.c.h.b16 %v2554
    %v2818 = vunpack.c.l.b16 %v2555
    %v2819 = vunpack.c.h.b16 %v2555
    %v2820 = vunpack.c.l.b16 %v2556
    %v2821 = vunpack.c.h.b16 %v2556
    %v2822 = vunpack.c.l.b16 %v2557
    %v2823 = vunpack.c.h.b16 %v2557
    %v2824 = vunpack.c.l.b16 %v2558
    %v2825 = vunpack.c.h.b16 %v2558
    %v2826 = vunpack.c.l.b16 %v2559
    %v2827 = vunpack.c.h.b16 %v2559
    %v2828 = vunpack.c.l.b16 %v2560
    %v2829 = vunpack.c.h.b16 %v2560
    %v2830 = vunpack.c.l.b16 %v2561
    %v2831 = vunpack.c.h.b16 %v2561
    %v2832 = vunpack.c.l.b16 %v2562
    %v2833 = vunpack.c.h.b16 %v2562
    %v2834 = vunpack.c.l.b16 %v2563
    %v2835 = vunpack.c.h.b16 %v2563
    %v2836 = vunpack.c.l.b16 %v2564
    %v2837 = vunpack.c.h.b16 %v2564
    %v2838 = vunpack.c.l.b16 %v2565
    %v2839 = vunpack.c.h.b16 %v2565
    %v2840 = vunpack.c.l.b16 %v2566
    %v2841 = vunpack.c.h.b16 %v2566
    %v2842 = vunpack.c.l.b16 %v2567
    %v2843 = vunpack.c.h.b16 %v2567
    %v2844 = vunpack.c.l.b16 %v2568
    %v2845 = vunpack.c.h.b16 %v2568
    %v2846 = vunpack.c.l.b16 %v2569
    %v2847 = vunpack.c.h.b16 %v2569
    %v2848 = vunpack.c.l.b16 %v2570
    %v2849 = vunpack.c.h.b16 %v2570
    %v2850 = vunpack.c.l.b16 %v2571
    %v2851 = vunpack.c.h.b16 %v2571
    %v2852 = vunpack.c.l.b16 %v2572
    %v2853 = vunpack.c.h.b16 %v2572
    %v2854 = vunpack.c.l.b16 %v2573
    %v2855 = vunpack.c.h.b16 %v2573
    %v2856 = vunpack.c.l.b16 %v2574
    %v2857 = vunpack.c.h.b16 %v2574
    %v2858 = vunpack.c.l.b16 %v2575
    %v2859 = vunpack.c.h.b16 %v2575
    %v2860 = vunpack.c.l.b16 %v2576
    %v2861 = vunpack.c.h.b16 %v2576
    %v2862 = vunpack.c.l.b16 %v2577
    %v2863 = vunpack.c.h.b16 %v2577
    %v2864 = vunpack.c.l.b16 %v2578
    %v2865 = vunpack.c.h.b16 %v2578
    %v2866 = vunpack.c.l.b16 %v2579
    %v2867 = vunpack.c.h.b16 %v2579
    %v2868 = vunpack.c.l.b16 %v2580
    %v2869 = vunpack.c.h.b16 %v2580
    %v2870 = vunpack.c.l.b16 %v2581
    %v2871 = vunpack.c.h.b16 %v2581
    %v2872 = vunpack.c.l.b16 %v2582
    %v2873 = vunpack.c.h.b16 %v2582
    %v2874 = vunpack.c.l.b16 %v2583
    %v2875 = vunpack.c.h.b16 %v2583
    %v2876 = vunpack.c.l.b16 %v2584
    %v2877 = vunpack.c.h.b16 %v2584
    %v2878 = vunpack.c.l.b16 %v2585
    %v2879 = vunpack.c.h.b16 %v2585
    %v2880 = vunpack.c.l.b16 %v2586
    %v2881 = vunpack.c.h.b16 %v2586
    %v2882 = vunpack.c.l.b16 %v2587
    %v2883 = vunpack.c.h.b16 %v2587
    %v2884 = vunpack.c.l.b16 %v2588
    %v2885 = vunpack.c.h.b16 %v2588
    %v2886 = vunpack.c.l.b16 %v2589
    %v2887 = vunpack.c.h.b16 %v2589
    %v2888 = vunpack.c.l.b16 %v2590
    %v2889 = vunpack.c.h.b16 %v2590
    %v2890 = vunpack.c.l.b16 %v2591
    %v2891 = vunpack.c.h.b16 %v2591
    %v2892 = vunpack.c.l.b16 %v2592
    %v2893 = vunpack.c.h.b16 %v2592
    %v2894 = vunpack.c.l.b16 %v2593
    %v2895 = vunpack.c.h.b16 %v2593
    %v2896 = vunpack.c.l.b16 %v2594
    %v2897 = vunpack.c.h.b16 %v2594
    %v2898 = vunpack.c.l.b16 %v2595
    %v2899 = vunpack.c.h.b16 %v2595
    %v2900 = vunpack.c.l.b16 %v2596
    %v2901 = vunpack.c.h.b16 %v2596
    %v2902 = vunpack.c.l.b16 %v2597
    %v2903 = vunpack.c.h.b16 %v2597
    %v2904 = vunpack.c.l.b16 %v2598
    %v2905 = vunpack.c.h.b16 %v2598
    %v2906 = vunpack.c.l.b16 %v2599
    %v2907 = vunpack.c.h.b16 %v2599
    %v2908 = vunpack.c.l.b16 %v2600
    %v2909 = vunpack.c.h.b16 %v2600
    %v2910 = vunpack.c.l.b16 %v2601
    %v2911 = vunpack.c.h.b16 %v2601
    %v2912 = vunpack.c.l.b16 %v2602
    %v2913 = vunpack.c.h.b16 %v2602
    %v2914 = vunpack.c.l.b16 %v2603
    %v2915 = vunpack.c.h.b16 %v2603
    %v2916 = vunpack.c.l.b16 %v2604
    %v2917 = vunpack.c.h.b16 %v2604
    %v2918 = vunpack.c.l.b16 %v2605
    %v2919 = vunpack.c.h.b16 %v2605
    %v2920 = vunpack.c.l.b16 %v2606
    %v2921 = vunpack.c.h.b16 %v2606
    %v2922 = vunpack.c.l.b16 %v2607
    %v2923 = vunpack.c.h.b16 %v2607
    %v2924 = vunpack.c.l.b16 %v2608
    %v2925 = vunpack.c.h.b16 %v2608
    %v2926 = vunpack.c.l.b16 %v2609
    %v2927 = vunpack.c.h.b16 %v2609
    %v2928 = vunpack.c.l.b16 %v2610
    %v2929 = vunpack.c.h.b16 %v2610
    %v2930 = vunpack.c.l.b16 %v2611
    %v2931 = vunpack.c.h.b16 %v2611
    %v2932 = vunpack.c.l.b16 %v2612
    %v2933 = vunpack.c.h.b16 %v2612
    %v2934 = vunpack.c.l.b16 %v2613
    %v2935 = vunpack.c.h.b16 %v2613
    %v2936 = vunpack.c.l.b16 %v2614
    %v2937 = vunpack.c.h.b16 %v2614
    %v2938 = vunpack.c.l.b16 %v2615
    %v2939 = vunpack.c.h.b16 %v2615
    %v2940 = vpack.c.b16 %v2796, %v2780
    %v2941 = vpack.c.b16 %v2797, %v2781
    %v2942 = vpack.c.b16 %v2798, %v2782
    %v2943 = vpack.c.b16 %v2799, %v2783
    %v2944 = vpack.c.b16 %v2800, %v2784
    %v2945 = vpack.c.b16 %v2801, %v2785
    %v2946 = vpack.c.b16 %v2802, %v2786
    %v2947 = vpack.c.b16 %v2803, %v2787
    %v2948 = vpack.c.b16 %v2804, %v2788
    %v2949 = vpack.c.b16 %v2805, %v2789
    %v2950 = vpack.c.b16 %v2806, %v2790
    %v2951 = vpack.c.b16 %v2807, %v2791
    %v2952 = vpack.c.b16 %v2808, %v2792
    %v2953 = vpack.c.b16 %v2809, %v2793
    %v2954 = vpack.c.b16 %v2810, %v2794
    %v2955 = vpack.c.b16 %v2811, %v2795
    %v2956 = vpack.c.b16 %v2828, %v2812
    %v2957 = vpack.c.b16 %v2829, %v2813
    %v2958 = vpack.c.b16 %v2830, %v2814
    %v2959 = vpack.c.b16 %v2831, %v2815
    %v2960 = vpack.c.b16 %v2832, %v2816
    %v2961 = vpack.c.b16 %v2833, %v2817
    %v2962 = vpack.c.b16 %v2834, %v2818
    %v2963 = vpack.c.b16 %v2835, %v2819
    %v2964 = vpack.c.b16 %v2836, %v2820
    %v2965 = vpack.c.b16 %v2837, %v2821
    %v2966 = vpack.c.b16 %v2838, %v2822
    %v2967 = vpack.c.b16 %v2839, %v2823
    %v2968 = vpack.c.b16 %v2840, %v2824
    %v2969 = vpack.c.b16 %v2841, %v2825
    %v2970 = vpack.c.b16 %v2842, %v2826
    %v2971 = vpack.c.b16 %v2843, %v2827
    %v2972 = vpack.c.b16 %v2860, %v2844
    %v2973 = vpack.c.b16 %v2861, %v2845
    %v2974 = vpack.c.b16 %v2862, %v2846
    %v2975 = vpack.c.b16 %v2863, %v2847
    %v2976 = vpack.c.b16 %v2864, %v2848
    %v2977 = vpack.c.b16 %v2865, %v2849
    %v2978 = vpack.c.b16 %v2866, %v2850
    %v2979 = vpack.c.b16 %v2867, %v2851
    %v2980 = vpack.c.b16 %v2868, %v2852
    %v2981 = vpack.c.b16 %v2869, %v2853
    %v2982 = vpack.c.b16 %v2870, %v2854
    %v2983 = vpack.c.b16 %v2871, %v2855
    %v2984 = vpack.c.b16 %v2872, %v2856
    %v2985 = vpack.c.b16 %v2873, %v2857
    %v2986 = vpack.c.b16 %v2874, %v2858
    %v2987 = vpack.c.b16 %v2875, %v2859
    %v2988 = vpack.c.b16 %v2892, %v2876
    %v2989 = vpack.c.b16 %v2893, %v2877
    %v2990 = vpack.c.b16 %v2894, %v2878
    %v2991 = vpack.c.b16 %v2895, %v2879
    %v2992 = vpack.c.b16 %v2896, %v2880
    %v2993 = vpack.c.b16 %v2897, %v2881
    %v2994 = vpack.c.b16 %v2898, %v2882
    %v2995 = vpack.c.b16 %v2899, %v2883
    %v2996 = vpack.c.b16 %v2900, %v2884
    %v2997 = vpack.c.b16 %v2901, %v2885
    %v2998 = vpack.c.b16 %v2902, %v2886
    %v2999 = vpack.c.b16 %v2903, %v2887
    %v3000 = vpack.c.b16 %v2904, %v2888
    %v3001 = vpack.c.b16 %v2905, %v2889
    %v3002 = vpack.c.b16 %v2906, %v2890
    %v3003 = vpack.c.b16 %v2907, %v2891
    %v3004 = vpack.c.b16 %v2924, %v2908
    %v3005 = vpack.c.b16 %v2925, %v2909
    %v3006 = vpack.c.b16 %v2926, %v2910
    %v3007 = vpack.c.b16 %v2927, %v2911
    %v3008 = vpack.c.b16 %v2928, %v2912
    %v3009 = vpack.c.b16 %v2929, %v2913
    %v3010 = vpack.c.b16 %v2930, %v2914
    %v3011 = vpack.c.b16 %v2931, %v2915
    %v3012 = vpack.c.b16 %v2932, %v2916
    %v3013 = vpack.c.b16 %v2933, %v2917
    %v3014 = vpack.c.b16 %v2934, %v2918
    %v3015 = vpack.c.b16 %v2935, %v2919
    %v3016 = vpack.c.b16 %v2936, %v2920
    %v3017 = vpack.c.b16 %v2937, %v2921
    %v3018 = vpack.c.b16 %v2938, %v2922
    %v3019 = vpack.c.b16 %v2939, %v2923
    %v3101 = vsel %vm675, %v2535, 0
    %3103 = vmatprep.subr.bf16.mxu0 0
    %3104 = vmatpush1.bf16.msra.mxu0 0
    %3105 = vmatprep.subr.bf16.mxu0 0
    %3106 = vmatpush1.bf16.msra.mxu0 0
    %3107 = vmatprep.subr.bf16.mxu0 0
    %3108 = vmatpush1.bf16.msra.mxu0 0
    %3109 = vmatprep.subr.bf16.mxu0 %v3005
    %3110 = vmatpush1.bf16.msra.mxu0 %v3004
    %3111 = vmatprep.subr.bf16.mxu0 %v2989
    %3112 = vmatpush1.bf16.msra.mxu0 %v2988
    %3113 = vmatprep.subr.bf16.mxu0 %v2973
    %3114 = vmatpush1.bf16.msra.mxu0 %v2972
    %3115 = vmatprep.subr.bf16.mxu0 %v2957
    %3116 = vmatpush1.bf16.msra.mxu0 %v2956
    %3117 = vmatprep.subr.bf16.mxu0 %v2941
    %3118 = vmatpush1.bf16.msra.mxu0 %v2940
    %3119 = vmatprep.subr.bf16.mxu0 0
    %3120 = vmatpush2.bf16.msra.mxu0 0
    %3121 = vmatprep.subr.bf16.mxu0 0
    %3122 = vmatpush2.bf16.msra.mxu0 0
    %3123 = vmatprep.subr.bf16.mxu0 0
    %3124 = vmatpush2.bf16.msra.mxu0 0
    %3125 = vmatprep.subr.bf16.mxu0 0
    %3126 = vmatpush2.bf16.msra.mxu0 0
    %3127 = vmatprep.subr.bf16.mxu0 0
    %3128 = vmatpush2.bf16.msra.mxu0 0
    %3129 = vmatprep.subr.bf16.mxu0 0
    %3130 = vmatpush2.bf16.msra.mxu0 0
    %3131 = vmatprep.subr.bf16.mxu0 0
    %3132 = vmatpush2.bf16.msra.mxu0 0
    %3133 = vmatprep.subr.bf16.mxu0 0
    %3134 = vmatpush2.bf16.msra.mxu0 0
    %3135 = vmatprep.mubr.bf16.mxu0 0
    %3136 = vmatmul.mubr.bf16.gmra.mxu0 %v3101
    %v3137 = vpop.f32.mrf.mxu0
    %v3138 = vadd.f32 %v2623, %v3137
    %v3139 = vpop.f32.mrf.mxu0
    %v3140 = vadd.f32 %v2627, %v3139
    %v3141 = vpop.f32.mrf.mxu0
    %v3142 = vadd.f32 %v2623, %v3141
    %v3143 = vpop.f32.mrf.mxu0
    %v3144 = vadd.f32 %v2627, %v3143
    %3145 = vdwg.mxu0
    %3146 = vmatprep.subr.bf16.mxu0 0
    %3147 = vmatpush1.bf16.msra.mxu0 0
    %3148 = vmatprep.subr.bf16.mxu0 0
    %3149 = vmatpush1.bf16.msra.mxu0 0
    %3150 = vmatprep.subr.bf16.mxu0 0
    %3151 = vmatpush1.bf16.msra.mxu0 0
    %3152 = vmatprep.subr.bf16.mxu0 %v3007
    %3153 = vmatpush1.bf16.msra.mxu0 %v3006
    %3154 = vmatprep.subr.bf16.mxu0 %v2991
    %3155 = vmatpush1.bf16.msra.mxu0 %v2990
    %3156 = vmatprep.subr.bf16.mxu0 %v2975
    %3157 = vmatpush1.bf16.msra.mxu0 %v2974
    %3158 = vmatprep.subr.bf16.mxu0 %v2959
    %3159 = vmatpush1.bf16.msra.mxu0 %v2958
    %3160 = vmatprep.subr.bf16.mxu0 %v2943
    %3161 = vmatpush1.bf16.msra.mxu0 %v2942
    %3162 = vmatprep.subr.bf16.mxu0 0
    %3163 = vmatpush2.bf16.msra.mxu0 0
    %3164 = vmatprep.subr.bf16.mxu0 0
    %3165 = vmatpush2.bf16.msra.mxu0 0
    %3166 = vmatprep.subr.bf16.mxu0 0
    %3167 = vmatpush2.bf16.msra.mxu0 0
    %3168 = vmatprep.subr.bf16.mxu0 0
    %3169 = vmatpush2.bf16.msra.mxu0 0
    %3170 = vmatprep.subr.bf16.mxu0 0
    %3171 = vmatpush2.bf16.msra.mxu0 0
    %3172 = vmatprep.subr.bf16.mxu0 0
    %3173 = vmatpush2.bf16.msra.mxu0 0
    %3174 = vmatprep.subr.bf16.mxu0 0
    %3175 = vmatpush2.bf16.msra.mxu0 0
    %3176 = vmatprep.subr.bf16.mxu0 0
    %3177 = vmatpush2.bf16.msra.mxu0 0
    %3178 = vmatprep.mubr.bf16.mxu0 0
    %3179 = vmatmul.mubr.bf16.gmra.mxu0 %v3101
    %v3180 = vpop.f32.mrf.mxu0
    %v3181 = vadd.f32 %v2631, %v3180
    %v3182 = vpop.f32.mrf.mxu0
    %v3183 = vadd.f32 %v2635, %v3182
    %v3184 = vpop.f32.mrf.mxu0
    %v3185 = vadd.f32 %v2631, %v3184
    %v3186 = vpop.f32.mrf.mxu0
    %v3187 = vadd.f32 %v2635, %v3186
    %3188 = vdwg.mxu0
    %3189 = vmatprep.subr.bf16.mxu0 0
    %3190 = vmatpush1.bf16.msra.mxu0 0
    %3191 = vmatprep.subr.bf16.mxu0 0
    %3192 = vmatpush1.bf16.msra.mxu0 0
    %3193 = vmatprep.subr.bf16.mxu0 0
    %3194 = vmatpush1.bf16.msra.mxu0 0
    %3195 = vmatprep.subr.bf16.mxu0 %v3009
    %3196 = vmatpush1.bf16.msra.mxu0 %v3008
    %3197 = vmatprep.subr.bf16.mxu0 %v2993
    %3198 = vmatpush1.bf16.msra.mxu0 %v2992
    %3199 = vmatprep.subr.bf16.mxu0 %v2977
    %3200 = vmatpush1.bf16.msra.mxu0 %v2976
    %3201 = vmatprep.subr.bf16.mxu0 %v2961
    %3202 = vmatpush1.bf16.msra.mxu0 %v2960
    %3203 = vmatprep.subr.bf16.mxu0 %v2945
    %3204 = vmatpush1.bf16.msra.mxu0 %v2944
    %3205 = vmatprep.subr.bf16.mxu0 0
    %3206 = vmatpush2.bf16.msra.mxu0 0
    %3207 = vmatprep.subr.bf16.mxu0 0
    %3208 = vmatpush2.bf16.msra.mxu0 0
    %3209 = vmatprep.subr.bf16.mxu0 0
    %3210 = vmatpush2.bf16.msra.mxu0 0
    %3211 = vmatprep.subr.bf16.mxu0 0
    %3212 = vmatpush2.bf16.msra.mxu0 0
    %3213 = vmatprep.subr.bf16.mxu0 0
    %3214 = vmatpush2.bf16.msra.mxu0 0
    %3215 = vmatprep.subr.bf16.mxu0 0
    %3216 = vmatpush2.bf16.msra.mxu0 0
    %3217 = vmatprep.subr.bf16.mxu0 0
    %3218 = vmatpush2.bf16.msra.mxu0 0
    %3219 = vmatprep.subr.bf16.mxu0 0
    %3220 = vmatpush2.bf16.msra.mxu0 0
    %3221 = vmatprep.mubr.bf16.mxu0 0
    %3222 = vmatmul.mubr.bf16.gmra.mxu0 %v3101
    %v3223 = vpop.f32.mrf.mxu0
    %v3224 = vadd.f32 %v2639, %v3223
    %v3225 = vpop.f32.mrf.mxu0
    %v3226 = vadd.f32 %v2643, %v3225
    %v3227 = vpop.f32.mrf.mxu0
    %v3228 = vadd.f32 %v2639, %v3227
    %v3229 = vpop.f32.mrf.mxu0
    %v3230 = vadd.f32 %v2643, %v3229
    %3231 = vdwg.mxu0
    %3232 = vmatprep.subr.bf16.mxu0 0
    %3233 = vmatpush1.bf16.msra.mxu0 0
    %3234 = vmatprep.subr.bf16.mxu0 0
    %3235 = vmatpush1.bf16.msra.mxu0 0
    %3236 = vmatprep.subr.bf16.mxu0 0
    %3237 = vmatpush1.bf16.msra.mxu0 0
    %3238 = vmatprep.subr.bf16.mxu0 %v3011
    %3239 = vmatpush1.bf16.msra.mxu0 %v3010
    %3240 = vmatprep.subr.bf16.mxu0 %v2995
    %3241 = vmatpush1.bf16.msra.mxu0 %v2994
    %3242 = vmatprep.subr.bf16.mxu0 %v2979
    %3243 = vmatpush1.bf16.msra.mxu0 %v2978
    %3244 = vmatprep.subr.bf16.mxu0 %v2963
    %3245 = vmatpush1.bf16.msra.mxu0 %v2962
    %3246 = vmatprep.subr.bf16.mxu0 %v2947
    %3247 = vmatpush1.bf16.msra.mxu0 %v2946
    %3248 = vmatprep.subr.bf16.mxu0 0
    %3249 = vmatpush2.bf16.msra.mxu0 0
    %3250 = vmatprep.subr.bf16.mxu0 0
    %3251 = vmatpush2.bf16.msra.mxu0 0
    %3252 = vmatprep.subr.bf16.mxu0 0
    %3253 = vmatpush2.bf16.msra.mxu0 0
    %3254 = vmatprep.subr.bf16.mxu0 0
    %3255 = vmatpush2.bf16.msra.mxu0 0
    %3256 = vmatprep.subr.bf16.mxu0 0
    %3257 = vmatpush2.bf16.msra.mxu0 0
    %3258 = vmatprep.subr.bf16.mxu0 0
    %3259 = vmatpush2.bf16.msra.mxu0 0
    %3260 = vmatprep.subr.bf16.mxu0 0
    %3261 = vmatpush2.bf16.msra.mxu0 0
    %3262 = vmatprep.subr.bf16.mxu0 0
    %3263 = vmatpush2.bf16.msra.mxu0 0
    %3264 = vmatprep.mubr.bf16.mxu0 0
    %3265 = vmatmul.mubr.bf16.gmra.mxu0 %v3101
    %v3266 = vpop.f32.mrf.mxu0
    %v3267 = vadd.f32 %v2647, %v3266
    %v3268 = vpop.f32.mrf.mxu0
    %v3269 = vadd.f32 %v2651, %v3268
    %v3270 = vpop.f32.mrf.mxu0
    %v3271 = vadd.f32 %v2647, %v3270
    %v3272 = vpop.f32.mrf.mxu0
    %v3273 = vadd.f32 %v2651, %v3272
    %3274 = vdwg.mxu0
    %3275 = vmatprep.subr.bf16.mxu0 0
    %3276 = vmatpush1.bf16.msra.mxu0 0
    %3277 = vmatprep.subr.bf16.mxu0 0
    %3278 = vmatpush1.bf16.msra.mxu0 0
    %3279 = vmatprep.subr.bf16.mxu0 0
    %3280 = vmatpush1.bf16.msra.mxu0 0
    %3281 = vmatprep.subr.bf16.mxu0 %v3013
    %3282 = vmatpush1.bf16.msra.mxu0 %v3012
    %3283 = vmatprep.subr.bf16.mxu0 %v2997
    %3284 = vmatpush1.bf16.msra.mxu0 %v2996
    %3285 = vmatprep.subr.bf16.mxu0 %v2981
    %3286 = vmatpush1.bf16.msra.mxu0 %v2980
    %3287 = vmatprep.subr.bf16.mxu0 %v2965
    %3288 = vmatpush1.bf16.msra.mxu0 %v2964
    %3289 = vmatprep.subr.bf16.mxu0 %v2949
    %3290 = vmatpush1.bf16.msra.mxu0 %v2948
    %3291 = vmatprep.subr.bf16.mxu0 0
    %3292 = vmatpush2.bf16.msra.mxu0 0
    %3293 = vmatprep.subr.bf16.mxu0 0
    %3294 = vmatpush2.bf16.msra.mxu0 0
    %3295 = vmatprep.subr.bf16.mxu0 0
    %3296 = vmatpush2.bf16.msra.mxu0 0
    %3297 = vmatprep.subr.bf16.mxu0 0
    %3298 = vmatpush2.bf16.msra.mxu0 0
    %3299 = vmatprep.subr.bf16.mxu0 0
    %3300 = vmatpush2.bf16.msra.mxu0 0
    %3301 = vmatprep.subr.bf16.mxu0 0
    %3302 = vmatpush2.bf16.msra.mxu0 0
    %3303 = vmatprep.subr.bf16.mxu0 0
    %3304 = vmatpush2.bf16.msra.mxu0 0
    %3305 = vmatprep.subr.bf16.mxu0 0
    %3306 = vmatpush2.bf16.msra.mxu0 0
    %3307 = vmatprep.mubr.bf16.mxu0 0
    %3308 = vmatmul.mubr.bf16.gmra.mxu0 %v3101
    %v3309 = vpop.f32.mrf.mxu0
    %v3310 = vadd.f32 %v2655, %v3309
    %v3311 = vpop.f32.mrf.mxu0
    %v3312 = vadd.f32 %v2659, %v3311
    %v3313 = vpop.f32.mrf.mxu0
    %v3314 = vadd.f32 %v2655, %v3313
    %v3315 = vpop.f32.mrf.mxu0
    %v3316 = vadd.f32 %v2659, %v3315
    %3317 = vdwg.mxu0
    %3318 = vmatprep.subr.bf16.mxu0 0
    %3319 = vmatpush1.bf16.msra.mxu0 0
    %3320 = vmatprep.subr.bf16.mxu0 0
    %3321 = vmatpush1.bf16.msra.mxu0 0
    %3322 = vmatprep.subr.bf16.mxu0 0
    %3323 = vmatpush1.bf16.msra.mxu0 0
    %3324 = vmatprep.subr.bf16.mxu0 %v3015
    %3325 = vmatpush1.bf16.msra.mxu0 %v3014
    %3326 = vmatprep.subr.bf16.mxu0 %v2999
    %3327 = vmatpush1.bf16.msra.mxu0 %v2998
    %3328 = vmatprep.subr.bf16.mxu0 %v2983
    %3329 = vmatpush1.bf16.msra.mxu0 %v2982
    %3330 = vmatprep.subr.bf16.mxu0 %v2967
    %3331 = vmatpush1.bf16.msra.mxu0 %v2966
    %3332 = vmatprep.subr.bf16.mxu0 %v2951
    %3333 = vmatpush1.bf16.msra.mxu0 %v2950
    %3334 = vmatprep.subr.bf16.mxu0 0
    %3335 = vmatpush2.bf16.msra.mxu0 0
    %3336 = vmatprep.subr.bf16.mxu0 0
    %3337 = vmatpush2.bf16.msra.mxu0 0
    %3338 = vmatprep.subr.bf16.mxu0 0
    %3339 = vmatpush2.bf16.msra.mxu0 0
    %3340 = vmatprep.subr.bf16.mxu0 0
    %3341 = vmatpush2.bf16.msra.mxu0 0
    %3342 = vmatprep.subr.bf16.mxu0 0
    %3343 = vmatpush2.bf16.msra.mxu0 0
    %3344 = vmatprep.subr.bf16.mxu0 0
    %3345 = vmatpush2.bf16.msra.mxu0 0
    %3346 = vmatprep.subr.bf16.mxu0 0
    %3347 = vmatpush2.bf16.msra.mxu0 0
    %3348 = vmatprep.subr.bf16.mxu0 0
    %3349 = vmatpush2.bf16.msra.mxu0 0
    %3350 = vmatprep.mubr.bf16.mxu0 0
    %3351 = vmatmul.mubr.bf16.gmra.mxu0 %v3101
    %v3352 = vpop.f32.mrf.mxu0
    %v3353 = vadd.f32 %v2663, %v3352
    %v3354 = vpop.f32.mrf.mxu0
    %v3355 = vadd.f32 %v2667, %v3354
    %v3356 = vpop.f32.mrf.mxu0
    %v3357 = vadd.f32 %v2663, %v3356
    %v3358 = vpop.f32.mrf.mxu0
    %v3359 = vadd.f32 %v2667, %v3358
    %3360 = vdwg.mxu0
    %3361 = vmatprep.subr.bf16.mxu0 0
    %3362 = vmatpush1.bf16.msra.mxu0 0
    %3363 = vmatprep.subr.bf16.mxu0 0
    %3364 = vmatpush1.bf16.msra.mxu0 0
    %3365 = vmatprep.subr.bf16.mxu0 0
    %3366 = vmatpush1.bf16.msra.mxu0 0
    %3367 = vmatprep.subr.bf16.mxu0 %v3017
    %3368 = vmatpush1.bf16.msra.mxu0 %v3016
    %3369 = vmatprep.subr.bf16.mxu0 %v3001
    %3370 = vmatpush1.bf16.msra.mxu0 %v3000
    %3371 = vmatprep.subr.bf16.mxu0 %v2985
    %3372 = vmatpush1.bf16.msra.mxu0 %v2984
    %3373 = vmatprep.subr.bf16.mxu0 %v2969
    %3374 = vmatpush1.bf16.msra.mxu0 %v2968
    %3375 = vmatprep.subr.bf16.mxu0 %v2953
    %3376 = vmatpush1.bf16.msra.mxu0 %v2952
    %3377 = vmatprep.subr.bf16.mxu0 0
    %3378 = vmatpush2.bf16.msra.mxu0 0
    %3379 = vmatprep.subr.bf16.mxu0 0
    %3380 = vmatpush2.bf16.msra.mxu0 0
    %3381 = vmatprep.subr.bf16.mxu0 0
    %3382 = vmatpush2.bf16.msra.mxu0 0
    %3383 = vmatprep.subr.bf16.mxu0 0
    %3384 = vmatpush2.bf16.msra.mxu0 0
    %3385 = vmatprep.subr.bf16.mxu0 0
    %3386 = vmatpush2.bf16.msra.mxu0 0
    %3387 = vmatprep.subr.bf16.mxu0 0
    %3388 = vmatpush2.bf16.msra.mxu0 0
    %3389 = vmatprep.subr.bf16.mxu0 0
    %3390 = vmatpush2.bf16.msra.mxu0 0
    %3391 = vmatprep.subr.bf16.mxu0 0
    %3392 = vmatpush2.bf16.msra.mxu0 0
    %3393 = vmatprep.mubr.bf16.mxu0 0
    %3394 = vmatmul.mubr.bf16.gmra.mxu0 %v3101
    %v3395 = vpop.f32.mrf.mxu0
    %v3396 = vadd.f32 %v2671, %v3395
    %v3397 = vpop.f32.mrf.mxu0
    %v3398 = vadd.f32 %v2675, %v3397
    %v3399 = vpop.f32.mrf.mxu0
    %v3400 = vadd.f32 %v2671, %v3399
    %v3401 = vpop.f32.mrf.mxu0
    %v3402 = vadd.f32 %v2675, %v3401
    %3403 = vdwg.mxu0
    %3404 = vmatprep.subr.bf16.mxu0 0
    %3405 = vmatpush1.bf16.msra.mxu0 0
    %3406 = vmatprep.subr.bf16.mxu0 0
    %3407 = vmatpush1.bf16.msra.mxu0 0
    %3408 = vmatprep.subr.bf16.mxu0 0
    %3409 = vmatpush1.bf16.msra.mxu0 0
    %3410 = vmatprep.subr.bf16.mxu0 %v3019
    %3411 = vmatpush1.bf16.msra.mxu0 %v3018
    %3412 = vmatprep.subr.bf16.mxu0 %v3003
    %3413 = vmatpush1.bf16.msra.mxu0 %v3002
    %3414 = vmatprep.subr.bf16.mxu0 %v2987
    %3415 = vmatpush1.bf16.msra.mxu0 %v2986
    %3416 = vmatprep.subr.bf16.mxu0 %v2971
    %3417 = vmatpush1.bf16.msra.mxu0 %v2970
    %3418 = vmatprep.subr.bf16.mxu0 %v2955
    %3419 = vmatpush1.bf16.msra.mxu0 %v2954
    %3420 = vmatprep.subr.bf16.mxu0 0
    %3421 = vmatpush2.bf16.msra.mxu0 0
    %3422 = vmatprep.subr.bf16.mxu0 0
    %3423 = vmatpush2.bf16.msra.mxu0 0
    %3424 = vmatprep.subr.bf16.mxu0 0
    %3425 = vmatpush2.bf16.msra.mxu0 0
    %3426 = vmatprep.subr.bf16.mxu0 0
    %3427 = vmatpush2.bf16.msra.mxu0 0
    %3428 = vmatprep.subr.bf16.mxu0 0
    %3429 = vmatpush2.bf16.msra.mxu0 0
    %3430 = vmatprep.subr.bf16.mxu0 0
    %3431 = vmatpush2.bf16.msra.mxu0 0
    %3432 = vmatprep.subr.bf16.mxu0 0
    %3433 = vmatpush2.bf16.msra.mxu0 0
    %3434 = vmatprep.subr.bf16.mxu0 0
    %3435 = vmatpush2.bf16.msra.mxu0 0
    %3436 = vmatprep.mubr.bf16.mxu0 0
    %3437 = vmatmul.mubr.bf16.gmra.mxu0 %v3101
    %v3438 = vpop.f32.mrf.mxu0
    %v3439 = vadd.f32 %v2679, %v3438
    %v3440 = vpop.f32.mrf.mxu0
    %v3441 = vadd.f32 %v2683, %v3440
    %v3442 = vpop.f32.mrf.mxu0
    %v3443 = vadd.f32 %v2679, %v3442
    %v3444 = vpop.f32.mrf.mxu0
    %v3445 = vadd.f32 %v2683, %v3444
    %3446 = vdwg.mxu0
    %v3447 = vmax.f32 %v3138, 0.0
    %v3448 = vmax.f32 %v3140, 0.0
    %v3449 = vmax.f32 %v3181, 0.0
    %v3450 = vmax.f32 %v3183, 0.0
    %v3451 = vmax.f32 %v3224, 0.0
    %v3452 = vmax.f32 %v3226, 0.0
    %v3453 = vmax.f32 %v3267, 0.0
    %v3454 = vmax.f32 %v3269, 0.0
    %v3455 = vmax.f32 %v3310, 0.0
    %v3456 = vmax.f32 %v3312, 0.0
    %v3457 = vmax.f32 %v3353, 0.0
    %v3458 = vmax.f32 %v3355, 0.0
    %v3459 = vmax.f32 %v3396, 0.0
    %v3460 = vmax.f32 %v3398, 0.0
    %v3461 = vmax.f32 %v3439, 0.0
    %v3462 = vmax.f32 %v3441, 0.0
    %v3463 = vmax.f32 %v3142, 0.0
    %v3464 = vmax.f32 %v3144, 0.0
    %v3465 = vmax.f32 %v3185, 0.0
    %v3466 = vmax.f32 %v3187, 0.0
    %v3467 = vmax.f32 %v3228, 0.0
    %v3468 = vmax.f32 %v3230, 0.0
    %v3469 = vmax.f32 %v3271, 0.0
    %v3470 = vmax.f32 %v3273, 0.0
    %v3471 = vmax.f32 %v3314, 0.0
    %v3472 = vmax.f32 %v3316, 0.0
    %v3473 = vmax.f32 %v3357, 0.0
    %v3474 = vmax.f32 %v3359, 0.0
    %v3475 = vmax.f32 %v3400, 0.0
    %v3476 = vmax.f32 %v3402, 0.0
    %v3477 = vmax.f32 %v3443, 0.0
    %v3478 = vmax.f32 %v3445, 0.0
    %v3479 = vpack.c.bf16 %v3463, %v3447
    %v3480 = vpack.c.bf16 %v3464, %v3448
    %v3481 = vpack.c.bf16 %v3465, %v3449
    %v3482 = vpack.c.bf16 %v3466, %v3450
    %v3483 = vpack.c.bf16 %v3467, %v3451
    %v3484 = vpack.c.bf16 %v3468, %v3452
    %v3485 = vpack.c.bf16 %v3469, %v3453
    %v3486 = vpack.c.bf16 %v3470, %v3454
    %v3487 = vpack.c.bf16 %v3471, %v3455
    %v3488 = vpack.c.bf16 %v3472, %v3456
    %v3489 = vpack.c.bf16 %v3473, %v3457
    %v3490 = vpack.c.bf16 %v3474, %v3458
    %v3491 = vpack.c.bf16 %v3475, %v3459
    %v3492 = vpack.c.bf16 %v3476, %v3460
    %v3493 = vpack.c.bf16 %v3477, %v3461
    %v3494 = vpack.c.bf16 %v3478, %v3462
    %v3495 = vld [vmem:[%s5] sm:$0xf]
    %v3496 = vld [vmem:[%s5 + $0x4] sm:$0xf]
    %v3497 = vld [vmem:[%s5 + $0x8] sm:$0xf]
    %v3498 = vld [vmem:[%s5 + $0xc] sm:$0xf]
    %v3499 = vld [vmem:[%s5 + $0x10] sm:$0xf]
    %v3500 = vld [vmem:[%s5 + $0x14] sm:$0xf]
    %v3501 = vld [vmem:[%s5 + $0x18] sm:$0xf]
    %v3502 = vld [vmem:[%s5 + $0x1c] sm:$0xf]
    %v3503 = vld [vmem:[%s5 + $0x20] sm:$0xf]
    %v3504 = vld [vmem:[%s5 + $0x24] sm:$0xf]
    %v3505 = vld [vmem:[%s5 + $0x28] sm:$0xf]
    %v3506 = vld [vmem:[%s5 + $0x2c] sm:$0xf]
    %v3507 = vld [vmem:[%s5 + $0x30] sm:$0xf]
    %v3508 = vld [vmem:[%s5 + $0x34] sm:$0xf]
    %v3509 = vld [vmem:[%s5 + $0x38] sm:$0xf]
    %v3510 = vld [vmem:[%s5 + $0x3c] sm:$0xf]
    %v3511 = vld [vmem:[%s5 + $0x40] sm:$0xf]
    %v3512 = vld [vmem:[%s5 + $0x44] sm:$0xf]
    %v3513 = vld [vmem:[%s5 + $0x48] sm:$0xf]
    %v3514 = vld [vmem:[%s5 + $0x4c] sm:$0xf]
    %v3515 = vld [vmem:[%s5 + $0x50] sm:$0xf]
    %v3516 = vld [vmem:[%s5 + $0x54] sm:$0xf]
    %v3517 = vld [vmem:[%s5 + $0x58] sm:$0xf]
    %v3518 = vld [vmem:[%s5 + $0x5c] sm:$0xf]
    %v3519 = vld [vmem:[%s5 + $0x60] sm:$0xf]
    %v3520 = vld [vmem:[%s5 + $0x64] sm:$0xf]
    %v3521 = vld [vmem:[%s5 + $0x68] sm:$0xf]
    %v3522 = vld [vmem:[%s5 + $0x6c] sm:$0xf]
    %v3523 = vld [vmem:[%s5 + $0x70] sm:$0xf]
    %v3524 = vld [vmem:[%s5 + $0x74] sm:$0xf]
    %v3525 = vld [vmem:[%s5 + $0x78] sm:$0xf]
    %v3526 = vld [vmem:[%s5 + $0x7c] sm:$0xf]
    %v3527 = vld [vmem:[%s5 + $0x80] sm:$0xf]
    %v3528 = vld [vmem:[%s5 + $0x84] sm:$0xf]
    %v3529 = vld [vmem:[%s5 + $0x88] sm:$0xf]
    %v3530 = vld [vmem:[%s5 + $0x8c] sm:$0xf]
    %v3531 = vld [vmem:[%s5 + $0x90] sm:$0xf]
    %v3532 = vld [vmem:[%s5 + $0x94] sm:$0xf]
    %v3533 = vld [vmem:[%s5 + $0x98] sm:$0xf]
    %v3534 = vld [vmem:[%s5 + $0x9c] sm:$0xf]
    %v3535 = vld [vmem:[%s5 + $0xa0] sm:$0xf]
    %v3536 = vld [vmem:[%s5 + $0xa4] sm:$0xf]
    %v3537 = vld [vmem:[%s5 + $0xa8] sm:$0xf]
    %v3538 = vld [vmem:[%s5 + $0xac] sm:$0xf]
    %v3539 = vld [vmem:[%s5 + $0xb0] sm:$0xf]
    %v3540 = vld [vmem:[%s5 + $0xb4] sm:$0xf]
    %v3541 = vld [vmem:[%s5 + $0xb8] sm:$0xf]
    %v3542 = vld [vmem:[%s5 + $0xbc] sm:$0xf]
    %v3543 = vld [vmem:[%s5 + $0xc0] sm:$0xf]
    %v3544 = vld [vmem:[%s5 + $0xc4] sm:$0xf]
    %v3545 = vld [vmem:[%s5 + $0xc8] sm:$0xf]
    %v3546 = vld [vmem:[%s5 + $0xcc] sm:$0xf]
    %v3547 = vld [vmem:[%s5 + $0xd0] sm:$0xf]
    %v3548 = vld [vmem:[%s5 + $0xd4] sm:$0xf]
    %v3549 = vld [vmem:[%s5 + $0xd8] sm:$0xf]
    %v3550 = vld [vmem:[%s5 + $0xdc] sm:$0xf]
    %v3551 = vld [vmem:[%s5 + $0xe0] sm:$0xf]
    %v3552 = vld [vmem:[%s5 + $0xe4] sm:$0xf]
    %v3553 = vld [vmem:[%s5 + $0xe8] sm:$0xf]
    %v3554 = vld [vmem:[%s5 + $0xec] sm:$0xf]
    %v3555 = vld [vmem:[%s5 + $0xf0] sm:$0xf]
    %v3556 = vld [vmem:[%s5 + $0xf4] sm:$0xf]
    %v3557 = vld [vmem:[%s5 + $0xf8] sm:$0xf]
    %v3558 = vld [vmem:[%s5 + $0xfc] sm:$0xf]
    %v3559 = vld [vmem:[%s5 + $0x100] sm:$0xf]
    %v3560 = vld [vmem:[%s5 + $0x104] sm:$0xf]
    %v3561 = vld [vmem:[%s5 + $0x108] sm:$0xf]
    %v3562 = vld [vmem:[%s5 + $0x10c] sm:$0xf]
    %v3563 = vld [vmem:[%s5 + $0x110] sm:$0xf]
    %v3564 = vld [vmem:[%s5 + $0x114] sm:$0xf]
    %v3565 = vld [vmem:[%s5 + $0x118] sm:$0xf]
    %v3566 = vld [vmem:[%s5 + $0x11c] sm:$0xf]
    %v3567 = vld [vmem:[%s5 + $0x120] sm:$0xf]
    %v3568 = vld [vmem:[%s5 + $0x124] sm:$0xf]
    %v3569 = vld [vmem:[%s5 + $0x128] sm:$0xf]
    %v3570 = vld [vmem:[%s5 + $0x12c] sm:$0xf]
    %v3571 = vld [vmem:[%s5 + $0x130] sm:$0xf]
    %v3572 = vld [vmem:[%s5 + $0x134] sm:$0xf]
    %v3573 = vld [vmem:[%s5 + $0x138] sm:$0xf]
    %v3574 = vld [vmem:[%s5 + $0x13c] sm:$0xf]
    %v3575 = vld [vmem:[%s5 + $0x140] sm:$0xf]
    %v3576 = vld [vmem:[%s5 + $0x144] sm:$0xf]
    %v3577 = vld [vmem:[%s5 + $0x148] sm:$0xf]
    %v3578 = vld [vmem:[%s5 + $0x14c] sm:$0xf]
    %v3579 = vld [vmem:[%s5 + $0x150] sm:$0xf]
    %v3580 = vld [vmem:[%s5 + $0x154] sm:$0xf]
    %v3581 = vld [vmem:[%s5 + $0x158] sm:$0xf]
    %v3582 = vld [vmem:[%s5 + $0x15c] sm:$0xf]
    %v3583 = vld [vmem:[%s5 + $0x160] sm:$0xf]
    %v3584 = vld [vmem:[%s5 + $0x164] sm:$0xf]
    %v3585 = vld [vmem:[%s5 + $0x168] sm:$0xf]
    %v3586 = vld [vmem:[%s5 + $0x16c] sm:$0xf]
    %v3587 = vld [vmem:[%s5 + $0x170] sm:$0xf]
    %v3588 = vld [vmem:[%s5 + $0x174] sm:$0xf]
    %v3589 = vld [vmem:[%s5 + $0x178] sm:$0xf]
    %v3590 = vld [vmem:[%s5 + $0x17c] sm:$0xf]
    %v3591 = vld [vmem:[%s5 + $0x180] sm:$0xf]
    %v3592 = vld [vmem:[%s5 + $0x184] sm:$0xf]
    %v3593 = vld [vmem:[%s5 + $0x188] sm:$0xf]
    %v3594 = vld [vmem:[%s5 + $0x18c] sm:$0xf]
    %v3595 = vld [vmem:[%s5 + $0x190] sm:$0xf]
    %v3596 = vld [vmem:[%s5 + $0x194] sm:$0xf]
    %v3597 = vld [vmem:[%s5 + $0x198] sm:$0xf]
    %v3598 = vld [vmem:[%s5 + $0x19c] sm:$0xf]
    %v3599 = vld [vmem:[%s5 + $0x1a0] sm:$0xf]
    %v3600 = vld [vmem:[%s5 + $0x1a4] sm:$0xf]
    %v3601 = vld [vmem:[%s5 + $0x1a8] sm:$0xf]
    %v3602 = vld [vmem:[%s5 + $0x1ac] sm:$0xf]
    %v3603 = vld [vmem:[%s5 + $0x1b0] sm:$0xf]
    %v3604 = vld [vmem:[%s5 + $0x1b4] sm:$0xf]
    %v3605 = vld [vmem:[%s5 + $0x1b8] sm:$0xf]
    %v3606 = vld [vmem:[%s5 + $0x1bc] sm:$0xf]
    %v3607 = vld [vmem:[%s5 + $0x1c0] sm:$0xf]
    %v3608 = vld [vmem:[%s5 + $0x1c4] sm:$0xf]
    %v3609 = vld [vmem:[%s5 + $0x1c8] sm:$0xf]
    %v3610 = vld [vmem:[%s5 + $0x1cc] sm:$0xf]
    %v3611 = vld [vmem:[%s5 + $0x1d0] sm:$0xf]
    %v3612 = vld [vmem:[%s5 + $0x1d4] sm:$0xf]
    %v3613 = vld [vmem:[%s5 + $0x1d8] sm:$0xf]
    %v3614 = vld [vmem:[%s5 + $0x1dc] sm:$0xf]
    %v3615 = vld [vmem:[%s5 + $0x1e0] sm:$0xf]
    %v3616 = vld [vmem:[%s5 + $0x1e4] sm:$0xf]
    %v3617 = vld [vmem:[%s5 + $0x1e8] sm:$0xf]
    %v3618 = vld [vmem:[%s5 + $0x1ec] sm:$0xf]
    %v3619 = vld [vmem:[%s5 + $0x1f0] sm:$0xf]
    %v3620 = vld [vmem:[%s5 + $0x1f4] sm:$0xf]
    %v3621 = vld [vmem:[%s5 + $0x1f8] sm:$0xf]
    %v3622 = vld [vmem:[%s5 + $0x1fc] sm:$0xf]
    %v3623 = vld [vmem:[%s5 + $0x200] sm:$0xf]
    %v3624 = vld [vmem:[%s5 + $0x204] sm:$0xf]
    %v3625 = vld [vmem:[%s5 + $0x208] sm:$0xf]
    %v3626 = vld [vmem:[%s5 + $0x20c] sm:$0xf]
    %v3627 = vld [vmem:[%s5 + $0x210] sm:$0xf]
    %v3628 = vld [vmem:[%s5 + $0x214] sm:$0xf]
    %v3629 = vld [vmem:[%s5 + $0x218] sm:$0xf]
    %v3630 = vld [vmem:[%s5 + $0x21c] sm:$0xf]
    %v3631 = vld [vmem:[%s5 + $0x220] sm:$0xf]
    %v3632 = vld [vmem:[%s5 + $0x224] sm:$0xf]
    %v3633 = vld [vmem:[%s5 + $0x228] sm:$0xf]
    %v3634 = vld [vmem:[%s5 + $0x22c] sm:$0xf]
    %v3635 = vld [vmem:[%s5 + $0x230] sm:$0xf]
    %v3636 = vld [vmem:[%s5 + $0x234] sm:$0xf]
    %v3637 = vld [vmem:[%s5 + $0x238] sm:$0xf]
    %v3638 = vld [vmem:[%s5 + $0x23c] sm:$0xf]
    %v3639 = vld [vmem:[%s5 + $0x240] sm:$0xf]
    %v3640 = vld [vmem:[%s5 + $0x244] sm:$0xf]
    %v3641 = vld [vmem:[%s5 + $0x248] sm:$0xf]
    %v3642 = vld [vmem:[%s5 + $0x24c] sm:$0xf]
    %v3643 = vld [vmem:[%s5 + $0x250] sm:$0xf]
    %v3644 = vld [vmem:[%s5 + $0x254] sm:$0xf]
    %v3645 = vld [vmem:[%s5 + $0x258] sm:$0xf]
    %v3646 = vld [vmem:[%s5 + $0x25c] sm:$0xf]
    %v3647 = vld [vmem:[%s5 + $0x260] sm:$0xf]
    %v3648 = vld [vmem:[%s5 + $0x264] sm:$0xf]
    %v3649 = vld [vmem:[%s5 + $0x268] sm:$0xf]
    %v3650 = vld [vmem:[%s5 + $0x26c] sm:$0xf]
    %v3651 = vld [vmem:[%s5 + $0x270] sm:$0xf]
    %v3652 = vld [vmem:[%s5 + $0x274] sm:$0xf]
    %v3653 = vld [vmem:[%s5 + $0x278] sm:$0xf]
    %v3654 = vld [vmem:[%s5 + $0x27c] sm:$0xf]
    %v3655 = vld [vmem:[%s5 + $0x280] sm:$0xf]
    %v3656 = vld [vmem:[%s5 + $0x284] sm:$0xf]
    %v3657 = vld [vmem:[%s5 + $0x288] sm:$0xf]
    %v3658 = vld [vmem:[%s5 + $0x28c] sm:$0xf]
    %v3659 = vld [vmem:[%s5 + $0x290] sm:$0xf]
    %v3660 = vld [vmem:[%s5 + $0x294] sm:$0xf]
    %v3661 = vld [vmem:[%s5 + $0x298] sm:$0xf]
    %v3662 = vld [vmem:[%s5 + $0x29c] sm:$0xf]
    %v3663 = vld [vmem:[%s5 + $0x2a0] sm:$0xf]
    %v3664 = vld [vmem:[%s5 + $0x2a4] sm:$0xf]
    %v3665 = vld [vmem:[%s5 + $0x2a8] sm:$0xf]
    %v3666 = vld [vmem:[%s5 + $0x2ac] sm:$0xf]
    %v3667 = vld [vmem:[%s5 + $0x2b0] sm:$0xf]
    %v3668 = vld [vmem:[%s5 + $0x2b4] sm:$0xf]
    %v3669 = vld [vmem:[%s5 + $0x2b8] sm:$0xf]
    %v3670 = vld [vmem:[%s5 + $0x2bc] sm:$0xf]
    %v3671 = vld [vmem:[%s5 + $0x2c0] sm:$0xf]
    %v3672 = vld [vmem:[%s5 + $0x2c4] sm:$0xf]
    %v3673 = vld [vmem:[%s5 + $0x2c8] sm:$0xf]
    %v3674 = vld [vmem:[%s5 + $0x2cc] sm:$0xf]
    %v3675 = vld [vmem:[%s5 + $0x2d0] sm:$0xf]
    %v3676 = vld [vmem:[%s5 + $0x2d4] sm:$0xf]
    %v3677 = vld [vmem:[%s5 + $0x2d8] sm:$0xf]
    %v3678 = vld [vmem:[%s5 + $0x2dc] sm:$0xf]
    %v3679 = vld [vmem:[%s5 + $0x2e0] sm:$0xf]
    %v3680 = vld [vmem:[%s5 + $0x2e4] sm:$0xf]
    %v3681 = vld [vmem:[%s5 + $0x2e8] sm:$0xf]
    %v3682 = vld [vmem:[%s5 + $0x2ec] sm:$0xf]
    %v3683 = vld [vmem:[%s5 + $0x2f0] sm:$0xf]
    %v3684 = vld [vmem:[%s5 + $0x2f4] sm:$0xf]
    %v3685 = vld [vmem:[%s5 + $0x2f8] sm:$0xf]
    %v3686 = vld [vmem:[%s5 + $0x2fc] sm:$0xf]
    %v3687 = vld [vmem:[%s5 + $0x300] sm:$0xf]
    %v3688 = vld [vmem:[%s5 + $0x304] sm:$0xf]
    %v3689 = vld [vmem:[%s5 + $0x308] sm:$0xf]
    %v3690 = vld [vmem:[%s5 + $0x30c] sm:$0xf]
    %v3691 = vld [vmem:[%s5 + $0x310] sm:$0xf]
    %v3692 = vld [vmem:[%s5 + $0x314] sm:$0xf]
    %v3693 = vld [vmem:[%s5 + $0x318] sm:$0xf]
    %v3694 = vld [vmem:[%s5 + $0x31c] sm:$0xf]
    %v3695 = vld [vmem:[%s5 + $0x320] sm:$0xf]
    %v3696 = vld [vmem:[%s5 + $0x324] sm:$0xf]
    %v3697 = vld [vmem:[%s5 + $0x328] sm:$0xf]
    %v3698 = vld [vmem:[%s5 + $0x32c] sm:$0xf]
    %v3699 = vld [vmem:[%s5 + $0x330] sm:$0xf]
    %v3700 = vld [vmem:[%s5 + $0x334] sm:$0xf]
    %v3701 = vld [vmem:[%s5 + $0x338] sm:$0xf]
    %v3702 = vld [vmem:[%s5 + $0x33c] sm:$0xf]
    %v3703 = vld [vmem:[%s5 + $0x340] sm:$0xf]
    %v3704 = vld [vmem:[%s5 + $0x344] sm:$0xf]
    %v3705 = vld [vmem:[%s5 + $0x348] sm:$0xf]
    %v3706 = vld [vmem:[%s5 + $0x34c] sm:$0xf]
    %v3707 = vld [vmem:[%s5 + $0x350] sm:$0xf]
    %v3708 = vld [vmem:[%s5 + $0x354] sm:$0xf]
    %v3709 = vld [vmem:[%s5 + $0x358] sm:$0xf]
    %v3710 = vld [vmem:[%s5 + $0x35c] sm:$0xf]
    %v3711 = vld [vmem:[%s5 + $0x360] sm:$0xf]
    %v3712 = vld [vmem:[%s5 + $0x364] sm:$0xf]
    %v3713 = vld [vmem:[%s5 + $0x368] sm:$0xf]
    %v3714 = vld [vmem:[%s5 + $0x36c] sm:$0xf]
    %v3715 = vld [vmem:[%s5 + $0x370] sm:$0xf]
    %v3716 = vld [vmem:[%s5 + $0x374] sm:$0xf]
    %v3717 = vld [vmem:[%s5 + $0x378] sm:$0xf]
    %v3718 = vld [vmem:[%s5 + $0x37c] sm:$0xf]
    %v3719 = vld [vmem:[%s5 + $0x380] sm:$0xf]
    %v3720 = vld [vmem:[%s5 + $0x384] sm:$0xf]
    %v3721 = vld [vmem:[%s5 + $0x388] sm:$0xf]
    %v3722 = vld [vmem:[%s5 + $0x38c] sm:$0xf]
    %v3723 = vld [vmem:[%s5 + $0x390] sm:$0xf]
    %v3724 = vld [vmem:[%s5 + $0x394] sm:$0xf]
    %v3725 = vld [vmem:[%s5 + $0x398] sm:$0xf]
    %v3726 = vld [vmem:[%s5 + $0x39c] sm:$0xf]
    %v3727 = vld [vmem:[%s5 + $0x3a0] sm:$0xf]
    %v3728 = vld [vmem:[%s5 + $0x3a4] sm:$0xf]
    %v3729 = vld [vmem:[%s5 + $0x3a8] sm:$0xf]
    %v3730 = vld [vmem:[%s5 + $0x3ac] sm:$0xf]
    %v3731 = vld [vmem:[%s5 + $0x3b0] sm:$0xf]
    %v3732 = vld [vmem:[%s5 + $0x3b4] sm:$0xf]
    %v3733 = vld [vmem:[%s5 + $0x3b8] sm:$0xf]
    %v3734 = vld [vmem:[%s5 + $0x3bc] sm:$0xf]
    %v3735 = vld [vmem:[%s5 + $0x3c0] sm:$0xf]
    %v3736 = vld [vmem:[%s5 + $0x3c4] sm:$0xf]
    %v3737 = vld [vmem:[%s5 + $0x3c8] sm:$0xf]
    %v3738 = vld [vmem:[%s5 + $0x3cc] sm:$0xf]
    %v3739 = vld [vmem:[%s5 + $0x3d0] sm:$0xf]
    %v3740 = vld [vmem:[%s5 + $0x3d4] sm:$0xf]
    %v3741 = vld [vmem:[%s5 + $0x3d8] sm:$0xf]
    %v3742 = vld [vmem:[%s5 + $0x3dc] sm:$0xf]
    %v3743 = vld [vmem:[%s5 + $0x3e0] sm:$0xf]
    %v3744 = vld [vmem:[%s5 + $0x3e4] sm:$0xf]
    %v3745 = vld [vmem:[%s5 + $0x3e8] sm:$0xf]
    %v3746 = vld [vmem:[%s5 + $0x3ec] sm:$0xf]
    %v3747 = vld [vmem:[%s5 + $0x3f0] sm:$0xf]
    %v3748 = vld [vmem:[%s5 + $0x3f4] sm:$0xf]
    %v3749 = vld [vmem:[%s5 + $0x3f8] sm:$0xf]
    %v3750 = vld [vmem:[%s5 + $0x3fc] sm:$0xf]
    %v3751 = vld [vmem:[%s3 + $0x19] sm:$0x1]
    %v3753 = vlaneseq
    %v3754 = vshrl.u32 %v3753, 7
    %v3755 = vsub.s32 0, %v3754
    %v3756 = vrot.slane %v3751, %v3755
    %v4014 = vunpack.c.l.b16 %v3495
    %v4015 = vunpack.c.l.b16 %v3496
    %v4016 = vunpack.c.l.b16 %v3497
    %v4017 = vunpack.c.l.b16 %v3498
    %v4018 = vunpack.c.l.b16 %v3499
    %v4019 = vunpack.c.l.b16 %v3500
    %v4020 = vunpack.c.l.b16 %v3501
    %v4021 = vunpack.c.l.b16 %v3502
    %v4022 = vunpack.c.l.b16 %v3503
    %v4023 = vunpack.c.l.b16 %v3504
    %v4024 = vunpack.c.l.b16 %v3505
    %v4025 = vunpack.c.l.b16 %v3506
    %v4026 = vunpack.c.l.b16 %v3507
    %v4027 = vunpack.c.l.b16 %v3508
    %v4028 = vunpack.c.l.b16 %v3509
    %v4029 = vunpack.c.l.b16 %v3510
    %v4030 = vunpack.c.l.b16 %v3511
    %v4031 = vunpack.c.l.b16 %v3512
    %v4032 = vunpack.c.l.b16 %v3513
    %v4033 = vunpack.c.l.b16 %v3514
    %v4034 = vunpack.c.l.b16 %v3515
    %v4035 = vunpack.c.l.b16 %v3516
    %v4036 = vunpack.c.l.b16 %v3517
    %v4037 = vunpack.c.l.b16 %v3518
    %v4038 = vunpack.c.l.b16 %v3519
    %v4039 = vunpack.c.l.b16 %v3520
    %v4040 = vunpack.c.l.b16 %v3521
    %v4041 = vunpack.c.l.b16 %v3522
    %v4042 = vunpack.c.l.b16 %v3523
    %v4043 = vunpack.c.l.b16 %v3524
    %v4044 = vunpack.c.l.b16 %v3525
    %v4045 = vunpack.c.l.b16 %v3526
    %v4046 = vunpack.c.l.b16 %v3527
    %v4047 = vunpack.c.l.b16 %v3528
    %v4048 = vunpack.c.l.b16 %v3529
    %v4049 = vunpack.c.l.b16 %v3530
    %v4050 = vunpack.c.l.b16 %v3531
    %v4051 = vunpack.c.l.b16 %v3532
    %v4052 = vunpack.c.l.b16 %v3533
    %v4053 = vunpack.c.l.b16 %v3534
    %v4054 = vunpack.c.l.b16 %v3535
    %v4055 = vunpack.c.l.b16 %v3536
    %v4056 = vunpack.c.l.b16 %v3537
    %v4057 = vunpack.c.l.b16 %v3538
    %v4058 = vunpack.c.l.b16 %v3539
    %v4059 = vunpack.c.l.b16 %v3540
    %v4060 = vunpack.c.l.b16 %v3541
    %v4061 = vunpack.c.l.b16 %v3542
    %v4062 = vunpack.c.l.b16 %v3543
    %v4063 = vunpack.c.l.b16 %v3544
    %v4064 = vunpack.c.l.b16 %v3545
    %v4065 = vunpack.c.l.b16 %v3546
    %v4066 = vunpack.c.l.b16 %v3547
    %v4067 = vunpack.c.l.b16 %v3548
    %v4068 = vunpack.c.l.b16 %v3549
    %v4069 = vunpack.c.l.b16 %v3550
    %v4070 = vunpack.c.l.b16 %v3551
    %v4071 = vunpack.c.l.b16 %v3552
    %v4072 = vunpack.c.l.b16 %v3553
    %v4073 = vunpack.c.l.b16 %v3554
    %v4074 = vunpack.c.l.b16 %v3555
    %v4075 = vunpack.c.l.b16 %v3556
    %v4076 = vunpack.c.l.b16 %v3557
    %v4077 = vunpack.c.l.b16 %v3558
    %v4078 = vunpack.c.l.b16 %v3559
    %v4079 = vunpack.c.l.b16 %v3560
    %v4080 = vunpack.c.l.b16 %v3561
    %v4081 = vunpack.c.l.b16 %v3562
    %v4082 = vunpack.c.l.b16 %v3563
    %v4083 = vunpack.c.l.b16 %v3564
    %v4084 = vunpack.c.l.b16 %v3565
    %v4085 = vunpack.c.l.b16 %v3566
    %v4086 = vunpack.c.l.b16 %v3567
    %v4087 = vunpack.c.l.b16 %v3568
    %v4088 = vunpack.c.l.b16 %v3569
    %v4089 = vunpack.c.l.b16 %v3570
    %v4090 = vunpack.c.l.b16 %v3571
    %v4091 = vunpack.c.l.b16 %v3572
    %v4092 = vunpack.c.l.b16 %v3573
    %v4093 = vunpack.c.l.b16 %v3574
    %v4094 = vunpack.c.l.b16 %v3575
    %v4095 = vunpack.c.l.b16 %v3576
    %v4096 = vunpack.c.l.b16 %v3577
    %v4097 = vunpack.c.l.b16 %v3578
    %v4098 = vunpack.c.l.b16 %v3579
    %v4099 = vunpack.c.l.b16 %v3580
    %v4100 = vunpack.c.l.b16 %v3581
    %v4101 = vunpack.c.l.b16 %v3582
    %v4102 = vunpack.c.l.b16 %v3583
    %v4103 = vunpack.c.l.b16 %v3584
    %v4104 = vunpack.c.l.b16 %v3585
    %v4105 = vunpack.c.l.b16 %v3586
    %v4106 = vunpack.c.l.b16 %v3587
    %v4107 = vunpack.c.l.b16 %v3588
    %v4108 = vunpack.c.l.b16 %v3589
    %v4109 = vunpack.c.l.b16 %v3590
    %v4110 = vunpack.c.l.b16 %v3591
    %v4111 = vunpack.c.l.b16 %v3592
    %v4112 = vunpack.c.l.b16 %v3593
    %v4113 = vunpack.c.l.b16 %v3594
    %v4114 = vunpack.c.l.b16 %v3595
    %v4115 = vunpack.c.l.b16 %v3596
    %v4116 = vunpack.c.l.b16 %v3597
    %v4117 = vunpack.c.l.b16 %v3598
    %v4118 = vunpack.c.l.b16 %v3599
    %v4119 = vunpack.c.l.b16 %v3600
    %v4120 = vunpack.c.l.b16 %v3601
    %v4121 = vunpack.c.l.b16 %v3602
    %v4122 = vunpack.c.l.b16 %v3603
    %v4123 = vunpack.c.l.b16 %v3604
    %v4124 = vunpack.c.l.b16 %v3605
    %v4125 = vunpack.c.l.b16 %v3606
    %v4126 = vunpack.c.l.b16 %v3607
    %v4127 = vunpack.c.l.b16 %v3608
    %v4128 = vunpack.c.l.b16 %v3609
    %v4129 = vunpack.c.l.b16 %v3610
    %v4130 = vunpack.c.l.b16 %v3611
    %v4131 = vunpack.c.l.b16 %v3612
    %v4132 = vunpack.c.l.b16 %v3613
    %v4133 = vunpack.c.l.b16 %v3614
    %v4134 = vunpack.c.l.b16 %v3615
    %v4135 = vunpack.c.l.b16 %v3616
    %v4136 = vunpack.c.l.b16 %v3617
    %v4137 = vunpack.c.l.b16 %v3618
    %v4138 = vunpack.c.l.b16 %v3619
    %v4139 = vunpack.c.l.b16 %v3620
    %v4140 = vunpack.c.l.b16 %v3621
    %v4141 = vunpack.c.l.b16 %v3622
    %v4142 = vunpack.c.l.b16 %v3623
    %v4143 = vunpack.c.l.b16 %v3624
    %v4144 = vunpack.c.l.b16 %v3625
    %v4145 = vunpack.c.l.b16 %v3626
    %v4146 = vunpack.c.l.b16 %v3627
    %v4147 = vunpack.c.l.b16 %v3628
    %v4148 = vunpack.c.l.b16 %v3629
    %v4149 = vunpack.c.l.b16 %v3630
    %v4150 = vunpack.c.l.b16 %v3631
    %v4151 = vunpack.c.l.b16 %v3632
    %v4152 = vunpack.c.l.b16 %v3633
    %v4153 = vunpack.c.l.b16 %v3634
    %v4154 = vunpack.c.l.b16 %v3635
    %v4155 = vunpack.c.l.b16 %v3636
    %v4156 = vunpack.c.l.b16 %v3637
    %v4157 = vunpack.c.l.b16 %v3638
    %v4158 = vunpack.c.l.b16 %v3639
    %v4159 = vunpack.c.l.b16 %v3640
    %v4160 = vunpack.c.l.b16 %v3641
    %v4161 = vunpack.c.l.b16 %v3642
    %v4162 = vunpack.c.l.b16 %v3643
    %v4163 = vunpack.c.l.b16 %v3644
    %v4164 = vunpack.c.l.b16 %v3645
    %v4165 = vunpack.c.l.b16 %v3646
    %v4166 = vunpack.c.l.b16 %v3647
    %v4167 = vunpack.c.l.b16 %v3648
    %v4168 = vunpack.c.l.b16 %v3649
    %v4169 = vunpack.c.l.b16 %v3650
    %v4170 = vunpack.c.l.b16 %v3651
    %v4171 = vunpack.c.l.b16 %v3652
    %v4172 = vunpack.c.l.b16 %v3653
    %v4173 = vunpack.c.l.b16 %v3654
    %v4174 = vunpack.c.l.b16 %v3655
    %v4175 = vunpack.c.l.b16 %v3656
    %v4176 = vunpack.c.l.b16 %v3657
    %v4177 = vunpack.c.l.b16 %v3658
    %v4178 = vunpack.c.l.b16 %v3659
    %v4179 = vunpack.c.l.b16 %v3660
    %v4180 = vunpack.c.l.b16 %v3661
    %v4181 = vunpack.c.l.b16 %v3662
    %v4182 = vunpack.c.l.b16 %v3663
    %v4183 = vunpack.c.l.b16 %v3664
    %v4184 = vunpack.c.l.b16 %v3665
    %v4185 = vunpack.c.l.b16 %v3666
    %v4186 = vunpack.c.l.b16 %v3667
    %v4187 = vunpack.c.l.b16 %v3668
    %v4188 = vunpack.c.l.b16 %v3669
    %v4189 = vunpack.c.l.b16 %v3670
    %v4190 = vunpack.c.l.b16 %v3671
    %v4191 = vunpack.c.l.b16 %v3672
    %v4192 = vunpack.c.l.b16 %v3673
    %v4193 = vunpack.c.l.b16 %v3674
    %v4194 = vunpack.c.l.b16 %v3675
    %v4195 = vunpack.c.l.b16 %v3676
    %v4196 = vunpack.c.l.b16 %v3677
    %v4197 = vunpack.c.l.b16 %v3678
    %v4198 = vunpack.c.l.b16 %v3679
    %v4199 = vunpack.c.l.b16 %v3680
    %v4200 = vunpack.c.l.b16 %v3681
    %v4201 = vunpack.c.l.b16 %v3682
    %v4202 = vunpack.c.l.b16 %v3683
    %v4203 = vunpack.c.l.b16 %v3684
    %v4204 = vunpack.c.l.b16 %v3685
    %v4205 = vunpack.c.l.b16 %v3686
    %v4206 = vunpack.c.l.b16 %v3687
    %v4207 = vunpack.c.l.b16 %v3688
    %v4208 = vunpack.c.l.b16 %v3689
    %v4209 = vunpack.c.l.b16 %v3690
    %v4210 = vunpack.c.l.b16 %v3691
    %v4211 = vunpack.c.l.b16 %v3692
    %v4212 = vunpack.c.l.b16 %v3693
    %v4213 = vunpack.c.l.b16 %v3694
    %v4214 = vunpack.c.l.b16 %v3695
    %v4215 = vunpack.c.l.b16 %v3696
    %v4216 = vunpack.c.l.b16 %v3697
    %v4217 = vunpack.c.l.b16 %v3698
    %v4218 = vunpack.c.l.b16 %v3699
    %v4219 = vunpack.c.l.b16 %v3700
    %v4220 = vunpack.c.l.b16 %v3701
    %v4221 = vunpack.c.l.b16 %v3702
    %v4222 = vunpack.c.l.b16 %v3703
    %v4223 = vunpack.c.l.b16 %v3704
    %v4224 = vunpack.c.l.b16 %v3705
    %v4225 = vunpack.c.l.b16 %v3706
    %v4226 = vunpack.c.l.b16 %v3707
    %v4227 = vunpack.c.l.b16 %v3708
    %v4228 = vunpack.c.l.b16 %v3709
    %v4229 = vunpack.c.l.b16 %v3710
    %v4230 = vunpack.c.l.b16 %v3711
    %v4231 = vunpack.c.l.b16 %v3712
    %v4232 = vunpack.c.l.b16 %v3713
    %v4233 = vunpack.c.l.b16 %v3714
    %v4234 = vunpack.c.l.b16 %v3715
    %v4235 = vunpack.c.l.b16 %v3716
    %v4236 = vunpack.c.l.b16 %v3717
    %v4237 = vunpack.c.l.b16 %v3718
    %v4238 = vunpack.c.l.b16 %v3719
    %v4239 = vunpack.c.l.b16 %v3720
    %v4240 = vunpack.c.l.b16 %v3721
    %v4241 = vunpack.c.l.b16 %v3722
    %v4242 = vunpack.c.l.b16 %v3723
    %v4243 = vunpack.c.l.b16 %v3724
    %v4244 = vunpack.c.l.b16 %v3725
    %v4245 = vunpack.c.l.b16 %v3726
    %v4246 = vunpack.c.l.b16 %v3727
    %v4247 = vunpack.c.l.b16 %v3728
    %v4248 = vunpack.c.l.b16 %v3729
    %v4249 = vunpack.c.l.b16 %v3730
    %v4250 = vunpack.c.l.b16 %v3731
    %v4251 = vunpack.c.l.b16 %v3732
    %v4252 = vunpack.c.l.b16 %v3733
    %v4253 = vunpack.c.l.b16 %v3734
    %v4254 = vunpack.c.l.b16 %v3735
    %v4255 = vunpack.c.l.b16 %v3736
    %v4256 = vunpack.c.l.b16 %v3737
    %v4257 = vunpack.c.l.b16 %v3738
    %v4258 = vunpack.c.l.b16 %v3739
    %v4259 = vunpack.c.l.b16 %v3740
    %v4260 = vunpack.c.l.b16 %v3741
    %v4261 = vunpack.c.l.b16 %v3742
    %v4262 = vunpack.c.l.b16 %v3743
    %v4263 = vunpack.c.l.b16 %v3744
    %v4264 = vunpack.c.l.b16 %v3745
    %v4265 = vunpack.c.l.b16 %v3746
    %v4266 = vunpack.c.l.b16 %v3747
    %v4267 = vunpack.c.l.b16 %v3748
    %v4268 = vunpack.c.l.b16 %v3749
    %v4269 = vunpack.c.l.b16 %v3750
    %v4270 = vpack.c.b16 %v4015, %v4014
    %v4271 = vpack.c.b16 %v4017, %v4016
    %v4272 = vpack.c.b16 %v4019, %v4018
    %v4273 = vpack.c.b16 %v4021, %v4020
    %v4274 = vpack.c.b16 %v4023, %v4022
    %v4275 = vpack.c.b16 %v4025, %v4024
    %v4276 = vpack.c.b16 %v4027, %v4026
    %v4277 = vpack.c.b16 %v4029, %v4028
    %v4278 = vpack.c.b16 %v4031, %v4030
    %v4279 = vpack.c.b16 %v4033, %v4032
    %v4280 = vpack.c.b16 %v4035, %v4034
    %v4281 = vpack.c.b16 %v4037, %v4036
    %v4282 = vpack.c.b16 %v4039, %v4038
    %v4283 = vpack.c.b16 %v4041, %v4040
    %v4284 = vpack.c.b16 %v4043, %v4042
    %v4285 = vpack.c.b16 %v4045, %v4044
    %v4286 = vpack.c.b16 %v4047, %v4046
    %v4287 = vpack.c.b16 %v4049, %v4048
    %v4288 = vpack.c.b16 %v4051, %v4050
    %v4289 = vpack.c.b16 %v4053, %v4052
    %v4290 = vpack.c.b16 %v4055, %v4054
    %v4291 = vpack.c.b16 %v4057, %v4056
    %v4292 = vpack.c.b16 %v4059, %v4058
    %v4293 = vpack.c.b16 %v4061, %v4060
    %v4294 = vpack.c.b16 %v4063, %v4062
    %v4295 = vpack.c.b16 %v4065, %v4064
    %v4296 = vpack.c.b16 %v4067, %v4066
    %v4297 = vpack.c.b16 %v4069, %v4068
    %v4298 = vpack.c.b16 %v4071, %v4070
    %v4299 = vpack.c.b16 %v4073, %v4072
    %v4300 = vpack.c.b16 %v4075, %v4074
    %v4301 = vpack.c.b16 %v4077, %v4076
    %v4302 = vpack.c.b16 %v4079, %v4078
    %v4303 = vpack.c.b16 %v4081, %v4080
    %v4304 = vpack.c.b16 %v4083, %v4082
    %v4305 = vpack.c.b16 %v4085, %v4084
    %v4306 = vpack.c.b16 %v4087, %v4086
    %v4307 = vpack.c.b16 %v4089, %v4088
    %v4308 = vpack.c.b16 %v4091, %v4090
    %v4309 = vpack.c.b16 %v4093, %v4092
    %v4310 = vpack.c.b16 %v4095, %v4094
    %v4311 = vpack.c.b16 %v4097, %v4096
    %v4312 = vpack.c.b16 %v4099, %v4098
    %v4313 = vpack.c.b16 %v4101, %v4100
    %v4314 = vpack.c.b16 %v4103, %v4102
    %v4315 = vpack.c.b16 %v4105, %v4104
    %v4316 = vpack.c.b16 %v4107, %v4106
    %v4317 = vpack.c.b16 %v4109, %v4108
    %v4318 = vpack.c.b16 %v4111, %v4110
    %v4319 = vpack.c.b16 %v4113, %v4112
    %v4320 = vpack.c.b16 %v4115, %v4114
    %v4321 = vpack.c.b16 %v4117, %v4116
    %v4322 = vpack.c.b16 %v4119, %v4118
    %v4323 = vpack.c.b16 %v4121, %v4120
    %v4324 = vpack.c.b16 %v4123, %v4122
    %v4325 = vpack.c.b16 %v4125, %v4124
    %v4326 = vpack.c.b16 %v4127, %v4126
    %v4327 = vpack.c.b16 %v4129, %v4128
    %v4328 = vpack.c.b16 %v4131, %v4130
    %v4329 = vpack.c.b16 %v4133, %v4132
    %v4330 = vpack.c.b16 %v4135, %v4134
    %v4331 = vpack.c.b16 %v4137, %v4136
    %v4332 = vpack.c.b16 %v4139, %v4138
    %v4333 = vpack.c.b16 %v4141, %v4140
    %v4334 = vpack.c.b16 %v4143, %v4142
    %v4335 = vpack.c.b16 %v4145, %v4144
    %v4336 = vpack.c.b16 %v4147, %v4146
    %v4337 = vpack.c.b16 %v4149, %v4148
    %v4338 = vpack.c.b16 %v4151, %v4150
    %v4339 = vpack.c.b16 %v4153, %v4152
    %v4340 = vpack.c.b16 %v4155, %v4154
    %v4341 = vpack.c.b16 %v4157, %v4156
    %v4342 = vpack.c.b16 %v4159, %v4158
    %v4343 = vpack.c.b16 %v4161, %v4160
    %v4344 = vpack.c.b16 %v4163, %v4162
    %v4345 = vpack.c.b16 %v4165, %v4164
    %v4346 = vpack.c.b16 %v4167, %v4166
    %v4347 = vpack.c.b16 %v4169, %v4168
    %v4348 = vpack.c.b16 %v4171, %v4170
    %v4349 = vpack.c.b16 %v4173, %v4172
    %v4350 = vpack.c.b16 %v4175, %v4174
    %v4351 = vpack.c.b16 %v4177, %v4176
    %v4352 = vpack.c.b16 %v4179, %v4178
    %v4353 = vpack.c.b16 %v4181, %v4180
    %v4354 = vpack.c.b16 %v4183, %v4182
    %v4355 = vpack.c.b16 %v4185, %v4184
    %v4356 = vpack.c.b16 %v4187, %v4186
    %v4357 = vpack.c.b16 %v4189, %v4188
    %v4358 = vpack.c.b16 %v4191, %v4190
    %v4359 = vpack.c.b16 %v4193, %v4192
    %v4360 = vpack.c.b16 %v4195, %v4194
    %v4361 = vpack.c.b16 %v4197, %v4196
    %v4362 = vpack.c.b16 %v4199, %v4198
    %v4363 = vpack.c.b16 %v4201, %v4200
    %v4364 = vpack.c.b16 %v4203, %v4202
    %v4365 = vpack.c.b16 %v4205, %v4204
    %v4366 = vpack.c.b16 %v4207, %v4206
    %v4367 = vpack.c.b16 %v4209, %v4208
    %v4368 = vpack.c.b16 %v4211, %v4210
    %v4369 = vpack.c.b16 %v4213, %v4212
    %v4370 = vpack.c.b16 %v4215, %v4214
    %v4371 = vpack.c.b16 %v4217, %v4216
    %v4372 = vpack.c.b16 %v4219, %v4218
    %v4373 = vpack.c.b16 %v4221, %v4220
    %v4374 = vpack.c.b16 %v4223, %v4222
    %v4375 = vpack.c.b16 %v4225, %v4224
    %v4376 = vpack.c.b16 %v4227, %v4226
    %v4377 = vpack.c.b16 %v4229, %v4228
    %v4378 = vpack.c.b16 %v4231, %v4230
    %v4379 = vpack.c.b16 %v4233, %v4232
    %v4380 = vpack.c.b16 %v4235, %v4234
    %v4381 = vpack.c.b16 %v4237, %v4236
    %v4382 = vpack.c.b16 %v4239, %v4238
    %v4383 = vpack.c.b16 %v4241, %v4240
    %v4384 = vpack.c.b16 %v4243, %v4242
    %v4385 = vpack.c.b16 %v4245, %v4244
    %v4386 = vpack.c.b16 %v4247, %v4246
    %v4387 = vpack.c.b16 %v4249, %v4248
    %v4388 = vpack.c.b16 %v4251, %v4250
    %v4389 = vpack.c.b16 %v4253, %v4252
    %v4390 = vpack.c.b16 %v4255, %v4254
    %v4391 = vpack.c.b16 %v4257, %v4256
    %v4392 = vpack.c.b16 %v4259, %v4258
    %v4393 = vpack.c.b16 %v4261, %v4260
    %v4394 = vpack.c.b16 %v4263, %v4262
    %v4395 = vpack.c.b16 %v4265, %v4264
    %v4396 = vpack.c.b16 %v4267, %v4266
    %v4397 = vpack.c.b16 %v4269, %v4268
    %4526 = vmatprep.subr.bf16.mxu0 0
    %4527 = vmatpush1.bf16.msra.mxu0 %v4277
    %4528 = vmatprep.subr.bf16.mxu0 0
    %4529 = vmatpush1.bf16.msra.mxu0 %v4276
    %4530 = vmatprep.subr.bf16.mxu0 0
    %4531 = vmatpush1.bf16.msra.mxu0 %v4275
    %4532 = vmatprep.subr.bf16.mxu0 0
    %4533 = vmatpush1.bf16.msra.mxu0 %v4274
    %4534 = vmatprep.subr.bf16.mxu0 0
    %4535 = vmatpush1.bf16.msra.mxu0 %v4273
    %4536 = vmatprep.subr.bf16.mxu0 0
    %4537 = vmatpush1.bf16.msra.mxu0 %v4272
    %4538 = vmatprep.subr.bf16.mxu0 0
    %4539 = vmatpush1.bf16.msra.mxu0 %v4271
    %4540 = vmatprep.subr.bf16.mxu0 0
    %4541 = vmatpush1.bf16.msra.mxu0 %v4270
    %4542 = vmatprep.subr.bf16.mxu0 0
    %4543 = vmatpush2.bf16.msra.mxu0 %v4285
    %4544 = vmatprep.subr.bf16.mxu0 0
    %4545 = vmatpush2.bf16.msra.mxu0 %v4284
    %4546 = vmatprep.subr.bf16.mxu0 0
    %4547 = vmatpush2.bf16.msra.mxu0 %v4283
    %4548 = vmatprep.subr.bf16.mxu0 0
    %4549 = vmatpush2.bf16.msra.mxu0 %v4282
    %4550 = vmatprep.subr.bf16.mxu0 0
    %4551 = vmatpush2.bf16.msra.mxu0 %v4281
    %4552 = vmatprep.subr.bf16.mxu0 0
    %4553 = vmatpush2.bf16.msra.mxu0 %v4280
    %4554 = vmatprep.subr.bf16.mxu0 0
    %4555 = vmatpush2.bf16.msra.mxu0 %v4279
    %4556 = vmatprep.subr.bf16.mxu0 0
    %4557 = vmatpush2.bf16.msra.mxu0 %v4278
    %4558 = vmatprep.mubr.bf16.mxu0 %v3480
    %4559 = vmatmul.mubr.bf16.gmra.mxu0 %v3479
    %v4560 = vpop.f32.mrf.mxu0
    %v4561 = vadd.f32 %v3756, %v4560
    %v4562 = vpop.f32.mrf.mxu0
    %v4563 = vpop.f32.mrf.mxu0
    %v4564 = vadd.f32 %v3756, %v4563
    %v4565 = vpop.f32.mrf.mxu0
    %4566 = vdwg.mxu0
    %4567 = vmatprep.subr.bf16.mxu0 0
    %4568 = vmatpush1.bf16.msra.mxu0 %v4293
    %4569 = vmatprep.subr.bf16.mxu0 0
    %4570 = vmatpush1.bf16.msra.mxu0 %v4292
    %4571 = vmatprep.subr.bf16.mxu0 0
    %4572 = vmatpush1.bf16.msra.mxu0 %v4291
    %4573 = vmatprep.subr.bf16.mxu0 0
    %4574 = vmatpush1.bf16.msra.mxu0 %v4290
    %4575 = vmatprep.subr.bf16.mxu0 0
    %4576 = vmatpush1.bf16.msra.mxu0 %v4289
    %4577 = vmatprep.subr.bf16.mxu0 0
    %4578 = vmatpush1.bf16.msra.mxu0 %v4288
    %4579 = vmatprep.subr.bf16.mxu0 0
    %4580 = vmatpush1.bf16.msra.mxu0 %v4287
    %4581 = vmatprep.subr.bf16.mxu0 0
    %4582 = vmatpush1.bf16.msra.mxu0 %v4286
    %4583 = vmatprep.subr.bf16.mxu0 0
    %4584 = vmatpush2.bf16.msra.mxu0 %v4301
    %4585 = vmatprep.subr.bf16.mxu0 0
    %4586 = vmatpush2.bf16.msra.mxu0 %v4300
    %4587 = vmatprep.subr.bf16.mxu0 0
    %4588 = vmatpush2.bf16.msra.mxu0 %v4299
    %4589 = vmatprep.subr.bf16.mxu0 0
    %4590 = vmatpush2.bf16.msra.mxu0 %v4298
    %4591 = vmatprep.subr.bf16.mxu0 0
    %4592 = vmatpush2.bf16.msra.mxu0 %v4297
    %4593 = vmatprep.subr.bf16.mxu0 0
    %4594 = vmatpush2.bf16.msra.mxu0 %v4296
    %4595 = vmatprep.subr.bf16.mxu0 0
    %4596 = vmatpush2.bf16.msra.mxu0 %v4295
    %4597 = vmatprep.subr.bf16.mxu0 0
    %4598 = vmatpush2.bf16.msra.mxu0 %v4294
    %4599 = vmatprep.mubr.bf16.mxu0 %v3482
    %4600 = vmatmul.mubr.bf16.gmra.mxu0 %v3481
    %v4601 = vpop.f32.mrf.mxu0
    %v4602 = vadd.f32 %v4561, %v4601
    %v4603 = vpop.f32.mrf.mxu0
    %v4604 = vpop.f32.mrf.mxu0
    %v4605 = vadd.f32 %v4564, %v4604
    %v4606 = vpop.f32.mrf.mxu0
    %4607 = vdwg.mxu0
    %4608 = vmatprep.subr.bf16.mxu0 0
    %4609 = vmatpush1.bf16.msra.mxu0 %v4309
    %4610 = vmatprep.subr.bf16.mxu0 0
    %4611 = vmatpush1.bf16.msra.mxu0 %v4308
    %4612 = vmatprep.subr.bf16.mxu0 0
    %4613 = vmatpush1.bf16.msra.mxu0 %v4307
    %4614 = vmatprep.subr.bf16.mxu0 0
    %4615 = vmatpush1.bf16.msra.mxu0 %v4306
    %4616 = vmatprep.subr.bf16.mxu0 0
    %4617 = vmatpush1.bf16.msra.mxu0 %v4305
    %4618 = vmatprep.subr.bf16.mxu0 0
    %4619 = vmatpush1.bf16.msra.mxu0 %v4304
    %4620 = vmatprep.subr.bf16.mxu0 0
    %4621 = vmatpush1.bf16.msra.mxu0 %v4303
    %4622 = vmatprep.subr.bf16.mxu0 0
    %4623 = vmatpush1.bf16.msra.mxu0 %v4302
    %4624 = vmatprep.subr.bf16.mxu0 0
    %4625 = vmatpush2.bf16.msra.mxu0 %v4317
    %4626 = vmatprep.subr.bf16.mxu0 0
    %4627 = vmatpush2.bf16.msra.mxu0 %v4316
    %4628 = vmatprep.subr.bf16.mxu0 0
    %4629 = vmatpush2.bf16.msra.mxu0 %v4315
    %4630 = vmatprep.subr.bf16.mxu0 0
    %4631 = vmatpush2.bf16.msra.mxu0 %v4314
    %4632 = vmatprep.subr.bf16.mxu0 0
    %4633 = vmatpush2.bf16.msra.mxu0 %v4313
    %4634 = vmatprep.subr.bf16.mxu0 0
    %4635 = vmatpush2.bf16.msra.mxu0 %v4312
    %4636 = vmatprep.subr.bf16.mxu0 0
    %4637 = vmatpush2.bf16.msra.mxu0 %v4311
    %4638 = vmatprep.subr.bf16.mxu0 0
    %4639 = vmatpush2.bf16.msra.mxu0 %v4310
    %4640 = vmatprep.mubr.bf16.mxu0 %v3484
    %4641 = vmatmul.mubr.bf16.gmra.mxu0 %v3483
    %v4642 = vpop.f32.mrf.mxu0
    %v4643 = vadd.f32 %v4602, %v4642
    %v4644 = vpop.f32.mrf.mxu0
    %v4645 = vpop.f32.mrf.mxu0
    %v4646 = vadd.f32 %v4605, %v4645
    %v4647 = vpop.f32.mrf.mxu0
    %4648 = vdwg.mxu0
    %4649 = vmatprep.subr.bf16.mxu0 0
    %4650 = vmatpush1.bf16.msra.mxu0 %v4325
    %4651 = vmatprep.subr.bf16.mxu0 0
    %4652 = vmatpush1.bf16.msra.mxu0 %v4324
    %4653 = vmatprep.subr.bf16.mxu0 0
    %4654 = vmatpush1.bf16.msra.mxu0 %v4323
    %4655 = vmatprep.subr.bf16.mxu0 0
    %4656 = vmatpush1.bf16.msra.mxu0 %v4322
    %4657 = vmatprep.subr.bf16.mxu0 0
    %4658 = vmatpush1.bf16.msra.mxu0 %v4321
    %4659 = vmatprep.subr.bf16.mxu0 0
    %4660 = vmatpush1.bf16.msra.mxu0 %v4320
    %4661 = vmatprep.subr.bf16.mxu0 0
    %4662 = vmatpush1.bf16.msra.mxu0 %v4319
    %4663 = vmatprep.subr.bf16.mxu0 0
    %4664 = vmatpush1.bf16.msra.mxu0 %v4318
    %4665 = vmatprep.subr.bf16.mxu0 0
    %4666 = vmatpush2.bf16.msra.mxu0 %v4333
    %4667 = vmatprep.subr.bf16.mxu0 0
    %4668 = vmatpush2.bf16.msra.mxu0 %v4332
    %4669 = vmatprep.subr.bf16.mxu0 0
    %4670 = vmatpush2.bf16.msra.mxu0 %v4331
    %4671 = vmatprep.subr.bf16.mxu0 0
    %4672 = vmatpush2.bf16.msra.mxu0 %v4330
    %4673 = vmatprep.subr.bf16.mxu0 0
    %4674 = vmatpush2.bf16.msra.mxu0 %v4329
    %4675 = vmatprep.subr.bf16.mxu0 0
    %4676 = vmatpush2.bf16.msra.mxu0 %v4328
    %4677 = vmatprep.subr.bf16.mxu0 0
    %4678 = vmatpush2.bf16.msra.mxu0 %v4327
    %4679 = vmatprep.subr.bf16.mxu0 0
    %4680 = vmatpush2.bf16.msra.mxu0 %v4326
    %4681 = vmatprep.mubr.bf16.mxu0 %v3486
    %4682 = vmatmul.mubr.bf16.gmra.mxu0 %v3485
    %v4683 = vpop.f32.mrf.mxu0
    %v4684 = vadd.f32 %v4643, %v4683
    %v4685 = vpop.f32.mrf.mxu0
    %v4686 = vpop.f32.mrf.mxu0
    %v4687 = vadd.f32 %v4646, %v4686
    %v4688 = vpop.f32.mrf.mxu0
    %4689 = vdwg.mxu0
    %4690 = vmatprep.subr.bf16.mxu0 0
    %4691 = vmatpush1.bf16.msra.mxu0 %v4341
    %4692 = vmatprep.subr.bf16.mxu0 0
    %4693 = vmatpush1.bf16.msra.mxu0 %v4340
    %4694 = vmatprep.subr.bf16.mxu0 0
    %4695 = vmatpush1.bf16.msra.mxu0 %v4339
    %4696 = vmatprep.subr.bf16.mxu0 0
    %4697 = vmatpush1.bf16.msra.mxu0 %v4338
    %4698 = vmatprep.subr.bf16.mxu0 0
    %4699 = vmatpush1.bf16.msra.mxu0 %v4337
    %4700 = vmatprep.subr.bf16.mxu0 0
    %4701 = vmatpush1.bf16.msra.mxu0 %v4336
    %4702 = vmatprep.subr.bf16.mxu0 0
    %4703 = vmatpush1.bf16.msra.mxu0 %v4335
    %4704 = vmatprep.subr.bf16.mxu0 0
    %4705 = vmatpush1.bf16.msra.mxu0 %v4334
    %4706 = vmatprep.subr.bf16.mxu0 0
    %4707 = vmatpush2.bf16.msra.mxu0 %v4349
    %4708 = vmatprep.subr.bf16.mxu0 0
    %4709 = vmatpush2.bf16.msra.mxu0 %v4348
    %4710 = vmatprep.subr.bf16.mxu0 0
    %4711 = vmatpush2.bf16.msra.mxu0 %v4347
    %4712 = vmatprep.subr.bf16.mxu0 0
    %4713 = vmatpush2.bf16.msra.mxu0 %v4346
    %4714 = vmatprep.subr.bf16.mxu0 0
    %4715 = vmatpush2.bf16.msra.mxu0 %v4345
    %4716 = vmatprep.subr.bf16.mxu0 0
    %4717 = vmatpush2.bf16.msra.mxu0 %v4344
    %4718 = vmatprep.subr.bf16.mxu0 0
    %4719 = vmatpush2.bf16.msra.mxu0 %v4343
    %4720 = vmatprep.subr.bf16.mxu0 0
    %4721 = vmatpush2.bf16.msra.mxu0 %v4342
    %4722 = vmatprep.mubr.bf16.mxu0 %v3488
    %4723 = vmatmul.mubr.bf16.gmra.mxu0 %v3487
    %v4724 = vpop.f32.mrf.mxu0
    %v4725 = vadd.f32 %v4684, %v4724
    %v4726 = vpop.f32.mrf.mxu0
    %v4727 = vpop.f32.mrf.mxu0
    %v4728 = vadd.f32 %v4687, %v4727
    %v4729 = vpop.f32.mrf.mxu0
    %4730 = vdwg.mxu0
    %4731 = vmatprep.subr.bf16.mxu0 0
    %4732 = vmatpush1.bf16.msra.mxu0 %v4357
    %4733 = vmatprep.subr.bf16.mxu0 0
    %4734 = vmatpush1.bf16.msra.mxu0 %v4356
    %4735 = vmatprep.subr.bf16.mxu0 0
    %4736 = vmatpush1.bf16.msra.mxu0 %v4355
    %4737 = vmatprep.subr.bf16.mxu0 0
    %4738 = vmatpush1.bf16.msra.mxu0 %v4354
    %4739 = vmatprep.subr.bf16.mxu0 0
    %4740 = vmatpush1.bf16.msra.mxu0 %v4353
    %4741 = vmatprep.subr.bf16.mxu0 0
    %4742 = vmatpush1.bf16.msra.mxu0 %v4352
    %4743 = vmatprep.subr.bf16.mxu0 0
    %4744 = vmatpush1.bf16.msra.mxu0 %v4351
    %4745 = vmatprep.subr.bf16.mxu0 0
    %4746 = vmatpush1.bf16.msra.mxu0 %v4350
    %4747 = vmatprep.subr.bf16.mxu0 0
    %4748 = vmatpush2.bf16.msra.mxu0 %v4365
    %4749 = vmatprep.subr.bf16.mxu0 0
    %4750 = vmatpush2.bf16.msra.mxu0 %v4364
    %4751 = vmatprep.subr.bf16.mxu0 0
    %4752 = vmatpush2.bf16.msra.mxu0 %v4363
    %4753 = vmatprep.subr.bf16.mxu0 0
    %4754 = vmatpush2.bf16.msra.mxu0 %v4362
    %4755 = vmatprep.subr.bf16.mxu0 0
    %4756 = vmatpush2.bf16.msra.mxu0 %v4361
    %4757 = vmatprep.subr.bf16.mxu0 0
    %4758 = vmatpush2.bf16.msra.mxu0 %v4360
    %4759 = vmatprep.subr.bf16.mxu0 0
    %4760 = vmatpush2.bf16.msra.mxu0 %v4359
    %4761 = vmatprep.subr.bf16.mxu0 0
    %4762 = vmatpush2.bf16.msra.mxu0 %v4358
    %4763 = vmatprep.mubr.bf16.mxu0 %v3490
    %4764 = vmatmul.mubr.bf16.gmra.mxu0 %v3489
    %v4765 = vpop.f32.mrf.mxu0
    %v4766 = vadd.f32 %v4725, %v4765
    %v4767 = vpop.f32.mrf.mxu0
    %v4768 = vpop.f32.mrf.mxu0
    %v4769 = vadd.f32 %v4728, %v4768
    %v4770 = vpop.f32.mrf.mxu0
    %4771 = vdwg.mxu0
    %4772 = vmatprep.subr.bf16.mxu0 0
    %4773 = vmatpush1.bf16.msra.mxu0 %v4373
    %4774 = vmatprep.subr.bf16.mxu0 0
    %4775 = vmatpush1.bf16.msra.mxu0 %v4372
    %4776 = vmatprep.subr.bf16.mxu0 0
    %4777 = vmatpush1.bf16.msra.mxu0 %v4371
    %4778 = vmatprep.subr.bf16.mxu0 0
    %4779 = vmatpush1.bf16.msra.mxu0 %v4370
    %4780 = vmatprep.subr.bf16.mxu0 0
    %4781 = vmatpush1.bf16.msra.mxu0 %v4369
    %4782 = vmatprep.subr.bf16.mxu0 0
    %4783 = vmatpush1.bf16.msra.mxu0 %v4368
    %4784 = vmatprep.subr.bf16.mxu0 0
    %4785 = vmatpush1.bf16.msra.mxu0 %v4367
    %4786 = vmatprep.subr.bf16.mxu0 0
    %4787 = vmatpush1.bf16.msra.mxu0 %v4366
    %4788 = vmatprep.subr.bf16.mxu0 0
    %4789 = vmatpush2.bf16.msra.mxu0 %v4381
    %4790 = vmatprep.subr.bf16.mxu0 0
    %4791 = vmatpush2.bf16.msra.mxu0 %v4380
    %4792 = vmatprep.subr.bf16.mxu0 0
    %4793 = vmatpush2.bf16.msra.mxu0 %v4379
    %4794 = vmatprep.subr.bf16.mxu0 0
    %4795 = vmatpush2.bf16.msra.mxu0 %v4378
    %4796 = vmatprep.subr.bf16.mxu0 0
    %4797 = vmatpush2.bf16.msra.mxu0 %v4377
    %4798 = vmatprep.subr.bf16.mxu0 0
    %4799 = vmatpush2.bf16.msra.mxu0 %v4376
    %4800 = vmatprep.subr.bf16.mxu0 0
    %4801 = vmatpush2.bf16.msra.mxu0 %v4375
    %4802 = vmatprep.subr.bf16.mxu0 0
    %4803 = vmatpush2.bf16.msra.mxu0 %v4374
    %4804 = vmatprep.mubr.bf16.mxu0 %v3492
    %4805 = vmatmul.mubr.bf16.gmra.mxu0 %v3491
    %v4806 = vpop.f32.mrf.mxu0
    %v4807 = vadd.f32 %v4766, %v4806
    %v4808 = vpop.f32.mrf.mxu0
    %v4809 = vpop.f32.mrf.mxu0
    %v4810 = vadd.f32 %v4769, %v4809
    %v4811 = vpop.f32.mrf.mxu0
    %4812 = vdwg.mxu0
    %4813 = vmatprep.subr.bf16.mxu0 0
    %4814 = vmatpush1.bf16.msra.mxu0 %v4389
    %4815 = vmatprep.subr.bf16.mxu0 0
    %4816 = vmatpush1.bf16.msra.mxu0 %v4388
    %4817 = vmatprep.subr.bf16.mxu0 0
    %4818 = vmatpush1.bf16.msra.mxu0 %v4387
    %4819 = vmatprep.subr.bf16.mxu0 0
    %4820 = vmatpush1.bf16.msra.mxu0 %v4386
    %4821 = vmatprep.subr.bf16.mxu0 0
    %4822 = vmatpush1.bf16.msra.mxu0 %v4385
    %4823 = vmatprep.subr.bf16.mxu0 0
    %4824 = vmatpush1.bf16.msra.mxu0 %v4384
    %4825 = vmatprep.subr.bf16.mxu0 0
    %4826 = vmatpush1.bf16.msra.mxu0 %v4383
    %4827 = vmatprep.subr.bf16.mxu0 0
    %4828 = vmatpush1.bf16.msra.mxu0 %v4382
    %4829 = vmatprep.subr.bf16.mxu0 0
    %4830 = vmatpush2.bf16.msra.mxu0 %v4397
    %4831 = vmatprep.subr.bf16.mxu0 0
    %4832 = vmatpush2.bf16.msra.mxu0 %v4396
    %4833 = vmatprep.subr.bf16.mxu0 0
    %4834 = vmatpush2.bf16.msra.mxu0 %v4395
    %4835 = vmatprep.subr.bf16.mxu0 0
    %4836 = vmatpush2.bf16.msra.mxu0 %v4394
    %4837 = vmatprep.subr.bf16.mxu0 0
    %4838 = vmatpush2.bf16.msra.mxu0 %v4393
    %4839 = vmatprep.subr.bf16.mxu0 0
    %4840 = vmatpush2.bf16.msra.mxu0 %v4392
    %4841 = vmatprep.subr.bf16.mxu0 0
    %4842 = vmatpush2.bf16.msra.mxu0 %v4391
    %4843 = vmatprep.subr.bf16.mxu0 0
    %4844 = vmatpush2.bf16.msra.mxu0 %v4390
    %4845 = vmatprep.mubr.bf16.mxu0 %v3494
    %4846 = vmatmul.mubr.bf16.gmra.mxu0 %v3493
    %v4847 = vpop.f32.mrf.mxu0
    %v4848 = vadd.f32 %v4807, %v4847
    %v4849 = vpop.f32.mrf.mxu0
    %v4850 = vpop.f32.mrf.mxu0
    %v4851 = vadd.f32 %v4810, %v4850
    %v4852 = vpop.f32.mrf.mxu0
    %4853 = vdwg.mxu0
    %v4854 = vadd.f32 %v2533, %v4848
    %v4855 = vadd.f32 %v2534, %v4851
    %v4856 = vld [vmem:[%s3 + $0x1a] sm:$0x1]
    %v4857 = vld [vmem:[%s3 + $0x1b] sm:$0x1]
    %v4858 = vsel %vm675, %v4854, 0.0
    %4859 = vadd.xlane.f32.xlu0 %v4858
    %v4860 = vpop.xlane.xlu0 %4859
    %v4861 = vsel %vm675, %v4855, 0.0
    %4862 = vadd.xlane.f32.xlu0 %v4861
    %v4863 = vpop.xlane.xlu0 %4862
    %v4864 = vmul.f32 %v4860, %v2498
    %v4865 = vmul.f32 %v4863, %v2498
    %v4866 = vsub.f32 %v4854, %v4864
    %v4867 = vsub.f32 %v4855, %v4865
    %v4868 = vmul.f32 %v4866, %v4866
    %v4869 = vmul.f32 %v4867, %v4867
    %v4870 = vsel %vm675, %v4868, 0.0
    %4871 = vadd.xlane.f32.xlu0 %v4870
    %v4872 = vpop.xlane.xlu0 %4871
    %v4873 = vsel %vm675, %v4869, 0.0
    %4874 = vadd.xlane.f32.xlu0 %v4873
    %v4875 = vpop.xlane.xlu0 %4874
    %v4876 = vmul.f32 %v4872, %v2498
    %v4877 = vmul.f32 %v4875, %v2498
    %v4878 = vadd.f32 %v4876, 1e-05
    %v4879 = vadd.f32 %v4877, 1e-05
    %v4880 = vrsqrt.pop %v4878
    %v4881 = vrsqrt.pop %v4879
    %v4882 = vmul.f32 %v4866, %v4880
    %v4883 = vmul.f32 %v4867, %v4881
    %v4885 = vlaneseq
    %v4886 = vshrl.u32 %v4885, 7
    %v4887 = vsub.s32 0, %v4886
    %v4888 = vrot.slane %v4856, %v4887
    %v4890 = vmul.f32 %v4882, %v4888
    %v4891 = vmul.f32 %v4883, %v4888
    %v4893 = vlaneseq
    %v4894 = vshrl.u32 %v4893, 7
    %v4895 = vsub.s32 0, %v4894
    %v4896 = vrot.slane %v4857, %v4895
    %v4898 = vadd.f32 %v4890, %v4896
    %v4899 = vadd.f32 %v4891, %v4896
    %v4900 = vld [vmem:[%s2 + $0x30] sm:$0xff]
    %v4901 = vld [vmem:[%s2 + $0x38] sm:$0xff]
    %v4902 = vld [vmem:[%s2 + $0x80] sm:$0xff]
    %v4903 = vld [vmem:[%s2 + $0x88] sm:$0xff]
    %v4904 = vld [vmem:[%s2 + $0xd0] sm:$0xff]
    %v4905 = vld [vmem:[%s2 + $0xd8] sm:$0xff]
    %v4906 = vld [vmem:[%s2 + $0x120] sm:$0xff]
    %v4907 = vld [vmem:[%s2 + $0x128] sm:$0xff]
    %v4908 = vld [vmem:[%s2 + $0x170] sm:$0xff]
    %v4909 = vld [vmem:[%s2 + $0x178] sm:$0xff]
    %v4910 = vld [vmem:[%s2 + $0x1c0] sm:$0xff]
    %v4911 = vld [vmem:[%s2 + $0x1c8] sm:$0xff]
    %v4912 = vld [vmem:[%s2 + $0x210] sm:$0xff]
    %v4913 = vld [vmem:[%s2 + $0x218] sm:$0xff]
    %v4914 = vld [vmem:[%s2 + $0x260] sm:$0xff]
    %v4915 = vld [vmem:[%s2 + $0x268] sm:$0xff]
    %v4916 = vld [vmem:[%s2 + $0x2b0] sm:$0xff]
    %v4917 = vld [vmem:[%s2 + $0x2b8] sm:$0xff]
    %v4918 = vld [vmem:[%s2 + $0x300] sm:$0xff]
    %v4919 = vld [vmem:[%s2 + $0x308] sm:$0xff]
    %v4920 = vld [vmem:[%s3 + $0x1c] sm:$0x3]
    %v4922 = vlaneseq
    %v4923 = vshrl.u32 %v4922, 7
    %v4924 = vsub.s32 0, %v4923
    %v4925 = vrot.slane %v4920, %v4924
    %v4926 = vlaneseq
    %v4927 = vshrl.u32 %v4926, 7
    %v4928 = vsub.s32 1, %v4927
    %v4929 = vrot.slane %v4920, %v4928
    %v4933 = vsel %vm675, %v4898, 0
    %v4936 = vsel %vm675, %v4899, 0
    %4938 = vmatprep.subr.mxu0 0.0
    %4939 = vmatpush1.msra.mxu0 0.0
    %4940 = vmatprep.subr.mxu0 0.0
    %4941 = vmatpush1.msra.mxu0 0.0
    %4942 = vmatprep.subr.mxu0 0.0
    %4943 = vmatpush1.msra.mxu0 0.0
    %4944 = vmatprep.subr.mxu0 0.0
    %4945 = vmatpush1.msra.mxu0 0.0
    %4946 = vmatprep.subr.mxu0 0.0
    %4947 = vmatpush1.msra.mxu0 0.0
    %4948 = vmatprep.subr.mxu0 0.0
    %4949 = vmatpush1.msra.mxu0 0.0
    %4950 = vmatprep.subr.mxu0 %v4919
    %4951 = vmatpush1.msra.mxu0 %v4918
    %4952 = vmatprep.subr.mxu0 %v4917
    %4953 = vmatpush1.msra.mxu0 %v4916
    %4954 = vmatprep.subr.mxu0 %v4915
    %4955 = vmatpush1.msra.mxu0 %v4914
    %4956 = vmatprep.subr.mxu0 %v4913
    %4957 = vmatpush1.msra.mxu0 %v4912
    %4958 = vmatprep.subr.mxu0 %v4911
    %4959 = vmatpush1.msra.mxu0 %v4910
    %4960 = vmatprep.subr.mxu0 %v4909
    %4961 = vmatpush1.msra.mxu0 %v4908
    %4962 = vmatprep.subr.mxu0 %v4907
    %4963 = vmatpush1.msra.mxu0 %v4906
    %4964 = vmatprep.subr.mxu0 %v4905
    %4965 = vmatpush1.msra.mxu0 %v4904
    %4966 = vmatprep.subr.mxu0 %v4903
    %4967 = vmatpush1.msra.mxu0 %v4902
    %4968 = vmatprep.subr.mxu0 %v4901
    %4969 = vmatpush1.msra.mxu0 %v4900
    %4970 = vmatprep.subr.mxu0 0.0
    %4971 = vmatpush2.msra.mxu0 0.0
    %4972 = vmatprep.subr.mxu0 0.0
    %4973 = vmatpush2.msra.mxu0 0.0
    %4974 = vmatprep.subr.mxu0 0.0
    %4975 = vmatpush2.msra.mxu0 0.0
    %4976 = vmatprep.subr.mxu0 0.0
    %4977 = vmatpush2.msra.mxu0 0.0
    %4978 = vmatprep.subr.mxu0 0.0
    %4979 = vmatpush2.msra.mxu0 0.0
    %4980 = vmatprep.subr.mxu0 0.0
    %4981 = vmatpush2.msra.mxu0 0.0
    %4982 = vmatprep.subr.mxu0 0.0
    %4983 = vmatpush2.msra.mxu0 0.0
    %4984 = vmatprep.subr.mxu0 0.0
    %4985 = vmatpush2.msra.mxu0 0.0
    %4986 = vmatprep.subr.mxu0 0.0
    %4987 = vmatpush2.msra.mxu0 0.0
    %4988 = vmatprep.subr.mxu0 0.0
    %4989 = vmatpush2.msra.mxu0 0.0
    %4990 = vmatprep.subr.mxu0 0.0
    %4991 = vmatpush2.msra.mxu0 0.0
    %4992 = vmatprep.subr.mxu0 0.0
    %4993 = vmatpush2.msra.mxu0 0.0
    %4994 = vmatprep.subr.mxu0 0.0
    %4995 = vmatpush2.msra.mxu0 0.0
    %4996 = vmatprep.subr.mxu0 0.0
    %4997 = vmatpush2.msra.mxu0 0.0
    %4998 = vmatprep.subr.mxu0 0.0
    %4999 = vmatpush2.msra.mxu0 0.0
    %5000 = vmatprep.subr.mxu0 0.0
    %5001 = vmatpush2.msra.mxu0 0.0
    %5002 = vmatprep.mubr.f32.mxu0 0.0
    %5003 = vmatmul.mubr.f32.gmra.mxu0 %v4933
    %v5004 = vpop.f32.mrf.mxu0
    %v5005 = vadd.f32 %v4925, %v5004
    %v5006 = vpop.f32.mrf.mxu0
    %v5007 = vadd.f32 %v4929, %v5006
    %5008 = vmatprep.mubr.f32.mxu0 0.0
    %5009 = vmatmul.mubr.f32.gmra.mxu0 %v4936
    %v5010 = vpop.f32.mrf.mxu0
    %v5011 = vadd.f32 %v4925, %v5010
    %v5012 = vpop.f32.mrf.mxu0
    %v5013 = vadd.f32 %v4929, %v5012
    %5014 = vdwg.mxu0
    %v5015 = vmul.f32 %v5005, 0.31622776
    %v5016 = vmul.f32 %v5011, 0.31622776
    %5021 = vrot.lane.b32.xlu0 %v5005, 48
    %v5022 = vpop.permute.xlu0 %5021
    %5023 = vrot.lane.b32.xlu0 %v5007, 48
    %v5024 = vpop.permute.xlu0 %5023
    %5025 = vrot.lane.b32.xlu0 %v5011, 48
    %v5026 = vpop.permute.xlu0 %5025
    %5027 = vrot.lane.b32.xlu0 %v5013, 48
    %v5028 = vpop.permute.xlu0 %5027
    %v5029 = vsel %vm773, %v5022, %v5024
    %v5030 = vsel %vm773, %v5026, %v5028
    %5035 = vmatprep.subr.mxu0 0.0
    %5036 = vmatpush1.msra.mxu0 0.0
    %5037 = vmatprep.subr.mxu0 0.0
    %5038 = vmatpush1.msra.mxu0 0.0
    %5039 = vmatprep.subr.mxu0 0.0
    %5040 = vmatpush1.msra.mxu0 0.0
    %5041 = vmatprep.subr.mxu0 0.0
    %5042 = vmatpush1.msra.mxu0 0.0
    %5043 = vmatprep.subr.mxu0 0.0
    %5044 = vmatpush1.msra.mxu0 0.0
    %5045 = vmatprep.subr.mxu0 0.0
    %5046 = vmatpush1.msra.mxu0 0.0
    %5047 = vmatprep.subr.mxu0 0.0
    %5048 = vmatpush1.msra.mxu0 0.0
    %5049 = vmatprep.subr.mxu0 0.0
    %5050 = vmatpush1.msra.mxu0 0.0
    %5051 = vmatprep.subr.mxu0 0.0
    %5052 = vmatpush1.msra.mxu0 0.0
    %5053 = vmatprep.subr.mxu0 0.0
    %5054 = vmatpush1.msra.mxu0 0.0
    %5055 = vmatprep.subr.mxu0 0.0
    %5056 = vmatpush1.msra.mxu0 0.0
    %5057 = vmatprep.subr.mxu0 0.0
    %5058 = vmatpush1.msra.mxu0 0.0
    %5059 = vmatprep.subr.mxu0 0.0
    %5060 = vmatpush1.msra.mxu0 0.0
    %5061 = vmatprep.subr.mxu0 0.0
    %5062 = vmatpush1.msra.mxu0 0.0
    %5063 = vmatprep.subr.mxu0 %v5028
    %5064 = vmatpush1.msra.mxu0 %v5030
    %5065 = vmatprep.subr.mxu0 %v5024
    %5066 = vmatpush1.msra.mxu0 %v5029
    %5067 = vmatprep.subr.mxu0 0.0
    %5068 = vmatpush2.msra.mxu0 0.0
    %5069 = vmatprep.subr.mxu0 0.0
    %5070 = vmatpush2.msra.mxu0 0.0
    %5071 = vmatprep.subr.mxu0 0.0
    %5072 = vmatpush2.msra.mxu0 0.0
    %5073 = vmatprep.subr.mxu0 0.0
    %5074 = vmatpush2.msra.mxu0 0.0
    %5075 = vmatprep.subr.mxu0 0.0
    %5076 = vmatpush2.msra.mxu0 0.0
    %5077 = vmatprep.subr.mxu0 0.0
    %5078 = vmatpush2.msra.mxu0 0.0
    %5079 = vmatprep.subr.mxu0 0.0
    %5080 = vmatpush2.msra.mxu0 0.0
    %5081 = vmatprep.subr.mxu0 0.0
    %5082 = vmatpush2.msra.mxu0 0.0
    %5083 = vmatprep.subr.mxu0 0.0
    %5084 = vmatpush2.msra.mxu0 0.0
    %5085 = vmatprep.subr.mxu0 0.0
    %5086 = vmatpush2.msra.mxu0 0.0
    %5087 = vmatprep.subr.mxu0 0.0
    %5088 = vmatpush2.msra.mxu0 0.0
    %5089 = vmatprep.subr.mxu0 0.0
    %5090 = vmatpush2.msra.mxu0 0.0
    %5091 = vmatprep.subr.mxu0 0.0
    %5092 = vmatpush2.msra.mxu0 0.0
    %5093 = vmatprep.subr.mxu0 0.0
    %5094 = vmatpush2.msra.mxu0 0.0
    %5095 = vmatprep.subr.mxu0 0.0
    %5096 = vmatpush2.msra.mxu0 0.0
    %5097 = vmatprep.subr.mxu0 0.0
    %5098 = vmatpush2.msra.mxu0 0.0
    %5099 = vmatprep.mubr.f32.mxu0 0.0
    %5100 = vmatmul.mubr.f32.gmra.mxu0 %v782
    %v5101 = vpop.f32.mrf.mxu0
    %v5102 = vadd.f32 0.0, %v5101
    %v5103 = vpop.f32.mrf.mxu0
    %v5104 = vadd.f32 0.0, %v5103
    %5105 = vmatprep.mubr.f32.mxu0 0.0
    %5106 = vmatmul.mubr.f32.gmra.mxu0 %v785
    %v5107 = vpop.f32.mrf.mxu0
    %v5108 = vadd.f32 0.0, %v5107
    %v5109 = vpop.f32.mrf.mxu0
    %v5110 = vadd.f32 0.0, %v5109
    %5111 = vmatprep.mubr.f32.mxu0 0.0
    %5112 = vmatmul.mubr.f32.gmra.mxu0 %v788
    %v5113 = vpop.f32.mrf.mxu0
    %v5114 = vadd.f32 0.0, %v5113
    %v5115 = vpop.f32.mrf.mxu0
    %v5116 = vadd.f32 0.0, %v5115
    %5117 = vmatprep.mubr.f32.mxu0 0.0
    %5118 = vmatmul.mubr.f32.gmra.mxu0 %v791
    %v5119 = vpop.f32.mrf.mxu0
    %v5120 = vadd.f32 0.0, %v5119
    %v5121 = vpop.f32.mrf.mxu0
    %v5122 = vadd.f32 0.0, %v5121
    %5123 = vmatprep.mubr.f32.mxu0 0.0
    %5124 = vmatmul.mubr.f32.gmra.mxu0 %v794
    %v5125 = vpop.f32.mrf.mxu0
    %v5126 = vadd.f32 0.0, %v5125
    %v5127 = vpop.f32.mrf.mxu0
    %v5128 = vadd.f32 0.0, %v5127
    %5129 = vmatprep.mubr.f32.mxu0 0.0
    %5130 = vmatmul.mubr.f32.gmra.mxu0 %v797
    %v5131 = vpop.f32.mrf.mxu0
    %v5132 = vadd.f32 0.0, %v5131
    %v5133 = vpop.f32.mrf.mxu0
    %v5134 = vadd.f32 0.0, %v5133
    %5135 = vmatprep.mubr.f32.mxu0 0.0
    %5136 = vmatmul.mubr.f32.gmra.mxu0 %v800
    %v5137 = vpop.f32.mrf.mxu0
    %v5138 = vadd.f32 0.0, %v5137
    %v5139 = vpop.f32.mrf.mxu0
    %v5140 = vadd.f32 0.0, %v5139
    %5141 = vmatprep.mubr.f32.mxu0 0.0
    %5142 = vmatmul.mubr.f32.gmra.mxu0 %v803
    %v5143 = vpop.f32.mrf.mxu0
    %v5144 = vadd.f32 0.0, %v5143
    %v5145 = vpop.f32.mrf.mxu0
    %v5146 = vadd.f32 0.0, %v5145
    %5147 = vmatprep.mubr.f32.mxu0 0.0
    %5148 = vmatmul.mubr.f32.gmra.mxu0 %v806
    %v5149 = vpop.f32.mrf.mxu0
    %v5150 = vadd.f32 0.0, %v5149
    %v5151 = vpop.f32.mrf.mxu0
    %v5152 = vadd.f32 0.0, %v5151
    %5153 = vmatprep.mubr.f32.mxu0 0.0
    %5154 = vmatmul.mubr.f32.gmra.mxu0 %v809
    %v5155 = vpop.f32.mrf.mxu0
    %v5156 = vadd.f32 0.0, %v5155
    %v5157 = vpop.f32.mrf.mxu0
    %v5158 = vadd.f32 0.0, %v5157
    %5159 = vmatprep.mubr.f32.mxu0 0.0
    %5160 = vmatmul.mubr.f32.gmra.mxu0 %v812
    %v5161 = vpop.f32.mrf.mxu0
    %v5162 = vadd.f32 0.0, %v5161
    %v5163 = vpop.f32.mrf.mxu0
    %v5164 = vadd.f32 0.0, %v5163
    %5165 = vmatprep.mubr.f32.mxu0 0.0
    %5166 = vmatmul.mubr.f32.gmra.mxu0 %v815
    %v5167 = vpop.f32.mrf.mxu0
    %v5168 = vadd.f32 0.0, %v5167
    %v5169 = vpop.f32.mrf.mxu0
    %v5170 = vadd.f32 0.0, %v5169
    %5171 = vmatprep.mubr.f32.mxu0 0.0
    %5172 = vmatmul.mubr.f32.gmra.mxu0 %v818
    %v5173 = vpop.f32.mrf.mxu0
    %v5174 = vadd.f32 0.0, %v5173
    %v5175 = vpop.f32.mrf.mxu0
    %v5176 = vadd.f32 0.0, %v5175
    %5177 = vmatprep.mubr.f32.mxu0 0.0
    %5178 = vmatmul.mubr.f32.gmra.mxu0 %v821
    %v5179 = vpop.f32.mrf.mxu0
    %v5180 = vadd.f32 0.0, %v5179
    %v5181 = vpop.f32.mrf.mxu0
    %v5182 = vadd.f32 0.0, %v5181
    %5183 = vmatprep.mubr.f32.mxu0 0.0
    %5184 = vmatmul.mubr.f32.gmra.mxu0 %v824
    %v5185 = vpop.f32.mrf.mxu0
    %v5186 = vadd.f32 0.0, %v5185
    %v5187 = vpop.f32.mrf.mxu0
    %v5188 = vadd.f32 0.0, %v5187
    %5189 = vmatprep.mubr.f32.mxu0 0.0
    %5190 = vmatmul.mubr.f32.gmra.mxu0 %v827
    %v5191 = vpop.f32.mrf.mxu0
    %v5192 = vadd.f32 0.0, %v5191
    %v5193 = vpop.f32.mrf.mxu0
    %v5194 = vadd.f32 0.0, %v5193
    %5195 = vdwg.mxu0
    %v5196 = vmul.f32 %v5102, %v486
    %v5197 = vmul.f32 %v5108, %v487
    %v5198 = vmul.f32 %v5114, %v488
    %v5199 = vmul.f32 %v5120, %v489
    %v5200 = vmul.f32 %v5126, %v490
    %v5201 = vmul.f32 %v5132, %v491
    %v5202 = vmul.f32 %v5138, %v492
    %v5203 = vmul.f32 %v5144, %v493
    %v5204 = vmul.f32 %v5150, %v494
    %v5205 = vmul.f32 %v5156, %v495
    %v5206 = vmul.f32 %v5162, %v496
    %v5207 = vmul.f32 %v5168, %v497
    %v5208 = vmul.f32 %v5174, %v498
    %v5209 = vmul.f32 %v5180, %v499
    %v5210 = vmul.f32 %v5186, %v500
    %v5211 = vmul.f32 %v5192, %v501
    %v5212 = vmul.f32 %v5102, %v1023
    %v5213 = vmul.f32 %v5104, %v1023
    %v5214 = vmul.f32 %v5108, %v1025
    %v5215 = vmul.f32 %v5110, %v1025
    %v5216 = vmul.f32 %v5114, %v1027
    %v5217 = vmul.f32 %v5116, %v1027
    %v5218 = vmul.f32 %v5120, %v1029
    %v5219 = vmul.f32 %v5122, %v1029
    %v5220 = vmul.f32 %v5126, %v1031
    %v5221 = vmul.f32 %v5128, %v1031
    %v5222 = vmul.f32 %v5132, %v1033
    %v5223 = vmul.f32 %v5134, %v1033
    %v5224 = vmul.f32 %v5138, %v1035
    %v5225 = vmul.f32 %v5140, %v1035
    %v5226 = vmul.f32 %v5144, %v1037
    %v5227 = vmul.f32 %v5146, %v1037
    %v5228 = vmul.f32 %v5150, %v1039
    %v5229 = vmul.f32 %v5152, %v1039
    %v5230 = vmul.f32 %v5156, %v1041
    %v5231 = vmul.f32 %v5158, %v1041
    %v5232 = vmul.f32 %v5162, %v1043
    %v5233 = vmul.f32 %v5164, %v1043
    %v5234 = vmul.f32 %v5168, %v1045
    %v5235 = vmul.f32 %v5170, %v1045
    %v5236 = vmul.f32 %v5174, %v1047
    %v5237 = vmul.f32 %v5176, %v1047
    %v5238 = vmul.f32 %v5180, %v1049
    %v5239 = vmul.f32 %v5182, %v1049
    %v5240 = vmul.f32 %v5186, %v1051
    %v5241 = vmul.f32 %v5188, %v1051
    %v5242 = vmul.f32 %v5192, %v1053
    %v5243 = vmul.f32 %v5194, %v1053
    %v5245 = vsel %vm675, %v5015, 0
    %v5248 = vsel %vm675, %v5016, 0
    %v5251 = vsel %vm675, %v5196, 0
    %v5254 = vsel %vm675, %v5197, 0
    %v5257 = vsel %vm675, %v5198, 0
    %v5260 = vsel %vm675, %v5199, 0
    %v5263 = vsel %vm675, %v5200, 0
    %v5266 = vsel %vm675, %v5201, 0
    %v5269 = vsel %vm675, %v5202, 0
    %v5272 = vsel %vm675, %v5203, 0
    %v5275 = vsel %vm675, %v5204, 0
    %v5278 = vsel %vm675, %v5205, 0
    %v5281 = vsel %vm675, %v5206, 0
    %v5284 = vsel %vm675, %v5207, 0
    %v5287 = vsel %vm675, %v5208, 0
    %v5290 = vsel %vm675, %v5209, 0
    %v5293 = vsel %vm675, %v5210, 0
    %v5296 = vsel %vm675, %v5211, 0
    %5298 = vmatprep.subr.mxu0 0.0
    %5299 = vmatpush1.xpose.msra.mxu0 %v5296
    %5300 = vmatprep.subr.mxu0 0.0
    %5301 = vmatpush1.xpose.msra.mxu0 %v5293
    %5302 = vmatprep.subr.mxu0 0.0
    %5303 = vmatpush1.xpose.msra.mxu0 %v5290
    %5304 = vmatprep.subr.mxu0 0.0
    %5305 = vmatpush1.xpose.msra.mxu0 %v5287
    %5306 = vmatprep.subr.mxu0 0.0
    %5307 = vmatpush1.xpose.msra.mxu0 %v5284
    %5308 = vmatprep.subr.mxu0 0.0
    %5309 = vmatpush1.xpose.msra.mxu0 %v5281
    %5310 = vmatprep.subr.mxu0 0.0
    %5311 = vmatpush1.xpose.msra.mxu0 %v5278
    %5312 = vmatprep.subr.mxu0 0.0
    %5313 = vmatpush1.xpose.msra.mxu0 %v5275
    %5314 = vmatprep.subr.mxu0 0.0
    %5315 = vmatpush1.xpose.msra.mxu0 %v5272
    %5316 = vmatprep.subr.mxu0 0.0
    %5317 = vmatpush1.xpose.msra.mxu0 %v5269
    %5318 = vmatprep.subr.mxu0 0.0
    %5319 = vmatpush1.xpose.msra.mxu0 %v5266
    %5320 = vmatprep.subr.mxu0 0.0
    %5321 = vmatpush1.xpose.msra.mxu0 %v5263
    %5322 = vmatprep.subr.mxu0 0.0
    %5323 = vmatpush1.xpose.msra.mxu0 %v5260
    %5324 = vmatprep.subr.mxu0 0.0
    %5325 = vmatpush1.xpose.msra.mxu0 %v5257
    %5326 = vmatprep.subr.mxu0 0.0
    %5327 = vmatpush1.xpose.msra.mxu0 %v5254
    %5328 = vmatprep.subr.mxu0 0.0
    %5329 = vmatpush1.xpose.msra.mxu0 %v5251
    %5330 = vmatprep.subr.mxu0 0.0
    %5331 = vmatpush2.xpose.msra.mxu0 0.0
    %5332 = vmatprep.subr.mxu0 0.0
    %5333 = vmatpush2.xpose.msra.mxu0 0.0
    %5334 = vmatprep.subr.mxu0 0.0
    %5335 = vmatpush2.xpose.msra.mxu0 0.0
    %5336 = vmatprep.subr.mxu0 0.0
    %5337 = vmatpush2.xpose.msra.mxu0 0.0
    %5338 = vmatprep.subr.mxu0 0.0
    %5339 = vmatpush2.xpose.msra.mxu0 0.0
    %5340 = vmatprep.subr.mxu0 0.0
    %5341 = vmatpush2.xpose.msra.mxu0 0.0
    %5342 = vmatprep.subr.mxu0 0.0
    %5343 = vmatpush2.xpose.msra.mxu0 0.0
    %5344 = vmatprep.subr.mxu0 0.0
    %5345 = vmatpush2.xpose.msra.mxu0 0.0
    %5346 = vmatprep.subr.mxu0 0.0
    %5347 = vmatpush2.xpose.msra.mxu0 0.0
    %5348 = vmatprep.subr.mxu0 0.0
    %5349 = vmatpush2.xpose.msra.mxu0 0.0
    %5350 = vmatprep.subr.mxu0 0.0
    %5351 = vmatpush2.xpose.msra.mxu0 0.0
    %5352 = vmatprep.subr.mxu0 0.0
    %5353 = vmatpush2.xpose.msra.mxu0 0.0
    %5354 = vmatprep.subr.mxu0 0.0
    %5355 = vmatpush2.xpose.msra.mxu0 0.0
    %5356 = vmatprep.subr.mxu0 0.0
    %5357 = vmatpush2.xpose.msra.mxu0 0.0
    %5358 = vmatprep.subr.mxu0 0.0
    %5359 = vmatpush2.xpose.msra.mxu0 0.0
    %5360 = vmatprep.subr.mxu0 0.0
    %5361 = vmatpush2.xpose.msra.mxu0 0.0
    %5362 = vmatprep.mubr.f32.mxu0 0.0
    %5363 = vmatmul.mubr.f32.gmra.mxu0 %v5245
    %v5364 = vpop.f32.mrf.mxu0
    %v5365 = vadd.f32 0.0, %v5364
    %v5366 = vpop.f32.mrf.mxu0
    %5367 = vmatprep.mubr.f32.mxu0 0.0
    %5368 = vmatmul.mubr.f32.gmra.mxu0 %v5248
    %v5369 = vpop.f32.mrf.mxu0
    %v5370 = vadd.f32 0.0, %v5369
    %v5371 = vpop.f32.mrf.mxu0
    %5372 = vdwg.mxu0
    %5373 = vmax.xlane.f32.xlu0 %v5365
    %v5374 = vpop.xlane.xlu0 %5373
    %5375 = vmax.xlane.f32.xlu0 %v5370
    %v5376 = vpop.xlane.xlu0 %5375
    %v5377 = vsub.f32 %v5365, %v5374
    %v5378 = vsub.f32 %v5370, %v5376
    %v5379 = vmul.f32 %v5377, 1.442695
    %v5380 = vpow.pop %v5379
    %v5381 = vmul.f32 %v5378, 1.442695
    %v5382 = vpow.pop %v5381
    %5383 = vmatprep.subr.mxu0 0.0
    %5384 = vmatpush1.msra.mxu0 %v533
    %5385 = vmatprep.subr.mxu0 0.0
    %5386 = vmatpush1.msra.mxu0 %v532
    %5387 = vmatprep.subr.mxu0 0.0
    %5388 = vmatpush1.msra.mxu0 %v531
    %5389 = vmatprep.subr.mxu0 0.0
    %5390 = vmatpush1.msra.mxu0 %v530
    %5391 = vmatprep.subr.mxu0 0.0
    %5392 = vmatpush1.msra.mxu0 %v529
    %5393 = vmatprep.subr.mxu0 0.0
    %5394 = vmatpush1.msra.mxu0 %v528
    %5395 = vmatprep.subr.mxu0 0.0
    %5396 = vmatpush1.msra.mxu0 %v527
    %5397 = vmatprep.subr.mxu0 0.0
    %5398 = vmatpush1.msra.mxu0 %v526
    %5399 = vmatprep.subr.mxu0 0.0
    %5400 = vmatpush1.msra.mxu0 %v525
    %5401 = vmatprep.subr.mxu0 0.0
    %5402 = vmatpush1.msra.mxu0 %v524
    %5403 = vmatprep.subr.mxu0 0.0
    %5404 = vmatpush1.msra.mxu0 %v523
    %5405 = vmatprep.subr.mxu0 0.0
    %5406 = vmatpush1.msra.mxu0 %v522
    %5407 = vmatprep.subr.mxu0 0.0
    %5408 = vmatpush1.msra.mxu0 %v521
    %5409 = vmatprep.subr.mxu0 0.0
    %5410 = vmatpush1.msra.mxu0 %v520
    %5411 = vmatprep.subr.mxu0 0.0
    %5412 = vmatpush1.msra.mxu0 %v519
    %5413 = vmatprep.subr.mxu0 0.0
    %5414 = vmatpush1.msra.mxu0 %v518
    %5415 = vmatprep.subr.mxu0 0.0
    %5416 = vmatpush2.msra.mxu0 0.0
    %5417 = vmatprep.subr.mxu0 0.0
    %5418 = vmatpush2.msra.mxu0 0.0
    %5419 = vmatprep.subr.mxu0 0.0
    %5420 = vmatpush2.msra.mxu0 0.0
    %5421 = vmatprep.subr.mxu0 0.0
    %5422 = vmatpush2.msra.mxu0 0.0
    %5423 = vmatprep.subr.mxu0 0.0
    %5424 = vmatpush2.msra.mxu0 0.0
    %5425 = vmatprep.subr.mxu0 0.0
    %5426 = vmatpush2.msra.mxu0 0.0
    %5427 = vmatprep.subr.mxu0 0.0
    %5428 = vmatpush2.msra.mxu0 0.0
    %5429 = vmatprep.subr.mxu0 0.0
    %5430 = vmatpush2.msra.mxu0 0.0
    %5431 = vmatprep.subr.mxu0 0.0
    %5432 = vmatpush2.msra.mxu0 0.0
    %5433 = vmatprep.subr.mxu0 0.0
    %5434 = vmatpush2.msra.mxu0 0.0
    %5435 = vmatprep.subr.mxu0 0.0
    %5436 = vmatpush2.msra.mxu0 0.0
    %5437 = vmatprep.subr.mxu0 0.0
    %5438 = vmatpush2.msra.mxu0 0.0
    %5439 = vmatprep.subr.mxu0 0.0
    %5440 = vmatpush2.msra.mxu0 0.0
    %5441 = vmatprep.subr.mxu0 0.0
    %5442 = vmatpush2.msra.mxu0 0.0
    %5443 = vmatprep.subr.mxu0 0.0
    %5444 = vmatpush2.msra.mxu0 0.0
    %5445 = vmatprep.subr.mxu0 0.0
    %5446 = vmatpush2.msra.mxu0 0.0
    %5447 = vmatprep.mubr.f32.mxu0 0.0
    %5448 = vmatmul.mubr.f32.gmra.mxu0 %v5380
    %v5449 = vpop.f32.mrf.mxu0
    %v5450 = vadd.f32 0.0, %v5449
    %v5451 = vpop.f32.mrf.mxu0
    %5452 = vmatprep.mubr.f32.mxu0 0.0
    %5453 = vmatmul.mubr.f32.gmra.mxu0 %v5382
    %v5454 = vpop.f32.mrf.mxu0
    %v5455 = vadd.f32 0.0, %v5454
    %v5456 = vpop.f32.mrf.mxu0
    %5457 = vdwg.mxu0
    %v5458 = vmax.f32 %v5450, 1e-30
    %v5459 = vmax.f32 %v5455, 1e-30
    %v5460 = vrcp.pop %v5458
    %v5461 = vmul.f32 %v5380, %v5460
    %v5462 = vrcp.pop %v5459
    %v5463 = vmul.f32 %v5382, %v5462
    %5496 = vrot.lane.b32.xlu0 %v5212, 48
    %v5497 = vpop.permute.xlu0 %5496
    %5498 = vrot.lane.b32.xlu0 %v5213, 48
    %v5499 = vpop.permute.xlu0 %5498
    %5500 = vrot.lane.b32.xlu0 %v5214, 48
    %v5501 = vpop.permute.xlu0 %5500
    %5502 = vrot.lane.b32.xlu0 %v5215, 48
    %v5503 = vpop.permute.xlu0 %5502
    %5504 = vrot.lane.b32.xlu0 %v5216, 48
    %v5505 = vpop.permute.xlu0 %5504
    %5506 = vrot.lane.b32.xlu0 %v5217, 48
    %v5507 = vpop.permute.xlu0 %5506
    %5508 = vrot.lane.b32.xlu0 %v5218, 48
    %v5509 = vpop.permute.xlu0 %5508
    %5510 = vrot.lane.b32.xlu0 %v5219, 48
    %v5511 = vpop.permute.xlu0 %5510
    %5512 = vrot.lane.b32.xlu0 %v5220, 48
    %v5513 = vpop.permute.xlu0 %5512
    %5514 = vrot.lane.b32.xlu0 %v5221, 48
    %v5515 = vpop.permute.xlu0 %5514
    %5516 = vrot.lane.b32.xlu0 %v5222, 48
    %v5517 = vpop.permute.xlu0 %5516
    %5518 = vrot.lane.b32.xlu0 %v5223, 48
    %v5519 = vpop.permute.xlu0 %5518
    %5520 = vrot.lane.b32.xlu0 %v5224, 48
    %v5521 = vpop.permute.xlu0 %5520
    %5522 = vrot.lane.b32.xlu0 %v5225, 48
    %v5523 = vpop.permute.xlu0 %5522
    %5524 = vrot.lane.b32.xlu0 %v5226, 48
    %v5525 = vpop.permute.xlu0 %5524
    %5526 = vrot.lane.b32.xlu0 %v5227, 48
    %v5527 = vpop.permute.xlu0 %5526
    %5528 = vrot.lane.b32.xlu0 %v5228, 48
    %v5529 = vpop.permute.xlu0 %5528
    %5530 = vrot.lane.b32.xlu0 %v5229, 48
    %v5531 = vpop.permute.xlu0 %5530
    %5532 = vrot.lane.b32.xlu0 %v5230, 48
    %v5533 = vpop.permute.xlu0 %5532
    %5534 = vrot.lane.b32.xlu0 %v5231, 48
    %v5535 = vpop.permute.xlu0 %5534
    %5536 = vrot.lane.b32.xlu0 %v5232, 48
    %v5537 = vpop.permute.xlu0 %5536
    %5538 = vrot.lane.b32.xlu0 %v5233, 48
    %v5539 = vpop.permute.xlu0 %5538
    %5540 = vrot.lane.b32.xlu0 %v5234, 48
    %v5541 = vpop.permute.xlu0 %5540
    %5542 = vrot.lane.b32.xlu0 %v5235, 48
    %v5543 = vpop.permute.xlu0 %5542
    %5544 = vrot.lane.b32.xlu0 %v5236, 48
    %v5545 = vpop.permute.xlu0 %5544
    %5546 = vrot.lane.b32.xlu0 %v5237, 48
    %v5547 = vpop.permute.xlu0 %5546
    %5548 = vrot.lane.b32.xlu0 %v5238, 48
    %v5549 = vpop.permute.xlu0 %5548
    %5550 = vrot.lane.b32.xlu0 %v5239, 48
    %v5551 = vpop.permute.xlu0 %5550
    %5552 = vrot.lane.b32.xlu0 %v5240, 48
    %v5553 = vpop.permute.xlu0 %5552
    %5554 = vrot.lane.b32.xlu0 %v5241, 48
    %v5555 = vpop.permute.xlu0 %5554
    %5556 = vrot.lane.b32.xlu0 %v5242, 48
    %v5557 = vpop.permute.xlu0 %5556
    %5558 = vrot.lane.b32.xlu0 %v5243, 48
    %v5559 = vpop.permute.xlu0 %5558
    %v5560 = vsel %vm773, %v5497, %v5499
    %v5561 = vsel %vm773, %v5501, %v5503
    %v5562 = vsel %vm773, %v5505, %v5507
    %v5563 = vsel %vm773, %v5509, %v5511
    %v5564 = vsel %vm773, %v5513, %v5515
    %v5565 = vsel %vm773, %v5517, %v5519
    %v5566 = vsel %vm773, %v5521, %v5523
    %v5567 = vsel %vm773, %v5525, %v5527
    %v5568 = vsel %vm773, %v5529, %v5531
    %v5569 = vsel %vm773, %v5533, %v5535
    %v5570 = vsel %vm773, %v5537, %v5539
    %v5571 = vsel %vm773, %v5541, %v5543
    %v5572 = vsel %vm773, %v5545, %v5547
    %v5573 = vsel %vm773, %v5549, %v5551
    %v5574 = vsel %vm773, %v5553, %v5555
    %v5575 = vsel %vm773, %v5557, %v5559
    %5592 = vmatprep.subr.mxu0 0.0
    %5593 = vmatpush1.msra.mxu0 %v5575
    %5594 = vmatprep.subr.mxu0 0.0
    %5595 = vmatpush1.msra.mxu0 %v5574
    %5596 = vmatprep.subr.mxu0 0.0
    %5597 = vmatpush1.msra.mxu0 %v5573
    %5598 = vmatprep.subr.mxu0 0.0
    %5599 = vmatpush1.msra.mxu0 %v5572
    %5600 = vmatprep.subr.mxu0 0.0
    %5601 = vmatpush1.msra.mxu0 %v5571
    %5602 = vmatprep.subr.mxu0 0.0
    %5603 = vmatpush1.msra.mxu0 %v5570
    %5604 = vmatprep.subr.mxu0 0.0
    %5605 = vmatpush1.msra.mxu0 %v5569
    %5606 = vmatprep.subr.mxu0 0.0
    %5607 = vmatpush1.msra.mxu0 %v5568
    %5608 = vmatprep.subr.mxu0 0.0
    %5609 = vmatpush1.msra.mxu0 %v5567
    %5610 = vmatprep.subr.mxu0 0.0
    %5611 = vmatpush1.msra.mxu0 %v5566
    %5612 = vmatprep.subr.mxu0 0.0
    %5613 = vmatpush1.msra.mxu0 %v5565
    %5614 = vmatprep.subr.mxu0 0.0
    %5615 = vmatpush1.msra.mxu0 %v5564
    %5616 = vmatprep.subr.mxu0 0.0
    %5617 = vmatpush1.msra.mxu0 %v5563
    %5618 = vmatprep.subr.mxu0 0.0
    %5619 = vmatpush1.msra.mxu0 %v5562
    %5620 = vmatprep.subr.mxu0 0.0
    %5621 = vmatpush1.msra.mxu0 %v5561
    %5622 = vmatprep.subr.mxu0 0.0
    %5623 = vmatpush1.msra.mxu0 %v5560
    %5624 = vmatprep.subr.mxu0 0.0
    %5625 = vmatpush2.msra.mxu0 0.0
    %5626 = vmatprep.subr.mxu0 0.0
    %5627 = vmatpush2.msra.mxu0 0.0
    %5628 = vmatprep.subr.mxu0 0.0
    %5629 = vmatpush2.msra.mxu0 0.0
    %5630 = vmatprep.subr.mxu0 0.0
    %5631 = vmatpush2.msra.mxu0 0.0
    %5632 = vmatprep.subr.mxu0 0.0
    %5633 = vmatpush2.msra.mxu0 0.0
    %5634 = vmatprep.subr.mxu0 0.0
    %5635 = vmatpush2.msra.mxu0 0.0
    %5636 = vmatprep.subr.mxu0 0.0
    %5637 = vmatpush2.msra.mxu0 0.0
    %5638 = vmatprep.subr.mxu0 0.0
    %5639 = vmatpush2.msra.mxu0 0.0
    %5640 = vmatprep.subr.mxu0 0.0
    %5641 = vmatpush2.msra.mxu0 0.0
    %5642 = vmatprep.subr.mxu0 0.0
    %5643 = vmatpush2.msra.mxu0 0.0
    %5644 = vmatprep.subr.mxu0 0.0
    %5645 = vmatpush2.msra.mxu0 0.0
    %5646 = vmatprep.subr.mxu0 0.0
    %5647 = vmatpush2.msra.mxu0 0.0
    %5648 = vmatprep.subr.mxu0 0.0
    %5649 = vmatpush2.msra.mxu0 0.0
    %5650 = vmatprep.subr.mxu0 0.0
    %5651 = vmatpush2.msra.mxu0 0.0
    %5652 = vmatprep.subr.mxu0 0.0
    %5653 = vmatpush2.msra.mxu0 0.0
    %5654 = vmatprep.subr.mxu0 0.0
    %5655 = vmatpush2.msra.mxu0 0.0
    %5656 = vmatprep.mubr.f32.mxu0 0.0
    %5657 = vmatmul.mubr.f32.gmra.mxu0 %v5461
    %v5658 = vpop.f32.mrf.mxu0
    %v5659 = vadd.f32 0.0, %v5658
    %v5660 = vpop.f32.mrf.mxu0
    %5661 = vmatprep.mubr.f32.mxu0 0.0
    %5662 = vmatmul.mubr.f32.gmra.mxu0 %v5463
    %v5663 = vpop.f32.mrf.mxu0
    %v5664 = vadd.f32 0.0, %v5663
    %v5665 = vpop.f32.mrf.mxu0
    %5666 = vdwg.mxu0
    %v5667 = vld [vmem:[%s2 + $0x40] sm:$0xff]
    %v5668 = vld [vmem:[%s2 + $0x90] sm:$0xff]
    %v5669 = vld [vmem:[%s2 + $0xe0] sm:$0xff]
    %v5670 = vld [vmem:[%s2 + $0x130] sm:$0xff]
    %v5671 = vld [vmem:[%s2 + $0x180] sm:$0xff]
    %v5672 = vld [vmem:[%s2 + $0x1d0] sm:$0xff]
    %v5673 = vld [vmem:[%s2 + $0x220] sm:$0xff]
    %v5674 = vld [vmem:[%s2 + $0x270] sm:$0xff]
    %v5675 = vld [vmem:[%s2 + $0x2c0] sm:$0xff]
    %v5676 = vld [vmem:[%s2 + $0x310] sm:$0xff]
    %v5677 = vld [vmem:[%s3 + $0x1e] sm:$0x1]
    %v5679 = vlaneseq
    %v5680 = vshrl.u32 %v5679, 7
    %v5681 = vsub.s32 0, %v5680
    %v5682 = vrot.slane %v5677, %v5681
    %v5685 = vsel %vm675, %v5659, 0
    %v5688 = vsel %vm675, %v5664, 0
    %5690 = vmatprep.subr.mxu0 0.0
    %5691 = vmatpush1.msra.mxu0 0.0
    %5692 = vmatprep.subr.mxu0 0.0
    %5693 = vmatpush1.msra.mxu0 0.0
    %5694 = vmatprep.subr.mxu0 0.0
    %5695 = vmatpush1.msra.mxu0 0.0
    %5696 = vmatprep.subr.mxu0 0.0
    %5697 = vmatpush1.msra.mxu0 0.0
    %5698 = vmatprep.subr.mxu0 0.0
    %5699 = vmatpush1.msra.mxu0 0.0
    %5700 = vmatprep.subr.mxu0 0.0
    %5701 = vmatpush1.msra.mxu0 0.0
    %5702 = vmatprep.subr.mxu0 0.0
    %5703 = vmatpush1.msra.mxu0 %v5676
    %5704 = vmatprep.subr.mxu0 0.0
    %5705 = vmatpush1.msra.mxu0 %v5675
    %5706 = vmatprep.subr.mxu0 0.0
    %5707 = vmatpush1.msra.mxu0 %v5674
    %5708 = vmatprep.subr.mxu0 0.0
    %5709 = vmatpush1.msra.mxu0 %v5673
    %5710 = vmatprep.subr.mxu0 0.0
    %5711 = vmatpush1.msra.mxu0 %v5672
    %5712 = vmatprep.subr.mxu0 0.0
    %5713 = vmatpush1.msra.mxu0 %v5671
    %5714 = vmatprep.subr.mxu0 0.0
    %5715 = vmatpush1.msra.mxu0 %v5670
    %5716 = vmatprep.subr.mxu0 0.0
    %5717 = vmatpush1.msra.mxu0 %v5669
    %5718 = vmatprep.subr.mxu0 0.0
    %5719 = vmatpush1.msra.mxu0 %v5668
    %5720 = vmatprep.subr.mxu0 0.0
    %5721 = vmatpush1.msra.mxu0 %v5667
    %5722 = vmatprep.subr.mxu0 0.0
    %5723 = vmatpush2.msra.mxu0 0.0
    %5724 = vmatprep.subr.mxu0 0.0
    %5725 = vmatpush2.msra.mxu0 0.0
    %5726 = vmatprep.subr.mxu0 0.0
    %5727 = vmatpush2.msra.mxu0 0.0
    %5728 = vmatprep.subr.mxu0 0.0
    %5729 = vmatpush2.msra.mxu0 0.0
    %5730 = vmatprep.subr.mxu0 0.0
    %5731 = vmatpush2.msra.mxu0 0.0
    %5732 = vmatprep.subr.mxu0 0.0
    %5733 = vmatpush2.msra.mxu0 0.0
    %5734 = vmatprep.subr.mxu0 0.0
    %5735 = vmatpush2.msra.mxu0 0.0
    %5736 = vmatprep.subr.mxu0 0.0
    %5737 = vmatpush2.msra.mxu0 0.0
    %5738 = vmatprep.subr.mxu0 0.0
    %5739 = vmatpush2.msra.mxu0 0.0
    %5740 = vmatprep.subr.mxu0 0.0
    %5741 = vmatpush2.msra.mxu0 0.0
    %5742 = vmatprep.subr.mxu0 0.0
    %5743 = vmatpush2.msra.mxu0 0.0
    %5744 = vmatprep.subr.mxu0 0.0
    %5745 = vmatpush2.msra.mxu0 0.0
    %5746 = vmatprep.subr.mxu0 0.0
    %5747 = vmatpush2.msra.mxu0 0.0
    %5748 = vmatprep.subr.mxu0 0.0
    %5749 = vmatpush2.msra.mxu0 0.0
    %5750 = vmatprep.subr.mxu0 0.0
    %5751 = vmatpush2.msra.mxu0 0.0
    %5752 = vmatprep.subr.mxu0 0.0
    %5753 = vmatpush2.msra.mxu0 0.0
    %5754 = vmatprep.mubr.f32.mxu0 0.0
    %5755 = vmatmul.mubr.f32.gmra.mxu0 %v5685
    %v5756 = vpop.f32.mrf.mxu0
    %v5757 = vadd.f32 %v5682, %v5756
    %v5758 = vpop.f32.mrf.mxu0
    %5759 = vmatprep.mubr.f32.mxu0 0.0
    %5760 = vmatmul.mubr.f32.gmra.mxu0 %v5688
    %v5761 = vpop.f32.mrf.mxu0
    %v5762 = vadd.f32 %v5682, %v5761
    %v5763 = vpop.f32.mrf.mxu0
    %5764 = vdwg.mxu0
    %v5765 = vadd.f32 %v4898, %v5757
    %v5766 = vadd.f32 %v4899, %v5762
    %v5767 = vld [vmem:[%s3 + $0x1f] sm:$0x1]
    %v5768 = vld [vmem:[%s3 + $0x20] sm:$0x1]
    %v5769 = vsel %vm675, %v5765, 0.0
    %5770 = vadd.xlane.f32.xlu0 %v5769
    %v5771 = vpop.xlane.xlu0 %5770
    %v5772 = vsel %vm675, %v5766, 0.0
    %5773 = vadd.xlane.f32.xlu0 %v5772
    %v5774 = vpop.xlane.xlu0 %5773
    %v5775 = vmul.f32 %v5771, %v2498
    %v5776 = vmul.f32 %v5774, %v2498
    %v5777 = vsub.f32 %v5765, %v5775
    %v5778 = vsub.f32 %v5766, %v5776
    %v5779 = vmul.f32 %v5777, %v5777
    %v5780 = vmul.f32 %v5778, %v5778
    %v5781 = vsel %vm675, %v5779, 0.0
    %5782 = vadd.xlane.f32.xlu0 %v5781
    %v5783 = vpop.xlane.xlu0 %5782
    %v5784 = vsel %vm675, %v5780, 0.0
    %5785 = vadd.xlane.f32.xlu0 %v5784
    %v5786 = vpop.xlane.xlu0 %5785
    %v5787 = vmul.f32 %v5783, %v2498
    %v5788 = vmul.f32 %v5786, %v2498
    %v5789 = vadd.f32 %v5787, 1e-05
    %v5790 = vadd.f32 %v5788, 1e-05
    %v5791 = vrsqrt.pop %v5789
    %v5792 = vrsqrt.pop %v5790
    %v5793 = vmul.f32 %v5777, %v5791
    %v5794 = vmul.f32 %v5778, %v5792
    %v5796 = vlaneseq
    %v5797 = vshrl.u32 %v5796, 7
    %v5798 = vsub.s32 0, %v5797
    %v5799 = vrot.slane %v5767, %v5798
    %v5801 = vmul.f32 %v5793, %v5799
    %v5802 = vmul.f32 %v5794, %v5799
    %v5804 = vlaneseq
    %v5805 = vshrl.u32 %v5804, 7
    %v5806 = vsub.s32 0, %v5805
    %v5807 = vrot.slane %v5768, %v5806
    %v5809 = vadd.f32 %v5801, %v5807
    %v5810 = vadd.f32 %v5802, %v5807
    %v5811 = vpack.c.bf16 %v5810, %v5809
    %s5812 = scalar_lea.vmem %s4, 640
    %v5813 = vld [vmem:[%s5812] sm:$0xff]
    %v5814 = vld [vmem:[%s5812 + $0x8] sm:$0xff]
    %v5815 = vld [vmem:[%s5812 + $0x10] sm:$0xff]
    %v5816 = vld [vmem:[%s5812 + $0x18] sm:$0xff]
    %v5817 = vld [vmem:[%s5812 + $0x20] sm:$0xff]
    %v5818 = vld [vmem:[%s5812 + $0x28] sm:$0xff]
    %v5819 = vld [vmem:[%s5812 + $0x30] sm:$0xff]
    %v5820 = vld [vmem:[%s5812 + $0x38] sm:$0xff]
    %v5821 = vld [vmem:[%s5812 + $0x40] sm:$0xff]
    %v5822 = vld [vmem:[%s5812 + $0x48] sm:$0xff]
    %v5823 = vld [vmem:[%s5812 + $0x50] sm:$0xff]
    %v5824 = vld [vmem:[%s5812 + $0x58] sm:$0xff]
    %v5825 = vld [vmem:[%s5812 + $0x60] sm:$0xff]
    %v5826 = vld [vmem:[%s5812 + $0x68] sm:$0xff]
    %v5827 = vld [vmem:[%s5812 + $0x70] sm:$0xff]
    %v5828 = vld [vmem:[%s5812 + $0x78] sm:$0xff]
    %v5829 = vld [vmem:[%s5812 + $0x80] sm:$0xff]
    %v5830 = vld [vmem:[%s5812 + $0x88] sm:$0xff]
    %v5831 = vld [vmem:[%s5812 + $0x90] sm:$0xff]
    %v5832 = vld [vmem:[%s5812 + $0x98] sm:$0xff]
    %v5833 = vld [vmem:[%s5812 + $0xa0] sm:$0xff]
    %v5834 = vld [vmem:[%s5812 + $0xa8] sm:$0xff]
    %v5835 = vld [vmem:[%s5812 + $0xb0] sm:$0xff]
    %v5836 = vld [vmem:[%s5812 + $0xb8] sm:$0xff]
    %v5837 = vld [vmem:[%s5812 + $0xc0] sm:$0xff]
    %v5838 = vld [vmem:[%s5812 + $0xc8] sm:$0xff]
    %v5839 = vld [vmem:[%s5812 + $0xd0] sm:$0xff]
    %v5840 = vld [vmem:[%s5812 + $0xd8] sm:$0xff]
    %v5841 = vld [vmem:[%s5812 + $0xe0] sm:$0xff]
    %v5842 = vld [vmem:[%s5812 + $0xe8] sm:$0xff]
    %v5843 = vld [vmem:[%s5812 + $0xf0] sm:$0xff]
    %v5844 = vld [vmem:[%s5812 + $0xf8] sm:$0xff]
    %v5845 = vld [vmem:[%s5812 + $0x100] sm:$0xff]
    %v5846 = vld [vmem:[%s5812 + $0x108] sm:$0xff]
    %v5847 = vld [vmem:[%s5812 + $0x110] sm:$0xff]
    %v5848 = vld [vmem:[%s5812 + $0x118] sm:$0xff]
    %v5849 = vld [vmem:[%s5812 + $0x120] sm:$0xff]
    %v5850 = vld [vmem:[%s5812 + $0x128] sm:$0xff]
    %v5851 = vld [vmem:[%s5812 + $0x130] sm:$0xff]
    %v5852 = vld [vmem:[%s5812 + $0x138] sm:$0xff]
    %v5853 = vld [vmem:[%s5812 + $0x140] sm:$0xff]
    %v5854 = vld [vmem:[%s5812 + $0x148] sm:$0xff]
    %v5855 = vld [vmem:[%s5812 + $0x150] sm:$0xff]
    %v5856 = vld [vmem:[%s5812 + $0x158] sm:$0xff]
    %v5857 = vld [vmem:[%s5812 + $0x160] sm:$0xff]
    %v5858 = vld [vmem:[%s5812 + $0x168] sm:$0xff]
    %v5859 = vld [vmem:[%s5812 + $0x170] sm:$0xff]
    %v5860 = vld [vmem:[%s5812 + $0x178] sm:$0xff]
    %v5861 = vld [vmem:[%s5812 + $0x180] sm:$0xff]
    %v5862 = vld [vmem:[%s5812 + $0x188] sm:$0xff]
    %v5863 = vld [vmem:[%s5812 + $0x190] sm:$0xff]
    %v5864 = vld [vmem:[%s5812 + $0x198] sm:$0xff]
    %v5865 = vld [vmem:[%s5812 + $0x1a0] sm:$0xff]
    %v5866 = vld [vmem:[%s5812 + $0x1a8] sm:$0xff]
    %v5867 = vld [vmem:[%s5812 + $0x1b0] sm:$0xff]
    %v5868 = vld [vmem:[%s5812 + $0x1b8] sm:$0xff]
    %v5869 = vld [vmem:[%s5812 + $0x1c0] sm:$0xff]
    %v5870 = vld [vmem:[%s5812 + $0x1c8] sm:$0xff]
    %v5871 = vld [vmem:[%s5812 + $0x1d0] sm:$0xff]
    %v5872 = vld [vmem:[%s5812 + $0x1d8] sm:$0xff]
    %v5873 = vld [vmem:[%s5812 + $0x1e0] sm:$0xff]
    %v5874 = vld [vmem:[%s5812 + $0x1e8] sm:$0xff]
    %v5875 = vld [vmem:[%s5812 + $0x1f0] sm:$0xff]
    %v5876 = vld [vmem:[%s5812 + $0x1f8] sm:$0xff]
    %v5877 = vld [vmem:[%s5812 + $0x200] sm:$0xff]
    %v5878 = vld [vmem:[%s5812 + $0x208] sm:$0xff]
    %v5879 = vld [vmem:[%s5812 + $0x210] sm:$0xff]
    %v5880 = vld [vmem:[%s5812 + $0x218] sm:$0xff]
    %v5881 = vld [vmem:[%s5812 + $0x220] sm:$0xff]
    %v5882 = vld [vmem:[%s5812 + $0x228] sm:$0xff]
    %v5883 = vld [vmem:[%s5812 + $0x230] sm:$0xff]
    %v5884 = vld [vmem:[%s5812 + $0x238] sm:$0xff]
    %v5885 = vld [vmem:[%s5812 + $0x240] sm:$0xff]
    %v5886 = vld [vmem:[%s5812 + $0x248] sm:$0xff]
    %v5887 = vld [vmem:[%s5812 + $0x250] sm:$0xff]
    %v5888 = vld [vmem:[%s5812 + $0x258] sm:$0xff]
    %v5889 = vld [vmem:[%s5812 + $0x260] sm:$0xff]
    %v5890 = vld [vmem:[%s5812 + $0x268] sm:$0xff]
    %v5891 = vld [vmem:[%s5812 + $0x270] sm:$0xff]
    %v5892 = vld [vmem:[%s5812 + $0x278] sm:$0xff]
    %v5893 = vld [vmem:[%s3 + $0x21] sm:$0xff]
    %v5894 = vld [vmem:[%s3 + $0x29] sm:$0xff]
    %v5897 = vlaneseq
    %v5898 = vshrl.u32 %v5897, 7
    %v5899 = vsub.s32 0, %v5898
    %v5900 = vrot.slane %v5893, %v5899
    %v5901 = vlaneseq
    %v5902 = vshrl.u32 %v5901, 7
    %v5903 = vsub.s32 1, %v5902
    %v5904 = vrot.slane %v5893, %v5903
    %v5905 = vlaneseq
    %v5906 = vshrl.u32 %v5905, 7
    %v5907 = vsub.s32 2, %v5906
    %v5908 = vrot.slane %v5893, %v5907
    %v5909 = vlaneseq
    %v5910 = vshrl.u32 %v5909, 7
    %v5911 = vsub.s32 3, %v5910
    %v5912 = vrot.slane %v5893, %v5911
    %v5913 = vlaneseq
    %v5914 = vshrl.u32 %v5913, 7
    %v5915 = vsub.s32 4, %v5914
    %v5916 = vrot.slane %v5893, %v5915
    %v5917 = vlaneseq
    %v5918 = vshrl.u32 %v5917, 7
    %v5919 = vsub.s32 5, %v5918
    %v5920 = vrot.slane %v5893, %v5919
    %v5921 = vlaneseq
    %v5922 = vshrl.u32 %v5921, 7
    %v5923 = vsub.s32 6, %v5922
    %v5924 = vrot.slane %v5893, %v5923
    %v5925 = vlaneseq
    %v5926 = vshrl.u32 %v5925, 7
    %v5927 = vsub.s32 7, %v5926
    %v5928 = vrot.slane %v5893, %v5927
    %v5929 = vlaneseq
    %v5930 = vshrl.u32 %v5929, 7
    %v5931 = vsub.s32 0, %v5930
    %v5932 = vrot.slane %v5894, %v5931
    %v5933 = vlaneseq
    %v5934 = vshrl.u32 %v5933, 7
    %v5935 = vsub.s32 1, %v5934
    %v5936 = vrot.slane %v5894, %v5935
    %v5937 = vlaneseq
    %v5938 = vshrl.u32 %v5937, 7
    %v5939 = vsub.s32 2, %v5938
    %v5940 = vrot.slane %v5894, %v5939
    %v5941 = vlaneseq
    %v5942 = vshrl.u32 %v5941, 7
    %v5943 = vsub.s32 3, %v5942
    %v5944 = vrot.slane %v5894, %v5943
    %v5945 = vlaneseq
    %v5946 = vshrl.u32 %v5945, 7
    %v5947 = vsub.s32 4, %v5946
    %v5948 = vrot.slane %v5894, %v5947
    %v5949 = vlaneseq
    %v5950 = vshrl.u32 %v5949, 7
    %v5951 = vsub.s32 5, %v5950
    %v5952 = vrot.slane %v5894, %v5951
    %v5953 = vlaneseq
    %v5954 = vshrl.u32 %v5953, 7
    %v5955 = vsub.s32 6, %v5954
    %v5956 = vrot.slane %v5894, %v5955
    %v5957 = vlaneseq
    %v5958 = vshrl.u32 %v5957, 7
    %v5959 = vsub.s32 7, %v5958
    %v5960 = vrot.slane %v5894, %v5959
    %v6057 = vunpack.c.l.b16 %v5813
    %v6058 = vunpack.c.h.b16 %v5813
    %v6059 = vunpack.c.l.b16 %v5814
    %v6060 = vunpack.c.h.b16 %v5814
    %v6061 = vunpack.c.l.b16 %v5815
    %v6062 = vunpack.c.h.b16 %v5815
    %v6063 = vunpack.c.l.b16 %v5816
    %v6064 = vunpack.c.h.b16 %v5816
    %v6065 = vunpack.c.l.b16 %v5817
    %v6066 = vunpack.c.h.b16 %v5817
    %v6067 = vunpack.c.l.b16 %v5818
    %v6068 = vunpack.c.h.b16 %v5818
    %v6069 = vunpack.c.l.b16 %v5819
    %v6070 = vunpack.c.h.b16 %v5819
    %v6071 = vunpack.c.l.b16 %v5820
    %v6072 = vunpack.c.h.b16 %v5820
    %v6073 = vunpack.c.l.b16 %v5821
    %v6074 = vunpack.c.h.b16 %v5821
    %v6075 = vunpack.c.l.b16 %v5822
    %v6076 = vunpack.c.h.b16 %v5822
    %v6077 = vunpack.c.l.b16 %v5823
    %v6078 = vunpack.c.h.b16 %v5823
    %v6079 = vunpack.c.l.b16 %v5824
    %v6080 = vunpack.c.h.b16 %v5824
    %v6081 = vunpack.c.l.b16 %v5825
    %v6082 = vunpack.c.h.b16 %v5825
    %v6083 = vunpack.c.l.b16 %v5826
    %v6084 = vunpack.c.h.b16 %v5826
    %v6085 = vunpack.c.l.b16 %v5827
    %v6086 = vunpack.c.h.b16 %v5827
    %v6087 = vunpack.c.l.b16 %v5828
    %v6088 = vunpack.c.h.b16 %v5828
    %v6089 = vunpack.c.l.b16 %v5829
    %v6090 = vunpack.c.h.b16 %v5829
    %v6091 = vunpack.c.l.b16 %v5830
    %v6092 = vunpack.c.h.b16 %v5830
    %v6093 = vunpack.c.l.b16 %v5831
    %v6094 = vunpack.c.h.b16 %v5831
    %v6095 = vunpack.c.l.b16 %v5832
    %v6096 = vunpack.c.h.b16 %v5832
    %v6097 = vunpack.c.l.b16 %v5833
    %v6098 = vunpack.c.h.b16 %v5833
    %v6099 = vunpack.c.l.b16 %v5834
    %v6100 = vunpack.c.h.b16 %v5834
    %v6101 = vunpack.c.l.b16 %v5835
    %v6102 = vunpack.c.h.b16 %v5835
    %v6103 = vunpack.c.l.b16 %v5836
    %v6104 = vunpack.c.h.b16 %v5836
    %v6105 = vunpack.c.l.b16 %v5837
    %v6106 = vunpack.c.h.b16 %v5837
    %v6107 = vunpack.c.l.b16 %v5838
    %v6108 = vunpack.c.h.b16 %v5838
    %v6109 = vunpack.c.l.b16 %v5839
    %v6110 = vunpack.c.h.b16 %v5839
    %v6111 = vunpack.c.l.b16 %v5840
    %v6112 = vunpack.c.h.b16 %v5840
    %v6113 = vunpack.c.l.b16 %v5841
    %v6114 = vunpack.c.h.b16 %v5841
    %v6115 = vunpack.c.l.b16 %v5842
    %v6116 = vunpack.c.h.b16 %v5842
    %v6117 = vunpack.c.l.b16 %v5843
    %v6118 = vunpack.c.h.b16 %v5843
    %v6119 = vunpack.c.l.b16 %v5844
    %v6120 = vunpack.c.h.b16 %v5844
    %v6121 = vunpack.c.l.b16 %v5845
    %v6122 = vunpack.c.h.b16 %v5845
    %v6123 = vunpack.c.l.b16 %v5846
    %v6124 = vunpack.c.h.b16 %v5846
    %v6125 = vunpack.c.l.b16 %v5847
    %v6126 = vunpack.c.h.b16 %v5847
    %v6127 = vunpack.c.l.b16 %v5848
    %v6128 = vunpack.c.h.b16 %v5848
    %v6129 = vunpack.c.l.b16 %v5849
    %v6130 = vunpack.c.h.b16 %v5849
    %v6131 = vunpack.c.l.b16 %v5850
    %v6132 = vunpack.c.h.b16 %v5850
    %v6133 = vunpack.c.l.b16 %v5851
    %v6134 = vunpack.c.h.b16 %v5851
    %v6135 = vunpack.c.l.b16 %v5852
    %v6136 = vunpack.c.h.b16 %v5852
    %v6137 = vunpack.c.l.b16 %v5853
    %v6138 = vunpack.c.h.b16 %v5853
    %v6139 = vunpack.c.l.b16 %v5854
    %v6140 = vunpack.c.h.b16 %v5854
    %v6141 = vunpack.c.l.b16 %v5855
    %v6142 = vunpack.c.h.b16 %v5855
    %v6143 = vunpack.c.l.b16 %v5856
    %v6144 = vunpack.c.h.b16 %v5856
    %v6145 = vunpack.c.l.b16 %v5857
    %v6146 = vunpack.c.h.b16 %v5857
    %v6147 = vunpack.c.l.b16 %v5858
    %v6148 = vunpack.c.h.b16 %v5858
    %v6149 = vunpack.c.l.b16 %v5859
    %v6150 = vunpack.c.h.b16 %v5859
    %v6151 = vunpack.c.l.b16 %v5860
    %v6152 = vunpack.c.h.b16 %v5860
    %v6153 = vunpack.c.l.b16 %v5861
    %v6154 = vunpack.c.h.b16 %v5861
    %v6155 = vunpack.c.l.b16 %v5862
    %v6156 = vunpack.c.h.b16 %v5862
    %v6157 = vunpack.c.l.b16 %v5863
    %v6158 = vunpack.c.h.b16 %v5863
    %v6159 = vunpack.c.l.b16 %v5864
    %v6160 = vunpack.c.h.b16 %v5864
    %v6161 = vunpack.c.l.b16 %v5865
    %v6162 = vunpack.c.h.b16 %v5865
    %v6163 = vunpack.c.l.b16 %v5866
    %v6164 = vunpack.c.h.b16 %v5866
    %v6165 = vunpack.c.l.b16 %v5867
    %v6166 = vunpack.c.h.b16 %v5867
    %v6167 = vunpack.c.l.b16 %v5868
    %v6168 = vunpack.c.h.b16 %v5868
    %v6169 = vunpack.c.l.b16 %v5869
    %v6170 = vunpack.c.h.b16 %v5869
    %v6171 = vunpack.c.l.b16 %v5870
    %v6172 = vunpack.c.h.b16 %v5870
    %v6173 = vunpack.c.l.b16 %v5871
    %v6174 = vunpack.c.h.b16 %v5871
    %v6175 = vunpack.c.l.b16 %v5872
    %v6176 = vunpack.c.h.b16 %v5872
    %v6177 = vunpack.c.l.b16 %v5873
    %v6178 = vunpack.c.h.b16 %v5873
    %v6179 = vunpack.c.l.b16 %v5874
    %v6180 = vunpack.c.h.b16 %v5874
    %v6181 = vunpack.c.l.b16 %v5875
    %v6182 = vunpack.c.h.b16 %v5875
    %v6183 = vunpack.c.l.b16 %v5876
    %v6184 = vunpack.c.h.b16 %v5876
    %v6185 = vunpack.c.l.b16 %v5877
    %v6186 = vunpack.c.h.b16 %v5877
    %v6187 = vunpack.c.l.b16 %v5878
    %v6188 = vunpack.c.h.b16 %v5878
    %v6189 = vunpack.c.l.b16 %v5879
    %v6190 = vunpack.c.h.b16 %v5879
    %v6191 = vunpack.c.l.b16 %v5880
    %v6192 = vunpack.c.h.b16 %v5880
    %v6193 = vunpack.c.l.b16 %v5881
    %v6194 = vunpack.c.h.b16 %v5881
    %v6195 = vunpack.c.l.b16 %v5882
    %v6196 = vunpack.c.h.b16 %v5882
    %v6197 = vunpack.c.l.b16 %v5883
    %v6198 = vunpack.c.h.b16 %v5883
    %v6199 = vunpack.c.l.b16 %v5884
    %v6200 = vunpack.c.h.b16 %v5884
    %v6201 = vunpack.c.l.b16 %v5885
    %v6202 = vunpack.c.h.b16 %v5885
    %v6203 = vunpack.c.l.b16 %v5886
    %v6204 = vunpack.c.h.b16 %v5886
    %v6205 = vunpack.c.l.b16 %v5887
    %v6206 = vunpack.c.h.b16 %v5887
    %v6207 = vunpack.c.l.b16 %v5888
    %v6208 = vunpack.c.h.b16 %v5888
    %v6209 = vunpack.c.l.b16 %v5889
    %v6210 = vunpack.c.h.b16 %v5889
    %v6211 = vunpack.c.l.b16 %v5890
    %v6212 = vunpack.c.h.b16 %v5890
    %v6213 = vunpack.c.l.b16 %v5891
    %v6214 = vunpack.c.h.b16 %v5891
    %v6215 = vunpack.c.l.b16 %v5892
    %v6216 = vunpack.c.h.b16 %v5892
    %v6217 = vpack.c.b16 %v6073, %v6057
    %v6218 = vpack.c.b16 %v6074, %v6058
    %v6219 = vpack.c.b16 %v6075, %v6059
    %v6220 = vpack.c.b16 %v6076, %v6060
    %v6221 = vpack.c.b16 %v6077, %v6061
    %v6222 = vpack.c.b16 %v6078, %v6062
    %v6223 = vpack.c.b16 %v6079, %v6063
    %v6224 = vpack.c.b16 %v6080, %v6064
    %v6225 = vpack.c.b16 %v6081, %v6065
    %v6226 = vpack.c.b16 %v6082, %v6066
    %v6227 = vpack.c.b16 %v6083, %v6067
    %v6228 = vpack.c.b16 %v6084, %v6068
    %v6229 = vpack.c.b16 %v6085, %v6069
    %v6230 = vpack.c.b16 %v6086, %v6070
    %v6231 = vpack.c.b16 %v6087, %v6071
    %v6232 = vpack.c.b16 %v6088, %v6072
    %v6233 = vpack.c.b16 %v6105, %v6089
    %v6234 = vpack.c.b16 %v6106, %v6090
    %v6235 = vpack.c.b16 %v6107, %v6091
    %v6236 = vpack.c.b16 %v6108, %v6092
    %v6237 = vpack.c.b16 %v6109, %v6093
    %v6238 = vpack.c.b16 %v6110, %v6094
    %v6239 = vpack.c.b16 %v6111, %v6095
    %v6240 = vpack.c.b16 %v6112, %v6096
    %v6241 = vpack.c.b16 %v6113, %v6097
    %v6242 = vpack.c.b16 %v6114, %v6098
    %v6243 = vpack.c.b16 %v6115, %v6099
    %v6244 = vpack.c.b16 %v6116, %v6100
    %v6245 = vpack.c.b16 %v6117, %v6101
    %v6246 = vpack.c.b16 %v6118, %v6102
    %v6247 = vpack.c.b16 %v6119, %v6103
    %v6248 = vpack.c.b16 %v6120, %v6104
    %v6249 = vpack.c.b16 %v6137, %v6121
    %v6250 = vpack.c.b16 %v6138, %v6122
    %v6251 = vpack.c.b16 %v6139, %v6123
    %v6252 = vpack.c.b16 %v6140, %v6124
    %v6253 = vpack.c.b16 %v6141, %v6125
    %v6254 = vpack.c.b16 %v6142, %v6126
    %v6255 = vpack.c.b16 %v6143, %v6127
    %v6256 = vpack.c.b16 %v6144, %v6128
    %v6257 = vpack.c.b16 %v6145, %v6129
    %v6258 = vpack.c.b16 %v6146, %v6130
    %v6259 = vpack.c.b16 %v6147, %v6131
    %v6260 = vpack.c.b16 %v6148, %v6132
    %v6261 = vpack.c.b16 %v6149, %v6133
    %v6262 = vpack.c.b16 %v6150, %v6134
    %v6263 = vpack.c.b16 %v6151, %v6135
    %v6264 = vpack.c.b16 %v6152, %v6136
    %v6265 = vpack.c.b16 %v6169, %v6153
    %v6266 = vpack.c.b16 %v6170, %v6154
    %v6267 = vpack.c.b16 %v6171, %v6155
    %v6268 = vpack.c.b16 %v6172, %v6156
    %v6269 = vpack.c.b16 %v6173, %v6157
    %v6270 = vpack.c.b16 %v6174, %v6158
    %v6271 = vpack.c.b16 %v6175, %v6159
    %v6272 = vpack.c.b16 %v6176, %v6160
    %v6273 = vpack.c.b16 %v6177, %v6161
    %v6274 = vpack.c.b16 %v6178, %v6162
    %v6275 = vpack.c.b16 %v6179, %v6163
    %v6276 = vpack.c.b16 %v6180, %v6164
    %v6277 = vpack.c.b16 %v6181, %v6165
    %v6278 = vpack.c.b16 %v6182, %v6166
    %v6279 = vpack.c.b16 %v6183, %v6167
    %v6280 = vpack.c.b16 %v6184, %v6168
    %v6281 = vpack.c.b16 %v6201, %v6185
    %v6282 = vpack.c.b16 %v6202, %v6186
    %v6283 = vpack.c.b16 %v6203, %v6187
    %v6284 = vpack.c.b16 %v6204, %v6188
    %v6285 = vpack.c.b16 %v6205, %v6189
    %v6286 = vpack.c.b16 %v6206, %v6190
    %v6287 = vpack.c.b16 %v6207, %v6191
    %v6288 = vpack.c.b16 %v6208, %v6192
    %v6289 = vpack.c.b16 %v6209, %v6193
    %v6290 = vpack.c.b16 %v6210, %v6194
    %v6291 = vpack.c.b16 %v6211, %v6195
    %v6292 = vpack.c.b16 %v6212, %v6196
    %v6293 = vpack.c.b16 %v6213, %v6197
    %v6294 = vpack.c.b16 %v6214, %v6198
    %v6295 = vpack.c.b16 %v6215, %v6199
    %v6296 = vpack.c.b16 %v6216, %v6200
    %v6378 = vsel %vm675, %v5811, 0
    %6380 = vmatprep.subr.bf16.mxu0 0
    %6381 = vmatpush1.bf16.msra.mxu0 0
    %6382 = vmatprep.subr.bf16.mxu0 0
    %6383 = vmatpush1.bf16.msra.mxu0 0
    %6384 = vmatprep.subr.bf16.mxu0 0
    %6385 = vmatpush1.bf16.msra.mxu0 0
    %6386 = vmatprep.subr.bf16.mxu0 %v6282
    %6387 = vmatpush1.bf16.msra.mxu0 %v6281
    %6388 = vmatprep.subr.bf16.mxu0 %v6266
    %6389 = vmatpush1.bf16.msra.mxu0 %v6265
    %6390 = vmatprep.subr.bf16.mxu0 %v6250
    %6391 = vmatpush1.bf16.msra.mxu0 %v6249
    %6392 = vmatprep.subr.bf16.mxu0 %v6234
    %6393 = vmatpush1.bf16.msra.mxu0 %v6233
    %6394 = vmatprep.subr.bf16.mxu0 %v6218
    %6395 = vmatpush1.bf16.msra.mxu0 %v6217
    %6396 = vmatprep.subr.bf16.mxu0 0
    %6397 = vmatpush2.bf16.msra.mxu0 0
    %6398 = vmatprep.subr.bf16.mxu0 0
    %6399 = vmatpush2.bf16.msra.mxu0 0
    %6400 = vmatprep.subr.bf16.mxu0 0
    %6401 = vmatpush2.bf16.msra.mxu0 0
    %6402 = vmatprep.subr.bf16.mxu0 0
    %6403 = vmatpush2.bf16.msra.mxu0 0
    %6404 = vmatprep.subr.bf16.mxu0 0
    %6405 = vmatpush2.bf16.msra.mxu0 0
    %6406 = vmatprep.subr.bf16.mxu0 0
    %6407 = vmatpush2.bf16.msra.mxu0 0
    %6408 = vmatprep.subr.bf16.mxu0 0
    %6409 = vmatpush2.bf16.msra.mxu0 0
    %6410 = vmatprep.subr.bf16.mxu0 0
    %6411 = vmatpush2.bf16.msra.mxu0 0
    %6412 = vmatprep.mubr.bf16.mxu0 0
    %6413 = vmatmul.mubr.bf16.gmra.mxu0 %v6378
    %v6414 = vpop.f32.mrf.mxu0
    %v6415 = vadd.f32 %v5900, %v6414
    %v6416 = vpop.f32.mrf.mxu0
    %v6417 = vadd.f32 %v5904, %v6416
    %v6418 = vpop.f32.mrf.mxu0
    %v6419 = vadd.f32 %v5900, %v6418
    %v6420 = vpop.f32.mrf.mxu0
    %v6421 = vadd.f32 %v5904, %v6420
    %6422 = vdwg.mxu0
    %6423 = vmatprep.subr.bf16.mxu0 0
    %6424 = vmatpush1.bf16.msra.mxu0 0
    %6425 = vmatprep.subr.bf16.mxu0 0
    %6426 = vmatpush1.bf16.msra.mxu0 0
    %6427 = vmatprep.subr.bf16.mxu0 0
    %6428 = vmatpush1.bf16.msra.mxu0 0
    %6429 = vmatprep.subr.bf16.mxu0 %v6284
    %6430 = vmatpush1.bf16.msra.mxu0 %v6283
    %6431 = vmatprep.subr.bf16.mxu0 %v6268
    %6432 = vmatpush1.bf16.msra.mxu0 %v6267
    %6433 = vmatprep.subr.bf16.mxu0 %v6252
    %6434 = vmatpush1.bf16.msra.mxu0 %v6251
    %6435 = vmatprep.subr.bf16.mxu0 %v6236
    %6436 = vmatpush1.bf16.msra.mxu0 %v6235
    %6437 = vmatprep.subr.bf16.mxu0 %v6220
    %6438 = vmatpush1.bf16.msra.mxu0 %v6219
    %6439 = vmatprep.subr.bf16.mxu0 0
    %6440 = vmatpush2.bf16.msra.mxu0 0
    %6441 = vmatprep.subr.bf16.mxu0 0
    %6442 = vmatpush2.bf16.msra.mxu0 0
    %6443 = vmatprep.subr.bf16.mxu0 0
    %6444 = vmatpush2.bf16.msra.mxu0 0
    %6445 = vmatprep.subr.bf16.mxu0 0
    %6446 = vmatpush2.bf16.msra.mxu0 0
    %6447 = vmatprep.subr.bf16.mxu0 0
    %6448 = vmatpush2.bf16.msra.mxu0 0
    %6449 = vmatprep.subr.bf16.mxu0 0
    %6450 = vmatpush2.bf16.msra.mxu0 0
    %6451 = vmatprep.subr.bf16.mxu0 0
    %6452 = vmatpush2.bf16.msra.mxu0 0
    %6453 = vmatprep.subr.bf16.mxu0 0
    %6454 = vmatpush2.bf16.msra.mxu0 0
    %6455 = vmatprep.mubr.bf16.mxu0 0
    %6456 = vmatmul.mubr.bf16.gmra.mxu0 %v6378
    %v6457 = vpop.f32.mrf.mxu0
    %v6458 = vadd.f32 %v5908, %v6457
    %v6459 = vpop.f32.mrf.mxu0
    %v6460 = vadd.f32 %v5912, %v6459
    %v6461 = vpop.f32.mrf.mxu0
    %v6462 = vadd.f32 %v5908, %v6461
    %v6463 = vpop.f32.mrf.mxu0
    %v6464 = vadd.f32 %v5912, %v6463
    %6465 = vdwg.mxu0
    %6466 = vmatprep.subr.bf16.mxu0 0
    %6467 = vmatpush1.bf16.msra.mxu0 0
    %6468 = vmatprep.subr.bf16.mxu0 0
    %6469 = vmatpush1.bf16.msra.mxu0 0
    %6470 = vmatprep.subr.bf16.mxu0 0
    %6471 = vmatpush1.bf16.msra.mxu0 0
    %6472 = vmatprep.subr.bf16.mxu0 %v6286
    %6473 = vmatpush1.bf16.msra.mxu0 %v6285
    %6474 = vmatprep.subr.bf16.mxu0 %v6270
    %6475 = vmatpush1.bf16.msra.mxu0 %v6269
    %6476 = vmatprep.subr.bf16.mxu0 %v6254
    %6477 = vmatpush1.bf16.msra.mxu0 %v6253
    %6478 = vmatprep.subr.bf16.mxu0 %v6238
    %6479 = vmatpush1.bf16.msra.mxu0 %v6237
    %6480 = vmatprep.subr.bf16.mxu0 %v6222
    %6481 = vmatpush1.bf16.msra.mxu0 %v6221
    %6482 = vmatprep.subr.bf16.mxu0 0
    %6483 = vmatpush2.bf16.msra.mxu0 0
    %6484 = vmatprep.subr.bf16.mxu0 0
    %6485 = vmatpush2.bf16.msra.mxu0 0
    %6486 = vmatprep.subr.bf16.mxu0 0
    %6487 = vmatpush2.bf16.msra.mxu0 0
    %6488 = vmatprep.subr.bf16.mxu0 0
    %6489 = vmatpush2.bf16.msra.mxu0 0
    %6490 = vmatprep.subr.bf16.mxu0 0
    %6491 = vmatpush2.bf16.msra.mxu0 0
    %6492 = vmatprep.subr.bf16.mxu0 0
    %6493 = vmatpush2.bf16.msra.mxu0 0
    %6494 = vmatprep.subr.bf16.mxu0 0
    %6495 = vmatpush2.bf16.msra.mxu0 0
    %6496 = vmatprep.subr.bf16.mxu0 0
    %6497 = vmatpush2.bf16.msra.mxu0 0
    %6498 = vmatprep.mubr.bf16.mxu0 0
    %6499 = vmatmul.mubr.bf16.gmra.mxu0 %v6378
    %v6500 = vpop.f32.mrf.mxu0
    %v6501 = vadd.f32 %v5916, %v6500
    %v6502 = vpop.f32.mrf.mxu0
    %v6503 = vadd.f32 %v5920, %v6502
    %v6504 = vpop.f32.mrf.mxu0
    %v6505 = vadd.f32 %v5916, %v6504
    %v6506 = vpop.f32.mrf.mxu0
    %v6507 = vadd.f32 %v5920, %v6506
    %6508 = vdwg.mxu0
    %6509 = vmatprep.subr.bf16.mxu0 0
    %6510 = vmatpush1.bf16.msra.mxu0 0
    %6511 = vmatprep.subr.bf16.mxu0 0
    %6512 = vmatpush1.bf16.msra.mxu0 0
    %6513 = vmatprep.subr.bf16.mxu0 0
    %6514 = vmatpush1.bf16.msra.mxu0 0
    %6515 = vmatprep.subr.bf16.mxu0 %v6288
    %6516 = vmatpush1.bf16.msra.mxu0 %v6287
    %6517 = vmatprep.subr.bf16.mxu0 %v6272
    %6518 = vmatpush1.bf16.msra.mxu0 %v6271
    %6519 = vmatprep.subr.bf16.mxu0 %v6256
    %6520 = vmatpush1.bf16.msra.mxu0 %v6255
    %6521 = vmatprep.subr.bf16.mxu0 %v6240
    %6522 = vmatpush1.bf16.msra.mxu0 %v6239
    %6523 = vmatprep.subr.bf16.mxu0 %v6224
    %6524 = vmatpush1.bf16.msra.mxu0 %v6223
    %6525 = vmatprep.subr.bf16.mxu0 0
    %6526 = vmatpush2.bf16.msra.mxu0 0
    %6527 = vmatprep.subr.bf16.mxu0 0
    %6528 = vmatpush2.bf16.msra.mxu0 0
    %6529 = vmatprep.subr.bf16.mxu0 0
    %6530 = vmatpush2.bf16.msra.mxu0 0
    %6531 = vmatprep.subr.bf16.mxu0 0
    %6532 = vmatpush2.bf16.msra.mxu0 0
    %6533 = vmatprep.subr.bf16.mxu0 0
    %6534 = vmatpush2.bf16.msra.mxu0 0
    %6535 = vmatprep.subr.bf16.mxu0 0
    %6536 = vmatpush2.bf16.msra.mxu0 0
    %6537 = vmatprep.subr.bf16.mxu0 0
    %6538 = vmatpush2.bf16.msra.mxu0 0
    %6539 = vmatprep.subr.bf16.mxu0 0
    %6540 = vmatpush2.bf16.msra.mxu0 0
    %6541 = vmatprep.mubr.bf16.mxu0 0
    %6542 = vmatmul.mubr.bf16.gmra.mxu0 %v6378
    %v6543 = vpop.f32.mrf.mxu0
    %v6544 = vadd.f32 %v5924, %v6543
    %v6545 = vpop.f32.mrf.mxu0
    %v6546 = vadd.f32 %v5928, %v6545
    %v6547 = vpop.f32.mrf.mxu0
    %v6548 = vadd.f32 %v5924, %v6547
    %v6549 = vpop.f32.mrf.mxu0
    %v6550 = vadd.f32 %v5928, %v6549
    %6551 = vdwg.mxu0
    %6552 = vmatprep.subr.bf16.mxu0 0
    %6553 = vmatpush1.bf16.msra.mxu0 0
    %6554 = vmatprep.subr.bf16.mxu0 0
    %6555 = vmatpush1.bf16.msra.mxu0 0
    %6556 = vmatprep.subr.bf16.mxu0 0
    %6557 = vmatpush1.bf16.msra.mxu0 0
    %6558 = vmatprep.subr.bf16.mxu0 %v6290
    %6559 = vmatpush1.bf16.msra.mxu0 %v6289
    %6560 = vmatprep.subr.bf16.mxu0 %v6274
    %6561 = vmatpush1.bf16.msra.mxu0 %v6273
    %6562 = vmatprep.subr.bf16.mxu0 %v6258
    %6563 = vmatpush1.bf16.msra.mxu0 %v6257
    %6564 = vmatprep.subr.bf16.mxu0 %v6242
    %6565 = vmatpush1.bf16.msra.mxu0 %v6241
    %6566 = vmatprep.subr.bf16.mxu0 %v6226
    %6567 = vmatpush1.bf16.msra.mxu0 %v6225
    %6568 = vmatprep.subr.bf16.mxu0 0
    %6569 = vmatpush2.bf16.msra.mxu0 0
    %6570 = vmatprep.subr.bf16.mxu0 0
    %6571 = vmatpush2.bf16.msra.mxu0 0
    %6572 = vmatprep.subr.bf16.mxu0 0
    %6573 = vmatpush2.bf16.msra.mxu0 0
    %6574 = vmatprep.subr.bf16.mxu0 0
    %6575 = vmatpush2.bf16.msra.mxu0 0
    %6576 = vmatprep.subr.bf16.mxu0 0
    %6577 = vmatpush2.bf16.msra.mxu0 0
    %6578 = vmatprep.subr.bf16.mxu0 0
    %6579 = vmatpush2.bf16.msra.mxu0 0
    %6580 = vmatprep.subr.bf16.mxu0 0
    %6581 = vmatpush2.bf16.msra.mxu0 0
    %6582 = vmatprep.subr.bf16.mxu0 0
    %6583 = vmatpush2.bf16.msra.mxu0 0
    %6584 = vmatprep.mubr.bf16.mxu0 0
    %6585 = vmatmul.mubr.bf16.gmra.mxu0 %v6378
    %v6586 = vpop.f32.mrf.mxu0
    %v6587 = vadd.f32 %v5932, %v6586
    %v6588 = vpop.f32.mrf.mxu0
    %v6589 = vadd.f32 %v5936, %v6588
    %v6590 = vpop.f32.mrf.mxu0
    %v6591 = vadd.f32 %v5932, %v6590
    %v6592 = vpop.f32.mrf.mxu0
    %v6593 = vadd.f32 %v5936, %v6592
    %6594 = vdwg.mxu0
    %6595 = vmatprep.subr.bf16.mxu0 0
    %6596 = vmatpush1.bf16.msra.mxu0 0
    %6597 = vmatprep.subr.bf16.mxu0 0
    %6598 = vmatpush1.bf16.msra.mxu0 0
    %6599 = vmatprep.subr.bf16.mxu0 0
    %6600 = vmatpush1.bf16.msra.mxu0 0
    %6601 = vmatprep.subr.bf16.mxu0 %v6292
    %6602 = vmatpush1.bf16.msra.mxu0 %v6291
    %6603 = vmatprep.subr.bf16.mxu0 %v6276
    %6604 = vmatpush1.bf16.msra.mxu0 %v6275
    %6605 = vmatprep.subr.bf16.mxu0 %v6260
    %6606 = vmatpush1.bf16.msra.mxu0 %v6259
    %6607 = vmatprep.subr.bf16.mxu0 %v6244
    %6608 = vmatpush1.bf16.msra.mxu0 %v6243
    %6609 = vmatprep.subr.bf16.mxu0 %v6228
    %6610 = vmatpush1.bf16.msra.mxu0 %v6227
    %6611 = vmatprep.subr.bf16.mxu0 0
    %6612 = vmatpush2.bf16.msra.mxu0 0
    %6613 = vmatprep.subr.bf16.mxu0 0
    %6614 = vmatpush2.bf16.msra.mxu0 0
    %6615 = vmatprep.subr.bf16.mxu0 0
    %6616 = vmatpush2.bf16.msra.mxu0 0
    %6617 = vmatprep.subr.bf16.mxu0 0
    %6618 = vmatpush2.bf16.msra.mxu0 0
    %6619 = vmatprep.subr.bf16.mxu0 0
    %6620 = vmatpush2.bf16.msra.mxu0 0
    %6621 = vmatprep.subr.bf16.mxu0 0
    %6622 = vmatpush2.bf16.msra.mxu0 0
    %6623 = vmatprep.subr.bf16.mxu0 0
    %6624 = vmatpush2.bf16.msra.mxu0 0
    %6625 = vmatprep.subr.bf16.mxu0 0
    %6626 = vmatpush2.bf16.msra.mxu0 0
    %6627 = vmatprep.mubr.bf16.mxu0 0
    %6628 = vmatmul.mubr.bf16.gmra.mxu0 %v6378
    %v6629 = vpop.f32.mrf.mxu0
    %v6630 = vadd.f32 %v5940, %v6629
    %v6631 = vpop.f32.mrf.mxu0
    %v6632 = vadd.f32 %v5944, %v6631
    %v6633 = vpop.f32.mrf.mxu0
    %v6634 = vadd.f32 %v5940, %v6633
    %v6635 = vpop.f32.mrf.mxu0
    %v6636 = vadd.f32 %v5944, %v6635
    %6637 = vdwg.mxu0
    %6638 = vmatprep.subr.bf16.mxu0 0
    %6639 = vmatpush1.bf16.msra.mxu0 0
    %6640 = vmatprep.subr.bf16.mxu0 0
    %6641 = vmatpush1.bf16.msra.mxu0 0
    %6642 = vmatprep.subr.bf16.mxu0 0
    %6643 = vmatpush1.bf16.msra.mxu0 0
    %6644 = vmatprep.subr.bf16.mxu0 %v6294
    %6645 = vmatpush1.bf16.msra.mxu0 %v6293
    %6646 = vmatprep.subr.bf16.mxu0 %v6278
    %6647 = vmatpush1.bf16.msra.mxu0 %v6277
    %6648 = vmatprep.subr.bf16.mxu0 %v6262
    %6649 = vmatpush1.bf16.msra.mxu0 %v6261
    %6650 = vmatprep.subr.bf16.mxu0 %v6246
    %6651 = vmatpush1.bf16.msra.mxu0 %v6245
    %6652 = vmatprep.subr.bf16.mxu0 %v6230
    %6653 = vmatpush1.bf16.msra.mxu0 %v6229
    %6654 = vmatprep.subr.bf16.mxu0 0
    %6655 = vmatpush2.bf16.msra.mxu0 0
    %6656 = vmatprep.subr.bf16.mxu0 0
    %6657 = vmatpush2.bf16.msra.mxu0 0
    %6658 = vmatprep.subr.bf16.mxu0 0
    %6659 = vmatpush2.bf16.msra.mxu0 0
    %6660 = vmatprep.subr.bf16.mxu0 0
    %6661 = vmatpush2.bf16.msra.mxu0 0
    %6662 = vmatprep.subr.bf16.mxu0 0
    %6663 = vmatpush2.bf16.msra.mxu0 0
    %6664 = vmatprep.subr.bf16.mxu0 0
    %6665 = vmatpush2.bf16.msra.mxu0 0
    %6666 = vmatprep.subr.bf16.mxu0 0
    %6667 = vmatpush2.bf16.msra.mxu0 0
    %6668 = vmatprep.subr.bf16.mxu0 0
    %6669 = vmatpush2.bf16.msra.mxu0 0
    %6670 = vmatprep.mubr.bf16.mxu0 0
    %6671 = vmatmul.mubr.bf16.gmra.mxu0 %v6378
    %v6672 = vpop.f32.mrf.mxu0
    %v6673 = vadd.f32 %v5948, %v6672
    %v6674 = vpop.f32.mrf.mxu0
    %v6675 = vadd.f32 %v5952, %v6674
    %v6676 = vpop.f32.mrf.mxu0
    %v6677 = vadd.f32 %v5948, %v6676
    %v6678 = vpop.f32.mrf.mxu0
    %v6679 = vadd.f32 %v5952, %v6678
    %6680 = vdwg.mxu0
    %6681 = vmatprep.subr.bf16.mxu0 0
    %6682 = vmatpush1.bf16.msra.mxu0 0
    %6683 = vmatprep.subr.bf16.mxu0 0
    %6684 = vmatpush1.bf16.msra.mxu0 0
    %6685 = vmatprep.subr.bf16.mxu0 0
    %6686 = vmatpush1.bf16.msra.mxu0 0
    %6687 = vmatprep.subr.bf16.mxu0 %v6296
    %6688 = vmatpush1.bf16.msra.mxu0 %v6295
    %6689 = vmatprep.subr.bf16.mxu0 %v6280
    %6690 = vmatpush1.bf16.msra.mxu0 %v6279
    %6691 = vmatprep.subr.bf16.mxu0 %v6264
    %6692 = vmatpush1.bf16.msra.mxu0 %v6263
    %6693 = vmatprep.subr.bf16.mxu0 %v6248
    %6694 = vmatpush1.bf16.msra.mxu0 %v6247
    %6695 = vmatprep.subr.bf16.mxu0 %v6232
    %6696 = vmatpush1.bf16.msra.mxu0 %v6231
    %6697 = vmatprep.subr.bf16.mxu0 0
    %6698 = vmatpush2.bf16.msra.mxu0 0
    %6699 = vmatprep.subr.bf16.mxu0 0
    %6700 = vmatpush2.bf16.msra.mxu0 0
    %6701 = vmatprep.subr.bf16.mxu0 0
    %6702 = vmatpush2.bf16.msra.mxu0 0
    %6703 = vmatprep.subr.bf16.mxu0 0
    %6704 = vmatpush2.bf16.msra.mxu0 0
    %6705 = vmatprep.subr.bf16.mxu0 0
    %6706 = vmatpush2.bf16.msra.mxu0 0
    %6707 = vmatprep.subr.bf16.mxu0 0
    %6708 = vmatpush2.bf16.msra.mxu0 0
    %6709 = vmatprep.subr.bf16.mxu0 0
    %6710 = vmatpush2.bf16.msra.mxu0 0
    %6711 = vmatprep.subr.bf16.mxu0 0
    %6712 = vmatpush2.bf16.msra.mxu0 0
    %6713 = vmatprep.mubr.bf16.mxu0 0
    %6714 = vmatmul.mubr.bf16.gmra.mxu0 %v6378
    %v6715 = vpop.f32.mrf.mxu0
    %v6716 = vadd.f32 %v5956, %v6715
    %v6717 = vpop.f32.mrf.mxu0
    %v6718 = vadd.f32 %v5960, %v6717
    %v6719 = vpop.f32.mrf.mxu0
    %v6720 = vadd.f32 %v5956, %v6719
    %v6721 = vpop.f32.mrf.mxu0
    %v6722 = vadd.f32 %v5960, %v6721
    %6723 = vdwg.mxu0
    %v6724 = vmax.f32 %v6415, 0.0
    %v6725 = vmax.f32 %v6417, 0.0
    %v6726 = vmax.f32 %v6458, 0.0
    %v6727 = vmax.f32 %v6460, 0.0
    %v6728 = vmax.f32 %v6501, 0.0
    %v6729 = vmax.f32 %v6503, 0.0
    %v6730 = vmax.f32 %v6544, 0.0
    %v6731 = vmax.f32 %v6546, 0.0
    %v6732 = vmax.f32 %v6587, 0.0
    %v6733 = vmax.f32 %v6589, 0.0
    %v6734 = vmax.f32 %v6630, 0.0
    %v6735 = vmax.f32 %v6632, 0.0
    %v6736 = vmax.f32 %v6673, 0.0
    %v6737 = vmax.f32 %v6675, 0.0
    %v6738 = vmax.f32 %v6716, 0.0
    %v6739 = vmax.f32 %v6718, 0.0
    %v6740 = vmax.f32 %v6419, 0.0
    %v6741 = vmax.f32 %v6421, 0.0
    %v6742 = vmax.f32 %v6462, 0.0
    %v6743 = vmax.f32 %v6464, 0.0
    %v6744 = vmax.f32 %v6505, 0.0
    %v6745 = vmax.f32 %v6507, 0.0
    %v6746 = vmax.f32 %v6548, 0.0
    %v6747 = vmax.f32 %v6550, 0.0
    %v6748 = vmax.f32 %v6591, 0.0
    %v6749 = vmax.f32 %v6593, 0.0
    %v6750 = vmax.f32 %v6634, 0.0
    %v6751 = vmax.f32 %v6636, 0.0
    %v6752 = vmax.f32 %v6677, 0.0
    %v6753 = vmax.f32 %v6679, 0.0
    %v6754 = vmax.f32 %v6720, 0.0
    %v6755 = vmax.f32 %v6722, 0.0
    %v6756 = vpack.c.bf16 %v6740, %v6724
    %v6757 = vpack.c.bf16 %v6741, %v6725
    %v6758 = vpack.c.bf16 %v6742, %v6726
    %v6759 = vpack.c.bf16 %v6743, %v6727
    %v6760 = vpack.c.bf16 %v6744, %v6728
    %v6761 = vpack.c.bf16 %v6745, %v6729
    %v6762 = vpack.c.bf16 %v6746, %v6730
    %v6763 = vpack.c.bf16 %v6747, %v6731
    %v6764 = vpack.c.bf16 %v6748, %v6732
    %v6765 = vpack.c.bf16 %v6749, %v6733
    %v6766 = vpack.c.bf16 %v6750, %v6734
    %v6767 = vpack.c.bf16 %v6751, %v6735
    %v6768 = vpack.c.bf16 %v6752, %v6736
    %v6769 = vpack.c.bf16 %v6753, %v6737
    %v6770 = vpack.c.bf16 %v6754, %v6738
    %v6771 = vpack.c.bf16 %v6755, %v6739
    %s6772 = scalar_lea.vmem %s5, 1024
    %v6773 = vld [vmem:[%s6772] sm:$0xf]
    %v6774 = vld [vmem:[%s6772 + $0x4] sm:$0xf]
    %v6775 = vld [vmem:[%s6772 + $0x8] sm:$0xf]
    %v6776 = vld [vmem:[%s6772 + $0xc] sm:$0xf]
    %v6777 = vld [vmem:[%s6772 + $0x10] sm:$0xf]
    %v6778 = vld [vmem:[%s6772 + $0x14] sm:$0xf]
    %v6779 = vld [vmem:[%s6772 + $0x18] sm:$0xf]
    %v6780 = vld [vmem:[%s6772 + $0x1c] sm:$0xf]
    %v6781 = vld [vmem:[%s6772 + $0x20] sm:$0xf]
    %v6782 = vld [vmem:[%s6772 + $0x24] sm:$0xf]
    %v6783 = vld [vmem:[%s6772 + $0x28] sm:$0xf]
    %v6784 = vld [vmem:[%s6772 + $0x2c] sm:$0xf]
    %v6785 = vld [vmem:[%s6772 + $0x30] sm:$0xf]
    %v6786 = vld [vmem:[%s6772 + $0x34] sm:$0xf]
    %v6787 = vld [vmem:[%s6772 + $0x38] sm:$0xf]
    %v6788 = vld [vmem:[%s6772 + $0x3c] sm:$0xf]
    %v6789 = vld [vmem:[%s6772 + $0x40] sm:$0xf]
    %v6790 = vld [vmem:[%s6772 + $0x44] sm:$0xf]
    %v6791 = vld [vmem:[%s6772 + $0x48] sm:$0xf]
    %v6792 = vld [vmem:[%s6772 + $0x4c] sm:$0xf]
    %v6793 = vld [vmem:[%s6772 + $0x50] sm:$0xf]
    %v6794 = vld [vmem:[%s6772 + $0x54] sm:$0xf]
    %v6795 = vld [vmem:[%s6772 + $0x58] sm:$0xf]
    %v6796 = vld [vmem:[%s6772 + $0x5c] sm:$0xf]
    %v6797 = vld [vmem:[%s6772 + $0x60] sm:$0xf]
    %v6798 = vld [vmem:[%s6772 + $0x64] sm:$0xf]
    %v6799 = vld [vmem:[%s6772 + $0x68] sm:$0xf]
    %v6800 = vld [vmem:[%s6772 + $0x6c] sm:$0xf]
    %v6801 = vld [vmem:[%s6772 + $0x70] sm:$0xf]
    %v6802 = vld [vmem:[%s6772 + $0x74] sm:$0xf]
    %v6803 = vld [vmem:[%s6772 + $0x78] sm:$0xf]
    %v6804 = vld [vmem:[%s6772 + $0x7c] sm:$0xf]
    %v6805 = vld [vmem:[%s6772 + $0x80] sm:$0xf]
    %v6806 = vld [vmem:[%s6772 + $0x84] sm:$0xf]
    %v6807 = vld [vmem:[%s6772 + $0x88] sm:$0xf]
    %v6808 = vld [vmem:[%s6772 + $0x8c] sm:$0xf]
    %v6809 = vld [vmem:[%s6772 + $0x90] sm:$0xf]
    %v6810 = vld [vmem:[%s6772 + $0x94] sm:$0xf]
    %v6811 = vld [vmem:[%s6772 + $0x98] sm:$0xf]
    %v6812 = vld [vmem:[%s6772 + $0x9c] sm:$0xf]
    %v6813 = vld [vmem:[%s6772 + $0xa0] sm:$0xf]
    %v6814 = vld [vmem:[%s6772 + $0xa4] sm:$0xf]
    %v6815 = vld [vmem:[%s6772 + $0xa8] sm:$0xf]
    %v6816 = vld [vmem:[%s6772 + $0xac] sm:$0xf]
    %v6817 = vld [vmem:[%s6772 + $0xb0] sm:$0xf]
    %v6818 = vld [vmem:[%s6772 + $0xb4] sm:$0xf]
    %v6819 = vld [vmem:[%s6772 + $0xb8] sm:$0xf]
    %v6820 = vld [vmem:[%s6772 + $0xbc] sm:$0xf]
    %v6821 = vld [vmem:[%s6772 + $0xc0] sm:$0xf]
    %v6822 = vld [vmem:[%s6772 + $0xc4] sm:$0xf]
    %v6823 = vld [vmem:[%s6772 + $0xc8] sm:$0xf]
    %v6824 = vld [vmem:[%s6772 + $0xcc] sm:$0xf]
    %v6825 = vld [vmem:[%s6772 + $0xd0] sm:$0xf]
    %v6826 = vld [vmem:[%s6772 + $0xd4] sm:$0xf]
    %v6827 = vld [vmem:[%s6772 + $0xd8] sm:$0xf]
    %v6828 = vld [vmem:[%s6772 + $0xdc] sm:$0xf]
    %v6829 = vld [vmem:[%s6772 + $0xe0] sm:$0xf]
    %v6830 = vld [vmem:[%s6772 + $0xe4] sm:$0xf]
    %v6831 = vld [vmem:[%s6772 + $0xe8] sm:$0xf]
    %v6832 = vld [vmem:[%s6772 + $0xec] sm:$0xf]
    %v6833 = vld [vmem:[%s6772 + $0xf0] sm:$0xf]
    %v6834 = vld [vmem:[%s6772 + $0xf4] sm:$0xf]
    %v6835 = vld [vmem:[%s6772 + $0xf8] sm:$0xf]
    %v6836 = vld [vmem:[%s6772 + $0xfc] sm:$0xf]
    %v6837 = vld [vmem:[%s6772 + $0x100] sm:$0xf]
    %v6838 = vld [vmem:[%s6772 + $0x104] sm:$0xf]
    %v6839 = vld [vmem:[%s6772 + $0x108] sm:$0xf]
    %v6840 = vld [vmem:[%s6772 + $0x10c] sm:$0xf]
    %v6841 = vld [vmem:[%s6772 + $0x110] sm:$0xf]
    %v6842 = vld [vmem:[%s6772 + $0x114] sm:$0xf]
    %v6843 = vld [vmem:[%s6772 + $0x118] sm:$0xf]
    %v6844 = vld [vmem:[%s6772 + $0x11c] sm:$0xf]
    %v6845 = vld [vmem:[%s6772 + $0x120] sm:$0xf]
    %v6846 = vld [vmem:[%s6772 + $0x124] sm:$0xf]
    %v6847 = vld [vmem:[%s6772 + $0x128] sm:$0xf]
    %v6848 = vld [vmem:[%s6772 + $0x12c] sm:$0xf]
    %v6849 = vld [vmem:[%s6772 + $0x130] sm:$0xf]
    %v6850 = vld [vmem:[%s6772 + $0x134] sm:$0xf]
    %v6851 = vld [vmem:[%s6772 + $0x138] sm:$0xf]
    %v6852 = vld [vmem:[%s6772 + $0x13c] sm:$0xf]
    %v6853 = vld [vmem:[%s6772 + $0x140] sm:$0xf]
    %v6854 = vld [vmem:[%s6772 + $0x144] sm:$0xf]
    %v6855 = vld [vmem:[%s6772 + $0x148] sm:$0xf]
    %v6856 = vld [vmem:[%s6772 + $0x14c] sm:$0xf]
    %v6857 = vld [vmem:[%s6772 + $0x150] sm:$0xf]
    %v6858 = vld [vmem:[%s6772 + $0x154] sm:$0xf]
    %v6859 = vld [vmem:[%s6772 + $0x158] sm:$0xf]
    %v6860 = vld [vmem:[%s6772 + $0x15c] sm:$0xf]
    %v6861 = vld [vmem:[%s6772 + $0x160] sm:$0xf]
    %v6862 = vld [vmem:[%s6772 + $0x164] sm:$0xf]
    %v6863 = vld [vmem:[%s6772 + $0x168] sm:$0xf]
    %v6864 = vld [vmem:[%s6772 + $0x16c] sm:$0xf]
    %v6865 = vld [vmem:[%s6772 + $0x170] sm:$0xf]
    %v6866 = vld [vmem:[%s6772 + $0x174] sm:$0xf]
    %v6867 = vld [vmem:[%s6772 + $0x178] sm:$0xf]
    %v6868 = vld [vmem:[%s6772 + $0x17c] sm:$0xf]
    %v6869 = vld [vmem:[%s6772 + $0x180] sm:$0xf]
    %v6870 = vld [vmem:[%s6772 + $0x184] sm:$0xf]
    %v6871 = vld [vmem:[%s6772 + $0x188] sm:$0xf]
    %v6872 = vld [vmem:[%s6772 + $0x18c] sm:$0xf]
    %v6873 = vld [vmem:[%s6772 + $0x190] sm:$0xf]
    %v6874 = vld [vmem:[%s6772 + $0x194] sm:$0xf]
    %v6875 = vld [vmem:[%s6772 + $0x198] sm:$0xf]
    %v6876 = vld [vmem:[%s6772 + $0x19c] sm:$0xf]
    %v6877 = vld [vmem:[%s6772 + $0x1a0] sm:$0xf]
    %v6878 = vld [vmem:[%s6772 + $0x1a4] sm:$0xf]
    %v6879 = vld [vmem:[%s6772 + $0x1a8] sm:$0xf]
    %v6880 = vld [vmem:[%s6772 + $0x1ac] sm:$0xf]
    %v6881 = vld [vmem:[%s6772 + $0x1b0] sm:$0xf]
    %v6882 = vld [vmem:[%s6772 + $0x1b4] sm:$0xf]
    %v6883 = vld [vmem:[%s6772 + $0x1b8] sm:$0xf]
    %v6884 = vld [vmem:[%s6772 + $0x1bc] sm:$0xf]
    %v6885 = vld [vmem:[%s6772 + $0x1c0] sm:$0xf]
    %v6886 = vld [vmem:[%s6772 + $0x1c4] sm:$0xf]
    %v6887 = vld [vmem:[%s6772 + $0x1c8] sm:$0xf]
    %v6888 = vld [vmem:[%s6772 + $0x1cc] sm:$0xf]
    %v6889 = vld [vmem:[%s6772 + $0x1d0] sm:$0xf]
    %v6890 = vld [vmem:[%s6772 + $0x1d4] sm:$0xf]
    %v6891 = vld [vmem:[%s6772 + $0x1d8] sm:$0xf]
    %v6892 = vld [vmem:[%s6772 + $0x1dc] sm:$0xf]
    %v6893 = vld [vmem:[%s6772 + $0x1e0] sm:$0xf]
    %v6894 = vld [vmem:[%s6772 + $0x1e4] sm:$0xf]
    %v6895 = vld [vmem:[%s6772 + $0x1e8] sm:$0xf]
    %v6896 = vld [vmem:[%s6772 + $0x1ec] sm:$0xf]
    %v6897 = vld [vmem:[%s6772 + $0x1f0] sm:$0xf]
    %v6898 = vld [vmem:[%s6772 + $0x1f4] sm:$0xf]
    %v6899 = vld [vmem:[%s6772 + $0x1f8] sm:$0xf]
    %v6900 = vld [vmem:[%s6772 + $0x1fc] sm:$0xf]
    %v6901 = vld [vmem:[%s6772 + $0x200] sm:$0xf]
    %v6902 = vld [vmem:[%s6772 + $0x204] sm:$0xf]
    %v6903 = vld [vmem:[%s6772 + $0x208] sm:$0xf]
    %v6904 = vld [vmem:[%s6772 + $0x20c] sm:$0xf]
    %v6905 = vld [vmem:[%s6772 + $0x210] sm:$0xf]
    %v6906 = vld [vmem:[%s6772 + $0x214] sm:$0xf]
    %v6907 = vld [vmem:[%s6772 + $0x218] sm:$0xf]
    %v6908 = vld [vmem:[%s6772 + $0x21c] sm:$0xf]
    %v6909 = vld [vmem:[%s6772 + $0x220] sm:$0xf]
    %v6910 = vld [vmem:[%s6772 + $0x224] sm:$0xf]
    %v6911 = vld [vmem:[%s6772 + $0x228] sm:$0xf]
    %v6912 = vld [vmem:[%s6772 + $0x22c] sm:$0xf]
    %v6913 = vld [vmem:[%s6772 + $0x230] sm:$0xf]
    %v6914 = vld [vmem:[%s6772 + $0x234] sm:$0xf]
    %v6915 = vld [vmem:[%s6772 + $0x238] sm:$0xf]
    %v6916 = vld [vmem:[%s6772 + $0x23c] sm:$0xf]
    %v6917 = vld [vmem:[%s6772 + $0x240] sm:$0xf]
    %v6918 = vld [vmem:[%s6772 + $0x244] sm:$0xf]
    %v6919 = vld [vmem:[%s6772 + $0x248] sm:$0xf]
    %v6920 = vld [vmem:[%s6772 + $0x24c] sm:$0xf]
    %v6921 = vld [vmem:[%s6772 + $0x250] sm:$0xf]
    %v6922 = vld [vmem:[%s6772 + $0x254] sm:$0xf]
    %v6923 = vld [vmem:[%s6772 + $0x258] sm:$0xf]
    %v6924 = vld [vmem:[%s6772 + $0x25c] sm:$0xf]
    %v6925 = vld [vmem:[%s6772 + $0x260] sm:$0xf]
    %v6926 = vld [vmem:[%s6772 + $0x264] sm:$0xf]
    %v6927 = vld [vmem:[%s6772 + $0x268] sm:$0xf]
    %v6928 = vld [vmem:[%s6772 + $0x26c] sm:$0xf]
    %v6929 = vld [vmem:[%s6772 + $0x270] sm:$0xf]
    %v6930 = vld [vmem:[%s6772 + $0x274] sm:$0xf]
    %v6931 = vld [vmem:[%s6772 + $0x278] sm:$0xf]
    %v6932 = vld [vmem:[%s6772 + $0x27c] sm:$0xf]
    %v6933 = vld [vmem:[%s6772 + $0x280] sm:$0xf]
    %v6934 = vld [vmem:[%s6772 + $0x284] sm:$0xf]
    %v6935 = vld [vmem:[%s6772 + $0x288] sm:$0xf]
    %v6936 = vld [vmem:[%s6772 + $0x28c] sm:$0xf]
    %v6937 = vld [vmem:[%s6772 + $0x290] sm:$0xf]
    %v6938 = vld [vmem:[%s6772 + $0x294] sm:$0xf]
    %v6939 = vld [vmem:[%s6772 + $0x298] sm:$0xf]
    %v6940 = vld [vmem:[%s6772 + $0x29c] sm:$0xf]
    %v6941 = vld [vmem:[%s6772 + $0x2a0] sm:$0xf]
    %v6942 = vld [vmem:[%s6772 + $0x2a4] sm:$0xf]
    %v6943 = vld [vmem:[%s6772 + $0x2a8] sm:$0xf]
    %v6944 = vld [vmem:[%s6772 + $0x2ac] sm:$0xf]
    %v6945 = vld [vmem:[%s6772 + $0x2b0] sm:$0xf]
    %v6946 = vld [vmem:[%s6772 + $0x2b4] sm:$0xf]
    %v6947 = vld [vmem:[%s6772 + $0x2b8] sm:$0xf]
    %v6948 = vld [vmem:[%s6772 + $0x2bc] sm:$0xf]
    %v6949 = vld [vmem:[%s6772 + $0x2c0] sm:$0xf]
    %v6950 = vld [vmem:[%s6772 + $0x2c4] sm:$0xf]
    %v6951 = vld [vmem:[%s6772 + $0x2c8] sm:$0xf]
    %v6952 = vld [vmem:[%s6772 + $0x2cc] sm:$0xf]
    %v6953 = vld [vmem:[%s6772 + $0x2d0] sm:$0xf]
    %v6954 = vld [vmem:[%s6772 + $0x2d4] sm:$0xf]
    %v6955 = vld [vmem:[%s6772 + $0x2d8] sm:$0xf]
    %v6956 = vld [vmem:[%s6772 + $0x2dc] sm:$0xf]
    %v6957 = vld [vmem:[%s6772 + $0x2e0] sm:$0xf]
    %v6958 = vld [vmem:[%s6772 + $0x2e4] sm:$0xf]
    %v6959 = vld [vmem:[%s6772 + $0x2e8] sm:$0xf]
    %v6960 = vld [vmem:[%s6772 + $0x2ec] sm:$0xf]
    %v6961 = vld [vmem:[%s6772 + $0x2f0] sm:$0xf]
    %v6962 = vld [vmem:[%s6772 + $0x2f4] sm:$0xf]
    %v6963 = vld [vmem:[%s6772 + $0x2f8] sm:$0xf]
    %v6964 = vld [vmem:[%s6772 + $0x2fc] sm:$0xf]
    %v6965 = vld [vmem:[%s6772 + $0x300] sm:$0xf]
    %v6966 = vld [vmem:[%s6772 + $0x304] sm:$0xf]
    %v6967 = vld [vmem:[%s6772 + $0x308] sm:$0xf]
    %v6968 = vld [vmem:[%s6772 + $0x30c] sm:$0xf]
    %v6969 = vld [vmem:[%s6772 + $0x310] sm:$0xf]
    %v6970 = vld [vmem:[%s6772 + $0x314] sm:$0xf]
    %v6971 = vld [vmem:[%s6772 + $0x318] sm:$0xf]
    %v6972 = vld [vmem:[%s6772 + $0x31c] sm:$0xf]
    %v6973 = vld [vmem:[%s6772 + $0x320] sm:$0xf]
    %v6974 = vld [vmem:[%s6772 + $0x324] sm:$0xf]
    %v6975 = vld [vmem:[%s6772 + $0x328] sm:$0xf]
    %v6976 = vld [vmem:[%s6772 + $0x32c] sm:$0xf]
    %v6977 = vld [vmem:[%s6772 + $0x330] sm:$0xf]
    %v6978 = vld [vmem:[%s6772 + $0x334] sm:$0xf]
    %v6979 = vld [vmem:[%s6772 + $0x338] sm:$0xf]
    %v6980 = vld [vmem:[%s6772 + $0x33c] sm:$0xf]
    %v6981 = vld [vmem:[%s6772 + $0x340] sm:$0xf]
    %v6982 = vld [vmem:[%s6772 + $0x344] sm:$0xf]
    %v6983 = vld [vmem:[%s6772 + $0x348] sm:$0xf]
    %v6984 = vld [vmem:[%s6772 + $0x34c] sm:$0xf]
    %v6985 = vld [vmem:[%s6772 + $0x350] sm:$0xf]
    %v6986 = vld [vmem:[%s6772 + $0x354] sm:$0xf]
    %v6987 = vld [vmem:[%s6772 + $0x358] sm:$0xf]
    %v6988 = vld [vmem:[%s6772 + $0x35c] sm:$0xf]
    %v6989 = vld [vmem:[%s6772 + $0x360] sm:$0xf]
    %v6990 = vld [vmem:[%s6772 + $0x364] sm:$0xf]
    %v6991 = vld [vmem:[%s6772 + $0x368] sm:$0xf]
    %v6992 = vld [vmem:[%s6772 + $0x36c] sm:$0xf]
    %v6993 = vld [vmem:[%s6772 + $0x370] sm:$0xf]
    %v6994 = vld [vmem:[%s6772 + $0x374] sm:$0xf]
    %v6995 = vld [vmem:[%s6772 + $0x378] sm:$0xf]
    %v6996 = vld [vmem:[%s6772 + $0x37c] sm:$0xf]
    %v6997 = vld [vmem:[%s6772 + $0x380] sm:$0xf]
    %v6998 = vld [vmem:[%s6772 + $0x384] sm:$0xf]
    %v6999 = vld [vmem:[%s6772 + $0x388] sm:$0xf]
    %v7000 = vld [vmem:[%s6772 + $0x38c] sm:$0xf]
    %v7001 = vld [vmem:[%s6772 + $0x390] sm:$0xf]
    %v7002 = vld [vmem:[%s6772 + $0x394] sm:$0xf]
    %v7003 = vld [vmem:[%s6772 + $0x398] sm:$0xf]
    %v7004 = vld [vmem:[%s6772 + $0x39c] sm:$0xf]
    %v7005 = vld [vmem:[%s6772 + $0x3a0] sm:$0xf]
    %v7006 = vld [vmem:[%s6772 + $0x3a4] sm:$0xf]
    %v7007 = vld [vmem:[%s6772 + $0x3a8] sm:$0xf]
    %v7008 = vld [vmem:[%s6772 + $0x3ac] sm:$0xf]
    %v7009 = vld [vmem:[%s6772 + $0x3b0] sm:$0xf]
    %v7010 = vld [vmem:[%s6772 + $0x3b4] sm:$0xf]
    %v7011 = vld [vmem:[%s6772 + $0x3b8] sm:$0xf]
    %v7012 = vld [vmem:[%s6772 + $0x3bc] sm:$0xf]
    %v7013 = vld [vmem:[%s6772 + $0x3c0] sm:$0xf]
    %v7014 = vld [vmem:[%s6772 + $0x3c4] sm:$0xf]
    %v7015 = vld [vmem:[%s6772 + $0x3c8] sm:$0xf]
    %v7016 = vld [vmem:[%s6772 + $0x3cc] sm:$0xf]
    %v7017 = vld [vmem:[%s6772 + $0x3d0] sm:$0xf]
    %v7018 = vld [vmem:[%s6772 + $0x3d4] sm:$0xf]
    %v7019 = vld [vmem:[%s6772 + $0x3d8] sm:$0xf]
    %v7020 = vld [vmem:[%s6772 + $0x3dc] sm:$0xf]
    %v7021 = vld [vmem:[%s6772 + $0x3e0] sm:$0xf]
    %v7022 = vld [vmem:[%s6772 + $0x3e4] sm:$0xf]
    %v7023 = vld [vmem:[%s6772 + $0x3e8] sm:$0xf]
    %v7024 = vld [vmem:[%s6772 + $0x3ec] sm:$0xf]
    %v7025 = vld [vmem:[%s6772 + $0x3f0] sm:$0xf]
    %v7026 = vld [vmem:[%s6772 + $0x3f4] sm:$0xf]
    %v7027 = vld [vmem:[%s6772 + $0x3f8] sm:$0xf]
    %v7028 = vld [vmem:[%s6772 + $0x3fc] sm:$0xf]
    %v7029 = vld [vmem:[%s3 + $0x31] sm:$0x1]
    %v7031 = vlaneseq
    %v7032 = vshrl.u32 %v7031, 7
    %v7033 = vsub.s32 0, %v7032
    %v7034 = vrot.slane %v7029, %v7033
    %v7292 = vunpack.c.l.b16 %v6773
    %v7293 = vunpack.c.l.b16 %v6774
    %v7294 = vunpack.c.l.b16 %v6775
    %v7295 = vunpack.c.l.b16 %v6776
    %v7296 = vunpack.c.l.b16 %v6777
    %v7297 = vunpack.c.l.b16 %v6778
    %v7298 = vunpack.c.l.b16 %v6779
    %v7299 = vunpack.c.l.b16 %v6780
    %v7300 = vunpack.c.l.b16 %v6781
    %v7301 = vunpack.c.l.b16 %v6782
    %v7302 = vunpack.c.l.b16 %v6783
    %v7303 = vunpack.c.l.b16 %v6784
    %v7304 = vunpack.c.l.b16 %v6785
    %v7305 = vunpack.c.l.b16 %v6786
    %v7306 = vunpack.c.l.b16 %v6787
    %v7307 = vunpack.c.l.b16 %v6788
    %v7308 = vunpack.c.l.b16 %v6789
    %v7309 = vunpack.c.l.b16 %v6790
    %v7310 = vunpack.c.l.b16 %v6791
    %v7311 = vunpack.c.l.b16 %v6792
    %v7312 = vunpack.c.l.b16 %v6793
    %v7313 = vunpack.c.l.b16 %v6794
    %v7314 = vunpack.c.l.b16 %v6795
    %v7315 = vunpack.c.l.b16 %v6796
    %v7316 = vunpack.c.l.b16 %v6797
    %v7317 = vunpack.c.l.b16 %v6798
    %v7318 = vunpack.c.l.b16 %v6799
    %v7319 = vunpack.c.l.b16 %v6800
    %v7320 = vunpack.c.l.b16 %v6801
    %v7321 = vunpack.c.l.b16 %v6802
    %v7322 = vunpack.c.l.b16 %v6803
    %v7323 = vunpack.c.l.b16 %v6804
    %v7324 = vunpack.c.l.b16 %v6805
    %v7325 = vunpack.c.l.b16 %v6806
    %v7326 = vunpack.c.l.b16 %v6807
    %v7327 = vunpack.c.l.b16 %v6808
    %v7328 = vunpack.c.l.b16 %v6809
    %v7329 = vunpack.c.l.b16 %v6810
    %v7330 = vunpack.c.l.b16 %v6811
    %v7331 = vunpack.c.l.b16 %v6812
    %v7332 = vunpack.c.l.b16 %v6813
    %v7333 = vunpack.c.l.b16 %v6814
    %v7334 = vunpack.c.l.b16 %v6815
    %v7335 = vunpack.c.l.b16 %v6816
    %v7336 = vunpack.c.l.b16 %v6817
    %v7337 = vunpack.c.l.b16 %v6818
    %v7338 = vunpack.c.l.b16 %v6819
    %v7339 = vunpack.c.l.b16 %v6820
    %v7340 = vunpack.c.l.b16 %v6821
    %v7341 = vunpack.c.l.b16 %v6822
    %v7342 = vunpack.c.l.b16 %v6823
    %v7343 = vunpack.c.l.b16 %v6824
    %v7344 = vunpack.c.l.b16 %v6825
    %v7345 = vunpack.c.l.b16 %v6826
    %v7346 = vunpack.c.l.b16 %v6827
    %v7347 = vunpack.c.l.b16 %v6828
    %v7348 = vunpack.c.l.b16 %v6829
    %v7349 = vunpack.c.l.b16 %v6830
    %v7350 = vunpack.c.l.b16 %v6831
    %v7351 = vunpack.c.l.b16 %v6832
    %v7352 = vunpack.c.l.b16 %v6833
    %v7353 = vunpack.c.l.b16 %v6834
    %v7354 = vunpack.c.l.b16 %v6835
    %v7355 = vunpack.c.l.b16 %v6836
    %v7356 = vunpack.c.l.b16 %v6837
    %v7357 = vunpack.c.l.b16 %v6838
    %v7358 = vunpack.c.l.b16 %v6839
    %v7359 = vunpack.c.l.b16 %v6840
    %v7360 = vunpack.c.l.b16 %v6841
    %v7361 = vunpack.c.l.b16 %v6842
    %v7362 = vunpack.c.l.b16 %v6843
    %v7363 = vunpack.c.l.b16 %v6844
    %v7364 = vunpack.c.l.b16 %v6845
    %v7365 = vunpack.c.l.b16 %v6846
    %v7366 = vunpack.c.l.b16 %v6847
    %v7367 = vunpack.c.l.b16 %v6848
    %v7368 = vunpack.c.l.b16 %v6849
    %v7369 = vunpack.c.l.b16 %v6850
    %v7370 = vunpack.c.l.b16 %v6851
    %v7371 = vunpack.c.l.b16 %v6852
    %v7372 = vunpack.c.l.b16 %v6853
    %v7373 = vunpack.c.l.b16 %v6854
    %v7374 = vunpack.c.l.b16 %v6855
    %v7375 = vunpack.c.l.b16 %v6856
    %v7376 = vunpack.c.l.b16 %v6857
    %v7377 = vunpack.c.l.b16 %v6858
    %v7378 = vunpack.c.l.b16 %v6859
    %v7379 = vunpack.c.l.b16 %v6860
    %v7380 = vunpack.c.l.b16 %v6861
    %v7381 = vunpack.c.l.b16 %v6862
    %v7382 = vunpack.c.l.b16 %v6863
    %v7383 = vunpack.c.l.b16 %v6864
    %v7384 = vunpack.c.l.b16 %v6865
    %v7385 = vunpack.c.l.b16 %v6866
    %v7386 = vunpack.c.l.b16 %v6867
    %v7387 = vunpack.c.l.b16 %v6868
    %v7388 = vunpack.c.l.b16 %v6869
    %v7389 = vunpack.c.l.b16 %v6870
    %v7390 = vunpack.c.l.b16 %v6871
    %v7391 = vunpack.c.l.b16 %v6872
    %v7392 = vunpack.c.l.b16 %v6873
    %v7393 = vunpack.c.l.b16 %v6874
    %v7394 = vunpack.c.l.b16 %v6875
    %v7395 = vunpack.c.l.b16 %v6876
    %v7396 = vunpack.c.l.b16 %v6877
    %v7397 = vunpack.c.l.b16 %v6878
    %v7398 = vunpack.c.l.b16 %v6879
    %v7399 = vunpack.c.l.b16 %v6880
    %v7400 = vunpack.c.l.b16 %v6881
    %v7401 = vunpack.c.l.b16 %v6882
    %v7402 = vunpack.c.l.b16 %v6883
    %v7403 = vunpack.c.l.b16 %v6884
    %v7404 = vunpack.c.l.b16 %v6885
    %v7405 = vunpack.c.l.b16 %v6886
    %v7406 = vunpack.c.l.b16 %v6887
    %v7407 = vunpack.c.l.b16 %v6888
    %v7408 = vunpack.c.l.b16 %v6889
    %v7409 = vunpack.c.l.b16 %v6890
    %v7410 = vunpack.c.l.b16 %v6891
    %v7411 = vunpack.c.l.b16 %v6892
    %v7412 = vunpack.c.l.b16 %v6893
    %v7413 = vunpack.c.l.b16 %v6894
    %v7414 = vunpack.c.l.b16 %v6895
    %v7415 = vunpack.c.l.b16 %v6896
    %v7416 = vunpack.c.l.b16 %v6897
    %v7417 = vunpack.c.l.b16 %v6898
    %v7418 = vunpack.c.l.b16 %v6899
    %v7419 = vunpack.c.l.b16 %v6900
    %v7420 = vunpack.c.l.b16 %v6901
    %v7421 = vunpack.c.l.b16 %v6902
    %v7422 = vunpack.c.l.b16 %v6903
    %v7423 = vunpack.c.l.b16 %v6904
    %v7424 = vunpack.c.l.b16 %v6905
    %v7425 = vunpack.c.l.b16 %v6906
    %v7426 = vunpack.c.l.b16 %v6907
    %v7427 = vunpack.c.l.b16 %v6908
    %v7428 = vunpack.c.l.b16 %v6909
    %v7429 = vunpack.c.l.b16 %v6910
    %v7430 = vunpack.c.l.b16 %v6911
    %v7431 = vunpack.c.l.b16 %v6912
    %v7432 = vunpack.c.l.b16 %v6913
    %v7433 = vunpack.c.l.b16 %v6914
    %v7434 = vunpack.c.l.b16 %v6915
    %v7435 = vunpack.c.l.b16 %v6916
    %v7436 = vunpack.c.l.b16 %v6917
    %v7437 = vunpack.c.l.b16 %v6918
    %v7438 = vunpack.c.l.b16 %v6919
    %v7439 = vunpack.c.l.b16 %v6920
    %v7440 = vunpack.c.l.b16 %v6921
    %v7441 = vunpack.c.l.b16 %v6922
    %v7442 = vunpack.c.l.b16 %v6923
    %v7443 = vunpack.c.l.b16 %v6924
    %v7444 = vunpack.c.l.b16 %v6925
    %v7445 = vunpack.c.l.b16 %v6926
    %v7446 = vunpack.c.l.b16 %v6927
    %v7447 = vunpack.c.l.b16 %v6928
    %v7448 = vunpack.c.l.b16 %v6929
    %v7449 = vunpack.c.l.b16 %v6930
    %v7450 = vunpack.c.l.b16 %v6931
    %v7451 = vunpack.c.l.b16 %v6932
    %v7452 = vunpack.c.l.b16 %v6933
    %v7453 = vunpack.c.l.b16 %v6934
    %v7454 = vunpack.c.l.b16 %v6935
    %v7455 = vunpack.c.l.b16 %v6936
    %v7456 = vunpack.c.l.b16 %v6937
    %v7457 = vunpack.c.l.b16 %v6938
    %v7458 = vunpack.c.l.b16 %v6939
    %v7459 = vunpack.c.l.b16 %v6940
    %v7460 = vunpack.c.l.b16 %v6941
    %v7461 = vunpack.c.l.b16 %v6942
    %v7462 = vunpack.c.l.b16 %v6943
    %v7463 = vunpack.c.l.b16 %v6944
    %v7464 = vunpack.c.l.b16 %v6945
    %v7465 = vunpack.c.l.b16 %v6946
    %v7466 = vunpack.c.l.b16 %v6947
    %v7467 = vunpack.c.l.b16 %v6948
    %v7468 = vunpack.c.l.b16 %v6949
    %v7469 = vunpack.c.l.b16 %v6950
    %v7470 = vunpack.c.l.b16 %v6951
    %v7471 = vunpack.c.l.b16 %v6952
    %v7472 = vunpack.c.l.b16 %v6953
    %v7473 = vunpack.c.l.b16 %v6954
    %v7474 = vunpack.c.l.b16 %v6955
    %v7475 = vunpack.c.l.b16 %v6956
    %v7476 = vunpack.c.l.b16 %v6957
    %v7477 = vunpack.c.l.b16 %v6958
    %v7478 = vunpack.c.l.b16 %v6959
    %v7479 = vunpack.c.l.b16 %v6960
    %v7480 = vunpack.c.l.b16 %v6961
    %v7481 = vunpack.c.l.b16 %v6962
    %v7482 = vunpack.c.l.b16 %v6963
    %v7483 = vunpack.c.l.b16 %v6964
    %v7484 = vunpack.c.l.b16 %v6965
    %v7485 = vunpack.c.l.b16 %v6966
    %v7486 = vunpack.c.l.b16 %v6967
    %v7487 = vunpack.c.l.b16 %v6968
    %v7488 = vunpack.c.l.b16 %v6969
    %v7489 = vunpack.c.l.b16 %v6970
    %v7490 = vunpack.c.l.b16 %v6971
    %v7491 = vunpack.c.l.b16 %v6972
    %v7492 = vunpack.c.l.b16 %v6973
    %v7493 = vunpack.c.l.b16 %v6974
    %v7494 = vunpack.c.l.b16 %v6975
    %v7495 = vunpack.c.l.b16 %v6976
    %v7496 = vunpack.c.l.b16 %v6977
    %v7497 = vunpack.c.l.b16 %v6978
    %v7498 = vunpack.c.l.b16 %v6979
    %v7499 = vunpack.c.l.b16 %v6980
    %v7500 = vunpack.c.l.b16 %v6981
    %v7501 = vunpack.c.l.b16 %v6982
    %v7502 = vunpack.c.l.b16 %v6983
    %v7503 = vunpack.c.l.b16 %v6984
    %v7504 = vunpack.c.l.b16 %v6985
    %v7505 = vunpack.c.l.b16 %v6986
    %v7506 = vunpack.c.l.b16 %v6987
    %v7507 = vunpack.c.l.b16 %v6988
    %v7508 = vunpack.c.l.b16 %v6989
    %v7509 = vunpack.c.l.b16 %v6990
    %v7510 = vunpack.c.l.b16 %v6991
    %v7511 = vunpack.c.l.b16 %v6992
    %v7512 = vunpack.c.l.b16 %v6993
    %v7513 = vunpack.c.l.b16 %v6994
    %v7514 = vunpack.c.l.b16 %v6995
    %v7515 = vunpack.c.l.b16 %v6996
    %v7516 = vunpack.c.l.b16 %v6997
    %v7517 = vunpack.c.l.b16 %v6998
    %v7518 = vunpack.c.l.b16 %v6999
    %v7519 = vunpack.c.l.b16 %v7000
    %v7520 = vunpack.c.l.b16 %v7001
    %v7521 = vunpack.c.l.b16 %v7002
    %v7522 = vunpack.c.l.b16 %v7003
    %v7523 = vunpack.c.l.b16 %v7004
    %v7524 = vunpack.c.l.b16 %v7005
    %v7525 = vunpack.c.l.b16 %v7006
    %v7526 = vunpack.c.l.b16 %v7007
    %v7527 = vunpack.c.l.b16 %v7008
    %v7528 = vunpack.c.l.b16 %v7009
    %v7529 = vunpack.c.l.b16 %v7010
    %v7530 = vunpack.c.l.b16 %v7011
    %v7531 = vunpack.c.l.b16 %v7012
    %v7532 = vunpack.c.l.b16 %v7013
    %v7533 = vunpack.c.l.b16 %v7014
    %v7534 = vunpack.c.l.b16 %v7015
    %v7535 = vunpack.c.l.b16 %v7016
    %v7536 = vunpack.c.l.b16 %v7017
    %v7537 = vunpack.c.l.b16 %v7018
    %v7538 = vunpack.c.l.b16 %v7019
    %v7539 = vunpack.c.l.b16 %v7020
    %v7540 = vunpack.c.l.b16 %v7021
    %v7541 = vunpack.c.l.b16 %v7022
    %v7542 = vunpack.c.l.b16 %v7023
    %v7543 = vunpack.c.l.b16 %v7024
    %v7544 = vunpack.c.l.b16 %v7025
    %v7545 = vunpack.c.l.b16 %v7026
    %v7546 = vunpack.c.l.b16 %v7027
    %v7547 = vunpack.c.l.b16 %v7028
    %v7548 = vpack.c.b16 %v7293, %v7292
    %v7549 = vpack.c.b16 %v7295, %v7294
    %v7550 = vpack.c.b16 %v7297, %v7296
    %v7551 = vpack.c.b16 %v7299, %v7298
    %v7552 = vpack.c.b16 %v7301, %v7300
    %v7553 = vpack.c.b16 %v7303, %v7302
    %v7554 = vpack.c.b16 %v7305, %v7304
    %v7555 = vpack.c.b16 %v7307, %v7306
    %v7556 = vpack.c.b16 %v7309, %v7308
    %v7557 = vpack.c.b16 %v7311, %v7310
    %v7558 = vpack.c.b16 %v7313, %v7312
    %v7559 = vpack.c.b16 %v7315, %v7314
    %v7560 = vpack.c.b16 %v7317, %v7316
    %v7561 = vpack.c.b16 %v7319, %v7318
    %v7562 = vpack.c.b16 %v7321, %v7320
    %v7563 = vpack.c.b16 %v7323, %v7322
    %v7564 = vpack.c.b16 %v7325, %v7324
    %v7565 = vpack.c.b16 %v7327, %v7326
    %v7566 = vpack.c.b16 %v7329, %v7328
    %v7567 = vpack.c.b16 %v7331, %v7330
    %v7568 = vpack.c.b16 %v7333, %v7332
    %v7569 = vpack.c.b16 %v7335, %v7334
    %v7570 = vpack.c.b16 %v7337, %v7336
    %v7571 = vpack.c.b16 %v7339, %v7338
    %v7572 = vpack.c.b16 %v7341, %v7340
    %v7573 = vpack.c.b16 %v7343, %v7342
    %v7574 = vpack.c.b16 %v7345, %v7344
    %v7575 = vpack.c.b16 %v7347, %v7346
    %v7576 = vpack.c.b16 %v7349, %v7348
    %v7577 = vpack.c.b16 %v7351, %v7350
    %v7578 = vpack.c.b16 %v7353, %v7352
    %v7579 = vpack.c.b16 %v7355, %v7354
    %v7580 = vpack.c.b16 %v7357, %v7356
    %v7581 = vpack.c.b16 %v7359, %v7358
    %v7582 = vpack.c.b16 %v7361, %v7360
    %v7583 = vpack.c.b16 %v7363, %v7362
    %v7584 = vpack.c.b16 %v7365, %v7364
    %v7585 = vpack.c.b16 %v7367, %v7366
    %v7586 = vpack.c.b16 %v7369, %v7368
    %v7587 = vpack.c.b16 %v7371, %v7370
    %v7588 = vpack.c.b16 %v7373, %v7372
    %v7589 = vpack.c.b16 %v7375, %v7374
    %v7590 = vpack.c.b16 %v7377, %v7376
    %v7591 = vpack.c.b16 %v7379, %v7378
    %v7592 = vpack.c.b16 %v7381, %v7380
    %v7593 = vpack.c.b16 %v7383, %v7382
    %v7594 = vpack.c.b16 %v7385, %v7384
    %v7595 = vpack.c.b16 %v7387, %v7386
    %v7596 = vpack.c.b16 %v7389, %v7388
    %v7597 = vpack.c.b16 %v7391, %v7390
    %v7598 = vpack.c.b16 %v7393, %v7392
    %v7599 = vpack.c.b16 %v7395, %v7394
    %v7600 = vpack.c.b16 %v7397, %v7396
    %v7601 = vpack.c.b16 %v7399, %v7398
    %v7602 = vpack.c.b16 %v7401, %v7400
    %v7603 = vpack.c.b16 %v7403, %v7402
    %v7604 = vpack.c.b16 %v7405, %v7404
    %v7605 = vpack.c.b16 %v7407, %v7406
    %v7606 = vpack.c.b16 %v7409, %v7408
    %v7607 = vpack.c.b16 %v7411, %v7410
    %v7608 = vpack.c.b16 %v7413, %v7412
    %v7609 = vpack.c.b16 %v7415, %v7414
    %v7610 = vpack.c.b16 %v7417, %v7416
    %v7611 = vpack.c.b16 %v7419, %v7418
    %v7612 = vpack.c.b16 %v7421, %v7420
    %v7613 = vpack.c.b16 %v7423, %v7422
    %v7614 = vpack.c.b16 %v7425, %v7424
    %v7615 = vpack.c.b16 %v7427, %v7426
    %v7616 = vpack.c.b16 %v7429, %v7428
    %v7617 = vpack.c.b16 %v7431, %v7430
    %v7618 = vpack.c.b16 %v7433, %v7432
    %v7619 = vpack.c.b16 %v7435, %v7434
    %v7620 = vpack.c.b16 %v7437, %v7436
    %v7621 = vpack.c.b16 %v7439, %v7438
    %v7622 = vpack.c.b16 %v7441, %v7440
    %v7623 = vpack.c.b16 %v7443, %v7442
    %v7624 = vpack.c.b16 %v7445, %v7444
    %v7625 = vpack.c.b16 %v7447, %v7446
    %v7626 = vpack.c.b16 %v7449, %v7448
    %v7627 = vpack.c.b16 %v7451, %v7450
    %v7628 = vpack.c.b16 %v7453, %v7452
    %v7629 = vpack.c.b16 %v7455, %v7454
    %v7630 = vpack.c.b16 %v7457, %v7456
    %v7631 = vpack.c.b16 %v7459, %v7458
    %v7632 = vpack.c.b16 %v7461, %v7460
    %v7633 = vpack.c.b16 %v7463, %v7462
    %v7634 = vpack.c.b16 %v7465, %v7464
    %v7635 = vpack.c.b16 %v7467, %v7466
    %v7636 = vpack.c.b16 %v7469, %v7468
    %v7637 = vpack.c.b16 %v7471, %v7470
    %v7638 = vpack.c.b16 %v7473, %v7472
    %v7639 = vpack.c.b16 %v7475, %v7474
    %v7640 = vpack.c.b16 %v7477, %v7476
    %v7641 = vpack.c.b16 %v7479, %v7478
    %v7642 = vpack.c.b16 %v7481, %v7480
    %v7643 = vpack.c.b16 %v7483, %v7482
    %v7644 = vpack.c.b16 %v7485, %v7484
    %v7645 = vpack.c.b16 %v7487, %v7486
    %v7646 = vpack.c.b16 %v7489, %v7488
    %v7647 = vpack.c.b16 %v7491, %v7490
    %v7648 = vpack.c.b16 %v7493, %v7492
    %v7649 = vpack.c.b16 %v7495, %v7494
    %v7650 = vpack.c.b16 %v7497, %v7496
    %v7651 = vpack.c.b16 %v7499, %v7498
    %v7652 = vpack.c.b16 %v7501, %v7500
    %v7653 = vpack.c.b16 %v7503, %v7502
    %v7654 = vpack.c.b16 %v7505, %v7504
    %v7655 = vpack.c.b16 %v7507, %v7506
    %v7656 = vpack.c.b16 %v7509, %v7508
    %v7657 = vpack.c.b16 %v7511, %v7510
    %v7658 = vpack.c.b16 %v7513, %v7512
    %v7659 = vpack.c.b16 %v7515, %v7514
    %v7660 = vpack.c.b16 %v7517, %v7516
    %v7661 = vpack.c.b16 %v7519, %v7518
    %v7662 = vpack.c.b16 %v7521, %v7520
    %v7663 = vpack.c.b16 %v7523, %v7522
    %v7664 = vpack.c.b16 %v7525, %v7524
    %v7665 = vpack.c.b16 %v7527, %v7526
    %v7666 = vpack.c.b16 %v7529, %v7528
    %v7667 = vpack.c.b16 %v7531, %v7530
    %v7668 = vpack.c.b16 %v7533, %v7532
    %v7669 = vpack.c.b16 %v7535, %v7534
    %v7670 = vpack.c.b16 %v7537, %v7536
    %v7671 = vpack.c.b16 %v7539, %v7538
    %v7672 = vpack.c.b16 %v7541, %v7540
    %v7673 = vpack.c.b16 %v7543, %v7542
    %v7674 = vpack.c.b16 %v7545, %v7544
    %v7675 = vpack.c.b16 %v7547, %v7546
    %7804 = vmatprep.subr.bf16.mxu0 0
    %7805 = vmatpush1.bf16.msra.mxu0 %v7555
    %7806 = vmatprep.subr.bf16.mxu0 0
    %7807 = vmatpush1.bf16.msra.mxu0 %v7554
    %7808 = vmatprep.subr.bf16.mxu0 0
    %7809 = vmatpush1.bf16.msra.mxu0 %v7553
    %7810 = vmatprep.subr.bf16.mxu0 0
    %7811 = vmatpush1.bf16.msra.mxu0 %v7552
    %7812 = vmatprep.subr.bf16.mxu0 0
    %7813 = vmatpush1.bf16.msra.mxu0 %v7551
    %7814 = vmatprep.subr.bf16.mxu0 0
    %7815 = vmatpush1.bf16.msra.mxu0 %v7550
    %7816 = vmatprep.subr.bf16.mxu0 0
    %7817 = vmatpush1.bf16.msra.mxu0 %v7549
    %7818 = vmatprep.subr.bf16.mxu0 0
    %7819 = vmatpush1.bf16.msra.mxu0 %v7548
    %7820 = vmatprep.subr.bf16.mxu0 0
    %7821 = vmatpush2.bf16.msra.mxu0 %v7563
    %7822 = vmatprep.subr.bf16.mxu0 0
    %7823 = vmatpush2.bf16.msra.mxu0 %v7562
    %7824 = vmatprep.subr.bf16.mxu0 0
    %7825 = vmatpush2.bf16.msra.mxu0 %v7561
    %7826 = vmatprep.subr.bf16.mxu0 0
    %7827 = vmatpush2.bf16.msra.mxu0 %v7560
    %7828 = vmatprep.subr.bf16.mxu0 0
    %7829 = vmatpush2.bf16.msra.mxu0 %v7559
    %7830 = vmatprep.subr.bf16.mxu0 0
    %7831 = vmatpush2.bf16.msra.mxu0 %v7558
    %7832 = vmatprep.subr.bf16.mxu0 0
    %7833 = vmatpush2.bf16.msra.mxu0 %v7557
    %7834 = vmatprep.subr.bf16.mxu0 0
    %7835 = vmatpush2.bf16.msra.mxu0 %v7556
    %7836 = vmatprep.mubr.bf16.mxu0 %v6757
    %7837 = vmatmul.mubr.bf16.gmra.mxu0 %v6756
    %v7838 = vpop.f32.mrf.mxu0
    %v7839 = vadd.f32 %v7034, %v7838
    %v7840 = vpop.f32.mrf.mxu0
    %v7841 = vpop.f32.mrf.mxu0
    %v7842 = vadd.f32 %v7034, %v7841
    %v7843 = vpop.f32.mrf.mxu0
    %7844 = vdwg.mxu0
    %7845 = vmatprep.subr.bf16.mxu0 0
    %7846 = vmatpush1.bf16.msra.mxu0 %v7571
    %7847 = vmatprep.subr.bf16.mxu0 0
    %7848 = vmatpush1.bf16.msra.mxu0 %v7570
    %7849 = vmatprep.subr.bf16.mxu0 0
    %7850 = vmatpush1.bf16.msra.mxu0 %v7569
    %7851 = vmatprep.subr.bf16.mxu0 0
    %7852 = vmatpush1.bf16.msra.mxu0 %v7568
    %7853 = vmatprep.subr.bf16.mxu0 0
    %7854 = vmatpush1.bf16.msra.mxu0 %v7567
    %7855 = vmatprep.subr.bf16.mxu0 0
    %7856 = vmatpush1.bf16.msra.mxu0 %v7566
    %7857 = vmatprep.subr.bf16.mxu0 0
    %7858 = vmatpush1.bf16.msra.mxu0 %v7565
    %7859 = vmatprep.subr.bf16.mxu0 0
    %7860 = vmatpush1.bf16.msra.mxu0 %v7564
    %7861 = vmatprep.subr.bf16.mxu0 0
    %7862 = vmatpush2.bf16.msra.mxu0 %v7579
    %7863 = vmatprep.subr.bf16.mxu0 0
    %7864 = vmatpush2.bf16.msra.mxu0 %v7578
    %7865 = vmatprep.subr.bf16.mxu0 0
    %7866 = vmatpush2.bf16.msra.mxu0 %v7577
    %7867 = vmatprep.subr.bf16.mxu0 0
    %7868 = vmatpush2.bf16.msra.mxu0 %v7576
    %7869 = vmatprep.subr.bf16.mxu0 0
    %7870 = vmatpush2.bf16.msra.mxu0 %v7575
    %7871 = vmatprep.subr.bf16.mxu0 0
    %7872 = vmatpush2.bf16.msra.mxu0 %v7574
    %7873 = vmatprep.subr.bf16.mxu0 0
    %7874 = vmatpush2.bf16.msra.mxu0 %v7573
    %7875 = vmatprep.subr.bf16.mxu0 0
    %7876 = vmatpush2.bf16.msra.mxu0 %v7572
    %7877 = vmatprep.mubr.bf16.mxu0 %v6759
    %7878 = vmatmul.mubr.bf16.gmra.mxu0 %v6758
    %v7879 = vpop.f32.mrf.mxu0
    %v7880 = vadd.f32 %v7839, %v7879
    %v7881 = vpop.f32.mrf.mxu0
    %v7882 = vpop.f32.mrf.mxu0
    %v7883 = vadd.f32 %v7842, %v7882
    %v7884 = vpop.f32.mrf.mxu0
    %7885 = vdwg.mxu0
    %7886 = vmatprep.subr.bf16.mxu0 0
    %7887 = vmatpush1.bf16.msra.mxu0 %v7587
    %7888 = vmatprep.subr.bf16.mxu0 0
    %7889 = vmatpush1.bf16.msra.mxu0 %v7586
    %7890 = vmatprep.subr.bf16.mxu0 0
    %7891 = vmatpush1.bf16.msra.mxu0 %v7585
    %7892 = vmatprep.subr.bf16.mxu0 0
    %7893 = vmatpush1.bf16.msra.mxu0 %v7584
    %7894 = vmatprep.subr.bf16.mxu0 0
    %7895 = vmatpush1.bf16.msra.mxu0 %v7583
    %7896 = vmatprep.subr.bf16.mxu0 0
    %7897 = vmatpush1.bf16.msra.mxu0 %v7582
    %7898 = vmatprep.subr.bf16.mxu0 0
    %7899 = vmatpush1.bf16.msra.mxu0 %v7581
    %7900 = vmatprep.subr.bf16.mxu0 0
    %7901 = vmatpush1.bf16.msra.mxu0 %v7580
    %7902 = vmatprep.subr.bf16.mxu0 0
    %7903 = vmatpush2.bf16.msra.mxu0 %v7595
    %7904 = vmatprep.subr.bf16.mxu0 0
    %7905 = vmatpush2.bf16.msra.mxu0 %v7594
    %7906 = vmatprep.subr.bf16.mxu0 0
    %7907 = vmatpush2.bf16.msra.mxu0 %v7593
    %7908 = vmatprep.subr.bf16.mxu0 0
    %7909 = vmatpush2.bf16.msra.mxu0 %v7592
    %7910 = vmatprep.subr.bf16.mxu0 0
    %7911 = vmatpush2.bf16.msra.mxu0 %v7591
    %7912 = vmatprep.subr.bf16.mxu0 0
    %7913 = vmatpush2.bf16.msra.mxu0 %v7590
    %7914 = vmatprep.subr.bf16.mxu0 0
    %7915 = vmatpush2.bf16.msra.mxu0 %v7589
    %7916 = vmatprep.subr.bf16.mxu0 0
    %7917 = vmatpush2.bf16.msra.mxu0 %v7588
    %7918 = vmatprep.mubr.bf16.mxu0 %v6761
    %7919 = vmatmul.mubr.bf16.gmra.mxu0 %v6760
    %v7920 = vpop.f32.mrf.mxu0
    %v7921 = vadd.f32 %v7880, %v7920
    %v7922 = vpop.f32.mrf.mxu0
    %v7923 = vpop.f32.mrf.mxu0
    %v7924 = vadd.f32 %v7883, %v7923
    %v7925 = vpop.f32.mrf.mxu0
    %7926 = vdwg.mxu0
    %7927 = vmatprep.subr.bf16.mxu0 0
    %7928 = vmatpush1.bf16.msra.mxu0 %v7603
    %7929 = vmatprep.subr.bf16.mxu0 0
    %7930 = vmatpush1.bf16.msra.mxu0 %v7602
    %7931 = vmatprep.subr.bf16.mxu0 0
    %7932 = vmatpush1.bf16.msra.mxu0 %v7601
    %7933 = vmatprep.subr.bf16.mxu0 0
    %7934 = vmatpush1.bf16.msra.mxu0 %v7600
    %7935 = vmatprep.subr.bf16.mxu0 0
    %7936 = vmatpush1.bf16.msra.mxu0 %v7599
    %7937 = vmatprep.subr.bf16.mxu0 0
    %7938 = vmatpush1.bf16.msra.mxu0 %v7598
    %7939 = vmatprep.subr.bf16.mxu0 0
    %7940 = vmatpush1.bf16.msra.mxu0 %v7597
    %7941 = vmatprep.subr.bf16.mxu0 0
    %7942 = vmatpush1.bf16.msra.mxu0 %v7596
    %7943 = vmatprep.subr.bf16.mxu0 0
    %7944 = vmatpush2.bf16.msra.mxu0 %v7611
    %7945 = vmatprep.subr.bf16.mxu0 0
    %7946 = vmatpush2.bf16.msra.mxu0 %v7610
    %7947 = vmatprep.subr.bf16.mxu0 0
    %7948 = vmatpush2.bf16.msra.mxu0 %v7609
    %7949 = vmatprep.subr.bf16.mxu0 0
    %7950 = vmatpush2.bf16.msra.mxu0 %v7608
    %7951 = vmatprep.subr.bf16.mxu0 0
    %7952 = vmatpush2.bf16.msra.mxu0 %v7607
    %7953 = vmatprep.subr.bf16.mxu0 0
    %7954 = vmatpush2.bf16.msra.mxu0 %v7606
    %7955 = vmatprep.subr.bf16.mxu0 0
    %7956 = vmatpush2.bf16.msra.mxu0 %v7605
    %7957 = vmatprep.subr.bf16.mxu0 0
    %7958 = vmatpush2.bf16.msra.mxu0 %v7604
    %7959 = vmatprep.mubr.bf16.mxu0 %v6763
    %7960 = vmatmul.mubr.bf16.gmra.mxu0 %v6762
    %v7961 = vpop.f32.mrf.mxu0
    %v7962 = vadd.f32 %v7921, %v7961
    %v7963 = vpop.f32.mrf.mxu0
    %v7964 = vpop.f32.mrf.mxu0
    %v7965 = vadd.f32 %v7924, %v7964
    %v7966 = vpop.f32.mrf.mxu0
    %7967 = vdwg.mxu0
    %7968 = vmatprep.subr.bf16.mxu0 0
    %7969 = vmatpush1.bf16.msra.mxu0 %v7619
    %7970 = vmatprep.subr.bf16.mxu0 0
    %7971 = vmatpush1.bf16.msra.mxu0 %v7618
    %7972 = vmatprep.subr.bf16.mxu0 0
    %7973 = vmatpush1.bf16.msra.mxu0 %v7617
    %7974 = vmatprep.subr.bf16.mxu0 0
    %7975 = vmatpush1.bf16.msra.mxu0 %v7616
    %7976 = vmatprep.subr.bf16.mxu0 0
    %7977 = vmatpush1.bf16.msra.mxu0 %v7615
    %7978 = vmatprep.subr.bf16.mxu0 0
    %7979 = vmatpush1.bf16.msra.mxu0 %v7614
    %7980 = vmatprep.subr.bf16.mxu0 0
    %7981 = vmatpush1.bf16.msra.mxu0 %v7613
    %7982 = vmatprep.subr.bf16.mxu0 0
    %7983 = vmatpush1.bf16.msra.mxu0 %v7612
    %7984 = vmatprep.subr.bf16.mxu0 0
    %7985 = vmatpush2.bf16.msra.mxu0 %v7627
    %7986 = vmatprep.subr.bf16.mxu0 0
    %7987 = vmatpush2.bf16.msra.mxu0 %v7626
    %7988 = vmatprep.subr.bf16.mxu0 0
    %7989 = vmatpush2.bf16.msra.mxu0 %v7625
    %7990 = vmatprep.subr.bf16.mxu0 0
    %7991 = vmatpush2.bf16.msra.mxu0 %v7624
    %7992 = vmatprep.subr.bf16.mxu0 0
    %7993 = vmatpush2.bf16.msra.mxu0 %v7623
    %7994 = vmatprep.subr.bf16.mxu0 0
    %7995 = vmatpush2.bf16.msra.mxu0 %v7622
    %7996 = vmatprep.subr.bf16.mxu0 0
    %7997 = vmatpush2.bf16.msra.mxu0 %v7621
    %7998 = vmatprep.subr.bf16.mxu0 0
    %7999 = vmatpush2.bf16.msra.mxu0 %v7620
    %8000 = vmatprep.mubr.bf16.mxu0 %v6765
    %8001 = vmatmul.mubr.bf16.gmra.mxu0 %v6764
    %v8002 = vpop.f32.mrf.mxu0
    %v8003 = vadd.f32 %v7962, %v8002
    %v8004 = vpop.f32.mrf.mxu0
    %v8005 = vpop.f32.mrf.mxu0
    %v8006 = vadd.f32 %v7965, %v8005
    %v8007 = vpop.f32.mrf.mxu0
    %8008 = vdwg.mxu0
    %8009 = vmatprep.subr.bf16.mxu0 0
    %8010 = vmatpush1.bf16.msra.mxu0 %v7635
    %8011 = vmatprep.subr.bf16.mxu0 0
    %8012 = vmatpush1.bf16.msra.mxu0 %v7634
    %8013 = vmatprep.subr.bf16.mxu0 0
    %8014 = vmatpush1.bf16.msra.mxu0 %v7633
    %8015 = vmatprep.subr.bf16.mxu0 0
    %8016 = vmatpush1.bf16.msra.mxu0 %v7632
    %8017 = vmatprep.subr.bf16.mxu0 0
    %8018 = vmatpush1.bf16.msra.mxu0 %v7631
    %8019 = vmatprep.subr.bf16.mxu0 0
    %8020 = vmatpush1.bf16.msra.mxu0 %v7630
    %8021 = vmatprep.subr.bf16.mxu0 0
    %8022 = vmatpush1.bf16.msra.mxu0 %v7629
    %8023 = vmatprep.subr.bf16.mxu0 0
    %8024 = vmatpush1.bf16.msra.mxu0 %v7628
    %8025 = vmatprep.subr.bf16.mxu0 0
    %8026 = vmatpush2.bf16.msra.mxu0 %v7643
    %8027 = vmatprep.subr.bf16.mxu0 0
    %8028 = vmatpush2.bf16.msra.mxu0 %v7642
    %8029 = vmatprep.subr.bf16.mxu0 0
    %8030 = vmatpush2.bf16.msra.mxu0 %v7641
    %8031 = vmatprep.subr.bf16.mxu0 0
    %8032 = vmatpush2.bf16.msra.mxu0 %v7640
    %8033 = vmatprep.subr.bf16.mxu0 0
    %8034 = vmatpush2.bf16.msra.mxu0 %v7639
    %8035 = vmatprep.subr.bf16.mxu0 0
    %8036 = vmatpush2.bf16.msra.mxu0 %v7638
    %8037 = vmatprep.subr.bf16.mxu0 0
    %8038 = vmatpush2.bf16.msra.mxu0 %v7637
    %8039 = vmatprep.subr.bf16.mxu0 0
    %8040 = vmatpush2.bf16.msra.mxu0 %v7636
    %8041 = vmatprep.mubr.bf16.mxu0 %v6767
    %8042 = vmatmul.mubr.bf16.gmra.mxu0 %v6766
    %v8043 = vpop.f32.mrf.mxu0
    %v8044 = vadd.f32 %v8003, %v8043
    %v8045 = vpop.f32.mrf.mxu0
    %v8046 = vpop.f32.mrf.mxu0
    %v8047 = vadd.f32 %v8006, %v8046
    %v8048 = vpop.f32.mrf.mxu0
    %8049 = vdwg.mxu0
    %8050 = vmatprep.subr.bf16.mxu0 0
    %8051 = vmatpush1.bf16.msra.mxu0 %v7651
    %8052 = vmatprep.subr.bf16.mxu0 0
    %8053 = vmatpush1.bf16.msra.mxu0 %v7650
    %8054 = vmatprep.subr.bf16.mxu0 0
    %8055 = vmatpush1.bf16.msra.mxu0 %v7649
    %8056 = vmatprep.subr.bf16.mxu0 0
    %8057 = vmatpush1.bf16.msra.mxu0 %v7648
    %8058 = vmatprep.subr.bf16.mxu0 0
    %8059 = vmatpush1.bf16.msra.mxu0 %v7647
    %8060 = vmatprep.subr.bf16.mxu0 0
    %8061 = vmatpush1.bf16.msra.mxu0 %v7646
    %8062 = vmatprep.subr.bf16.mxu0 0
    %8063 = vmatpush1.bf16.msra.mxu0 %v7645
    %8064 = vmatprep.subr.bf16.mxu0 0
    %8065 = vmatpush1.bf16.msra.mxu0 %v7644
    %8066 = vmatprep.subr.bf16.mxu0 0
    %8067 = vmatpush2.bf16.msra.mxu0 %v7659
    %8068 = vmatprep.subr.bf16.mxu0 0
    %8069 = vmatpush2.bf16.msra.mxu0 %v7658
    %8070 = vmatprep.subr.bf16.mxu0 0
    %8071 = vmatpush2.bf16.msra.mxu0 %v7657
    %8072 = vmatprep.subr.bf16.mxu0 0
    %8073 = vmatpush2.bf16.msra.mxu0 %v7656
    %8074 = vmatprep.subr.bf16.mxu0 0
    %8075 = vmatpush2.bf16.msra.mxu0 %v7655
    %8076 = vmatprep.subr.bf16.mxu0 0
    %8077 = vmatpush2.bf16.msra.mxu0 %v7654
    %8078 = vmatprep.subr.bf16.mxu0 0
    %8079 = vmatpush2.bf16.msra.mxu0 %v7653
    %8080 = vmatprep.subr.bf16.mxu0 0
    %8081 = vmatpush2.bf16.msra.mxu0 %v7652
    %8082 = vmatprep.mubr.bf16.mxu0 %v6769
    %8083 = vmatmul.mubr.bf16.gmra.mxu0 %v6768
    %v8084 = vpop.f32.mrf.mxu0
    %v8085 = vadd.f32 %v8044, %v8084
    %v8086 = vpop.f32.mrf.mxu0
    %v8087 = vpop.f32.mrf.mxu0
    %v8088 = vadd.f32 %v8047, %v8087
    %v8089 = vpop.f32.mrf.mxu0
    %8090 = vdwg.mxu0
    %8091 = vmatprep.subr.bf16.mxu0 0
    %8092 = vmatpush1.bf16.msra.mxu0 %v7667
    %8093 = vmatprep.subr.bf16.mxu0 0
    %8094 = vmatpush1.bf16.msra.mxu0 %v7666
    %8095 = vmatprep.subr.bf16.mxu0 0
    %8096 = vmatpush1.bf16.msra.mxu0 %v7665
    %8097 = vmatprep.subr.bf16.mxu0 0
    %8098 = vmatpush1.bf16.msra.mxu0 %v7664
    %8099 = vmatprep.subr.bf16.mxu0 0
    %8100 = vmatpush1.bf16.msra.mxu0 %v7663
    %8101 = vmatprep.subr.bf16.mxu0 0
    %8102 = vmatpush1.bf16.msra.mxu0 %v7662
    %8103 = vmatprep.subr.bf16.mxu0 0
    %8104 = vmatpush1.bf16.msra.mxu0 %v7661
    %8105 = vmatprep.subr.bf16.mxu0 0
    %8106 = vmatpush1.bf16.msra.mxu0 %v7660
    %8107 = vmatprep.subr.bf16.mxu0 0
    %8108 = vmatpush2.bf16.msra.mxu0 %v7675
    %8109 = vmatprep.subr.bf16.mxu0 0
    %8110 = vmatpush2.bf16.msra.mxu0 %v7674
    %8111 = vmatprep.subr.bf16.mxu0 0
    %8112 = vmatpush2.bf16.msra.mxu0 %v7673
    %8113 = vmatprep.subr.bf16.mxu0 0
    %8114 = vmatpush2.bf16.msra.mxu0 %v7672
    %8115 = vmatprep.subr.bf16.mxu0 0
    %8116 = vmatpush2.bf16.msra.mxu0 %v7671
    %8117 = vmatprep.subr.bf16.mxu0 0
    %8118 = vmatpush2.bf16.msra.mxu0 %v7670
    %8119 = vmatprep.subr.bf16.mxu0 0
    %8120 = vmatpush2.bf16.msra.mxu0 %v7669
    %8121 = vmatprep.subr.bf16.mxu0 0
    %8122 = vmatpush2.bf16.msra.mxu0 %v7668
    %8123 = vmatprep.mubr.bf16.mxu0 %v6771
    %8124 = vmatmul.mubr.bf16.gmra.mxu0 %v6770
    %v8125 = vpop.f32.mrf.mxu0
    %v8126 = vadd.f32 %v8085, %v8125
    %v8127 = vpop.f32.mrf.mxu0
    %v8128 = vpop.f32.mrf.mxu0
    %v8129 = vadd.f32 %v8088, %v8128
    %v8130 = vpop.f32.mrf.mxu0
    %8131 = vdwg.mxu0
    %v8132 = vadd.f32 %v5809, %v8126
    %v8133 = vadd.f32 %v5810, %v8129
    %v8134 = vld [vmem:[%s3 + $0x32] sm:$0x1]
    %v8135 = vld [vmem:[%s3 + $0x33] sm:$0x1]
    %v8136 = vsel %vm675, %v8132, 0.0
    %8137 = vadd.xlane.f32.xlu0 %v8136
    %v8138 = vpop.xlane.xlu0 %8137
    %v8139 = vsel %vm675, %v8133, 0.0
    %8140 = vadd.xlane.f32.xlu0 %v8139
    %v8141 = vpop.xlane.xlu0 %8140
    %v8142 = vmul.f32 %v8138, %v2498
    %v8143 = vmul.f32 %v8141, %v2498
    %v8144 = vsub.f32 %v8132, %v8142
    %v8145 = vsub.f32 %v8133, %v8143
    %v8146 = vmul.f32 %v8144, %v8144
    %v8147 = vmul.f32 %v8145, %v8145
    %v8148 = vsel %vm675, %v8146, 0.0
    %8149 = vadd.xlane.f32.xlu0 %v8148
    %v8150 = vpop.xlane.xlu0 %8149
    %v8151 = vsel %vm675, %v8147, 0.0
    %8152 = vadd.xlane.f32.xlu0 %v8151
    %v8153 = vpop.xlane.xlu0 %8152
    %v8154 = vmul.f32 %v8150, %v2498
    %v8155 = vmul.f32 %v8153, %v2498
    %v8156 = vadd.f32 %v8154, 1e-05
    %v8157 = vadd.f32 %v8155, 1e-05
    %v8158 = vrsqrt.pop %v8156
    %v8159 = vrsqrt.pop %v8157
    %v8160 = vmul.f32 %v8144, %v8158
    %v8161 = vmul.f32 %v8145, %v8159
    %v8163 = vlaneseq
    %v8164 = vshrl.u32 %v8163, 7
    %v8165 = vsub.s32 0, %v8164
    %v8166 = vrot.slane %v8134, %v8165
    %v8168 = vmul.f32 %v8160, %v8166
    %v8169 = vmul.f32 %v8161, %v8166
    %v8171 = vlaneseq
    %v8172 = vshrl.u32 %v8171, 7
    %v8173 = vsub.s32 0, %v8172
    %v8174 = vrot.slane %v8135, %v8173
    %v8176 = vadd.f32 %v8168, %v8174
    %v8177 = vadd.f32 %v8169, %v8174
    %v8178 = vld [vmem:[%s2 + $0x48] sm:$0xff]
    %v8179 = vld [vmem:[%s2 + $0x98] sm:$0xff]
    %v8180 = vld [vmem:[%s2 + $0xe8] sm:$0xff]
    %v8181 = vld [vmem:[%s2 + $0x138] sm:$0xff]
    %v8182 = vld [vmem:[%s2 + $0x188] sm:$0xff]
    %v8183 = vld [vmem:[%s2 + $0x1d8] sm:$0xff]
    %v8184 = vld [vmem:[%s2 + $0x228] sm:$0xff]
    %v8185 = vld [vmem:[%s2 + $0x278] sm:$0xff]
    %v8186 = vld [vmem:[%s2 + $0x2c8] sm:$0xff]
    %v8187 = vld [vmem:[%s2 + $0x318] sm:$0xff]
    %v8188 = vld [vmem:[%s3 + $0x34] sm:$0x1]
    %v8190 = vlaneseq
    %v8191 = vshrl.u32 %v8190, 7
    %v8192 = vsub.s32 0, %v8191
    %v8193 = vrot.slane %v8188, %v8192
    %v8196 = vsel %vm675, %v8176, 0
    %v8199 = vsel %vm675, %v8177, 0
    %8201 = vmatprep.subr.mxu0 0.0
    %8202 = vmatpush1.msra.mxu0 0.0
    %8203 = vmatprep.subr.mxu0 0.0
    %8204 = vmatpush1.msra.mxu0 0.0
    %8205 = vmatprep.subr.mxu0 0.0
    %8206 = vmatpush1.msra.mxu0 0.0
    %8207 = vmatprep.subr.mxu0 0.0
    %8208 = vmatpush1.msra.mxu0 0.0
    %8209 = vmatprep.subr.mxu0 0.0
    %8210 = vmatpush1.msra.mxu0 0.0
    %8211 = vmatprep.subr.mxu0 0.0
    %8212 = vmatpush1.msra.mxu0 0.0
    %8213 = vmatprep.subr.mxu0 0.0
    %8214 = vmatpush1.msra.mxu0 %v8187
    %8215 = vmatprep.subr.mxu0 0.0
    %8216 = vmatpush1.msra.mxu0 %v8186
    %8217 = vmatprep.subr.mxu0 0.0
    %8218 = vmatpush1.msra.mxu0 %v8185
    %8219 = vmatprep.subr.mxu0 0.0
    %8220 = vmatpush1.msra.mxu0 %v8184
    %8221 = vmatprep.subr.mxu0 0.0
    %8222 = vmatpush1.msra.mxu0 %v8183
    %8223 = vmatprep.subr.mxu0 0.0
    %8224 = vmatpush1.msra.mxu0 %v8182
    %8225 = vmatprep.subr.mxu0 0.0
    %8226 = vmatpush1.msra.mxu0 %v8181
    %8227 = vmatprep.subr.mxu0 0.0
    %8228 = vmatpush1.msra.mxu0 %v8180
    %8229 = vmatprep.subr.mxu0 0.0
    %8230 = vmatpush1.msra.mxu0 %v8179
    %8231 = vmatprep.subr.mxu0 0.0
    %8232 = vmatpush1.msra.mxu0 %v8178
    %8233 = vmatprep.subr.mxu0 0.0
    %8234 = vmatpush2.msra.mxu0 0.0
    %8235 = vmatprep.subr.mxu0 0.0
    %8236 = vmatpush2.msra.mxu0 0.0
    %8237 = vmatprep.subr.mxu0 0.0
    %8238 = vmatpush2.msra.mxu0 0.0
    %8239 = vmatprep.subr.mxu0 0.0
    %8240 = vmatpush2.msra.mxu0 0.0
    %8241 = vmatprep.subr.mxu0 0.0
    %8242 = vmatpush2.msra.mxu0 0.0
    %8243 = vmatprep.subr.mxu0 0.0
    %8244 = vmatpush2.msra.mxu0 0.0
    %8245 = vmatprep.subr.mxu0 0.0
    %8246 = vmatpush2.msra.mxu0 0.0
    %8247 = vmatprep.subr.mxu0 0.0
    %8248 = vmatpush2.msra.mxu0 0.0
    %8249 = vmatprep.subr.mxu0 0.0
    %8250 = vmatpush2.msra.mxu0 0.0
    %8251 = vmatprep.subr.mxu0 0.0
    %8252 = vmatpush2.msra.mxu0 0.0
    %8253 = vmatprep.subr.mxu0 0.0
    %8254 = vmatpush2.msra.mxu0 0.0
    %8255 = vmatprep.subr.mxu0 0.0
    %8256 = vmatpush2.msra.mxu0 0.0
    %8257 = vmatprep.subr.mxu0 0.0
    %8258 = vmatpush2.msra.mxu0 0.0
    %8259 = vmatprep.subr.mxu0 0.0
    %8260 = vmatpush2.msra.mxu0 0.0
    %8261 = vmatprep.subr.mxu0 0.0
    %8262 = vmatpush2.msra.mxu0 0.0
    %8263 = vmatprep.subr.mxu0 0.0
    %8264 = vmatpush2.msra.mxu0 0.0
    %8265 = vmatprep.mubr.f32.mxu0 0.0
    %8266 = vmatmul.mubr.f32.gmra.mxu0 %v8196
    %v8267 = vpop.f32.mrf.mxu0
    %v8268 = vadd.f32 %v8193, %v8267
    %v8269 = vpop.f32.mrf.mxu0
    %8270 = vmatprep.mubr.f32.mxu0 0.0
    %8271 = vmatmul.mubr.f32.gmra.mxu0 %v8199
    %v8272 = vpop.f32.mrf.mxu0
    %v8273 = vadd.f32 %v8193, %v8272
    %v8274 = vpop.f32.mrf.mxu0
    %8275 = vdwg.mxu0
    %8276 = vst [vmem:[#allocation2] sm:$0xff] %v8268
    %8277 = vst [vmem:[#allocation2 + $0x8] sm:$0xff] %v8273
    // Predicated region
    $region26: #{tpu_custom_call.1} parent=1 // pred_check
      _
    $region27: #{tpu_custom_call.1} parent=1 // pred_check_branch
      %8279 = sbr.rel (0) target = $region29
    $region28: #{tpu_custom_call.1} parent=1 // pred_region
      %s8281 = ssub.s32 256, 256
      %8282 = vsyncadd [#allocation3], %s8281
      %s8283 = sshll.u32 [#allocation2], 4
      %s8284 = int_to_ptr.vmem [resolvable:$true] %s8283
      %8289 = dma.vmem_to_hbm [thread:$0]  %s8284, 256, %s6, [#allocation3], 128, 128, 8
    $region29: #{tpu_custom_call.1} parent=1 // pred_fallthru
      _
    // Predicated region
    $region30: #{tpu_custom_call.1} parent=1 // pred_check
      _
    $region31: #{tpu_custom_call.1} parent=1 // pred_check_branch
      %8291 = sbr.rel (0) target = $region33
    $region32: #{tpu_custom_call.1} parent=1 // pred_region
      %8292 = dma.done [#allocation3], 256
    $region33: #{tpu_custom_call.1} parent=1 // pred_fallthru
      _
    %8293 = vsyncpa [#allocation3], 1

</llo_original>
